<compile_context>
chip_gen: v7x
topology: tpu7x:2x2x1
jax: 0.10.0
libtpu: 0.0.40
codegen_flags: <defaults>
</compile_context>

<pallas_src>
import numpy as np
import jax
import jax.numpy as jnp
from jax.experimental import pallas as pl
from jax.experimental.pallas import tpu as pltpu

# ----------------------------- hyper-params -----------------------------------
BATCH = 64            # boards per call (batched per the perf review)
NUM_ACTIONS = 4
CH = 32               # conv channels
H_IN = 4              # 4x4 board -> Linear(32*5*5 = 800, num_actions)
BN_EPS = 1e-5         # PyTorch BatchNorm2d default
LANES = 128

# conv/pool tap order used everywhere: (dy, dx)
_TAPS = ((0, 0), (0, 1), (1, 0), (1, 1))
_CONV_OFFS = (-9, -8, -1, 0)   # (dy-1)*8 + (dx-1)  (k=2, s=1, p=1), _TAPS order
_POOL_OFFS = (1, 8, 9)         # dy*8 + dx          (k=2, s=1), tap (0,0) handled in-place

# per-board padded pixel grid: 8x8 = 64 rows per board, row = y*8 + x
_GRID = 8
_RPB = 64
_MARGIN = 16                   # scratch margin rows (>= max |shift| = 9, multiple of 8)

# packed weight-constant row layout (lane width = CH)
_W1_OFF, _W2_OFF, _W3_OFF = 0, 8, 136
_T1_OFF, _T2_OFF, _T3_OFF = 264, 272, 280
_WCONST_ROWS = 288


# ----------------------------- wrapper + kernel --------------------------------
def convnet_forward(src, params, boards_per_step=8):
    """src: (B, 1, 4, 4) float32 -> softmax action probs (B, num_actions)."""
    f32 = jnp.float32
    B = src.shape[0]
    A = params["wfc"].shape[0]
    C = params["w1"].shape[0]
    P = 25                                     # 5x5 spatial positions fed to the fc
    assert C == CH and P * A <= LANES
    tb = min(boards_per_step, B)
    assert B % tb == 0
    R = tb * _RPB                              # activation rows per grid step

    # ---- fold conv bias + eval-mode BatchNorm into weight scale / channel shift ----
    def bn_fold(b, g, be, m, v):
        scale = g * jax.lax.rsqrt(v + BN_EPS)
        return scale, be + (b - m) * scale

    s1, t1 = bn_fold(params["b1"], params["g1"], params["be1"], params["m1"], params["v1"])
    s2, t2 = bn_fold(params["b2"], params["g2"], params["be2"], params["m2"], params["v2"])
    s3, t3 = bn_fold(params["b3"], params["g3"], params["be3"], params["m3"], params["v3"])

    # scale-folded conv weights, tap-major rows (tap order == _TAPS == _CONV_OFFS)
    w1f = jnp.stack([params["w1"][:, 0, dy, dx] for dy, dx in _TAPS], axis=0) * s1[None, :]
    w2c = jnp.concatenate([params["w2"][:, :, dy, dx].T for dy, dx in _TAPS], axis=0) * s2[None, :]
    w3c = jnp.concatenate([params["w3"][:, :, dy, dx].T for dy, dx in _TAPS], axis=0) * s3[None, :]

    wconst = jnp.zeros((_WCONST_ROWS, C), f32)
    wconst = wconst.at[_W1_OFF:_W1_OFF + 4].set(w1f)
    wconst = wconst.at[_W2_OFF:_W2_OFF + 4 * C].set(w2c)
    wconst = wconst.at[_W3_OFF:_W3_OFF + 4 * C].set(w3c)
    wconst = wconst.at[_T1_OFF].set(t1)
    wconst = wconst.at[_T2_OFF].set(t2)
    wconst = wconst.at[_T3_OFF].set(t3)

    # ---- fc: PyTorch (c,h,w) flatten + Linear folded into wsel / fcmask / ffold ----
    # wsel[c, p*A + a] = wfc[a, c*25 + p]
    wsel = params["wfc"].reshape(A, C, P).transpose(1, 2, 0).reshape(C, P * A)
    fm = np.zeros((_RPB, P * A), np.float32)   # per-board pixel -> fc-column mask
    for yy in range(5):
        for xx in range(5):
            p = yy * 5 + xx
            fm[yy * _GRID + xx, p * A:(p + 1) * A] = 1.0
    fcmask = np.tile(fm, (tb, 1))              # (R, 100)
    ffold = np.zeros((LANES, A), np.float32)   # fold the 25 pixel groups of A columns
    ffold[:P * A] = np.tile(np.eye(A, dtype=np.float32), (P, 1))

    FCM_OFF = 32
    FFOLD_OFF = FCM_OFF + R
    BFC_OFF = FFOLD_OFF + LANES
    FCONST_ROWS = BFC_OFF + 8
    fconst = jnp.zeros((FCONST_ROWS, LANES), f32)
    fconst = fconst.at[0:C, 0:P * A].set(wsel)
    fconst = fconst.at[FCM_OFF:FCM_OFF + R, 0:P * A].set(jnp.asarray(fcmask))
    fconst = fconst.at[FFOLD_OFF:FFOLD_OFF + LANES, 0:A].set(jnp.asarray(ffold))
    fconst = fconst.at[BFC_OFF, 0:A].set(params["bfc"])

    # per-board row-sum matrix (tb, R)
    ssum = jnp.asarray(np.kron(np.eye(tb, dtype=np.float32),
                               np.ones((1, _RPB), np.float32)))

    # ---- host-side im2col of the 1-channel 4x4 input onto the padded 8x8 grid ----
    xp = jnp.pad(src[:, 0].astype(f32), ((0, 0), (1, 1), (1, 1)))              # (B, 6, 6)
    taps = jnp.stack([xp[:, dy:dy + 5, dx:dx + 5] for dy, dx in _TAPS], axis=-1)
    x1 = jnp.zeros((B, _GRID, _GRID, 4), f32).at[:, :5, :5, :].set(taps)
    x1 = x1.reshape(B * _RPB, 4)                                               # (B*64, 4)

    # ----------------------------- the kernel ----------------------------------
    def kernel(x1_ref, wc_ref, fc_ref, ss_ref, o_ref, pad_ref):
        # valid-region masks on the 8x8 per-board pixel grid (like a causal mask: iota+cmp)
        r = jax.lax.broadcasted_iota(jnp.int32, (R, 1), 0)
        yy = (r >> 3) & 7
        xx = r & 7
        mask5 = ((yy < 5) & (xx < 5)).astype(f32)     # 5x5 valid: layer1 / pooled outputs
        mask6 = ((yy < 6) & (xx < 6)).astype(f32)     # 6x6 valid: conv2 / conv3 outputs

        # keep the scratch shift-margins zero (shifted reads at board edges land here)
        zeros_m = jnp.zeros((_MARGIN, C), f32)
        pad_ref[0:_MARGIN, :] = zeros_m
        pad_ref[_MARGIN + R:_MARGIN + R + _MARGIN, :] = zeros_m

        # ---- layer1: Conv2d(1->32) (pre-im2col'd input, K=4) + BN shift + ReLU ----
        a = jnp.dot(x1_ref[...], wc_ref[_W1_OFF:_W1_OFF + 4, :], preferred_element_type=f32)
        a = jnp.maximum(a + wc_ref[_T1_OFF:_T1_OFF + 1, :], 0.0) * mask5

        # ---- layer2 / layer3: Conv2d(32->32) + BN shift + ReLU + MaxPool2d(2,1) ----
        for w_off, t_off in ((_W2_OFF, _T2_OFF), (_W3_OFF, _T3_OFF)):
            pad_ref[_MARGIN:_MARGIN + R, :] = a
            # conv taps = statically shifted window reads (no gather matmuls);
            # consecutive dots accumulate into one value (MRB-friendly on v7x)
            c = jnp.dot(a, wc_ref[w_off + 3 * C:w_off + 4 * C, :], preferred_element_type=f32)
            for t, d in enumerate(_CONV_OFFS[:3]):
                win = pad_ref[_MARGIN + d:_MARGIN + d + R, :]
                c = c + jnp.dot(win, wc_ref[w_off + t * C:w_off + (t + 1) * C, :],
                                preferred_element_type=f32)
            c = jnp.maximum(c + wc_ref[t_off:t_off + 1, :], 0.0) * mask6
            # maxpool(k=2, s=1) = elementwise max of shifted window reads
            pad_ref[_MARGIN:_MARGIN + R, :] = c
            p = c
            for d in _POOL_OFFS:
                p = jnp.maximum(p, pad_ref[_MARGIN + d:_MARGIN + d + R, :])
            a = p * mask5

        # ---- fc ((c,h,w) flatten folded into constants) + softmax ----
        g = jnp.dot(a, fc_ref[0:C, :], preferred_element_type=f32)             # (R, 128)
        g = g * fc_ref[FCM_OFF:FCM_OFF + R, :]
        s = jnp.dot(ss_ref[...], g, preferred_element_type=f32)                # (tb, 128)
        logits = jnp.dot(s, fc_ref[FFOLD_OFF:FFOLD_OFF + LANES, 0:A],
                         preferred_element_type=f32) + fc_ref[BFC_OFF:BFC_OFF + 1, 0:A]
        m = jnp.max(logits, axis=-1, keepdims=True)
        e = jnp.exp(logits - m)
        o_ref[...] = e / jnp.sum(e, axis=-1, keepdims=True)

    # ----------------------------- pallas_call ---------------------------------
    return pl.pallas_call(
        kernel,
        out_shape=jax.ShapeDtypeStruct((B, A), f32),
        grid_spec=pltpu.PrefetchScalarGridSpec(
            num_scalar_prefetch=0,
            grid=(B // tb,),
            in_specs=[
                pl.BlockSpec((R, 4), lambda i: (i, 0)),              # per-step board block
                pl.BlockSpec((_WCONST_ROWS, C), lambda i: (0, 0)),   # resident conv weights
                pl.BlockSpec((FCONST_ROWS, LANES), lambda i: (0, 0)),  # resident fc constants
                pl.BlockSpec((tb, R), lambda i: (0, 0)),             # resident board-sum matrix
            ],
            out_specs=pl.BlockSpec((tb, A), lambda i: (i, 0)),
            scratch_shapes=[pltpu.VMEM((R + 2 * _MARGIN, C), f32)],
        ),
        compiler_params=pltpu.CompilerParams(dimension_semantics=("parallel",)),
    )(x1, wconst, fconst, ssum)


# ----------------------------- reference (plain JAX) ---------------------------
def reference_forward(src, params):
    hp = jax.lax.Precision.HIGHEST

    def cbr(x, w, b, g, be, m, v):
        y = jax.lax.conv_general_dilated(
            x, w, window_strides=(1, 1), padding=((1, 1), (1, 1)),
            dimension_numbers=("NCHW", "OIHW", "NCHW"), precision=hp)
        y = y + b.reshape(1, -1, 1, 1)
        y = (y - m.reshape(1, -1, 1, 1)) * jax.lax.rsqrt(v.reshape(1, -1, 1, 1) + BN_EPS)
        y = y * g.reshape(1, -1, 1, 1) + be.reshape(1, -1, 1, 1)
        return jnp.maximum(y, 0.0)

    def pool(x):
        return jax.lax.reduce_window(x, -jnp.inf, jax.lax.max,
                                     (1, 1, 2, 2), (1, 1, 1, 1), "VALID")

    x = cbr(src, params["w1"], params["b1"], params["g1"], params["be1"],
            params["m1"], params["v1"])
    x = pool(cbr(x, params["w2"], params["b2"], params["g2"], params["be2"],
                 params["m2"], params["v2"]))
    x = pool(cbr(x, params["w3"], params["b3"], params["g3"], params["be3"],
                 params["m3"], params["v3"]))
    x = x.reshape(x.shape[0], -1)                       # (B, 800), (c,h,w) order
    logits = jnp.dot(x, params["wfc"].T, precision=hp) + params["bfc"]
    return jax.nn.softmax(logits, axis=-1)


# ----------------------------- param init --------------------------------------
def make_params(key):
    C, A = CH, NUM_ACTIONS
    ks = jax.random.split(key, 20)
    u = lambda k, shape, s: jax.random.uniform(k, shape, jnp.float32, -s, s)
    pos = lambda k, shape: jax.random.uniform(k, shape, jnp.float32, 0.5, 1.5)
    return {
        "w1": u(ks[0], (C, 1, 2, 2), 0.5), "b1": u(ks[1], (C,), 0.1),
        "g1": pos(ks[2], (C,)), "be1": u(ks[3], (C,), 0.1),
        "m1": u(ks[4], (C,), 0.1), "v1": pos(ks[5], (C,)),
        "w2": u(ks[6], (C, C, 2, 2), 0.15), "b2": u(ks[7], (C,), 0.1),
        "g2": pos(ks[8], (C,)), "be2": u(ks[9], (C,), 0.1),
        "m2": u(ks[10], (C,), 0.1), "v2": pos(ks[11], (C,)),
        "w3": u(ks[12], (C, C, 2, 2), 0.15), "b3": u(ks[13], (C,), 0.1),
        "g3": pos(ks[14], (C,)), "be3": u(ks[15], (C,), 0.1),
        "m3": u(ks[16], (C,), 0.1), "v3": pos(ks[17], (C,)),
        "wfc": u(ks[18], (NUM_ACTIONS, C * 5 * 5), 0.05), "bfc": u(ks[19], (NUM_ACTIONS,), 0.1),
    }


# ----------------------------- main ---------------------------------------------
if __name__ == "__main__":
    key = jax.random.PRNGKey(0)
    k_param, k_src = jax.random.split(key)
    params = make_params(k_param)
    src = jax.random.normal(k_src, (BATCH, 1, H_IN, H_IN), jnp.float32)

    out = jax.block_until_ready(jax.jit(convnet_forward)(src, params))

    assert out.shape == (BATCH, NUM_ACTIONS), out.shape
    assert bool(jnp.all(jnp.isfinite(out)))
    np.testing.assert_allclose(np.asarray(jnp.sum(out, axis=-1)), 1.0, atol=1e-5)

    ref = jax.block_until_ready(jax.jit(reference_forward)(src, params))
    np.testing.assert_allclose(np.asarray(out), np.asarray(ref), atol=1e-4, rtol=1e-4)

    print("KERNEL_OK")
</pallas_src>

<mosaic_0001>
module attributes {stable_mosaic.version = 11 : i64} {
  func.func @kernel(%arg0: i32, %arg1: memref<512x4xf32, #tpu.memory_space<vmem>>, %arg2: memref<288x32xf32, #tpu.memory_space<vmem>>, %arg3: memref<680x128xf32, #tpu.memory_space<vmem>>, %arg4: memref<8x512xf32, #tpu.memory_space<vmem>>, %arg5: memref<8x4xf32, #tpu.memory_space<vmem>>, %arg6: memref<544x32xf32, #tpu.memory_space<vmem>>) attributes {dimension_semantics = [#tpu.dimension_semantics<parallel>], iteration_bounds = array<i64: 8>, scalar_prefetch = 0 : i64, scratch_operands = 1 : i64, tpu.core_type = #tpu.core_type<tc>, window_params = [{transform_indices = @transform_0, window_bounds = array<i64: 512, 4>}, {pipeline_mode = #tpu.pipeline_mode<synchronous>, transform_indices = @transform_1, window_bounds = array<i64: 288, 32>}, {pipeline_mode = #tpu.pipeline_mode<synchronous>, transform_indices = @transform_2, window_bounds = array<i64: 680, 128>}, {pipeline_mode = #tpu.pipeline_mode<synchronous>, transform_indices = @transform_3, window_bounds = array<i64: 8, 512>}, {transform_indices = @transform_4, window_bounds = array<i64: 8, 4>}]} {
    %0 = tpu.iota {dimensions = array<i32: 0>} : vector<512x1xi32>
    %c3_i32 = arith.constant 3 : i32
    %1 = vector.broadcast %c3_i32 : i32 to vector<512x1xi32>
    %2 = arith.shrsi %0, %1 : vector<512x1xi32>
    %c7_i32 = arith.constant 7 : i32
    %3 = vector.broadcast %c7_i32 : i32 to vector<512x1xi32>
    %4 = arith.andi %2, %3 : vector<512x1xi32>
    %c7_i32_0 = arith.constant 7 : i32
    %5 = vector.broadcast %c7_i32_0 : i32 to vector<512x1xi32>
    %6 = arith.andi %0, %5 : vector<512x1xi32>
    %c5_i32 = arith.constant 5 : i32
    %7 = vector.broadcast %c5_i32 : i32 to vector<512x1xi32>
    %8 = arith.cmpi slt, %4, %7 : vector<512x1xi32>
    %c5_i32_1 = arith.constant 5 : i32
    %9 = vector.broadcast %c5_i32_1 : i32 to vector<512x1xi32>
    %10 = arith.cmpi slt, %6, %9 : vector<512x1xi32>
    %11 = arith.andi %8, %10 : vector<512x1xi1>
    %12 = arith.extui %11 : vector<512x1xi1> to vector<512x1xi32>
    %13 = arith.sitofp %12 : vector<512x1xi32> to vector<512x1xf32>
    %c6_i32 = arith.constant 6 : i32
    %14 = vector.broadcast %c6_i32 : i32 to vector<512x1xi32>
    %15 = arith.cmpi slt, %4, %14 : vector<512x1xi32>
    %c6_i32_2 = arith.constant 6 : i32
    %16 = vector.broadcast %c6_i32_2 : i32 to vector<512x1xi32>
    %17 = arith.cmpi slt, %6, %16 : vector<512x1xi32>
    %18 = arith.andi %15, %17 : vector<512x1xi1>
    %19 = arith.extui %18 : vector<512x1xi1> to vector<512x1xi32>
    %20 = arith.sitofp %19 : vector<512x1xi32> to vector<512x1xf32>
    %cst = arith.constant 0.000000e+00 : f32
    %21 = vector.broadcast %cst : f32 to vector<16x32xf32>
    %c0 = arith.constant 0 : index
    %c0_3 = arith.constant 0 : index
    %22 = vector.load %arg6[%c0, %c0_3] : memref<544x32xf32, #tpu.memory_space<vmem>>, vector<16x32xf32>
    tpu.vector_store %arg6[%c0, %c0_3], %21 {strides = array<i32>} : memref<544x32xf32, #tpu.memory_space<vmem>>, vector<16x32xf32>,
    %c528 = arith.constant 528 : index
    %c0_4 = arith.constant 0 : index
    %23 = vector.load %arg6[%c528, %c0_4] : memref<544x32xf32, #tpu.memory_space<vmem>>, vector<16x32xf32>
    tpu.vector_store %arg6[%c528, %c0_4], %21 {strides = array<i32>} : memref<544x32xf32, #tpu.memory_space<vmem>>, vector<16x32xf32>,
    %c0_5 = arith.constant 0 : index
    %c0_6 = arith.constant 0 : index
    %24 = vector.load %arg1[%c0_5, %c0_6] : memref<512x4xf32, #tpu.memory_space<vmem>>, vector<512x4xf32>
    %c0_7 = arith.constant 0 : index
    %c0_8 = arith.constant 0 : index
    %25 = vector.load %arg2[%c0_7, %c0_8] : memref<288x32xf32, #tpu.memory_space<vmem>>, vector<4x32xf32>
    %cst_9 = arith.constant dense<0.000000e+00> : vector<512x32xf32>
    %26 = tpu.matmul %24, %25, %cst_9 {dimension_numbers = #tpu.dot_dimension_numbers<[1], [0], [0], [1], [0, 0, 1, 1], [], []>} : vector<512x4xf32>, vector<4x32xf32>, vector<512x32xf32> -> vector<512x32xf32>
    %c264 = arith.constant 264 : index
    %c0_10 = arith.constant 0 : index
    %27 = vector.load %arg2[%c264, %c0_10] : memref<288x32xf32, #tpu.memory_space<vmem>>, vector<1x32xf32>
    %28 = vector.broadcast %27 : vector<1x32xf32> to vector<512x32xf32>
    %29 = arith.addf %26, %28 : vector<512x32xf32>
    %cst_11 = arith.constant 0.000000e+00 : f32
    %30 = vector.broadcast %cst_11 : f32 to vector<512x32xf32>
    %31 = arith.maximumf %29, %30 : vector<512x32xf32>
    %32 = vector.broadcast %13 : vector<512x1xf32> to vector<512x32xf32>
    %33 = arith.mulf %31, %32 : vector<512x32xf32>
    %c16 = arith.constant 16 : index
    %c0_12 = arith.constant 0 : index
    %34 = vector.load %arg6[%c16, %c0_12] : memref<544x32xf32, #tpu.memory_space<vmem>>, vector<512x32xf32>
    tpu.vector_store %arg6[%c16, %c0_12], %33 {strides = array<i32>} : memref<544x32xf32, #tpu.memory_space<vmem>>, vector<512x32xf32>,
    %c104 = arith.constant 104 : index
    %c0_13 = arith.constant 0 : index
    %35 = vector.load %arg2[%c104, %c0_13] : memref<288x32xf32, #tpu.memory_space<vmem>>, vector<32x32xf32>
    %cst_14 = arith.constant dense<0.000000e+00> : vector<512x32xf32>
    %36 = tpu.matmul %33, %35, %cst_14 {dimension_numbers = #tpu.dot_dimension_numbers<[1], [0], [0], [1], [0, 0, 1, 1], [], []>} : vector<512x32xf32>, vector<32x32xf32>, vector<512x32xf32> -> vector<512x32xf32>
    %c7 = arith.constant 7 : index
    %c0_15 = arith.constant 0 : index
    %37 = vector.load %arg6[%c7, %c0_15] : memref<544x32xf32, #tpu.memory_space<vmem>>, vector<512x32xf32>
    %c8 = arith.constant 8 : index
    %c0_16 = arith.constant 0 : index
    %38 = vector.load %arg2[%c8, %c0_16] : memref<288x32xf32, #tpu.memory_space<vmem>>, vector<32x32xf32>
    %cst_17 = arith.constant dense<0.000000e+00> : vector<512x32xf32>
    %39 = tpu.matmul %37, %38, %cst_17 {dimension_numbers = #tpu.dot_dimension_numbers<[1], [0], [0], [1], [0, 0, 1, 1], [], []>} : vector<512x32xf32>, vector<32x32xf32>, vector<512x32xf32> -> vector<512x32xf32>
    %40 = arith.addf %36, %39 : vector<512x32xf32>
    %c8_18 = arith.constant 8 : index
    %c0_19 = arith.constant 0 : index
    %41 = vector.load %arg6[%c8_18, %c0_19] : memref<544x32xf32, #tpu.memory_space<vmem>>, vector<512x32xf32>
    %c40 = arith.constant 40 : index
    %c0_20 = arith.constant 0 : index
    %42 = vector.load %arg2[%c40, %c0_20] : memref<288x32xf32, #tpu.memory_space<vmem>>, vector<32x32xf32>
    %cst_21 = arith.constant dense<0.000000e+00> : vector<512x32xf32>
    %43 = tpu.matmul %41, %42, %cst_21 {dimension_numbers = #tpu.dot_dimension_numbers<[1], [0], [0], [1], [0, 0, 1, 1], [], []>} : vector<512x32xf32>, vector<32x32xf32>, vector<512x32xf32> -> vector<512x32xf32>
    %44 = arith.addf %40, %43 : vector<512x32xf32>
    %c15 = arith.constant 15 : index
    %c0_22 = arith.constant 0 : index
    %45 = vector.load %arg6[%c15, %c0_22] : memref<544x32xf32, #tpu.memory_space<vmem>>, vector<512x32xf32>
    %c72 = arith.constant 72 : index
    %c0_23 = arith.constant 0 : index
    %46 = vector.load %arg2[%c72, %c0_23] : memref<288x32xf32, #tpu.memory_space<vmem>>, vector<32x32xf32>
    %cst_24 = arith.constant dense<0.000000e+00> : vector<512x32xf32>
    %47 = tpu.matmul %45, %46, %cst_24 {dimension_numbers = #tpu.dot_dimension_numbers<[1], [0], [0], [1], [0, 0, 1, 1], [], []>} : vector<512x32xf32>, vector<32x32xf32>, vector<512x32xf32> -> vector<512x32xf32>
    %48 = arith.addf %44, %47 : vector<512x32xf32>
    %c272 = arith.constant 272 : index
    %c0_25 = arith.constant 0 : index
    %49 = vector.load %arg2[%c272, %c0_25] : memref<288x32xf32, #tpu.memory_space<vmem>>, vector<1x32xf32>
    %50 = vector.broadcast %49 : vector<1x32xf32> to vector<512x32xf32>
    %51 = arith.addf %48, %50 : vector<512x32xf32>
    %cst_26 = arith.constant 0.000000e+00 : f32
    %52 = vector.broadcast %cst_26 : f32 to vector<512x32xf32>
    %53 = arith.maximumf %51, %52 : vector<512x32xf32>
    %54 = vector.broadcast %20 : vector<512x1xf32> to vector<512x32xf32>
    %55 = arith.mulf %53, %54 : vector<512x32xf32>
    %c16_27 = arith.constant 16 : index
    %c0_28 = arith.constant 0 : index
    %56 = vector.load %arg6[%c16_27, %c0_28] : memref<544x32xf32, #tpu.memory_space<vmem>>, vector<512x32xf32>
    tpu.vector_store %arg6[%c16_27, %c0_28], %55 {strides = array<i32>} : memref<544x32xf32, #tpu.memory_space<vmem>>, vector<512x32xf32>,
    %c17 = arith.constant 17 : index
    %c0_29 = arith.constant 0 : index
    %57 = vector.load %arg6[%c17, %c0_29] : memref<544x32xf32, #tpu.memory_space<vmem>>, vector<512x32xf32>
    %58 = arith.maximumf %55, %57 : vector<512x32xf32>
    %c24 = arith.constant 24 : index
    %c0_30 = arith.constant 0 : index
    %59 = vector.load %arg6[%c24, %c0_30] : memref<544x32xf32, #tpu.memory_space<vmem>>, vector<512x32xf32>
    %60 = arith.maximumf %58, %59 : vector<512x32xf32>
    %c25 = arith.constant 25 : index
    %c0_31 = arith.constant 0 : index
    %61 = vector.load %arg6[%c25, %c0_31] : memref<544x32xf32, #tpu.memory_space<vmem>>, vector<512x32xf32>
    %62 = arith.maximumf %60, %61 : vector<512x32xf32>
    %63 = vector.broadcast %13 : vector<512x1xf32> to vector<512x32xf32>
    %64 = arith.mulf %62, %63 : vector<512x32xf32>
    %c16_32 = arith.constant 16 : index
    %c0_33 = arith.constant 0 : index
    %65 = vector.load %arg6[%c16_32, %c0_33] : memref<544x32xf32, #tpu.memory_space<vmem>>, vector<512x32xf32>
    tpu.vector_store %arg6[%c16_32, %c0_33], %64 {strides = array<i32>} : memref<544x32xf32, #tpu.memory_space<vmem>>, vector<512x32xf32>,
    %c232 = arith.constant 232 : index
    %c0_34 = arith.constant 0 : index
    %66 = vector.load %arg2[%c232, %c0_34] : memref<288x32xf32, #tpu.memory_space<vmem>>, vector<32x32xf32>
    %cst_35 = arith.constant dense<0.000000e+00> : vector<512x32xf32>
    %67 = tpu.matmul %64, %66, %cst_35 {dimension_numbers = #tpu.dot_dimension_numbers<[1], [0], [0], [1], [0, 0, 1, 1], [], []>} : vector<512x32xf32>, vector<32x32xf32>, vector<512x32xf32> -> vector<512x32xf32>
    %c7_36 = arith.constant 7 : index
    %c0_37 = arith.constant 0 : index
    %68 = vector.load %arg6[%c7_36, %c0_37] : memref<544x32xf32, #tpu.memory_space<vmem>>, vector<512x32xf32>
    %c136 = arith.constant 136 : index
    %c0_38 = arith.constant 0 : index
    %69 = vector.load %arg2[%c136, %c0_38] : memref<288x32xf32, #tpu.memory_space<vmem>>, vector<32x32xf32>
    %cst_39 = arith.constant dense<0.000000e+00> : vector<512x32xf32>
    %70 = tpu.matmul %68, %69, %cst_39 {dimension_numbers = #tpu.dot_dimension_numbers<[1], [0], [0], [1], [0, 0, 1, 1], [], []>} : vector<512x32xf32>, vector<32x32xf32>, vector<512x32xf32> -> vector<512x32xf32>
    %71 = arith.addf %67, %70 : vector<512x32xf32>
    %c8_40 = arith.constant 8 : index
    %c0_41 = arith.constant 0 : index
    %72 = vector.load %arg6[%c8_40, %c0_41] : memref<544x32xf32, #tpu.memory_space<vmem>>, vector<512x32xf32>
    %c168 = arith.constant 168 : index
    %c0_42 = arith.constant 0 : index
    %73 = vector.load %arg2[%c168, %c0_42] : memref<288x32xf32, #tpu.memory_space<vmem>>, vector<32x32xf32>
    %cst_43 = arith.constant dense<0.000000e+00> : vector<512x32xf32>
    %74 = tpu.matmul %72, %73, %cst_43 {dimension_numbers = #tpu.dot_dimension_numbers<[1], [0], [0], [1], [0, 0, 1, 1], [], []>} : vector<512x32xf32>, vector<32x32xf32>, vector<512x32xf32> -> vector<512x32xf32>
    %75 = arith.addf %71, %74 : vector<512x32xf32>
    %c15_44 = arith.constant 15 : index
    %c0_45 = arith.constant 0 : index
    %76 = vector.load %arg6[%c15_44, %c0_45] : memref<544x32xf32, #tpu.memory_space<vmem>>, vector<512x32xf32>
    %c200 = arith.constant 200 : index
    %c0_46 = arith.constant 0 : index
    %77 = vector.load %arg2[%c200, %c0_46] : memref<288x32xf32, #tpu.memory_space<vmem>>, vector<32x32xf32>
    %cst_47 = arith.constant dense<0.000000e+00> : vector<512x32xf32>
    %78 = tpu.matmul %76, %77, %cst_47 {dimension_numbers = #tpu.dot_dimension_numbers<[1], [0], [0], [1], [0, 0, 1, 1], [], []>} : vector<512x32xf32>, vector<32x32xf32>, vector<512x32xf32> -> vector<512x32xf32>
    %79 = arith.addf %75, %78 : vector<512x32xf32>
    %c280 = arith.constant 280 : index
    %c0_48 = arith.constant 0 : index
    %80 = vector.load %arg2[%c280, %c0_48] : memref<288x32xf32, #tpu.memory_space<vmem>>, vector<1x32xf32>
    %81 = vector.broadcast %80 : vector<1x32xf32> to vector<512x32xf32>
    %82 = arith.addf %79, %81 : vector<512x32xf32>
    %cst_49 = arith.constant 0.000000e+00 : f32
    %83 = vector.broadcast %cst_49 : f32 to vector<512x32xf32>
    %84 = arith.maximumf %82, %83 : vector<512x32xf32>
    %85 = vector.broadcast %20 : vector<512x1xf32> to vector<512x32xf32>
    %86 = arith.mulf %84, %85 : vector<512x32xf32>
    %c16_50 = arith.constant 16 : index
    %c0_51 = arith.constant 0 : index
    %87 = vector.load %arg6[%c16_50, %c0_51] : memref<544x32xf32, #tpu.memory_space<vmem>>, vector<512x32xf32>
    tpu.vector_store %arg6[%c16_50, %c0_51], %86 {strides = array<i32>} : memref<544x32xf32, #tpu.memory_space<vmem>>, vector<512x32xf32>,
    %c17_52 = arith.constant 17 : index
    %c0_53 = arith.constant 0 : index
    %88 = vector.load %arg6[%c17_52, %c0_53] : memref<544x32xf32, #tpu.memory_space<vmem>>, vector<512x32xf32>
    %89 = arith.maximumf %86, %88 : vector<512x32xf32>
    %c24_54 = arith.constant 24 : index
    %c0_55 = arith.constant 0 : index
    %90 = vector.load %arg6[%c24_54, %c0_55] : memref<544x32xf32, #tpu.memory_space<vmem>>, vector<512x32xf32>
    %91 = arith.maximumf %89, %90 : vector<512x32xf32>
    %c25_56 = arith.constant 25 : index
    %c0_57 = arith.constant 0 : index
    %92 = vector.load %arg6[%c25_56, %c0_57] : memref<544x32xf32, #tpu.memory_space<vmem>>, vector<512x32xf32>
    %93 = arith.maximumf %91, %92 : vector<512x32xf32>
    %94 = vector.broadcast %13 : vector<512x1xf32> to vector<512x32xf32>
    %95 = arith.mulf %93, %94 : vector<512x32xf32>
    %c0_58 = arith.constant 0 : index
    %c0_59 = arith.constant 0 : index
    %96 = vector.load %arg3[%c0_58, %c0_59] : memref<680x128xf32, #tpu.memory_space<vmem>>, vector<32x128xf32>
    %cst_60 = arith.constant dense<0.000000e+00> : vector<512x128xf32>
    %97 = tpu.matmul %95, %96, %cst_60 {dimension_numbers = #tpu.dot_dimension_numbers<[1], [0], [0], [1], [0, 0, 1, 1], [], []>} : vector<512x32xf32>, vector<32x128xf32>, vector<512x128xf32> -> vector<512x128xf32>
    %c32 = arith.constant 32 : index
    %c0_61 = arith.constant 0 : index
    %98 = vector.load %arg3[%c32, %c0_61] : memref<680x128xf32, #tpu.memory_space<vmem>>, vector<512x128xf32>
    %99 = arith.mulf %97, %98 : vector<512x128xf32>
    %c0_62 = arith.constant 0 : index
    %c0_63 = arith.constant 0 : index
    %100 = vector.load %arg4[%c0_62, %c0_63] : memref<8x512xf32, #tpu.memory_space<vmem>>, vector<8x512xf32>
    %cst_64 = arith.constant dense<0.000000e+00> : vector<8x128xf32>
    %101 = tpu.matmul %100, %99, %cst_64 {dimension_numbers = #tpu.dot_dimension_numbers<[1], [0], [0], [1], [0, 0, 1, 1], [], []>} : vector<8x512xf32>, vector<512x128xf32>, vector<8x128xf32> -> vector<8x128xf32>
    %c544 = arith.constant 544 : index
    %c0_65 = arith.constant 0 : index
    %102 = vector.load %arg3[%c544, %c0_65] : memref<680x128xf32, #tpu.memory_space<vmem>>, vector<128x4xf32>
    %cst_66 = arith.constant dense<0.000000e+00> : vector<8x4xf32>
    %103 = tpu.matmul %101, %102, %cst_66 {dimension_numbers = #tpu.dot_dimension_numbers<[1], [0], [0], [1], [0, 0, 1, 1], [], []>} : vector<8x128xf32>, vector<128x4xf32>, vector<8x4xf32> -> vector<8x4xf32>
    %c672 = arith.constant 672 : index
    %c0_67 = arith.constant 0 : index
    %104 = vector.load %arg3[%c672, %c0_67] : memref<680x128xf32, #tpu.memory_space<vmem>>, vector<1x4xf32>
    %105 = vector.broadcast %104 : vector<1x4xf32> to vector<8x4xf32>
    %106 = arith.addf %103, %105 : vector<8x4xf32>
    %cst_68 = arith.constant dense<0xFF800000> : vector<8xf32>
    %107 = vector.multi_reduction <maximumf>, %106, %cst_68 [1] : vector<8x4xf32> to vector<8xf32>
    %108 = vector.shape_cast %107 : vector<8xf32> to vector<8x1xf32>
    %109 = vector.broadcast %108 : vector<8x1xf32> to vector<8x4xf32>
    %110 = arith.subf %106, %109 : vector<8x4xf32>
    %111 = math.exp %110 : vector<8x4xf32>
    %cst_69 = arith.constant dense<0.000000e+00> : vector<8xf32>
    %112 = vector.multi_reduction <add>, %111, %cst_69 [1] : vector<8x4xf32> to vector<8xf32>
    %113 = vector.shape_cast %112 : vector<8xf32> to vector<8x1xf32>
    %114 = vector.broadcast %113 : vector<8x1xf32> to vector<8x4xf32>
    %115 = arith.divf %111, %114 : vector<8x4xf32>
    %c0_70 = arith.constant 0 : index
    %c0_71 = arith.constant 0 : index
    %116 = vector.load %arg5[%c0_70, %c0_71] : memref<8x4xf32, #tpu.memory_space<vmem>>, vector<8x4xf32>
    tpu.vector_store %arg5[%c0_70, %c0_71], %115 {strides = array<i32>} : memref<8x4xf32, #tpu.memory_space<vmem>>, vector<8x4xf32>,
    return
  }
  func.func @transform_0(%arg0: i32) -> (i32, i32) {
    %c0_i32 = arith.constant 0 : i32
    %c0_i32_0 = arith.constant 0 : i32
    return %arg0, %c0_i32 : i32, i32
  }
  func.func @transform_1(%arg0: i32) -> (i32, i32) {
    %c0_i32 = arith.constant 0 : i32
    %c0_i32_0 = arith.constant 0 : i32
    %c0_i32_1 = arith.constant 0 : i32
    return %c0_i32, %c0_i32_0 : i32, i32
  }
  func.func @transform_2(%arg0: i32) -> (i32, i32) {
    %c0_i32 = arith.constant 0 : i32
    %c0_i32_0 = arith.constant 0 : i32
    %c0_i32_1 = arith.constant 0 : i32
    return %c0_i32, %c0_i32_0 : i32, i32
  }
  func.func @transform_3(%arg0: i32) -> (i32, i32) {
    %c0_i32 = arith.constant 0 : i32
    %c0_i32_0 = arith.constant 0 : i32
    %c0_i32_1 = arith.constant 0 : i32
    return %c0_i32, %c0_i32_0 : i32, i32
  }
  func.func @transform_4(%arg0: i32) -> (i32, i32) {
    %c0_i32 = arith.constant 0 : i32
    %c0_i32_0 = arith.constant 0 : i32
    return %arg0, %c0_i32 : i32, i32
  }
}

</mosaic_0001>

<llo_original>
// kernel: convnet_forward.1
$region0: #{convnet_forward.1}
  #allocation0 [shape = 'u32[]', space=smem, size = 0x4, offset = 0x4, fixed_abs, tag = 'smem constant byte address 0x4 - core index']
  #allocation1 [shape = 'u32[144,128]{1,0:T(1,128)}', space=vmem, size = 0x12000, scoped, tag = 'internal scratch']
  #allocation2 [shape = 'f32[544,32]{1,0:T(8,128)}', space=vmem, size = 0x44000, scoped, tag = 'scratch operand']
  %s0 = inlined_call_operand.vmem [shape: f32[4096,4], index: 0, kind: input, shape index: {}]
  %s1 = inlined_call_operand.vmem [shape: f32[288,32], index: 1, kind: input, shape index: {}]
  %s2 = inlined_call_operand.vmem [shape: f32[680,128], index: 2, kind: input, shape index: {}]
  %s3 = inlined_call_operand.vmem [shape: f32[8,512], index: 3, kind: input, shape index: {}]
  %s4 = inlined_call_operand.vmem [shape: f32[64,4], index: 4, kind: output, shape index: {}]
  %s5 = sld [smem:[#allocation0]]
  $region49: #{convnet_forward.1} parent=0
    _
  %s7 = ssub.s32 1, %s5
  %s8 = scalar_select 0, %s7, %s5
  loop: start=0, step=1, limit=10
  $region2: #{convnet_forward.1} parent=0 // loop_pre_header
    _
  $region3: #{convnet_forward.1} parent=0 // loop_header
    %s10 = sphi 0, %s14
    %p11 = scmp.ge.s32.totalorder %s10, 10
    %s20 = sphi 0, %s22
    %s23 = sphi 0, %s20
    %s24 = sphi 0, %s23
    %s40 = sphi 0, %s24
    %s44 = sphi 0, %s44
    %s46 = sphi 0, %s44
    %s47 = sphi 0, %s46
    %s61 = sphi 0, %s47
    %s65 = sphi 0, %s65
    %s67 = sphi 0, %s65
    %s68 = sphi 0, %s67
    %s82 = sphi 0, %s68
    %s86 = sphi 0, %s86
    %s88 = sphi 0, %s86
    %s89 = sphi 0, %s88
    %s103 = sphi 0, %s89
    %s109 = sphi 0, %s111
    %s112 = sphi 0, %s109
    %s113 = sphi 0, %s112
    %s129 = sphi 0, %s113
  $region4: #{convnet_forward.1} parent=0 // loop_header_branch
    %13 = sbr.rel (%p11) target = $region8
  $region5: #{convnet_forward.1} parent=0 // loop_body
    %s15 = ssub.s32 %s10, 1
    %s16 = ssub.s32 %s10, 2
    %s17 = sadd.s32 %s10, 1
    %s18 = ssub.s32 %s10, %s17
    %p19 = scmp.eq.s32.totalorder %s18, 0
    %s21 = sadd.s32 %s20, 1
    %s22 = scalar_select %p19, %s20, %s21
    %p25 = pneg %p19
    %p26 = scmp.eq.s32.totalorder %s10, 7
    %p27 = por %p25, %p26
    %p28 = scmp.ne.s32.totalorder %s20, %s23
    %p29 = scmp.eq.s32.totalorder %s10, 0
    %p30 = por %p28, %p29
    %p31 = scmp.ne.s32.totalorder %s20, %s23
    %p32 = scmp.eq.s32.totalorder %s15, 7
    %p33 = por %p31, %p32
    %p34 = scmp.ne.s32.totalorder %s23, %s24
    %p35 = scmp.eq.s32.totalorder %s15, 0
    %p36 = por %p34, %p35
    %p37 = scmp.ne.s32.totalorder %s23, %s24
    %p38 = scmp.eq.s32.totalorder %s16, 7
    %p39 = por %p37, %p38
    %p41 = scmp.ne.s32.totalorder %s24, %s40
    %p42 = scmp.eq.s32.totalorder %s16, 0
    %p43 = por %p41, %p42
    %s45 = sadd.s32 %s44, 1
    %p48 = scmp.eq.s32.totalorder %s10, 7
    %p49 = scmp.ne.s32.totalorder %s44, %s46
    %p50 = scmp.eq.s32.totalorder %s10, 0
    %p51 = por %p49, %p50
    %p52 = scmp.ne.s32.totalorder %s44, %s46
    %p53 = scmp.eq.s32.totalorder %s15, 7
    %p54 = por %p52, %p53
    %p55 = scmp.ne.s32.totalorder %s46, %s47
    %p56 = scmp.eq.s32.totalorder %s15, 0
    %p57 = por %p55, %p56
    %p58 = scmp.ne.s32.totalorder %s46, %s47
    %p59 = scmp.eq.s32.totalorder %s16, 7
    %p60 = por %p58, %p59
    %p62 = scmp.ne.s32.totalorder %s47, %s61
    %p63 = scmp.eq.s32.totalorder %s16, 0
    %p64 = por %p62, %p63
    %s66 = sadd.s32 %s65, 1
    %p69 = scmp.eq.s32.totalorder %s10, 7
    %p70 = scmp.ne.s32.totalorder %s65, %s67
    %p71 = scmp.eq.s32.totalorder %s10, 0
    %p72 = por %p70, %p71
    %p73 = scmp.ne.s32.totalorder %s65, %s67
    %p74 = scmp.eq.s32.totalorder %s15, 7
    %p75 = por %p73, %p74
    %p76 = scmp.ne.s32.totalorder %s67, %s68
    %p77 = scmp.eq.s32.totalorder %s15, 0
    %p78 = por %p76, %p77
    %p79 = scmp.ne.s32.totalorder %s67, %s68
    %p80 = scmp.eq.s32.totalorder %s16, 7
    %p81 = por %p79, %p80
    %p83 = scmp.ne.s32.totalorder %s68, %s82
    %p84 = scmp.eq.s32.totalorder %s16, 0
    %p85 = por %p83, %p84
    %s87 = sadd.s32 %s86, 1
    %p90 = scmp.eq.s32.totalorder %s10, 7
    %p91 = scmp.ne.s32.totalorder %s86, %s88
    %p92 = scmp.eq.s32.totalorder %s10, 0
    %p93 = por %p91, %p92
    %p94 = scmp.ne.s32.totalorder %s86, %s88
    %p95 = scmp.eq.s32.totalorder %s15, 7
    %p96 = por %p94, %p95
    %p97 = scmp.ne.s32.totalorder %s88, %s89
    %p98 = scmp.eq.s32.totalorder %s15, 0
    %p99 = por %p97, %p98
    %p100 = scmp.ne.s32.totalorder %s88, %s89
    %p101 = scmp.eq.s32.totalorder %s16, 7
    %p102 = por %p100, %p101
    %p104 = scmp.ne.s32.totalorder %s89, %s103
    %p105 = scmp.eq.s32.totalorder %s16, 0
    %p106 = por %p104, %p105
    %s107 = ssub.s32 %s10, %s17
    %p108 = scmp.eq.s32.totalorder %s107, 0
    %s110 = sadd.s32 %s109, 1
    %s111 = scalar_select %p108, %s109, %s110
    %p114 = pneg %p108
    %p115 = scmp.eq.s32.totalorder %s10, 7
    %p116 = por %p114, %p115
    %p117 = scmp.ne.s32.totalorder %s109, %s112
    %p118 = scmp.eq.s32.totalorder %s10, 0
    %p119 = por %p117, %p118
    %p120 = scmp.ne.s32.totalorder %s109, %s112
    %p121 = scmp.eq.s32.totalorder %s15, 7
    %p122 = por %p120, %p121
    %p123 = scmp.ne.s32.totalorder %s112, %s113
    %p124 = scmp.eq.s32.totalorder %s15, 0
    %p125 = por %p123, %p124
    %p126 = scmp.ne.s32.totalorder %s112, %s113
    %p127 = scmp.eq.s32.totalorder %s16, 7
    %p128 = por %p126, %p127
    %p130 = scmp.ne.s32.totalorder %s113, %s129
    %p131 = scmp.eq.s32.totalorder %s16, 0
    %p132 = por %p130, %p131
    %p133 = scmp.le.s32.totalorder 1, %s10
    %p134 = scmp.lt.s32.totalorder %s10, 9
    %p135 = pnand %p133, %p134
    %p136 = pneg %p135
    // Predicated region
    $region9: #{convnet_forward.1} parent=5 // pred_check
      _
    $region10: #{convnet_forward.1} parent=5 // pred_check_branch
      %138 = sbr.rel (%p135) target = $region12
    $region11: #{convnet_forward.1} parent=5 // pred_region
      %s139 = ssub.s32 %s10, 1
      // Predicated region
      $region13: #{convnet_forward.1} parent=11 // pred_check
        %p140 = pneg %p57
      $region14: #{convnet_forward.1} parent=11 // pred_check_branch
        %142 = sbr.rel (%p140) target = $region16
      $region15: #{convnet_forward.1} parent=11 // pred_region
        _
      $region16: #{convnet_forward.1} parent=11 // pred_fallthru
        _
      // Predicated region
      $region17: #{convnet_forward.1} parent=11 // pred_check
        %p143 = pneg %p78
      $region18: #{convnet_forward.1} parent=11 // pred_check_branch
        %145 = sbr.rel (%p143) target = $region20
      $region19: #{convnet_forward.1} parent=11 // pred_region
        _
      $region20: #{convnet_forward.1} parent=11 // pred_fallthru
        _
      // Predicated region
      $region21: #{convnet_forward.1} parent=11 // pred_check
        %p146 = pneg %p99
      $region22: #{convnet_forward.1} parent=11 // pred_check_branch
        %148 = sbr.rel (%p146) target = $region24
      $region23: #{convnet_forward.1} parent=11 // pred_region
        _
      $region24: #{convnet_forward.1} parent=11 // pred_fallthru
        _
    $region12: #{convnet_forward.1} parent=5 // pred_fallthru
      _
    %p149 = scmp.lt.s32.totalorder %s10, 8
    // Predicated region
    $region25: #{convnet_forward.1} parent=5 // pred_check
      %p150 = pneg %p149
    $region26: #{convnet_forward.1} parent=5 // pred_check_branch
      %152 = sbr.rel (%p150) target = $region28
    $region27: #{convnet_forward.1} parent=5 // pred_region
      // Predicated region
      $region29: #{convnet_forward.1} parent=27 // pred_check
        %p153 = pneg %p30
      $region30: #{convnet_forward.1} parent=27 // pred_check_branch
        %155 = sbr.rel (%p153) target = $region32
      $region31: #{convnet_forward.1} parent=27 // pred_region
        %s156 = smul.u32 64, %s10
        %p157 = scmp.lt.s32.totalorder %s156, 511
        %s158 = scalar_select %p157, %s156, 511
        %s159 = smul.addr %s158, 8
        %s160 = scalar_lea.vmem %s0, %s159
        %s161 = smul.u32 64, %s10
      $region32: #{convnet_forward.1} parent=27 // pred_fallthru
        _
    $region28: #{convnet_forward.1} parent=5 // pred_fallthru
      _
    %p162 = scmp.le.s32.totalorder 1, %s10
    %p163 = scmp.lt.s32.totalorder %s10, 9
    %p164 = pnand %p162, %p163
    %p165 = pneg %p164
    // Predicated region
    $region33: #{convnet_forward.1} parent=5 // pred_check
      _
    $region34: #{convnet_forward.1} parent=5 // pred_check_branch
      %167 = sbr.rel (%p164) target = $region36
    $region35: #{convnet_forward.1} parent=5 // pred_region
      %s168 = ssub.s32 %s10, 1
      %s169 = smul.u32 64, %s15
      %p170 = scmp.lt.s32.totalorder %s169, 511
      %s171 = scalar_select %p170, %s169, 511
      %s172 = smul.addr %s171, 8
      %s173 = scalar_lea.vmem %s0, %s172
      %p174 = pneg %p36
      %p175 = pneg %p33
      %p176 = pneg %p57
      %p177 = pneg %p54
      %p178 = pneg %p78
      %p179 = pneg %p75
      %p180 = pneg %p99
      %p181 = pneg %p96
      %p182 = pneg %p125
      %p183 = pneg %p122
      %p184 = scmp.lt.s32.totalorder %s15, 7
      %s185 = scalar_select %p184, %s15, 7
      %s186 = smul.addr %s185, 8
      %s187 = scalar_lea.vmem %s4, %s186
      %s188 = smul.u32 64, %s15
      %p189 = scmp.lt.s32.totalorder %s188, 511
      %s190 = scalar_select %p189, %s188, 511
      %s191 = smul.addr %s190, 8
      %s192 = scalar_lea.vmem %s0, %s191
      %s193 = smul.u32 64, %s15
      %p194 = scmp.lt.s32.totalorder %s15, 7
      %s195 = scalar_select %p194, %s15, 7
      %s196 = smul.addr %s195, 8
      %s197 = scalar_lea.vmem %s4, %s196
      %v198 = vlaneseq
      %v199 = vshrl.u32 %v198, 7
      %v200 = vadd.s32 %v199, 8
      %v201 = vadd.s32 %v199, 16
      %v202 = vadd.s32 %v199, 24
      %v203 = vadd.s32 %v199, 32
      %v204 = vadd.s32 %v199, 40
      %v205 = vadd.s32 %v199, 48
      %v206 = vadd.s32 %v199, 56
      %v207 = vadd.s32 %v199, 64
      %v208 = vadd.s32 %v199, 72
      %v209 = vadd.s32 %v199, 80
      %v210 = vadd.s32 %v199, 88
      %v211 = vadd.s32 %v199, 96
      %v212 = vadd.s32 %v199, 104
      %v213 = vadd.s32 %v199, 112
      %v214 = vadd.s32 %v199, 120
      %v215 = vadd.s32 %v199, 128
      %v216 = vadd.s32 %v199, 136
      %v217 = vadd.s32 %v199, 144
      %v218 = vadd.s32 %v199, 152
      %v219 = vadd.s32 %v199, 160
      %v220 = vadd.s32 %v199, 168
      %v221 = vadd.s32 %v199, 176
      %v222 = vadd.s32 %v199, 184
      %v223 = vadd.s32 %v199, 192
      %v224 = vadd.s32 %v199, 200
      %v225 = vadd.s32 %v199, 208
      %v226 = vadd.s32 %v199, 216
      %v227 = vadd.s32 %v199, 224
      %v228 = vadd.s32 %v199, 232
      %v229 = vadd.s32 %v199, 240
      %v230 = vadd.s32 %v199, 248
      %v231 = vadd.s32 %v199, 256
      %v232 = vadd.s32 %v199, 264
      %v233 = vadd.s32 %v199, 272
      %v234 = vadd.s32 %v199, 280
      %v235 = vadd.s32 %v199, 288
      %v236 = vadd.s32 %v199, 296
      %v237 = vadd.s32 %v199, 304
      %v238 = vadd.s32 %v199, 312
      %v239 = vadd.s32 %v199, 320
      %v240 = vadd.s32 %v199, 328
      %v241 = vadd.s32 %v199, 336
      %v242 = vadd.s32 %v199, 344
      %v243 = vadd.s32 %v199, 352
      %v244 = vadd.s32 %v199, 360
      %v245 = vadd.s32 %v199, 368
      %v246 = vadd.s32 %v199, 376
      %v247 = vadd.s32 %v199, 384
      %v248 = vadd.s32 %v199, 392
      %v249 = vadd.s32 %v199, 400
      %v250 = vadd.s32 %v199, 408
      %v251 = vadd.s32 %v199, 416
      %v252 = vadd.s32 %v199, 424
      %v253 = vadd.s32 %v199, 432
      %v254 = vadd.s32 %v199, 440
      %v255 = vadd.s32 %v199, 448
      %v256 = vadd.s32 %v199, 456
      %v257 = vadd.s32 %v199, 464
      %v258 = vadd.s32 %v199, 472
      %v259 = vadd.s32 %v199, 480
      %v260 = vadd.s32 %v199, 488
      %v261 = vadd.s32 %v199, 496
      %v262 = vadd.s32 %v199, 504
      %v263 = vshra.s32 %v199, 3
      %v264 = vshra.s32 %v200, 3
      %v265 = vshra.s32 %v201, 3
      %v266 = vshra.s32 %v202, 3
      %v267 = vshra.s32 %v203, 3
      %v268 = vshra.s32 %v204, 3
      %v269 = vshra.s32 %v205, 3
      %v270 = vshra.s32 %v206, 3
      %v271 = vshra.s32 %v207, 3
      %v272 = vshra.s32 %v208, 3
      %v273 = vshra.s32 %v209, 3
      %v274 = vshra.s32 %v210, 3
      %v275 = vshra.s32 %v211, 3
      %v276 = vshra.s32 %v212, 3
      %v277 = vshra.s32 %v213, 3
      %v278 = vshra.s32 %v214, 3
      %v279 = vshra.s32 %v215, 3
      %v280 = vshra.s32 %v216, 3
      %v281 = vshra.s32 %v217, 3
      %v282 = vshra.s32 %v218, 3
      %v283 = vshra.s32 %v219, 3
      %v284 = vshra.s32 %v220, 3
      %v285 = vshra.s32 %v221, 3
      %v286 = vshra.s32 %v222, 3
      %v287 = vshra.s32 %v223, 3
      %v288 = vshra.s32 %v224, 3
      %v289 = vshra.s32 %v225, 3
      %v290 = vshra.s32 %v226, 3
      %v291 = vshra.s32 %v227, 3
      %v292 = vshra.s32 %v228, 3
      %v293 = vshra.s32 %v229, 3
      %v294 = vshra.s32 %v230, 3
      %v295 = vshra.s32 %v231, 3
      %v296 = vshra.s32 %v232, 3
      %v297 = vshra.s32 %v233, 3
      %v298 = vshra.s32 %v234, 3
      %v299 = vshra.s32 %v235, 3
      %v300 = vshra.s32 %v236, 3
      %v301 = vshra.s32 %v237, 3
      %v302 = vshra.s32 %v238, 3
      %v303 = vshra.s32 %v239, 3
      %v304 = vshra.s32 %v240, 3
      %v305 = vshra.s32 %v241, 3
      %v306 = vshra.s32 %v242, 3
      %v307 = vshra.s32 %v243, 3
      %v308 = vshra.s32 %v244, 3
      %v309 = vshra.s32 %v245, 3
      %v310 = vshra.s32 %v246, 3
      %v311 = vshra.s32 %v247, 3
      %v312 = vshra.s32 %v248, 3
      %v313 = vshra.s32 %v249, 3
      %v314 = vshra.s32 %v250, 3
      %v315 = vshra.s32 %v251, 3
      %v316 = vshra.s32 %v252, 3
      %v317 = vshra.s32 %v253, 3
      %v318 = vshra.s32 %v254, 3
      %v319 = vshra.s32 %v255, 3
      %v320 = vshra.s32 %v256, 3
      %v321 = vshra.s32 %v257, 3
      %v322 = vshra.s32 %v258, 3
      %v323 = vshra.s32 %v259, 3
      %v324 = vshra.s32 %v260, 3
      %v325 = vshra.s32 %v261, 3
      %v326 = vshra.s32 %v262, 3
      %v327 = vand.u32 %v263, 7
      %v328 = vand.u32 %v264, 7
      %v329 = vand.u32 %v265, 7
      %v330 = vand.u32 %v266, 7
      %v331 = vand.u32 %v267, 7
      %v332 = vand.u32 %v268, 7
      %v333 = vand.u32 %v269, 7
      %v334 = vand.u32 %v270, 7
      %v335 = vand.u32 %v271, 7
      %v336 = vand.u32 %v272, 7
      %v337 = vand.u32 %v273, 7
      %v338 = vand.u32 %v274, 7
      %v339 = vand.u32 %v275, 7
      %v340 = vand.u32 %v276, 7
      %v341 = vand.u32 %v277, 7
      %v342 = vand.u32 %v278, 7
      %v343 = vand.u32 %v279, 7
      %v344 = vand.u32 %v280, 7
      %v345 = vand.u32 %v281, 7
      %v346 = vand.u32 %v282, 7
      %v347 = vand.u32 %v283, 7
      %v348 = vand.u32 %v284, 7
      %v349 = vand.u32 %v285, 7
      %v350 = vand.u32 %v286, 7
      %v351 = vand.u32 %v287, 7
      %v352 = vand.u32 %v288, 7
      %v353 = vand.u32 %v289, 7
      %v354 = vand.u32 %v290, 7
      %v355 = vand.u32 %v291, 7
      %v356 = vand.u32 %v292, 7
      %v357 = vand.u32 %v293, 7
      %v358 = vand.u32 %v294, 7
      %v359 = vand.u32 %v295, 7
      %v360 = vand.u32 %v296, 7
      %v361 = vand.u32 %v297, 7
      %v362 = vand.u32 %v298, 7
      %v363 = vand.u32 %v299, 7
      %v364 = vand.u32 %v300, 7
      %v365 = vand.u32 %v301, 7
      %v366 = vand.u32 %v302, 7
      %v367 = vand.u32 %v303, 7
      %v368 = vand.u32 %v304, 7
      %v369 = vand.u32 %v305, 7
      %v370 = vand.u32 %v306, 7
      %v371 = vand.u32 %v307, 7
      %v372 = vand.u32 %v308, 7
      %v373 = vand.u32 %v309, 7
      %v374 = vand.u32 %v310, 7
      %v375 = vand.u32 %v311, 7
      %v376 = vand.u32 %v312, 7
      %v377 = vand.u32 %v313, 7
      %v378 = vand.u32 %v314, 7
      %v379 = vand.u32 %v315, 7
      %v380 = vand.u32 %v316, 7
      %v381 = vand.u32 %v317, 7
      %v382 = vand.u32 %v318, 7
      %v383 = vand.u32 %v319, 7
      %v384 = vand.u32 %v320, 7
      %v385 = vand.u32 %v321, 7
      %v386 = vand.u32 %v322, 7
      %v387 = vand.u32 %v323, 7
      %v388 = vand.u32 %v324, 7
      %v389 = vand.u32 %v325, 7
      %v390 = vand.u32 %v326, 7
      %v391 = vand.u32 %v199, 7
      %v392 = vand.u32 %v200, 7
      %v393 = vand.u32 %v201, 7
      %v394 = vand.u32 %v202, 7
      %v395 = vand.u32 %v203, 7
      %v396 = vand.u32 %v204, 7
      %v397 = vand.u32 %v205, 7
      %v398 = vand.u32 %v206, 7
      %v399 = vand.u32 %v207, 7
      %v400 = vand.u32 %v208, 7
      %v401 = vand.u32 %v209, 7
      %v402 = vand.u32 %v210, 7
      %v403 = vand.u32 %v211, 7
      %v404 = vand.u32 %v212, 7
      %v405 = vand.u32 %v213, 7
      %v406 = vand.u32 %v214, 7
      %v407 = vand.u32 %v215, 7
      %v408 = vand.u32 %v216, 7
      %v409 = vand.u32 %v217, 7
      %v410 = vand.u32 %v218, 7
      %v411 = vand.u32 %v219, 7
      %v412 = vand.u32 %v220, 7
      %v413 = vand.u32 %v221, 7
      %v414 = vand.u32 %v222, 7
      %v415 = vand.u32 %v223, 7
      %v416 = vand.u32 %v224, 7
      %v417 = vand.u32 %v225, 7
      %v418 = vand.u32 %v226, 7
      %v419 = vand.u32 %v227, 7
      %v420 = vand.u32 %v228, 7
      %v421 = vand.u32 %v229, 7
      %v422 = vand.u32 %v230, 7
      %v423 = vand.u32 %v231, 7
      %v424 = vand.u32 %v232, 7
      %v425 = vand.u32 %v233, 7
      %v426 = vand.u32 %v234, 7
      %v427 = vand.u32 %v235, 7
      %v428 = vand.u32 %v236, 7
      %v429 = vand.u32 %v237, 7
      %v430 = vand.u32 %v238, 7
      %v431 = vand.u32 %v239, 7
      %v432 = vand.u32 %v240, 7
      %v433 = vand.u32 %v241, 7
      %v434 = vand.u32 %v242, 7
      %v435 = vand.u32 %v243, 7
      %v436 = vand.u32 %v244, 7
      %v437 = vand.u32 %v245, 7
      %v438 = vand.u32 %v246, 7
      %v439 = vand.u32 %v247, 7
      %v440 = vand.u32 %v248, 7
      %v441 = vand.u32 %v249, 7
      %v442 = vand.u32 %v250, 7
      %v443 = vand.u32 %v251, 7
      %v444 = vand.u32 %v252, 7
      %v445 = vand.u32 %v253, 7
      %v446 = vand.u32 %v254, 7
      %v447 = vand.u32 %v255, 7
      %v448 = vand.u32 %v256, 7
      %v449 = vand.u32 %v257, 7
      %v450 = vand.u32 %v258, 7
      %v451 = vand.u32 %v259, 7
      %v452 = vand.u32 %v260, 7
      %v453 = vand.u32 %v261, 7
      %v454 = vand.u32 %v262, 7
      %vm455 = vcmp.lt.s32.totalorder %v327, 5
      %vm456 = vcmp.lt.s32.totalorder %v328, 5
      %vm457 = vcmp.lt.s32.totalorder %v329, 5
      %vm458 = vcmp.lt.s32.totalorder %v330, 5
      %vm459 = vcmp.lt.s32.totalorder %v331, 5
      %vm460 = vcmp.lt.s32.totalorder %v332, 5
      %vm461 = vcmp.lt.s32.totalorder %v333, 5
      %vm462 = vcmp.lt.s32.totalorder %v334, 5
      %vm463 = vcmp.lt.s32.totalorder %v335, 5
      %vm464 = vcmp.lt.s32.totalorder %v336, 5
      %vm465 = vcmp.lt.s32.totalorder %v337, 5
      %vm466 = vcmp.lt.s32.totalorder %v338, 5
      %vm467 = vcmp.lt.s32.totalorder %v339, 5
      %vm468 = vcmp.lt.s32.totalorder %v340, 5
      %vm469 = vcmp.lt.s32.totalorder %v341, 5
      %vm470 = vcmp.lt.s32.totalorder %v342, 5
      %vm471 = vcmp.lt.s32.totalorder %v343, 5
      %vm472 = vcmp.lt.s32.totalorder %v344, 5
      %vm473 = vcmp.lt.s32.totalorder %v345, 5
      %vm474 = vcmp.lt.s32.totalorder %v346, 5
      %vm475 = vcmp.lt.s32.totalorder %v347, 5
      %vm476 = vcmp.lt.s32.totalorder %v348, 5
      %vm477 = vcmp.lt.s32.totalorder %v349, 5
      %vm478 = vcmp.lt.s32.totalorder %v350, 5
      %vm479 = vcmp.lt.s32.totalorder %v351, 5
      %vm480 = vcmp.lt.s32.totalorder %v352, 5
      %vm481 = vcmp.lt.s32.totalorder %v353, 5
      %vm482 = vcmp.lt.s32.totalorder %v354, 5
      %vm483 = vcmp.lt.s32.totalorder %v355, 5
      %vm484 = vcmp.lt.s32.totalorder %v356, 5
      %vm485 = vcmp.lt.s32.totalorder %v357, 5
      %vm486 = vcmp.lt.s32.totalorder %v358, 5
      %vm487 = vcmp.lt.s32.totalorder %v359, 5
      %vm488 = vcmp.lt.s32.totalorder %v360, 5
      %vm489 = vcmp.lt.s32.totalorder %v361, 5
      %vm490 = vcmp.lt.s32.totalorder %v362, 5
      %vm491 = vcmp.lt.s32.totalorder %v363, 5
      %vm492 = vcmp.lt.s32.totalorder %v364, 5
      %vm493 = vcmp.lt.s32.totalorder %v365, 5
      %vm494 = vcmp.lt.s32.totalorder %v366, 5
      %vm495 = vcmp.lt.s32.totalorder %v367, 5
      %vm496 = vcmp.lt.s32.totalorder %v368, 5
      %vm497 = vcmp.lt.s32.totalorder %v369, 5
      %vm498 = vcmp.lt.s32.totalorder %v370, 5
      %vm499 = vcmp.lt.s32.totalorder %v371, 5
      %vm500 = vcmp.lt.s32.totalorder %v372, 5
      %vm501 = vcmp.lt.s32.totalorder %v373, 5
      %vm502 = vcmp.lt.s32.totalorder %v374, 5
      %vm503 = vcmp.lt.s32.totalorder %v375, 5
      %vm504 = vcmp.lt.s32.totalorder %v376, 5
      %vm505 = vcmp.lt.s32.totalorder %v377, 5
      %vm506 = vcmp.lt.s32.totalorder %v378, 5
      %vm507 = vcmp.lt.s32.totalorder %v379, 5
      %vm508 = vcmp.lt.s32.totalorder %v380, 5
      %vm509 = vcmp.lt.s32.totalorder %v381, 5
      %vm510 = vcmp.lt.s32.totalorder %v382, 5
      %vm511 = vcmp.lt.s32.totalorder %v383, 5
      %vm512 = vcmp.lt.s32.totalorder %v384, 5
      %vm513 = vcmp.lt.s32.totalorder %v385, 5
      %vm514 = vcmp.lt.s32.totalorder %v386, 5
      %vm515 = vcmp.lt.s32.totalorder %v387, 5
      %vm516 = vcmp.lt.s32.totalorder %v388, 5
      %vm517 = vcmp.lt.s32.totalorder %v389, 5
      %vm518 = vcmp.lt.s32.totalorder %v390, 5
      %vm519 = vcmp.lt.s32.totalorder %v391, 5
      %vm520 = vcmp.lt.s32.totalorder %v392, 5
      %vm521 = vcmp.lt.s32.totalorder %v393, 5
      %vm522 = vcmp.lt.s32.totalorder %v394, 5
      %vm523 = vcmp.lt.s32.totalorder %v395, 5
      %vm524 = vcmp.lt.s32.totalorder %v396, 5
      %vm525 = vcmp.lt.s32.totalorder %v397, 5
      %vm526 = vcmp.lt.s32.totalorder %v398, 5
      %vm527 = vcmp.lt.s32.totalorder %v399, 5
      %vm528 = vcmp.lt.s32.totalorder %v400, 5
      %vm529 = vcmp.lt.s32.totalorder %v401, 5
      %vm530 = vcmp.lt.s32.totalorder %v402, 5
      %vm531 = vcmp.lt.s32.totalorder %v403, 5
      %vm532 = vcmp.lt.s32.totalorder %v404, 5
      %vm533 = vcmp.lt.s32.totalorder %v405, 5
      %vm534 = vcmp.lt.s32.totalorder %v406, 5
      %vm535 = vcmp.lt.s32.totalorder %v407, 5
      %vm536 = vcmp.lt.s32.totalorder %v408, 5
      %vm537 = vcmp.lt.s32.totalorder %v409, 5
      %vm538 = vcmp.lt.s32.totalorder %v410, 5
      %vm539 = vcmp.lt.s32.totalorder %v411, 5
      %vm540 = vcmp.lt.s32.totalorder %v412, 5
      %vm541 = vcmp.lt.s32.totalorder %v413, 5
      %vm542 = vcmp.lt.s32.totalorder %v414, 5
      %vm543 = vcmp.lt.s32.totalorder %v415, 5
      %vm544 = vcmp.lt.s32.totalorder %v416, 5
      %vm545 = vcmp.lt.s32.totalorder %v417, 5
      %vm546 = vcmp.lt.s32.totalorder %v418, 5
      %vm547 = vcmp.lt.s32.totalorder %v419, 5
      %vm548 = vcmp.lt.s32.totalorder %v420, 5
      %vm549 = vcmp.lt.s32.totalorder %v421, 5
      %vm550 = vcmp.lt.s32.totalorder %v422, 5
      %vm551 = vcmp.lt.s32.totalorder %v423, 5
      %vm552 = vcmp.lt.s32.totalorder %v424, 5
      %vm553 = vcmp.lt.s32.totalorder %v425, 5
      %vm554 = vcmp.lt.s32.totalorder %v426, 5
      %vm555 = vcmp.lt.s32.totalorder %v427, 5
      %vm556 = vcmp.lt.s32.totalorder %v428, 5
      %vm557 = vcmp.lt.s32.totalorder %v429, 5
      %vm558 = vcmp.lt.s32.totalorder %v430, 5
      %vm559 = vcmp.lt.s32.totalorder %v431, 5
      %vm560 = vcmp.lt.s32.totalorder %v432, 5
      %vm561 = vcmp.lt.s32.totalorder %v433, 5
      %vm562 = vcmp.lt.s32.totalorder %v434, 5
      %vm563 = vcmp.lt.s32.totalorder %v435, 5
      %vm564 = vcmp.lt.s32.totalorder %v436, 5
      %vm565 = vcmp.lt.s32.totalorder %v437, 5
      %vm566 = vcmp.lt.s32.totalorder %v438, 5
      %vm567 = vcmp.lt.s32.totalorder %v439, 5
      %vm568 = vcmp.lt.s32.totalorder %v440, 5
      %vm569 = vcmp.lt.s32.totalorder %v441, 5
      %vm570 = vcmp.lt.s32.totalorder %v442, 5
      %vm571 = vcmp.lt.s32.totalorder %v443, 5
      %vm572 = vcmp.lt.s32.totalorder %v444, 5
      %vm573 = vcmp.lt.s32.totalorder %v445, 5
      %vm574 = vcmp.lt.s32.totalorder %v446, 5
      %vm575 = vcmp.lt.s32.totalorder %v447, 5
      %vm576 = vcmp.lt.s32.totalorder %v448, 5
      %vm577 = vcmp.lt.s32.totalorder %v449, 5
      %vm578 = vcmp.lt.s32.totalorder %v450, 5
      %vm579 = vcmp.lt.s32.totalorder %v451, 5
      %vm580 = vcmp.lt.s32.totalorder %v452, 5
      %vm581 = vcmp.lt.s32.totalorder %v453, 5
      %vm582 = vcmp.lt.s32.totalorder %v454, 5
      %vm583 = vmand %vm455, %vm519
      %vm584 = vmand %vm456, %vm520
      %vm585 = vmand %vm457, %vm521
      %vm586 = vmand %vm458, %vm522
      %vm587 = vmand %vm459, %vm523
      %vm588 = vmand %vm460, %vm524
      %vm589 = vmand %vm461, %vm525
      %vm590 = vmand %vm462, %vm526
      %vm591 = vmand %vm463, %vm527
      %vm592 = vmand %vm464, %vm528
      %vm593 = vmand %vm465, %vm529
      %vm594 = vmand %vm466, %vm530
      %vm595 = vmand %vm467, %vm531
      %vm596 = vmand %vm468, %vm532
      %vm597 = vmand %vm469, %vm533
      %vm598 = vmand %vm470, %vm534
      %vm599 = vmand %vm471, %vm535
      %vm600 = vmand %vm472, %vm536
      %vm601 = vmand %vm473, %vm537
      %vm602 = vmand %vm474, %vm538
      %vm603 = vmand %vm475, %vm539
      %vm604 = vmand %vm476, %vm540
      %vm605 = vmand %vm477, %vm541
      %vm606 = vmand %vm478, %vm542
      %vm607 = vmand %vm479, %vm543
      %vm608 = vmand %vm480, %vm544
      %vm609 = vmand %vm481, %vm545
      %vm610 = vmand %vm482, %vm546
      %vm611 = vmand %vm483, %vm547
      %vm612 = vmand %vm484, %vm548
      %vm613 = vmand %vm485, %vm549
      %vm614 = vmand %vm486, %vm550
      %vm615 = vmand %vm487, %vm551
      %vm616 = vmand %vm488, %vm552
      %vm617 = vmand %vm489, %vm553
      %vm618 = vmand %vm490, %vm554
      %vm619 = vmand %vm491, %vm555
      %vm620 = vmand %vm492, %vm556
      %vm621 = vmand %vm493, %vm557
      %vm622 = vmand %vm494, %vm558
      %vm623 = vmand %vm495, %vm559
      %vm624 = vmand %vm496, %vm560
      %vm625 = vmand %vm497, %vm561
      %vm626 = vmand %vm498, %vm562
      %vm627 = vmand %vm499, %vm563
      %vm628 = vmand %vm500, %vm564
      %vm629 = vmand %vm501, %vm565
      %vm630 = vmand %vm502, %vm566
      %vm631 = vmand %vm503, %vm567
      %vm632 = vmand %vm504, %vm568
      %vm633 = vmand %vm505, %vm569
      %vm634 = vmand %vm506, %vm570
      %vm635 = vmand %vm507, %vm571
      %vm636 = vmand %vm508, %vm572
      %vm637 = vmand %vm509, %vm573
      %vm638 = vmand %vm510, %vm574
      %vm639 = vmand %vm511, %vm575
      %vm640 = vmand %vm512, %vm576
      %vm641 = vmand %vm513, %vm577
      %vm642 = vmand %vm514, %vm578
      %vm643 = vmand %vm515, %vm579
      %vm644 = vmand %vm516, %vm580
      %vm645 = vmand %vm517, %vm581
      %vm646 = vmand %vm518, %vm582
      %v647 = vsel %vm583, 1, 0
      %v648 = vsel %vm584, 1, 0
      %v649 = vsel %vm585, 1, 0
      %v650 = vsel %vm586, 1, 0
      %v651 = vsel %vm587, 1, 0
      %v652 = vsel %vm588, 1, 0
      %v653 = vsel %vm589, 1, 0
      %v654 = vsel %vm590, 1, 0
      %v655 = vsel %vm591, 1, 0
      %v656 = vsel %vm592, 1, 0
      %v657 = vsel %vm593, 1, 0
      %v658 = vsel %vm594, 1, 0
      %v659 = vsel %vm595, 1, 0
      %v660 = vsel %vm596, 1, 0
      %v661 = vsel %vm597, 1, 0
      %v662 = vsel %vm598, 1, 0
      %v663 = vsel %vm599, 1, 0
      %v664 = vsel %vm600, 1, 0
      %v665 = vsel %vm601, 1, 0
      %v666 = vsel %vm602, 1, 0
      %v667 = vsel %vm603, 1, 0
      %v668 = vsel %vm604, 1, 0
      %v669 = vsel %vm605, 1, 0
      %v670 = vsel %vm606, 1, 0
      %v671 = vsel %vm607, 1, 0
      %v672 = vsel %vm608, 1, 0
      %v673 = vsel %vm609, 1, 0
      %v674 = vsel %vm610, 1, 0
      %v675 = vsel %vm611, 1, 0
      %v676 = vsel %vm612, 1, 0
      %v677 = vsel %vm613, 1, 0
      %v678 = vsel %vm614, 1, 0
      %v679 = vsel %vm615, 1, 0
      %v680 = vsel %vm616, 1, 0
      %v681 = vsel %vm617, 1, 0
      %v682 = vsel %vm618, 1, 0
      %v683 = vsel %vm619, 1, 0
      %v684 = vsel %vm620, 1, 0
      %v685 = vsel %vm621, 1, 0
      %v686 = vsel %vm622, 1, 0
      %v687 = vsel %vm623, 1, 0
      %v688 = vsel %vm624, 1, 0
      %v689 = vsel %vm625, 1, 0
      %v690 = vsel %vm626, 1, 0
      %v691 = vsel %vm627, 1, 0
      %v692 = vsel %vm628, 1, 0
      %v693 = vsel %vm629, 1, 0
      %v694 = vsel %vm630, 1, 0
      %v695 = vsel %vm631, 1, 0
      %v696 = vsel %vm632, 1, 0
      %v697 = vsel %vm633, 1, 0
      %v698 = vsel %vm634, 1, 0
      %v699 = vsel %vm635, 1, 0
      %v700 = vsel %vm636, 1, 0
      %v701 = vsel %vm637, 1, 0
      %v702 = vsel %vm638, 1, 0
      %v703 = vsel %vm639, 1, 0
      %v704 = vsel %vm640, 1, 0
      %v705 = vsel %vm641, 1, 0
      %v706 = vsel %vm642, 1, 0
      %v707 = vsel %vm643, 1, 0
      %v708 = vsel %vm644, 1, 0
      %v709 = vsel %vm645, 1, 0
      %v710 = vsel %vm646, 1, 0
      %v711 = vcvt.s32.f32 %v647
      %v712 = vcvt.s32.f32 %v648
      %v713 = vcvt.s32.f32 %v649
      %v714 = vcvt.s32.f32 %v650
      %v715 = vcvt.s32.f32 %v651
      %v716 = vcvt.s32.f32 %v652
      %v717 = vcvt.s32.f32 %v653
      %v718 = vcvt.s32.f32 %v654
      %v719 = vcvt.s32.f32 %v655
      %v720 = vcvt.s32.f32 %v656
      %v721 = vcvt.s32.f32 %v657
      %v722 = vcvt.s32.f32 %v658
      %v723 = vcvt.s32.f32 %v659
      %v724 = vcvt.s32.f32 %v660
      %v725 = vcvt.s32.f32 %v661
      %v726 = vcvt.s32.f32 %v662
      %v727 = vcvt.s32.f32 %v663
      %v728 = vcvt.s32.f32 %v664
      %v729 = vcvt.s32.f32 %v665
      %v730 = vcvt.s32.f32 %v666
      %v731 = vcvt.s32.f32 %v667
      %v732 = vcvt.s32.f32 %v668
      %v733 = vcvt.s32.f32 %v669
      %v734 = vcvt.s32.f32 %v670
      %v735 = vcvt.s32.f32 %v671
      %v736 = vcvt.s32.f32 %v672
      %v737 = vcvt.s32.f32 %v673
      %v738 = vcvt.s32.f32 %v674
      %v739 = vcvt.s32.f32 %v675
      %v740 = vcvt.s32.f32 %v676
      %v741 = vcvt.s32.f32 %v677
      %v742 = vcvt.s32.f32 %v678
      %v743 = vcvt.s32.f32 %v679
      %v744 = vcvt.s32.f32 %v680
      %v745 = vcvt.s32.f32 %v681
      %v746 = vcvt.s32.f32 %v682
      %v747 = vcvt.s32.f32 %v683
      %v748 = vcvt.s32.f32 %v684
      %v749 = vcvt.s32.f32 %v685
      %v750 = vcvt.s32.f32 %v686
      %v751 = vcvt.s32.f32 %v687
      %v752 = vcvt.s32.f32 %v688
      %v753 = vcvt.s32.f32 %v689
      %v754 = vcvt.s32.f32 %v690
      %v755 = vcvt.s32.f32 %v691
      %v756 = vcvt.s32.f32 %v692
      %v757 = vcvt.s32.f32 %v693
      %v758 = vcvt.s32.f32 %v694
      %v759 = vcvt.s32.f32 %v695
      %v760 = vcvt.s32.f32 %v696
      %v761 = vcvt.s32.f32 %v697
      %v762 = vcvt.s32.f32 %v698
      %v763 = vcvt.s32.f32 %v699
      %v764 = vcvt.s32.f32 %v700
      %v765 = vcvt.s32.f32 %v701
      %v766 = vcvt.s32.f32 %v702
      %v767 = vcvt.s32.f32 %v703
      %v768 = vcvt.s32.f32 %v704
      %v769 = vcvt.s32.f32 %v705
      %v770 = vcvt.s32.f32 %v706
      %v771 = vcvt.s32.f32 %v707
      %v772 = vcvt.s32.f32 %v708
      %v773 = vcvt.s32.f32 %v709
      %v774 = vcvt.s32.f32 %v710
      %vm775 = vcmp.lt.s32.totalorder %v327, 6
      %vm776 = vcmp.lt.s32.totalorder %v328, 6
      %vm777 = vcmp.lt.s32.totalorder %v329, 6
      %vm778 = vcmp.lt.s32.totalorder %v330, 6
      %vm779 = vcmp.lt.s32.totalorder %v331, 6
      %vm780 = vcmp.lt.s32.totalorder %v332, 6
      %vm781 = vcmp.lt.s32.totalorder %v333, 6
      %vm782 = vcmp.lt.s32.totalorder %v334, 6
      %vm783 = vcmp.lt.s32.totalorder %v335, 6
      %vm784 = vcmp.lt.s32.totalorder %v336, 6
      %vm785 = vcmp.lt.s32.totalorder %v337, 6
      %vm786 = vcmp.lt.s32.totalorder %v338, 6
      %vm787 = vcmp.lt.s32.totalorder %v339, 6
      %vm788 = vcmp.lt.s32.totalorder %v340, 6
      %vm789 = vcmp.lt.s32.totalorder %v341, 6
      %vm790 = vcmp.lt.s32.totalorder %v342, 6
      %vm791 = vcmp.lt.s32.totalorder %v343, 6
      %vm792 = vcmp.lt.s32.totalorder %v344, 6
      %vm793 = vcmp.lt.s32.totalorder %v345, 6
      %vm794 = vcmp.lt.s32.totalorder %v346, 6
      %vm795 = vcmp.lt.s32.totalorder %v347, 6
      %vm796 = vcmp.lt.s32.totalorder %v348, 6
      %vm797 = vcmp.lt.s32.totalorder %v349, 6
      %vm798 = vcmp.lt.s32.totalorder %v350, 6
      %vm799 = vcmp.lt.s32.totalorder %v351, 6
      %vm800 = vcmp.lt.s32.totalorder %v352, 6
      %vm801 = vcmp.lt.s32.totalorder %v353, 6
      %vm802 = vcmp.lt.s32.totalorder %v354, 6
      %vm803 = vcmp.lt.s32.totalorder %v355, 6
      %vm804 = vcmp.lt.s32.totalorder %v356, 6
      %vm805 = vcmp.lt.s32.totalorder %v357, 6
      %vm806 = vcmp.lt.s32.totalorder %v358, 6
      %vm807 = vcmp.lt.s32.totalorder %v359, 6
      %vm808 = vcmp.lt.s32.totalorder %v360, 6
      %vm809 = vcmp.lt.s32.totalorder %v361, 6
      %vm810 = vcmp.lt.s32.totalorder %v362, 6
      %vm811 = vcmp.lt.s32.totalorder %v363, 6
      %vm812 = vcmp.lt.s32.totalorder %v364, 6
      %vm813 = vcmp.lt.s32.totalorder %v365, 6
      %vm814 = vcmp.lt.s32.totalorder %v366, 6
      %vm815 = vcmp.lt.s32.totalorder %v367, 6
      %vm816 = vcmp.lt.s32.totalorder %v368, 6
      %vm817 = vcmp.lt.s32.totalorder %v369, 6
      %vm818 = vcmp.lt.s32.totalorder %v370, 6
      %vm819 = vcmp.lt.s32.totalorder %v371, 6
      %vm820 = vcmp.lt.s32.totalorder %v372, 6
      %vm821 = vcmp.lt.s32.totalorder %v373, 6
      %vm822 = vcmp.lt.s32.totalorder %v374, 6
      %vm823 = vcmp.lt.s32.totalorder %v375, 6
      %vm824 = vcmp.lt.s32.totalorder %v376, 6
      %vm825 = vcmp.lt.s32.totalorder %v377, 6
      %vm826 = vcmp.lt.s32.totalorder %v378, 6
      %vm827 = vcmp.lt.s32.totalorder %v379, 6
      %vm828 = vcmp.lt.s32.totalorder %v380, 6
      %vm829 = vcmp.lt.s32.totalorder %v381, 6
      %vm830 = vcmp.lt.s32.totalorder %v382, 6
      %vm831 = vcmp.lt.s32.totalorder %v383, 6
      %vm832 = vcmp.lt.s32.totalorder %v384, 6
      %vm833 = vcmp.lt.s32.totalorder %v385, 6
      %vm834 = vcmp.lt.s32.totalorder %v386, 6
      %vm835 = vcmp.lt.s32.totalorder %v387, 6
      %vm836 = vcmp.lt.s32.totalorder %v388, 6
      %vm837 = vcmp.lt.s32.totalorder %v389, 6
      %vm838 = vcmp.lt.s32.totalorder %v390, 6
      %vm839 = vcmp.lt.s32.totalorder %v391, 6
      %vm840 = vcmp.lt.s32.totalorder %v392, 6
      %vm841 = vcmp.lt.s32.totalorder %v393, 6
      %vm842 = vcmp.lt.s32.totalorder %v394, 6
      %vm843 = vcmp.lt.s32.totalorder %v395, 6
      %vm844 = vcmp.lt.s32.totalorder %v396, 6
      %vm845 = vcmp.lt.s32.totalorder %v397, 6
      %vm846 = vcmp.lt.s32.totalorder %v398, 6
      %vm847 = vcmp.lt.s32.totalorder %v399, 6
      %vm848 = vcmp.lt.s32.totalorder %v400, 6
      %vm849 = vcmp.lt.s32.totalorder %v401, 6
      %vm850 = vcmp.lt.s32.totalorder %v402, 6
      %vm851 = vcmp.lt.s32.totalorder %v403, 6
      %vm852 = vcmp.lt.s32.totalorder %v404, 6
      %vm853 = vcmp.lt.s32.totalorder %v405, 6
      %vm854 = vcmp.lt.s32.totalorder %v406, 6
      %vm855 = vcmp.lt.s32.totalorder %v407, 6
      %vm856 = vcmp.lt.s32.totalorder %v408, 6
      %vm857 = vcmp.lt.s32.totalorder %v409, 6
      %vm858 = vcmp.lt.s32.totalorder %v410, 6
      %vm859 = vcmp.lt.s32.totalorder %v411, 6
      %vm860 = vcmp.lt.s32.totalorder %v412, 6
      %vm861 = vcmp.lt.s32.totalorder %v413, 6
      %vm862 = vcmp.lt.s32.totalorder %v414, 6
      %vm863 = vcmp.lt.s32.totalorder %v415, 6
      %vm864 = vcmp.lt.s32.totalorder %v416, 6
      %vm865 = vcmp.lt.s32.totalorder %v417, 6
      %vm866 = vcmp.lt.s32.totalorder %v418, 6
      %vm867 = vcmp.lt.s32.totalorder %v419, 6
      %vm868 = vcmp.lt.s32.totalorder %v420, 6
      %vm869 = vcmp.lt.s32.totalorder %v421, 6
      %vm870 = vcmp.lt.s32.totalorder %v422, 6
      %vm871 = vcmp.lt.s32.totalorder %v423, 6
      %vm872 = vcmp.lt.s32.totalorder %v424, 6
      %vm873 = vcmp.lt.s32.totalorder %v425, 6
      %vm874 = vcmp.lt.s32.totalorder %v426, 6
      %vm875 = vcmp.lt.s32.totalorder %v427, 6
      %vm876 = vcmp.lt.s32.totalorder %v428, 6
      %vm877 = vcmp.lt.s32.totalorder %v429, 6
      %vm878 = vcmp.lt.s32.totalorder %v430, 6
      %vm879 = vcmp.lt.s32.totalorder %v431, 6
      %vm880 = vcmp.lt.s32.totalorder %v432, 6
      %vm881 = vcmp.lt.s32.totalorder %v433, 6
      %vm882 = vcmp.lt.s32.totalorder %v434, 6
      %vm883 = vcmp.lt.s32.totalorder %v435, 6
      %vm884 = vcmp.lt.s32.totalorder %v436, 6
      %vm885 = vcmp.lt.s32.totalorder %v437, 6
      %vm886 = vcmp.lt.s32.totalorder %v438, 6
      %vm887 = vcmp.lt.s32.totalorder %v439, 6
      %vm888 = vcmp.lt.s32.totalorder %v440, 6
      %vm889 = vcmp.lt.s32.totalorder %v441, 6
      %vm890 = vcmp.lt.s32.totalorder %v442, 6
      %vm891 = vcmp.lt.s32.totalorder %v443, 6
      %vm892 = vcmp.lt.s32.totalorder %v444, 6
      %vm893 = vcmp.lt.s32.totalorder %v445, 6
      %vm894 = vcmp.lt.s32.totalorder %v446, 6
      %vm895 = vcmp.lt.s32.totalorder %v447, 6
      %vm896 = vcmp.lt.s32.totalorder %v448, 6
      %vm897 = vcmp.lt.s32.totalorder %v449, 6
      %vm898 = vcmp.lt.s32.totalorder %v450, 6
      %vm899 = vcmp.lt.s32.totalorder %v451, 6
      %vm900 = vcmp.lt.s32.totalorder %v452, 6
      %vm901 = vcmp.lt.s32.totalorder %v453, 6
      %vm902 = vcmp.lt.s32.totalorder %v454, 6
      %vm903 = vmand %vm775, %vm839
      %vm904 = vmand %vm776, %vm840
      %vm905 = vmand %vm777, %vm841
      %vm906 = vmand %vm778, %vm842
      %vm907 = vmand %vm779, %vm843
      %vm908 = vmand %vm780, %vm844
      %vm909 = vmand %vm781, %vm845
      %vm910 = vmand %vm782, %vm846
      %vm911 = vmand %vm783, %vm847
      %vm912 = vmand %vm784, %vm848
      %vm913 = vmand %vm785, %vm849
      %vm914 = vmand %vm786, %vm850
      %vm915 = vmand %vm787, %vm851
      %vm916 = vmand %vm788, %vm852
      %vm917 = vmand %vm789, %vm853
      %vm918 = vmand %vm790, %vm854
      %vm919 = vmand %vm791, %vm855
      %vm920 = vmand %vm792, %vm856
      %vm921 = vmand %vm793, %vm857
      %vm922 = vmand %vm794, %vm858
      %vm923 = vmand %vm795, %vm859
      %vm924 = vmand %vm796, %vm860
      %vm925 = vmand %vm797, %vm861
      %vm926 = vmand %vm798, %vm862
      %vm927 = vmand %vm799, %vm863
      %vm928 = vmand %vm800, %vm864
      %vm929 = vmand %vm801, %vm865
      %vm930 = vmand %vm802, %vm866
      %vm931 = vmand %vm803, %vm867
      %vm932 = vmand %vm804, %vm868
      %vm933 = vmand %vm805, %vm869
      %vm934 = vmand %vm806, %vm870
      %vm935 = vmand %vm807, %vm871
      %vm936 = vmand %vm808, %vm872
      %vm937 = vmand %vm809, %vm873
      %vm938 = vmand %vm810, %vm874
      %vm939 = vmand %vm811, %vm875
      %vm940 = vmand %vm812, %vm876
      %vm941 = vmand %vm813, %vm877
      %vm942 = vmand %vm814, %vm878
      %vm943 = vmand %vm815, %vm879
      %vm944 = vmand %vm816, %vm880
      %vm945 = vmand %vm817, %vm881
      %vm946 = vmand %vm818, %vm882
      %vm947 = vmand %vm819, %vm883
      %vm948 = vmand %vm820, %vm884
      %vm949 = vmand %vm821, %vm885
      %vm950 = vmand %vm822, %vm886
      %vm951 = vmand %vm823, %vm887
      %vm952 = vmand %vm824, %vm888
      %vm953 = vmand %vm825, %vm889
      %vm954 = vmand %vm826, %vm890
      %vm955 = vmand %vm827, %vm891
      %vm956 = vmand %vm828, %vm892
      %vm957 = vmand %vm829, %vm893
      %vm958 = vmand %vm830, %vm894
      %vm959 = vmand %vm831, %vm895
      %vm960 = vmand %vm832, %vm896
      %vm961 = vmand %vm833, %vm897
      %vm962 = vmand %vm834, %vm898
      %vm963 = vmand %vm835, %vm899
      %vm964 = vmand %vm836, %vm900
      %vm965 = vmand %vm837, %vm901
      %vm966 = vmand %vm838, %vm902
      %v967 = vsel %vm903, 1, 0
      %v968 = vsel %vm904, 1, 0
      %v969 = vsel %vm905, 1, 0
      %v970 = vsel %vm906, 1, 0
      %v971 = vsel %vm907, 1, 0
      %v972 = vsel %vm908, 1, 0
      %v973 = vsel %vm909, 1, 0
      %v974 = vsel %vm910, 1, 0
      %v975 = vsel %vm911, 1, 0
      %v976 = vsel %vm912, 1, 0
      %v977 = vsel %vm913, 1, 0
      %v978 = vsel %vm914, 1, 0
      %v979 = vsel %vm915, 1, 0
      %v980 = vsel %vm916, 1, 0
      %v981 = vsel %vm917, 1, 0
      %v982 = vsel %vm918, 1, 0
      %v983 = vsel %vm919, 1, 0
      %v984 = vsel %vm920, 1, 0
      %v985 = vsel %vm921, 1, 0
      %v986 = vsel %vm922, 1, 0
      %v987 = vsel %vm923, 1, 0
      %v988 = vsel %vm924, 1, 0
      %v989 = vsel %vm925, 1, 0
      %v990 = vsel %vm926, 1, 0
      %v991 = vsel %vm927, 1, 0
      %v992 = vsel %vm928, 1, 0
      %v993 = vsel %vm929, 1, 0
      %v994 = vsel %vm930, 1, 0
      %v995 = vsel %vm931, 1, 0
      %v996 = vsel %vm932, 1, 0
      %v997 = vsel %vm933, 1, 0
      %v998 = vsel %vm934, 1, 0
      %v999 = vsel %vm935, 1, 0
      %v1000 = vsel %vm936, 1, 0
      %v1001 = vsel %vm937, 1, 0
      %v1002 = vsel %vm938, 1, 0
      %v1003 = vsel %vm939, 1, 0
      %v1004 = vsel %vm940, 1, 0
      %v1005 = vsel %vm941, 1, 0
      %v1006 = vsel %vm942, 1, 0
      %v1007 = vsel %vm943, 1, 0
      %v1008 = vsel %vm944, 1, 0
      %v1009 = vsel %vm945, 1, 0
      %v1010 = vsel %vm946, 1, 0
      %v1011 = vsel %vm947, 1, 0
      %v1012 = vsel %vm948, 1, 0
      %v1013 = vsel %vm949, 1, 0
      %v1014 = vsel %vm950, 1, 0
      %v1015 = vsel %vm951, 1, 0
      %v1016 = vsel %vm952, 1, 0
      %v1017 = vsel %vm953, 1, 0
      %v1018 = vsel %vm954, 1, 0
      %v1019 = vsel %vm955, 1, 0
      %v1020 = vsel %vm956, 1, 0
      %v1021 = vsel %vm957, 1, 0
      %v1022 = vsel %vm958, 1, 0
      %v1023 = vsel %vm959, 1, 0
      %v1024 = vsel %vm960, 1, 0
      %v1025 = vsel %vm961, 1, 0
      %v1026 = vsel %vm962, 1, 0
      %v1027 = vsel %vm963, 1, 0
      %v1028 = vsel %vm964, 1, 0
      %v1029 = vsel %vm965, 1, 0
      %v1030 = vsel %vm966, 1, 0
      %v1031 = vcvt.s32.f32 %v967
      %v1032 = vcvt.s32.f32 %v968
      %v1033 = vcvt.s32.f32 %v969
      %v1034 = vcvt.s32.f32 %v970
      %v1035 = vcvt.s32.f32 %v971
      %v1036 = vcvt.s32.f32 %v972
      %v1037 = vcvt.s32.f32 %v973
      %v1038 = vcvt.s32.f32 %v974
      %v1039 = vcvt.s32.f32 %v975
      %v1040 = vcvt.s32.f32 %v976
      %v1041 = vcvt.s32.f32 %v977
      %v1042 = vcvt.s32.f32 %v978
      %v1043 = vcvt.s32.f32 %v979
      %v1044 = vcvt.s32.f32 %v980
      %v1045 = vcvt.s32.f32 %v981
      %v1046 = vcvt.s32.f32 %v982
      %v1047 = vcvt.s32.f32 %v983
      %v1048 = vcvt.s32.f32 %v984
      %v1049 = vcvt.s32.f32 %v985
      %v1050 = vcvt.s32.f32 %v986
      %v1051 = vcvt.s32.f32 %v987
      %v1052 = vcvt.s32.f32 %v988
      %v1053 = vcvt.s32.f32 %v989
      %v1054 = vcvt.s32.f32 %v990
      %v1055 = vcvt.s32.f32 %v991
      %v1056 = vcvt.s32.f32 %v992
      %v1057 = vcvt.s32.f32 %v993
      %v1058 = vcvt.s32.f32 %v994
      %v1059 = vcvt.s32.f32 %v995
      %v1060 = vcvt.s32.f32 %v996
      %v1061 = vcvt.s32.f32 %v997
      %v1062 = vcvt.s32.f32 %v998
      %v1063 = vcvt.s32.f32 %v999
      %v1064 = vcvt.s32.f32 %v1000
      %v1065 = vcvt.s32.f32 %v1001
      %v1066 = vcvt.s32.f32 %v1002
      %v1067 = vcvt.s32.f32 %v1003
      %v1068 = vcvt.s32.f32 %v1004
      %v1069 = vcvt.s32.f32 %v1005
      %v1070 = vcvt.s32.f32 %v1006
      %v1071 = vcvt.s32.f32 %v1007
      %v1072 = vcvt.s32.f32 %v1008
      %v1073 = vcvt.s32.f32 %v1009
      %v1074 = vcvt.s32.f32 %v1010
      %v1075 = vcvt.s32.f32 %v1011
      %v1076 = vcvt.s32.f32 %v1012
      %v1077 = vcvt.s32.f32 %v1013
      %v1078 = vcvt.s32.f32 %v1014
      %v1079 = vcvt.s32.f32 %v1015
      %v1080 = vcvt.s32.f32 %v1016
      %v1081 = vcvt.s32.f32 %v1017
      %v1082 = vcvt.s32.f32 %v1018
      %v1083 = vcvt.s32.f32 %v1019
      %v1084 = vcvt.s32.f32 %v1020
      %v1085 = vcvt.s32.f32 %v1021
      %v1086 = vcvt.s32.f32 %v1022
      %v1087 = vcvt.s32.f32 %v1023
      %v1088 = vcvt.s32.f32 %v1024
      %v1089 = vcvt.s32.f32 %v1025
      %v1090 = vcvt.s32.f32 %v1026
      %v1091 = vcvt.s32.f32 %v1027
      %v1092 = vcvt.s32.f32 %v1028
      %v1093 = vcvt.s32.f32 %v1029
      %v1094 = vcvt.s32.f32 %v1030
      %vm1095 = vcmask 261120
      %1096 = vst.msk [vmem:[#allocation2] sm:$0xff] %vm1095, 0.0
      %1097 = vst.msk [vmem:[#allocation2 + $0x8] sm:$0xff] %vm1095, 0.0
      %1098 = vst.msk [vmem:[#allocation2 + $0x210] sm:$0xff] %vm1095, 0.0
      %1099 = vst.msk [vmem:[#allocation2 + $0x218] sm:$0xff] %vm1095, 0.0
      %v1100 = vld [vmem:[%s192] sm:$0xff]
      %v1101 = vld [vmem:[%s192 + $0x8] sm:$0xff]
      %v1102 = vld [vmem:[%s192 + $0x10] sm:$0xff]
      %v1103 = vld [vmem:[%s192 + $0x18] sm:$0xff]
      %v1104 = vld [vmem:[%s192 + $0x20] sm:$0xff]
      %v1105 = vld [vmem:[%s192 + $0x28] sm:$0xff]
      %v1106 = vld [vmem:[%s192 + $0x30] sm:$0xff]
      %v1107 = vld [vmem:[%s192 + $0x38] sm:$0xff]
      %v1108 = vld [vmem:[%s192 + $0x40] sm:$0xff]
      %v1109 = vld [vmem:[%s192 + $0x48] sm:$0xff]
      %v1110 = vld [vmem:[%s192 + $0x50] sm:$0xff]
      %v1111 = vld [vmem:[%s192 + $0x58] sm:$0xff]
      %v1112 = vld [vmem:[%s192 + $0x60] sm:$0xff]
      %v1113 = vld [vmem:[%s192 + $0x68] sm:$0xff]
      %v1114 = vld [vmem:[%s192 + $0x70] sm:$0xff]
      %v1115 = vld [vmem:[%s192 + $0x78] sm:$0xff]
      %v1116 = vld [vmem:[%s192 + $0x80] sm:$0xff]
      %v1117 = vld [vmem:[%s192 + $0x88] sm:$0xff]
      %v1118 = vld [vmem:[%s192 + $0x90] sm:$0xff]
      %v1119 = vld [vmem:[%s192 + $0x98] sm:$0xff]
      %v1120 = vld [vmem:[%s192 + $0xa0] sm:$0xff]
      %v1121 = vld [vmem:[%s192 + $0xa8] sm:$0xff]
      %v1122 = vld [vmem:[%s192 + $0xb0] sm:$0xff]
      %v1123 = vld [vmem:[%s192 + $0xb8] sm:$0xff]
      %v1124 = vld [vmem:[%s192 + $0xc0] sm:$0xff]
      %v1125 = vld [vmem:[%s192 + $0xc8] sm:$0xff]
      %v1126 = vld [vmem:[%s192 + $0xd0] sm:$0xff]
      %v1127 = vld [vmem:[%s192 + $0xd8] sm:$0xff]
      %v1128 = vld [vmem:[%s192 + $0xe0] sm:$0xff]
      %v1129 = vld [vmem:[%s192 + $0xe8] sm:$0xff]
      %v1130 = vld [vmem:[%s192 + $0xf0] sm:$0xff]
      %v1131 = vld [vmem:[%s192 + $0xf8] sm:$0xff]
      %v1132 = vld [vmem:[%s192 + $0x100] sm:$0xff]
      %v1133 = vld [vmem:[%s192 + $0x108] sm:$0xff]
      %v1134 = vld [vmem:[%s192 + $0x110] sm:$0xff]
      %v1135 = vld [vmem:[%s192 + $0x118] sm:$0xff]
      %v1136 = vld [vmem:[%s192 + $0x120] sm:$0xff]
      %v1137 = vld [vmem:[%s192 + $0x128] sm:$0xff]
      %v1138 = vld [vmem:[%s192 + $0x130] sm:$0xff]
      %v1139 = vld [vmem:[%s192 + $0x138] sm:$0xff]
      %v1140 = vld [vmem:[%s192 + $0x140] sm:$0xff]
      %v1141 = vld [vmem:[%s192 + $0x148] sm:$0xff]
      %v1142 = vld [vmem:[%s192 + $0x150] sm:$0xff]
      %v1143 = vld [vmem:[%s192 + $0x158] sm:$0xff]
      %v1144 = vld [vmem:[%s192 + $0x160] sm:$0xff]
      %v1145 = vld [vmem:[%s192 + $0x168] sm:$0xff]
      %v1146 = vld [vmem:[%s192 + $0x170] sm:$0xff]
      %v1147 = vld [vmem:[%s192 + $0x178] sm:$0xff]
      %v1148 = vld [vmem:[%s192 + $0x180] sm:$0xff]
      %v1149 = vld [vmem:[%s192 + $0x188] sm:$0xff]
      %v1150 = vld [vmem:[%s192 + $0x190] sm:$0xff]
      %v1151 = vld [vmem:[%s192 + $0x198] sm:$0xff]
      %v1152 = vld [vmem:[%s192 + $0x1a0] sm:$0xff]
      %v1153 = vld [vmem:[%s192 + $0x1a8] sm:$0xff]
      %v1154 = vld [vmem:[%s192 + $0x1b0] sm:$0xff]
      %v1155 = vld [vmem:[%s192 + $0x1b8] sm:$0xff]
      %v1156 = vld [vmem:[%s192 + $0x1c0] sm:$0xff]
      %v1157 = vld [vmem:[%s192 + $0x1c8] sm:$0xff]
      %v1158 = vld [vmem:[%s192 + $0x1d0] sm:$0xff]
      %v1159 = vld [vmem:[%s192 + $0x1d8] sm:$0xff]
      %v1160 = vld [vmem:[%s192 + $0x1e0] sm:$0xff]
      %v1161 = vld [vmem:[%s192 + $0x1e8] sm:$0xff]
      %v1162 = vld [vmem:[%s192 + $0x1f0] sm:$0xff]
      %v1163 = vld [vmem:[%s192 + $0x1f8] sm:$0xff]
      %v1164 = vld [vmem:[%s1] sm:$0xf]
      %v1165 = vld [vmem:[%s1 + $0x108] sm:$0x1]
      %v1166 = vlaneseq
      %v1167 = vshrl.u32 %v1166, 7
      %v1168 = vsub.s32 0, %v1167
      %v1169 = vrot.slane %v1165, %v1168
      %vm1170 = vcmask 31744
      %v1172 = vsel %vm1170, %v1100, 0
      %v1175 = vsel %vm1170, %v1101, 0
      %v1178 = vsel %vm1170, %v1102, 0
      %v1181 = vsel %vm1170, %v1103, 0
      %v1184 = vsel %vm1170, %v1104, 0
      %v1187 = vsel %vm1170, %v1105, 0
      %v1190 = vsel %vm1170, %v1106, 0
      %v1193 = vsel %vm1170, %v1107, 0
      %v1196 = vsel %vm1170, %v1108, 0
      %v1199 = vsel %vm1170, %v1109, 0
      %v1202 = vsel %vm1170, %v1110, 0
      %v1205 = vsel %vm1170, %v1111, 0
      %v1208 = vsel %vm1170, %v1112, 0
      %v1211 = vsel %vm1170, %v1113, 0
      %v1214 = vsel %vm1170, %v1114, 0
      %v1217 = vsel %vm1170, %v1115, 0
      %v1220 = vsel %vm1170, %v1116, 0
      %v1223 = vsel %vm1170, %v1117, 0
      %v1226 = vsel %vm1170, %v1118, 0
      %v1229 = vsel %vm1170, %v1119, 0
      %v1232 = vsel %vm1170, %v1120, 0
      %v1235 = vsel %vm1170, %v1121, 0
      %v1238 = vsel %vm1170, %v1122, 0
      %v1241 = vsel %vm1170, %v1123, 0
      %v1244 = vsel %vm1170, %v1124, 0
      %v1247 = vsel %vm1170, %v1125, 0
      %v1250 = vsel %vm1170, %v1126, 0
      %v1253 = vsel %vm1170, %v1127, 0
      %v1256 = vsel %vm1170, %v1128, 0
      %v1259 = vsel %vm1170, %v1129, 0
      %v1262 = vsel %vm1170, %v1130, 0
      %v1265 = vsel %vm1170, %v1131, 0
      %v1268 = vsel %vm1170, %v1132, 0
      %v1271 = vsel %vm1170, %v1133, 0
      %v1274 = vsel %vm1170, %v1134, 0
      %v1277 = vsel %vm1170, %v1135, 0
      %v1280 = vsel %vm1170, %v1136, 0
      %v1283 = vsel %vm1170, %v1137, 0
      %v1286 = vsel %vm1170, %v1138, 0
      %v1289 = vsel %vm1170, %v1139, 0
      %v1292 = vsel %vm1170, %v1140, 0
      %v1295 = vsel %vm1170, %v1141, 0
      %v1298 = vsel %vm1170, %v1142, 0
      %v1301 = vsel %vm1170, %v1143, 0
      %v1304 = vsel %vm1170, %v1144, 0
      %v1307 = vsel %vm1170, %v1145, 0
      %v1310 = vsel %vm1170, %v1146, 0
      %v1313 = vsel %vm1170, %v1147, 0
      %v1316 = vsel %vm1170, %v1148, 0
      %v1319 = vsel %vm1170, %v1149, 0
      %v1322 = vsel %vm1170, %v1150, 0
      %v1325 = vsel %vm1170, %v1151, 0
      %v1328 = vsel %vm1170, %v1152, 0
      %v1331 = vsel %vm1170, %v1153, 0
      %v1334 = vsel %vm1170, %v1154, 0
      %v1337 = vsel %vm1170, %v1155, 0
      %v1340 = vsel %vm1170, %v1156, 0
      %v1343 = vsel %vm1170, %v1157, 0
      %v1346 = vsel %vm1170, %v1158, 0
      %v1349 = vsel %vm1170, %v1159, 0
      %v1352 = vsel %vm1170, %v1160, 0
      %v1355 = vsel %vm1170, %v1161, 0
      %v1358 = vsel %vm1170, %v1162, 0
      %v1361 = vsel %vm1170, %v1163, 0
      %vm1363 = vcmask 1043456
      %v1365 = vsel %vm1363, %v1164, 0
      %1367 = vmatprep.subr.mxu0 0.0
      %1368 = vmatpush1.msra.mxu0 %v1365
      %1369 = vmatprep.subr.mxu0 0.0
      %1370 = vmatpush1.msra.mxu0 0.0
      %1371 = vmatprep.subr.mxu0 0.0
      %1372 = vmatpush1.msra.mxu0 0.0
      %1373 = vmatprep.subr.mxu0 0.0
      %1374 = vmatpush1.msra.mxu0 0.0
      %1375 = vmatprep.subr.mxu0 0.0
      %1376 = vmatpush1.msra.mxu0 0.0
      %1377 = vmatprep.subr.mxu0 0.0
      %1378 = vmatpush1.msra.mxu0 0.0
      %1379 = vmatprep.subr.mxu0 0.0
      %1380 = vmatpush1.msra.mxu0 0.0
      %1381 = vmatprep.subr.mxu0 0.0
      %1382 = vmatpush1.msra.mxu0 0.0
      %1383 = vmatprep.subr.mxu0 0.0
      %1384 = vmatpush1.msra.mxu0 0.0
      %1385 = vmatprep.subr.mxu0 0.0
      %1386 = vmatpush1.msra.mxu0 0.0
      %1387 = vmatprep.subr.mxu0 0.0
      %1388 = vmatpush1.msra.mxu0 0.0
      %1389 = vmatprep.subr.mxu0 0.0
      %1390 = vmatpush1.msra.mxu0 0.0
      %1391 = vmatprep.subr.mxu0 0.0
      %1392 = vmatpush1.msra.mxu0 0.0
      %1393 = vmatprep.subr.mxu0 0.0
      %1394 = vmatpush1.msra.mxu0 0.0
      %1395 = vmatprep.subr.mxu0 0.0
      %1396 = vmatpush1.msra.mxu0 0.0
      %1397 = vmatprep.subr.mxu0 0.0
      %1398 = vmatpush1.msra.mxu0 0.0
      %1399 = vmatprep.subr.mxu0 0.0
      %1400 = vmatpush1.msra.mxu0 0.0
      %1401 = vmatprep.subr.mxu0 0.0
      %1402 = vmatpush1.msra.mxu0 0.0
      %1403 = vmatprep.subr.mxu0 0.0
      %1404 = vmatpush1.msra.mxu0 0.0
      %1405 = vmatprep.subr.mxu0 0.0
      %1406 = vmatpush1.msra.mxu0 0.0
      %1407 = vmatprep.subr.mxu0 0.0
      %1408 = vmatpush1.msra.mxu0 0.0
      %1409 = vmatprep.subr.mxu0 0.0
      %1410 = vmatpush1.msra.mxu0 0.0
      %1411 = vmatprep.subr.mxu0 0.0
      %1412 = vmatpush1.msra.mxu0 0.0
      %1413 = vmatprep.subr.mxu0 0.0
      %1414 = vmatpush1.msra.mxu0 0.0
      %1415 = vmatprep.subr.mxu0 0.0
      %1416 = vmatpush1.msra.mxu0 0.0
      %1417 = vmatprep.subr.mxu0 0.0
      %1418 = vmatpush1.msra.mxu0 0.0
      %1419 = vmatprep.subr.mxu0 0.0
      %1420 = vmatpush1.msra.mxu0 0.0
      %1421 = vmatprep.subr.mxu0 0.0
      %1422 = vmatpush1.msra.mxu0 0.0
      %1423 = vmatprep.subr.mxu0 0.0
      %1424 = vmatpush1.msra.mxu0 0.0
      %1425 = vmatprep.subr.mxu0 0.0
      %1426 = vmatpush1.msra.mxu0 0.0
      %1427 = vmatprep.subr.mxu0 0.0
      %1428 = vmatpush1.msra.mxu0 0.0
      %1429 = vmatprep.subr.mxu0 0.0
      %1430 = vmatpush1.msra.mxu0 0.0
      %1431 = vmatprep.mubr.f32.mxu0 0.0
      %1432 = vmatmul.mubr.f32.gmra.mrb[0].mxu0 %v1172
      %v1433 = vpop.f32.mrb[0].mxu0
      %v1434 = vadd.f32 %v1169, %v1433
      %v1435 = vpop.f32.mrb[0].mxu0
      %1436 = vmatprep.mubr.f32.mxu0 0.0
      %1437 = vmatmul.mubr.f32.gmra.mrb[0].mxu0 %v1175
      %v1438 = vpop.f32.mrb[0].mxu0
      %v1439 = vadd.f32 %v1169, %v1438
      %v1440 = vpop.f32.mrb[0].mxu0
      %1441 = vmatprep.mubr.f32.mxu0 0.0
      %1442 = vmatmul.mubr.f32.gmra.mrb[0].mxu0 %v1178
      %v1443 = vpop.f32.mrb[0].mxu0
      %v1444 = vadd.f32 %v1169, %v1443
      %v1445 = vpop.f32.mrb[0].mxu0
      %1446 = vmatprep.mubr.f32.mxu0 0.0
      %1447 = vmatmul.mubr.f32.gmra.mrb[0].mxu0 %v1181
      %v1448 = vpop.f32.mrb[0].mxu0
      %v1449 = vadd.f32 %v1169, %v1448
      %v1450 = vpop.f32.mrb[0].mxu0
      %1451 = vmatprep.mubr.f32.mxu0 0.0
      %1452 = vmatmul.mubr.f32.gmra.mrb[0].mxu0 %v1184
      %v1453 = vpop.f32.mrb[0].mxu0
      %v1454 = vadd.f32 %v1169, %v1453
      %v1455 = vpop.f32.mrb[0].mxu0
      %1456 = vmatprep.mubr.f32.mxu0 0.0
      %1457 = vmatmul.mubr.f32.gmra.mrb[0].mxu0 %v1187
      %v1458 = vpop.f32.mrb[0].mxu0
      %v1459 = vadd.f32 %v1169, %v1458
      %v1460 = vpop.f32.mrb[0].mxu0
      %1461 = vmatprep.mubr.f32.mxu0 0.0
      %1462 = vmatmul.mubr.f32.gmra.mrb[0].mxu0 %v1190
      %v1463 = vpop.f32.mrb[0].mxu0
      %v1464 = vadd.f32 %v1169, %v1463
      %v1465 = vpop.f32.mrb[0].mxu0
      %1466 = vmatprep.mubr.f32.mxu0 0.0
      %1467 = vmatmul.mubr.f32.gmra.mrb[0].mxu0 %v1193
      %v1468 = vpop.f32.mrb[0].mxu0
      %v1469 = vadd.f32 %v1169, %v1468
      %v1470 = vpop.f32.mrb[0].mxu0
      %1471 = vmatprep.mubr.f32.mxu0 0.0
      %1472 = vmatmul.mubr.f32.gmra.mrb[0].mxu0 %v1196
      %v1473 = vpop.f32.mrb[0].mxu0
      %v1474 = vadd.f32 %v1169, %v1473
      %v1475 = vpop.f32.mrb[0].mxu0
      %1476 = vmatprep.mubr.f32.mxu0 0.0
      %1477 = vmatmul.mubr.f32.gmra.mrb[0].mxu0 %v1199
      %v1478 = vpop.f32.mrb[0].mxu0
      %v1479 = vadd.f32 %v1169, %v1478
      %v1480 = vpop.f32.mrb[0].mxu0
      %1481 = vmatprep.mubr.f32.mxu0 0.0
      %1482 = vmatmul.mubr.f32.gmra.mrb[0].mxu0 %v1202
      %v1483 = vpop.f32.mrb[0].mxu0
      %v1484 = vadd.f32 %v1169, %v1483
      %v1485 = vpop.f32.mrb[0].mxu0
      %1486 = vmatprep.mubr.f32.mxu0 0.0
      %1487 = vmatmul.mubr.f32.gmra.mrb[0].mxu0 %v1205
      %v1488 = vpop.f32.mrb[0].mxu0
      %v1489 = vadd.f32 %v1169, %v1488
      %v1490 = vpop.f32.mrb[0].mxu0
      %1491 = vmatprep.mubr.f32.mxu0 0.0
      %1492 = vmatmul.mubr.f32.gmra.mrb[0].mxu0 %v1208
      %v1493 = vpop.f32.mrb[0].mxu0
      %v1494 = vadd.f32 %v1169, %v1493
      %v1495 = vpop.f32.mrb[0].mxu0
      %1496 = vmatprep.mubr.f32.mxu0 0.0
      %1497 = vmatmul.mubr.f32.gmra.mrb[0].mxu0 %v1211
      %v1498 = vpop.f32.mrb[0].mxu0
      %v1499 = vadd.f32 %v1169, %v1498
      %v1500 = vpop.f32.mrb[0].mxu0
      %1501 = vmatprep.mubr.f32.mxu0 0.0
      %1502 = vmatmul.mubr.f32.gmra.mrb[0].mxu0 %v1214
      %v1503 = vpop.f32.mrb[0].mxu0
      %v1504 = vadd.f32 %v1169, %v1503
      %v1505 = vpop.f32.mrb[0].mxu0
      %1506 = vmatprep.mubr.f32.mxu0 0.0
      %1507 = vmatmul.mubr.f32.gmra.mrb[0].mxu0 %v1217
      %v1508 = vpop.f32.mrb[0].mxu0
      %v1509 = vadd.f32 %v1169, %v1508
      %v1510 = vpop.f32.mrb[0].mxu0
      %1511 = vmatprep.mubr.f32.mxu0 0.0
      %1512 = vmatmul.mubr.f32.gmra.mrb[0].mxu0 %v1220
      %v1513 = vpop.f32.mrb[0].mxu0
      %v1514 = vadd.f32 %v1169, %v1513
      %v1515 = vpop.f32.mrb[0].mxu0
      %1516 = vmatprep.mubr.f32.mxu0 0.0
      %1517 = vmatmul.mubr.f32.gmra.mrb[0].mxu0 %v1223
      %v1518 = vpop.f32.mrb[0].mxu0
      %v1519 = vadd.f32 %v1169, %v1518
      %v1520 = vpop.f32.mrb[0].mxu0
      %1521 = vmatprep.mubr.f32.mxu0 0.0
      %1522 = vmatmul.mubr.f32.gmra.mrb[0].mxu0 %v1226
      %v1523 = vpop.f32.mrb[0].mxu0
      %v1524 = vadd.f32 %v1169, %v1523
      %v1525 = vpop.f32.mrb[0].mxu0
      %1526 = vmatprep.mubr.f32.mxu0 0.0
      %1527 = vmatmul.mubr.f32.gmra.mrb[0].mxu0 %v1229
      %v1528 = vpop.f32.mrb[0].mxu0
      %v1529 = vadd.f32 %v1169, %v1528
      %v1530 = vpop.f32.mrb[0].mxu0
      %1531 = vmatprep.mubr.f32.mxu0 0.0
      %1532 = vmatmul.mubr.f32.gmra.mrb[0].mxu0 %v1232
      %v1533 = vpop.f32.mrb[0].mxu0
      %v1534 = vadd.f32 %v1169, %v1533
      %v1535 = vpop.f32.mrb[0].mxu0
      %1536 = vmatprep.mubr.f32.mxu0 0.0
      %1537 = vmatmul.mubr.f32.gmra.mrb[0].mxu0 %v1235
      %v1538 = vpop.f32.mrb[0].mxu0
      %v1539 = vadd.f32 %v1169, %v1538
      %v1540 = vpop.f32.mrb[0].mxu0
      %1541 = vmatprep.mubr.f32.mxu0 0.0
      %1542 = vmatmul.mubr.f32.gmra.mrb[0].mxu0 %v1238
      %v1543 = vpop.f32.mrb[0].mxu0
      %v1544 = vadd.f32 %v1169, %v1543
      %v1545 = vpop.f32.mrb[0].mxu0
      %1546 = vmatprep.mubr.f32.mxu0 0.0
      %1547 = vmatmul.mubr.f32.gmra.mrb[0].mxu0 %v1241
      %v1548 = vpop.f32.mrb[0].mxu0
      %v1549 = vadd.f32 %v1169, %v1548
      %v1550 = vpop.f32.mrb[0].mxu0
      %1551 = vmatprep.mubr.f32.mxu0 0.0
      %1552 = vmatmul.mubr.f32.gmra.mrb[0].mxu0 %v1244
      %v1553 = vpop.f32.mrb[0].mxu0
      %v1554 = vadd.f32 %v1169, %v1553
      %v1555 = vpop.f32.mrb[0].mxu0
      %1556 = vmatprep.mubr.f32.mxu0 0.0
      %1557 = vmatmul.mubr.f32.gmra.mrb[0].mxu0 %v1247
      %v1558 = vpop.f32.mrb[0].mxu0
      %v1559 = vadd.f32 %v1169, %v1558
      %v1560 = vpop.f32.mrb[0].mxu0
      %1561 = vmatprep.mubr.f32.mxu0 0.0
      %1562 = vmatmul.mubr.f32.gmra.mrb[0].mxu0 %v1250
      %v1563 = vpop.f32.mrb[0].mxu0
      %v1564 = vadd.f32 %v1169, %v1563
      %v1565 = vpop.f32.mrb[0].mxu0
      %1566 = vmatprep.mubr.f32.mxu0 0.0
      %1567 = vmatmul.mubr.f32.gmra.mrb[0].mxu0 %v1253
      %v1568 = vpop.f32.mrb[0].mxu0
      %v1569 = vadd.f32 %v1169, %v1568
      %v1570 = vpop.f32.mrb[0].mxu0
      %1571 = vmatprep.mubr.f32.mxu0 0.0
      %1572 = vmatmul.mubr.f32.gmra.mrb[0].mxu0 %v1256
      %v1573 = vpop.f32.mrb[0].mxu0
      %v1574 = vadd.f32 %v1169, %v1573
      %v1575 = vpop.f32.mrb[0].mxu0
      %1576 = vmatprep.mubr.f32.mxu0 0.0
      %1577 = vmatmul.mubr.f32.gmra.mrb[0].mxu0 %v1259
      %v1578 = vpop.f32.mrb[0].mxu0
      %v1579 = vadd.f32 %v1169, %v1578
      %v1580 = vpop.f32.mrb[0].mxu0
      %1581 = vmatprep.mubr.f32.mxu0 0.0
      %1582 = vmatmul.mubr.f32.gmra.mrb[0].mxu0 %v1262
      %v1583 = vpop.f32.mrb[0].mxu0
      %v1584 = vadd.f32 %v1169, %v1583
      %v1585 = vpop.f32.mrb[0].mxu0
      %1586 = vmatprep.mubr.f32.mxu0 0.0
      %1587 = vmatmul.mubr.f32.gmra.mrb[0].mxu0 %v1265
      %v1588 = vpop.f32.mrb[0].mxu0
      %v1589 = vadd.f32 %v1169, %v1588
      %v1590 = vpop.f32.mrb[0].mxu0
      %1591 = vmatprep.mubr.f32.mxu0 0.0
      %1592 = vmatmul.mubr.f32.gmra.mrb[0].mxu0 %v1268
      %v1593 = vpop.f32.mrb[0].mxu0
      %v1594 = vadd.f32 %v1169, %v1593
      %v1595 = vpop.f32.mrb[0].mxu0
      %1596 = vmatprep.mubr.f32.mxu0 0.0
      %1597 = vmatmul.mubr.f32.gmra.mrb[0].mxu0 %v1271
      %v1598 = vpop.f32.mrb[0].mxu0
      %v1599 = vadd.f32 %v1169, %v1598
      %v1600 = vpop.f32.mrb[0].mxu0
      %1601 = vmatprep.mubr.f32.mxu0 0.0
      %1602 = vmatmul.mubr.f32.gmra.mrb[0].mxu0 %v1274
      %v1603 = vpop.f32.mrb[0].mxu0
      %v1604 = vadd.f32 %v1169, %v1603
      %v1605 = vpop.f32.mrb[0].mxu0
      %1606 = vmatprep.mubr.f32.mxu0 0.0
      %1607 = vmatmul.mubr.f32.gmra.mrb[0].mxu0 %v1277
      %v1608 = vpop.f32.mrb[0].mxu0
      %v1609 = vadd.f32 %v1169, %v1608
      %v1610 = vpop.f32.mrb[0].mxu0
      %1611 = vmatprep.mubr.f32.mxu0 0.0
      %1612 = vmatmul.mubr.f32.gmra.mrb[0].mxu0 %v1280
      %v1613 = vpop.f32.mrb[0].mxu0
      %v1614 = vadd.f32 %v1169, %v1613
      %v1615 = vpop.f32.mrb[0].mxu0
      %1616 = vmatprep.mubr.f32.mxu0 0.0
      %1617 = vmatmul.mubr.f32.gmra.mrb[0].mxu0 %v1283
      %v1618 = vpop.f32.mrb[0].mxu0
      %v1619 = vadd.f32 %v1169, %v1618
      %v1620 = vpop.f32.mrb[0].mxu0
      %1621 = vmatprep.mubr.f32.mxu0 0.0
      %1622 = vmatmul.mubr.f32.gmra.mrb[0].mxu0 %v1286
      %v1623 = vpop.f32.mrb[0].mxu0
      %v1624 = vadd.f32 %v1169, %v1623
      %v1625 = vpop.f32.mrb[0].mxu0
      %1626 = vmatprep.mubr.f32.mxu0 0.0
      %1627 = vmatmul.mubr.f32.gmra.mrb[0].mxu0 %v1289
      %v1628 = vpop.f32.mrb[0].mxu0
      %v1629 = vadd.f32 %v1169, %v1628
      %v1630 = vpop.f32.mrb[0].mxu0
      %1631 = vmatprep.mubr.f32.mxu0 0.0
      %1632 = vmatmul.mubr.f32.gmra.mrb[0].mxu0 %v1292
      %v1633 = vpop.f32.mrb[0].mxu0
      %v1634 = vadd.f32 %v1169, %v1633
      %v1635 = vpop.f32.mrb[0].mxu0
      %1636 = vmatprep.mubr.f32.mxu0 0.0
      %1637 = vmatmul.mubr.f32.gmra.mrb[0].mxu0 %v1295
      %v1638 = vpop.f32.mrb[0].mxu0
      %v1639 = vadd.f32 %v1169, %v1638
      %v1640 = vpop.f32.mrb[0].mxu0
      %1641 = vmatprep.mubr.f32.mxu0 0.0
      %1642 = vmatmul.mubr.f32.gmra.mrb[0].mxu0 %v1298
      %v1643 = vpop.f32.mrb[0].mxu0
      %v1644 = vadd.f32 %v1169, %v1643
      %v1645 = vpop.f32.mrb[0].mxu0
      %1646 = vmatprep.mubr.f32.mxu0 0.0
      %1647 = vmatmul.mubr.f32.gmra.mrb[0].mxu0 %v1301
      %v1648 = vpop.f32.mrb[0].mxu0
      %v1649 = vadd.f32 %v1169, %v1648
      %v1650 = vpop.f32.mrb[0].mxu0
      %1651 = vmatprep.mubr.f32.mxu0 0.0
      %1652 = vmatmul.mubr.f32.gmra.mrb[0].mxu0 %v1304
      %v1653 = vpop.f32.mrb[0].mxu0
      %v1654 = vadd.f32 %v1169, %v1653
      %v1655 = vpop.f32.mrb[0].mxu0
      %1656 = vmatprep.mubr.f32.mxu0 0.0
      %1657 = vmatmul.mubr.f32.gmra.mrb[0].mxu0 %v1307
      %v1658 = vpop.f32.mrb[0].mxu0
      %v1659 = vadd.f32 %v1169, %v1658
      %v1660 = vpop.f32.mrb[0].mxu0
      %1661 = vmatprep.mubr.f32.mxu0 0.0
      %1662 = vmatmul.mubr.f32.gmra.mrb[0].mxu0 %v1310
      %v1663 = vpop.f32.mrb[0].mxu0
      %v1664 = vadd.f32 %v1169, %v1663
      %v1665 = vpop.f32.mrb[0].mxu0
      %1666 = vmatprep.mubr.f32.mxu0 0.0
      %1667 = vmatmul.mubr.f32.gmra.mrb[0].mxu0 %v1313
      %v1668 = vpop.f32.mrb[0].mxu0
      %v1669 = vadd.f32 %v1169, %v1668
      %v1670 = vpop.f32.mrb[0].mxu0
      %1671 = vmatprep.mubr.f32.mxu0 0.0
      %1672 = vmatmul.mubr.f32.gmra.mrb[0].mxu0 %v1316
      %v1673 = vpop.f32.mrb[0].mxu0
      %v1674 = vadd.f32 %v1169, %v1673
      %v1675 = vpop.f32.mrb[0].mxu0
      %1676 = vmatprep.mubr.f32.mxu0 0.0
      %1677 = vmatmul.mubr.f32.gmra.mrb[0].mxu0 %v1319
      %v1678 = vpop.f32.mrb[0].mxu0
      %v1679 = vadd.f32 %v1169, %v1678
      %v1680 = vpop.f32.mrb[0].mxu0
      %1681 = vmatprep.mubr.f32.mxu0 0.0
      %1682 = vmatmul.mubr.f32.gmra.mrb[0].mxu0 %v1322
      %v1683 = vpop.f32.mrb[0].mxu0
      %v1684 = vadd.f32 %v1169, %v1683
      %v1685 = vpop.f32.mrb[0].mxu0
      %1686 = vmatprep.mubr.f32.mxu0 0.0
      %1687 = vmatmul.mubr.f32.gmra.mrb[0].mxu0 %v1325
      %v1688 = vpop.f32.mrb[0].mxu0
      %v1689 = vadd.f32 %v1169, %v1688
      %v1690 = vpop.f32.mrb[0].mxu0
      %1691 = vmatprep.mubr.f32.mxu0 0.0
      %1692 = vmatmul.mubr.f32.gmra.mrb[0].mxu0 %v1328
      %v1693 = vpop.f32.mrb[0].mxu0
      %v1694 = vadd.f32 %v1169, %v1693
      %v1695 = vpop.f32.mrb[0].mxu0
      %1696 = vmatprep.mubr.f32.mxu0 0.0
      %1697 = vmatmul.mubr.f32.gmra.mrb[0].mxu0 %v1331
      %v1698 = vpop.f32.mrb[0].mxu0
      %v1699 = vadd.f32 %v1169, %v1698
      %v1700 = vpop.f32.mrb[0].mxu0
      %1701 = vmatprep.mubr.f32.mxu0 0.0
      %1702 = vmatmul.mubr.f32.gmra.mrb[0].mxu0 %v1334
      %v1703 = vpop.f32.mrb[0].mxu0
      %v1704 = vadd.f32 %v1169, %v1703
      %v1705 = vpop.f32.mrb[0].mxu0
      %1706 = vmatprep.mubr.f32.mxu0 0.0
      %1707 = vmatmul.mubr.f32.gmra.mrb[0].mxu0 %v1337
      %v1708 = vpop.f32.mrb[0].mxu0
      %v1709 = vadd.f32 %v1169, %v1708
      %v1710 = vpop.f32.mrb[0].mxu0
      %1711 = vmatprep.mubr.f32.mxu0 0.0
      %1712 = vmatmul.mubr.f32.gmra.mrb[0].mxu0 %v1340
      %v1713 = vpop.f32.mrb[0].mxu0
      %v1714 = vadd.f32 %v1169, %v1713
      %v1715 = vpop.f32.mrb[0].mxu0
      %1716 = vmatprep.mubr.f32.mxu0 0.0
      %1717 = vmatmul.mubr.f32.gmra.mrb[0].mxu0 %v1343
      %v1718 = vpop.f32.mrb[0].mxu0
      %v1719 = vadd.f32 %v1169, %v1718
      %v1720 = vpop.f32.mrb[0].mxu0
      %1721 = vmatprep.mubr.f32.mxu0 0.0
      %1722 = vmatmul.mubr.f32.gmra.mrb[0].mxu0 %v1346
      %v1723 = vpop.f32.mrb[0].mxu0
      %v1724 = vadd.f32 %v1169, %v1723
      %v1725 = vpop.f32.mrb[0].mxu0
      %1726 = vmatprep.mubr.f32.mxu0 0.0
      %1727 = vmatmul.mubr.f32.gmra.mrb[0].mxu0 %v1349
      %v1728 = vpop.f32.mrb[0].mxu0
      %v1729 = vadd.f32 %v1169, %v1728
      %v1730 = vpop.f32.mrb[0].mxu0
      %1731 = vmatprep.mubr.f32.mxu0 0.0
      %1732 = vmatmul.mubr.f32.gmra.mrb[0].mxu0 %v1352
      %v1733 = vpop.f32.mrb[0].mxu0
      %v1734 = vadd.f32 %v1169, %v1733
      %v1735 = vpop.f32.mrb[0].mxu0
      %1736 = vmatprep.mubr.f32.mxu0 0.0
      %1737 = vmatmul.mubr.f32.gmra.mrb[0].mxu0 %v1355
      %v1738 = vpop.f32.mrb[0].mxu0
      %v1739 = vadd.f32 %v1169, %v1738
      %v1740 = vpop.f32.mrb[0].mxu0
      %1741 = vmatprep.mubr.f32.mxu0 0.0
      %1742 = vmatmul.mubr.f32.gmra.mrb[0].mxu0 %v1358
      %v1743 = vpop.f32.mrb[0].mxu0
      %v1744 = vadd.f32 %v1169, %v1743
      %v1745 = vpop.f32.mrb[0].mxu0
      %1746 = vmatprep.mubr.f32.mxu0 0.0
      %1747 = vmatmul.mubr.f32.gmra.mrb[0].mxu0 %v1361
      %v1748 = vpop.f32.mrb[0].mxu0
      %v1749 = vadd.f32 %v1169, %v1748
      %v1750 = vpop.f32.mrb[0].mxu0
      %1751 = vdwg.mxu0
      %v1752 = vmax.f32 %v1434, 0.0
      %v1753 = vmax.f32 %v1439, 0.0
      %v1754 = vmax.f32 %v1444, 0.0
      %v1755 = vmax.f32 %v1449, 0.0
      %v1756 = vmax.f32 %v1454, 0.0
      %v1757 = vmax.f32 %v1459, 0.0
      %v1758 = vmax.f32 %v1464, 0.0
      %v1759 = vmax.f32 %v1469, 0.0
      %v1760 = vmax.f32 %v1474, 0.0
      %v1761 = vmax.f32 %v1479, 0.0
      %v1762 = vmax.f32 %v1484, 0.0
      %v1763 = vmax.f32 %v1489, 0.0
      %v1764 = vmax.f32 %v1494, 0.0
      %v1765 = vmax.f32 %v1499, 0.0
      %v1766 = vmax.f32 %v1504, 0.0
      %v1767 = vmax.f32 %v1509, 0.0
      %v1768 = vmax.f32 %v1514, 0.0
      %v1769 = vmax.f32 %v1519, 0.0
      %v1770 = vmax.f32 %v1524, 0.0
      %v1771 = vmax.f32 %v1529, 0.0
      %v1772 = vmax.f32 %v1534, 0.0
      %v1773 = vmax.f32 %v1539, 0.0
      %v1774 = vmax.f32 %v1544, 0.0
      %v1775 = vmax.f32 %v1549, 0.0
      %v1776 = vmax.f32 %v1554, 0.0
      %v1777 = vmax.f32 %v1559, 0.0
      %v1778 = vmax.f32 %v1564, 0.0
      %v1779 = vmax.f32 %v1569, 0.0
      %v1780 = vmax.f32 %v1574, 0.0
      %v1781 = vmax.f32 %v1579, 0.0
      %v1782 = vmax.f32 %v1584, 0.0
      %v1783 = vmax.f32 %v1589, 0.0
      %v1784 = vmax.f32 %v1594, 0.0
      %v1785 = vmax.f32 %v1599, 0.0
      %v1786 = vmax.f32 %v1604, 0.0
      %v1787 = vmax.f32 %v1609, 0.0
      %v1788 = vmax.f32 %v1614, 0.0
      %v1789 = vmax.f32 %v1619, 0.0
      %v1790 = vmax.f32 %v1624, 0.0
      %v1791 = vmax.f32 %v1629, 0.0
      %v1792 = vmax.f32 %v1634, 0.0
      %v1793 = vmax.f32 %v1639, 0.0
      %v1794 = vmax.f32 %v1644, 0.0
      %v1795 = vmax.f32 %v1649, 0.0
      %v1796 = vmax.f32 %v1654, 0.0
      %v1797 = vmax.f32 %v1659, 0.0
      %v1798 = vmax.f32 %v1664, 0.0
      %v1799 = vmax.f32 %v1669, 0.0
      %v1800 = vmax.f32 %v1674, 0.0
      %v1801 = vmax.f32 %v1679, 0.0
      %v1802 = vmax.f32 %v1684, 0.0
      %v1803 = vmax.f32 %v1689, 0.0
      %v1804 = vmax.f32 %v1694, 0.0
      %v1805 = vmax.f32 %v1699, 0.0
      %v1806 = vmax.f32 %v1704, 0.0
      %v1807 = vmax.f32 %v1709, 0.0
      %v1808 = vmax.f32 %v1714, 0.0
      %v1809 = vmax.f32 %v1719, 0.0
      %v1810 = vmax.f32 %v1724, 0.0
      %v1811 = vmax.f32 %v1729, 0.0
      %v1812 = vmax.f32 %v1734, 0.0
      %v1813 = vmax.f32 %v1739, 0.0
      %v1814 = vmax.f32 %v1744, 0.0
      %v1815 = vmax.f32 %v1749, 0.0
      %v1816 = vmul.f32 %v1752, %v711
      %v1817 = vmul.f32 %v1753, %v712
      %v1818 = vmul.f32 %v1754, %v713
      %v1819 = vmul.f32 %v1755, %v714
      %v1820 = vmul.f32 %v1756, %v715
      %v1821 = vmul.f32 %v1757, %v716
      %v1822 = vmul.f32 %v1758, %v717
      %v1823 = vmul.f32 %v1759, %v718
      %v1824 = vmul.f32 %v1760, %v719
      %v1825 = vmul.f32 %v1761, %v720
      %v1826 = vmul.f32 %v1762, %v721
      %v1827 = vmul.f32 %v1763, %v722
      %v1828 = vmul.f32 %v1764, %v723
      %v1829 = vmul.f32 %v1765, %v724
      %v1830 = vmul.f32 %v1766, %v725
      %v1831 = vmul.f32 %v1767, %v726
      %v1832 = vmul.f32 %v1768, %v727
      %v1833 = vmul.f32 %v1769, %v728
      %v1834 = vmul.f32 %v1770, %v729
      %v1835 = vmul.f32 %v1771, %v730
      %v1836 = vmul.f32 %v1772, %v731
      %v1837 = vmul.f32 %v1773, %v732
      %v1838 = vmul.f32 %v1774, %v733
      %v1839 = vmul.f32 %v1775, %v734
      %v1840 = vmul.f32 %v1776, %v735
      %v1841 = vmul.f32 %v1777, %v736
      %v1842 = vmul.f32 %v1778, %v737
      %v1843 = vmul.f32 %v1779, %v738
      %v1844 = vmul.f32 %v1780, %v739
      %v1845 = vmul.f32 %v1781, %v740
      %v1846 = vmul.f32 %v1782, %v741
      %v1847 = vmul.f32 %v1783, %v742
      %v1848 = vmul.f32 %v1784, %v743
      %v1849 = vmul.f32 %v1785, %v744
      %v1850 = vmul.f32 %v1786, %v745
      %v1851 = vmul.f32 %v1787, %v746
      %v1852 = vmul.f32 %v1788, %v747
      %v1853 = vmul.f32 %v1789, %v748
      %v1854 = vmul.f32 %v1790, %v749
      %v1855 = vmul.f32 %v1791, %v750
      %v1856 = vmul.f32 %v1792, %v751
      %v1857 = vmul.f32 %v1793, %v752
      %v1858 = vmul.f32 %v1794, %v753
      %v1859 = vmul.f32 %v1795, %v754
      %v1860 = vmul.f32 %v1796, %v755
      %v1861 = vmul.f32 %v1797, %v756
      %v1862 = vmul.f32 %v1798, %v757
      %v1863 = vmul.f32 %v1799, %v758
      %v1864 = vmul.f32 %v1800, %v759
      %v1865 = vmul.f32 %v1801, %v760
      %v1866 = vmul.f32 %v1802, %v761
      %v1867 = vmul.f32 %v1803, %v762
      %v1868 = vmul.f32 %v1804, %v763
      %v1869 = vmul.f32 %v1805, %v764
      %v1870 = vmul.f32 %v1806, %v765
      %v1871 = vmul.f32 %v1807, %v766
      %v1872 = vmul.f32 %v1808, %v767
      %v1873 = vmul.f32 %v1809, %v768
      %v1874 = vmul.f32 %v1810, %v769
      %v1875 = vmul.f32 %v1811, %v770
      %v1876 = vmul.f32 %v1812, %v771
      %v1877 = vmul.f32 %v1813, %v772
      %v1878 = vmul.f32 %v1814, %v773
      %v1879 = vmul.f32 %v1815, %v774
      %1880 = vst.msk [vmem:[#allocation2 + $0x10] sm:$0xff] %vm1095, %v1816
      %1881 = vst.msk [vmem:[#allocation2 + $0x18] sm:$0xff] %vm1095, %v1817
      %1882 = vst.msk [vmem:[#allocation2 + $0x20] sm:$0xff] %vm1095, %v1818
      %1883 = vst.msk [vmem:[#allocation2 + $0x28] sm:$0xff] %vm1095, %v1819
      %1884 = vst.msk [vmem:[#allocation2 + $0x30] sm:$0xff] %vm1095, %v1820
      %1885 = vst.msk [vmem:[#allocation2 + $0x38] sm:$0xff] %vm1095, %v1821
      %1886 = vst.msk [vmem:[#allocation2 + $0x40] sm:$0xff] %vm1095, %v1822
      %1887 = vst.msk [vmem:[#allocation2 + $0x48] sm:$0xff] %vm1095, %v1823
      %1888 = vst.msk [vmem:[#allocation2 + $0x50] sm:$0xff] %vm1095, %v1824
      %1889 = vst.msk [vmem:[#allocation2 + $0x58] sm:$0xff] %vm1095, %v1825
      %1890 = vst.msk [vmem:[#allocation2 + $0x60] sm:$0xff] %vm1095, %v1826
      %1891 = vst.msk [vmem:[#allocation2 + $0x68] sm:$0xff] %vm1095, %v1827
      %1892 = vst.msk [vmem:[#allocation2 + $0x70] sm:$0xff] %vm1095, %v1828
      %1893 = vst.msk [vmem:[#allocation2 + $0x78] sm:$0xff] %vm1095, %v1829
      %1894 = vst.msk [vmem:[#allocation2 + $0x80] sm:$0xff] %vm1095, %v1830
      %1895 = vst.msk [vmem:[#allocation2 + $0x88] sm:$0xff] %vm1095, %v1831
      %1896 = vst.msk [vmem:[#allocation2 + $0x90] sm:$0xff] %vm1095, %v1832
      %1897 = vst.msk [vmem:[#allocation2 + $0x98] sm:$0xff] %vm1095, %v1833
      %1898 = vst.msk [vmem:[#allocation2 + $0xa0] sm:$0xff] %vm1095, %v1834
      %1899 = vst.msk [vmem:[#allocation2 + $0xa8] sm:$0xff] %vm1095, %v1835
      %1900 = vst.msk [vmem:[#allocation2 + $0xb0] sm:$0xff] %vm1095, %v1836
      %1901 = vst.msk [vmem:[#allocation2 + $0xb8] sm:$0xff] %vm1095, %v1837
      %1902 = vst.msk [vmem:[#allocation2 + $0xc0] sm:$0xff] %vm1095, %v1838
      %1903 = vst.msk [vmem:[#allocation2 + $0xc8] sm:$0xff] %vm1095, %v1839
      %1904 = vst.msk [vmem:[#allocation2 + $0xd0] sm:$0xff] %vm1095, %v1840
      %1905 = vst.msk [vmem:[#allocation2 + $0xd8] sm:$0xff] %vm1095, %v1841
      %1906 = vst.msk [vmem:[#allocation2 + $0xe0] sm:$0xff] %vm1095, %v1842
      %1907 = vst.msk [vmem:[#allocation2 + $0xe8] sm:$0xff] %vm1095, %v1843
      %1908 = vst.msk [vmem:[#allocation2 + $0xf0] sm:$0xff] %vm1095, %v1844
      %1909 = vst.msk [vmem:[#allocation2 + $0xf8] sm:$0xff] %vm1095, %v1845
      %1910 = vst.msk [vmem:[#allocation2 + $0x100] sm:$0xff] %vm1095, %v1846
      %1911 = vst.msk [vmem:[#allocation2 + $0x108] sm:$0xff] %vm1095, %v1847
      %1912 = vst.msk [vmem:[#allocation2 + $0x110] sm:$0xff] %vm1095, %v1848
      %1913 = vst.msk [vmem:[#allocation2 + $0x118] sm:$0xff] %vm1095, %v1849
      %1914 = vst.msk [vmem:[#allocation2 + $0x120] sm:$0xff] %vm1095, %v1850
      %1915 = vst.msk [vmem:[#allocation2 + $0x128] sm:$0xff] %vm1095, %v1851
      %1916 = vst.msk [vmem:[#allocation2 + $0x130] sm:$0xff] %vm1095, %v1852
      %1917 = vst.msk [vmem:[#allocation2 + $0x138] sm:$0xff] %vm1095, %v1853
      %1918 = vst.msk [vmem:[#allocation2 + $0x140] sm:$0xff] %vm1095, %v1854
      %1919 = vst.msk [vmem:[#allocation2 + $0x148] sm:$0xff] %vm1095, %v1855
      %1920 = vst.msk [vmem:[#allocation2 + $0x150] sm:$0xff] %vm1095, %v1856
      %1921 = vst.msk [vmem:[#allocation2 + $0x158] sm:$0xff] %vm1095, %v1857
      %1922 = vst.msk [vmem:[#allocation2 + $0x160] sm:$0xff] %vm1095, %v1858
      %1923 = vst.msk [vmem:[#allocation2 + $0x168] sm:$0xff] %vm1095, %v1859
      %1924 = vst.msk [vmem:[#allocation2 + $0x170] sm:$0xff] %vm1095, %v1860
      %1925 = vst.msk [vmem:[#allocation2 + $0x178] sm:$0xff] %vm1095, %v1861
      %1926 = vst.msk [vmem:[#allocation2 + $0x180] sm:$0xff] %vm1095, %v1862
      %1927 = vst.msk [vmem:[#allocation2 + $0x188] sm:$0xff] %vm1095, %v1863
      %1928 = vst.msk [vmem:[#allocation2 + $0x190] sm:$0xff] %vm1095, %v1864
      %1929 = vst.msk [vmem:[#allocation2 + $0x198] sm:$0xff] %vm1095, %v1865
      %1930 = vst.msk [vmem:[#allocation2 + $0x1a0] sm:$0xff] %vm1095, %v1866
      %1931 = vst.msk [vmem:[#allocation2 + $0x1a8] sm:$0xff] %vm1095, %v1867
      %1932 = vst.msk [vmem:[#allocation2 + $0x1b0] sm:$0xff] %vm1095, %v1868
      %1933 = vst.msk [vmem:[#allocation2 + $0x1b8] sm:$0xff] %vm1095, %v1869
      %1934 = vst.msk [vmem:[#allocation2 + $0x1c0] sm:$0xff] %vm1095, %v1870
      %1935 = vst.msk [vmem:[#allocation2 + $0x1c8] sm:$0xff] %vm1095, %v1871
      %1936 = vst.msk [vmem:[#allocation2 + $0x1d0] sm:$0xff] %vm1095, %v1872
      %1937 = vst.msk [vmem:[#allocation2 + $0x1d8] sm:$0xff] %vm1095, %v1873
      %1938 = vst.msk [vmem:[#allocation2 + $0x1e0] sm:$0xff] %vm1095, %v1874
      %1939 = vst.msk [vmem:[#allocation2 + $0x1e8] sm:$0xff] %vm1095, %v1875
      %1940 = vst.msk [vmem:[#allocation2 + $0x1f0] sm:$0xff] %vm1095, %v1876
      %1941 = vst.msk [vmem:[#allocation2 + $0x1f8] sm:$0xff] %vm1095, %v1877
      %1942 = vst.msk [vmem:[#allocation2 + $0x200] sm:$0xff] %vm1095, %v1878
      %1943 = vst.msk [vmem:[#allocation2 + $0x208] sm:$0xff] %vm1095, %v1879
      %v1944 = vld [vmem:[%s1 + $0x68] sm:$0xff]
      %v1945 = vld [vmem:[%s1 + $0x70] sm:$0xff]
      %v1946 = vld [vmem:[%s1 + $0x78] sm:$0xff]
      %v1947 = vld [vmem:[%s1 + $0x80] sm:$0xff]
      %v1948 = vld [vmem:[#allocation2 + $0x7] sm:$0xff]
      %v1949 = vld [vmem:[#allocation2 + $0xf] sm:$0xff]
      %v1950 = vld [vmem:[#allocation2 + $0x17] sm:$0xff]
      %v1951 = vld [vmem:[#allocation2 + $0x1f] sm:$0xff]
      %v1952 = vld [vmem:[#allocation2 + $0x27] sm:$0xff]
      %v1953 = vld [vmem:[#allocation2 + $0x2f] sm:$0xff]
      %v1954 = vld [vmem:[#allocation2 + $0x37] sm:$0xff]
      %v1955 = vld [vmem:[#allocation2 + $0x3f] sm:$0xff]
      %v1956 = vld [vmem:[#allocation2 + $0x47] sm:$0xff]
      %v1957 = vld [vmem:[#allocation2 + $0x4f] sm:$0xff]
      %v1958 = vld [vmem:[#allocation2 + $0x57] sm:$0xff]
      %v1959 = vld [vmem:[#allocation2 + $0x5f] sm:$0xff]
      %v1960 = vld [vmem:[#allocation2 + $0x67] sm:$0xff]
      %v1961 = vld [vmem:[#allocation2 + $0x6f] sm:$0xff]
      %v1962 = vld [vmem:[#allocation2 + $0x77] sm:$0xff]
      %v1963 = vld [vmem:[#allocation2 + $0x7f] sm:$0xff]
      %v1964 = vld [vmem:[#allocation2 + $0x87] sm:$0xff]
      %v1965 = vld [vmem:[#allocation2 + $0x8f] sm:$0xff]
      %v1966 = vld [vmem:[#allocation2 + $0x97] sm:$0xff]
      %v1967 = vld [vmem:[#allocation2 + $0x9f] sm:$0xff]
      %v1968 = vld [vmem:[#allocation2 + $0xa7] sm:$0xff]
      %v1969 = vld [vmem:[#allocation2 + $0xaf] sm:$0xff]
      %v1970 = vld [vmem:[#allocation2 + $0xb7] sm:$0xff]
      %v1971 = vld [vmem:[#allocation2 + $0xbf] sm:$0xff]
      %v1972 = vld [vmem:[#allocation2 + $0xc7] sm:$0xff]
      %v1973 = vld [vmem:[#allocation2 + $0xcf] sm:$0xff]
      %v1974 = vld [vmem:[#allocation2 + $0xd7] sm:$0xff]
      %v1975 = vld [vmem:[#allocation2 + $0xdf] sm:$0xff]
      %v1976 = vld [vmem:[#allocation2 + $0xe7] sm:$0xff]
      %v1977 = vld [vmem:[#allocation2 + $0xef] sm:$0xff]
      %v1978 = vld [vmem:[#allocation2 + $0xf7] sm:$0xff]
      %v1979 = vld [vmem:[#allocation2 + $0xff] sm:$0xff]
      %v1980 = vld [vmem:[#allocation2 + $0x107] sm:$0xff]
      %v1981 = vld [vmem:[#allocation2 + $0x10f] sm:$0xff]
      %v1982 = vld [vmem:[#allocation2 + $0x117] sm:$0xff]
      %v1983 = vld [vmem:[#allocation2 + $0x11f] sm:$0xff]
      %v1984 = vld [vmem:[#allocation2 + $0x127] sm:$0xff]
      %v1985 = vld [vmem:[#allocation2 + $0x12f] sm:$0xff]
      %v1986 = vld [vmem:[#allocation2 + $0x137] sm:$0xff]
      %v1987 = vld [vmem:[#allocation2 + $0x13f] sm:$0xff]
      %v1988 = vld [vmem:[#allocation2 + $0x147] sm:$0xff]
      %v1989 = vld [vmem:[#allocation2 + $0x14f] sm:$0xff]
      %v1990 = vld [vmem:[#allocation2 + $0x157] sm:$0xff]
      %v1991 = vld [vmem:[#allocation2 + $0x15f] sm:$0xff]
      %v1992 = vld [vmem:[#allocation2 + $0x167] sm:$0xff]
      %v1993 = vld [vmem:[#allocation2 + $0x16f] sm:$0xff]
      %v1994 = vld [vmem:[#allocation2 + $0x177] sm:$0xff]
      %v1995 = vld [vmem:[#allocation2 + $0x17f] sm:$0xff]
      %v1996 = vld [vmem:[#allocation2 + $0x187] sm:$0xff]
      %v1997 = vld [vmem:[#allocation2 + $0x18f] sm:$0xff]
      %v1998 = vld [vmem:[#allocation2 + $0x197] sm:$0xff]
      %v1999 = vld [vmem:[#allocation2 + $0x19f] sm:$0xff]
      %v2000 = vld [vmem:[#allocation2 + $0x1a7] sm:$0xff]
      %v2001 = vld [vmem:[#allocation2 + $0x1af] sm:$0xff]
      %v2002 = vld [vmem:[#allocation2 + $0x1b7] sm:$0xff]
      %v2003 = vld [vmem:[#allocation2 + $0x1bf] sm:$0xff]
      %v2004 = vld [vmem:[#allocation2 + $0x1c7] sm:$0xff]
      %v2005 = vld [vmem:[#allocation2 + $0x1cf] sm:$0xff]
      %v2006 = vld [vmem:[#allocation2 + $0x1d7] sm:$0xff]
      %v2007 = vld [vmem:[#allocation2 + $0x1df] sm:$0xff]
      %v2008 = vld [vmem:[#allocation2 + $0x1e7] sm:$0xff]
      %v2009 = vld [vmem:[#allocation2 + $0x1ef] sm:$0xff]
      %v2010 = vld [vmem:[#allocation2 + $0x1f7] sm:$0xff]
      %v2011 = vld [vmem:[#allocation2 + $0x1ff] sm:$0xff]
      %v2012 = vld [vmem:[%s1 + $0x8] sm:$0xff]
      %v2013 = vld [vmem:[%s1 + $0x10] sm:$0xff]
      %v2014 = vld [vmem:[%s1 + $0x18] sm:$0xff]
      %v2015 = vld [vmem:[%s1 + $0x20] sm:$0xff]
      %v2017 = vsel %vm1095, %v1948, 0
      %v2020 = vsel %vm1095, %v1949, 0
      %v2023 = vsel %vm1095, %v1950, 0
      %v2026 = vsel %vm1095, %v1951, 0
      %v2029 = vsel %vm1095, %v1952, 0
      %v2032 = vsel %vm1095, %v1953, 0
      %v2035 = vsel %vm1095, %v1954, 0
      %v2038 = vsel %vm1095, %v1955, 0
      %v2041 = vsel %vm1095, %v1956, 0
      %v2044 = vsel %vm1095, %v1957, 0
      %v2047 = vsel %vm1095, %v1958, 0
      %v2050 = vsel %vm1095, %v1959, 0
      %v2053 = vsel %vm1095, %v1960, 0
      %v2056 = vsel %vm1095, %v1961, 0
      %v2059 = vsel %vm1095, %v1962, 0
      %v2062 = vsel %vm1095, %v1963, 0
      %v2065 = vsel %vm1095, %v1964, 0
      %v2068 = vsel %vm1095, %v1965, 0
      %v2071 = vsel %vm1095, %v1966, 0
      %v2074 = vsel %vm1095, %v1967, 0
      %v2077 = vsel %vm1095, %v1968, 0
      %v2080 = vsel %vm1095, %v1969, 0
      %v2083 = vsel %vm1095, %v1970, 0
      %v2086 = vsel %vm1095, %v1971, 0
      %v2089 = vsel %vm1095, %v1972, 0
      %v2092 = vsel %vm1095, %v1973, 0
      %v2095 = vsel %vm1095, %v1974, 0
      %v2098 = vsel %vm1095, %v1975, 0
      %v2101 = vsel %vm1095, %v1976, 0
      %v2104 = vsel %vm1095, %v1977, 0
      %v2107 = vsel %vm1095, %v1978, 0
      %v2110 = vsel %vm1095, %v1979, 0
      %v2113 = vsel %vm1095, %v1980, 0
      %v2116 = vsel %vm1095, %v1981, 0
      %v2119 = vsel %vm1095, %v1982, 0
      %v2122 = vsel %vm1095, %v1983, 0
      %v2125 = vsel %vm1095, %v1984, 0
      %v2128 = vsel %vm1095, %v1985, 0
      %v2131 = vsel %vm1095, %v1986, 0
      %v2134 = vsel %vm1095, %v1987, 0
      %v2137 = vsel %vm1095, %v1988, 0
      %v2140 = vsel %vm1095, %v1989, 0
      %v2143 = vsel %vm1095, %v1990, 0
      %v2146 = vsel %vm1095, %v1991, 0
      %v2149 = vsel %vm1095, %v1992, 0
      %v2152 = vsel %vm1095, %v1993, 0
      %v2155 = vsel %vm1095, %v1994, 0
      %v2158 = vsel %vm1095, %v1995, 0
      %v2161 = vsel %vm1095, %v1996, 0
      %v2164 = vsel %vm1095, %v1997, 0
      %v2167 = vsel %vm1095, %v1998, 0
      %v2170 = vsel %vm1095, %v1999, 0
      %v2173 = vsel %vm1095, %v2000, 0
      %v2176 = vsel %vm1095, %v2001, 0
      %v2179 = vsel %vm1095, %v2002, 0
      %v2182 = vsel %vm1095, %v2003, 0
      %v2185 = vsel %vm1095, %v2004, 0
      %v2188 = vsel %vm1095, %v2005, 0
      %v2191 = vsel %vm1095, %v2006, 0
      %v2194 = vsel %vm1095, %v2007, 0
      %v2197 = vsel %vm1095, %v2008, 0
      %v2200 = vsel %vm1095, %v2009, 0
      %v2203 = vsel %vm1095, %v2010, 0
      %v2206 = vsel %vm1095, %v2011, 0
      %2208 = vmatprep.subr.mxu0 0.0
      %2209 = vmatpush1.msra.mxu0 %v2012
      %2210 = vmatprep.subr.mxu0 0.0
      %2211 = vmatpush1.msra.mxu0 %v2013
      %2212 = vmatprep.subr.mxu0 0.0
      %2213 = vmatpush1.msra.mxu0 %v2014
      %2214 = vmatprep.subr.mxu0 0.0
      %2215 = vmatpush1.msra.mxu0 %v2015
      %2216 = vmatprep.subr.mxu0 0.0
      %2217 = vmatpush1.msra.mxu0 0.0
      %2218 = vmatprep.subr.mxu0 0.0
      %2219 = vmatpush1.msra.mxu0 0.0
      %2220 = vmatprep.subr.mxu0 0.0
      %2221 = vmatpush1.msra.mxu0 0.0
      %2222 = vmatprep.subr.mxu0 0.0
      %2223 = vmatpush1.msra.mxu0 0.0
      %2224 = vmatprep.subr.mxu0 0.0
      %2225 = vmatpush1.msra.mxu0 0.0
      %2226 = vmatprep.subr.mxu0 0.0
      %2227 = vmatpush1.msra.mxu0 0.0
      %2228 = vmatprep.subr.mxu0 0.0
      %2229 = vmatpush1.msra.mxu0 0.0
      %2230 = vmatprep.subr.mxu0 0.0
      %2231 = vmatpush1.msra.mxu0 0.0
      %2232 = vmatprep.subr.mxu0 0.0
      %2233 = vmatpush1.msra.mxu0 0.0
      %2234 = vmatprep.subr.mxu0 0.0
      %2235 = vmatpush1.msra.mxu0 0.0
      %2236 = vmatprep.subr.mxu0 0.0
      %2237 = vmatpush1.msra.mxu0 0.0
      %2238 = vmatprep.subr.mxu0 0.0
      %2239 = vmatpush1.msra.mxu0 0.0
      %2240 = vmatprep.subr.mxu0 0.0
      %2241 = vmatpush1.msra.mxu0 0.0
      %2242 = vmatprep.subr.mxu0 0.0
      %2243 = vmatpush1.msra.mxu0 0.0
      %2244 = vmatprep.subr.mxu0 0.0
      %2245 = vmatpush1.msra.mxu0 0.0
      %2246 = vmatprep.subr.mxu0 0.0
      %2247 = vmatpush1.msra.mxu0 0.0
      %2248 = vmatprep.subr.mxu0 0.0
      %2249 = vmatpush1.msra.mxu0 0.0
      %2250 = vmatprep.subr.mxu0 0.0
      %2251 = vmatpush1.msra.mxu0 0.0
      %2252 = vmatprep.subr.mxu0 0.0
      %2253 = vmatpush1.msra.mxu0 0.0
      %2254 = vmatprep.subr.mxu0 0.0
      %2255 = vmatpush1.msra.mxu0 0.0
      %2256 = vmatprep.subr.mxu0 0.0
      %2257 = vmatpush1.msra.mxu0 0.0
      %2258 = vmatprep.subr.mxu0 0.0
      %2259 = vmatpush1.msra.mxu0 0.0
      %2260 = vmatprep.subr.mxu0 0.0
      %2261 = vmatpush1.msra.mxu0 0.0
      %2262 = vmatprep.subr.mxu0 0.0
      %2263 = vmatpush1.msra.mxu0 0.0
      %2264 = vmatprep.subr.mxu0 0.0
      %2265 = vmatpush1.msra.mxu0 0.0
      %2266 = vmatprep.subr.mxu0 0.0
      %2267 = vmatpush1.msra.mxu0 0.0
      %2268 = vmatprep.subr.mxu0 0.0
      %2269 = vmatpush1.msra.mxu0 0.0
      %2270 = vmatprep.subr.mxu0 0.0
      %2271 = vmatpush1.msra.mxu0 0.0
      %2272 = vmatprep.mubr.f32.mxu0 0.0
      %2273 = vmatmul.mubr.f32.gmra.mrb[0].mxu0 %v2017
      %v2274 = vpop.f32.mrb[0].mxu0
      %v2275 = vadd.f32 0.0, %v2274
      %v2276 = vpop.f32.mrb[0].mxu0
      %2277 = vmatprep.mubr.f32.mxu0 0.0
      %2278 = vmatmul.mubr.f32.gmra.mrb[0].mxu0 %v2020
      %v2279 = vpop.f32.mrb[0].mxu0
      %v2280 = vadd.f32 0.0, %v2279
      %v2281 = vpop.f32.mrb[0].mxu0
      %2282 = vmatprep.mubr.f32.mxu0 0.0
      %2283 = vmatmul.mubr.f32.gmra.mrb[0].mxu0 %v2023
      %v2284 = vpop.f32.mrb[0].mxu0
      %v2285 = vadd.f32 0.0, %v2284
      %v2286 = vpop.f32.mrb[0].mxu0
      %2287 = vmatprep.mubr.f32.mxu0 0.0
      %2288 = vmatmul.mubr.f32.gmra.mrb[0].mxu0 %v2026
      %v2289 = vpop.f32.mrb[0].mxu0
      %v2290 = vadd.f32 0.0, %v2289
      %v2291 = vpop.f32.mrb[0].mxu0
      %2292 = vmatprep.mubr.f32.mxu0 0.0
      %2293 = vmatmul.mubr.f32.gmra.mrb[0].mxu0 %v2029
      %v2294 = vpop.f32.mrb[0].mxu0
      %v2295 = vadd.f32 0.0, %v2294
      %v2296 = vpop.f32.mrb[0].mxu0
      %2297 = vmatprep.mubr.f32.mxu0 0.0
      %2298 = vmatmul.mubr.f32.gmra.mrb[0].mxu0 %v2032
      %v2299 = vpop.f32.mrb[0].mxu0
      %v2300 = vadd.f32 0.0, %v2299
      %v2301 = vpop.f32.mrb[0].mxu0
      %2302 = vmatprep.mubr.f32.mxu0 0.0
      %2303 = vmatmul.mubr.f32.gmra.mrb[0].mxu0 %v2035
      %v2304 = vpop.f32.mrb[0].mxu0
      %v2305 = vadd.f32 0.0, %v2304
      %v2306 = vpop.f32.mrb[0].mxu0
      %2307 = vmatprep.mubr.f32.mxu0 0.0
      %2308 = vmatmul.mubr.f32.gmra.mrb[0].mxu0 %v2038
      %v2309 = vpop.f32.mrb[0].mxu0
      %v2310 = vadd.f32 0.0, %v2309
      %v2311 = vpop.f32.mrb[0].mxu0
      %2312 = vmatprep.mubr.f32.mxu0 0.0
      %2313 = vmatmul.mubr.f32.gmra.mrb[0].mxu0 %v2041
      %v2314 = vpop.f32.mrb[0].mxu0
      %v2315 = vadd.f32 0.0, %v2314
      %v2316 = vpop.f32.mrb[0].mxu0
      %2317 = vmatprep.mubr.f32.mxu0 0.0
      %2318 = vmatmul.mubr.f32.gmra.mrb[0].mxu0 %v2044
      %v2319 = vpop.f32.mrb[0].mxu0
      %v2320 = vadd.f32 0.0, %v2319
      %v2321 = vpop.f32.mrb[0].mxu0
      %2322 = vmatprep.mubr.f32.mxu0 0.0
      %2323 = vmatmul.mubr.f32.gmra.mrb[0].mxu0 %v2047
      %v2324 = vpop.f32.mrb[0].mxu0
      %v2325 = vadd.f32 0.0, %v2324
      %v2326 = vpop.f32.mrb[0].mxu0
      %2327 = vmatprep.mubr.f32.mxu0 0.0
      %2328 = vmatmul.mubr.f32.gmra.mrb[0].mxu0 %v2050
      %v2329 = vpop.f32.mrb[0].mxu0
      %v2330 = vadd.f32 0.0, %v2329
      %v2331 = vpop.f32.mrb[0].mxu0
      %2332 = vmatprep.mubr.f32.mxu0 0.0
      %2333 = vmatmul.mubr.f32.gmra.mrb[0].mxu0 %v2053
      %v2334 = vpop.f32.mrb[0].mxu0
      %v2335 = vadd.f32 0.0, %v2334
      %v2336 = vpop.f32.mrb[0].mxu0
      %2337 = vmatprep.mubr.f32.mxu0 0.0
      %2338 = vmatmul.mubr.f32.gmra.mrb[0].mxu0 %v2056
      %v2339 = vpop.f32.mrb[0].mxu0
      %v2340 = vadd.f32 0.0, %v2339
      %v2341 = vpop.f32.mrb[0].mxu0
      %2342 = vmatprep.mubr.f32.mxu0 0.0
      %2343 = vmatmul.mubr.f32.gmra.mrb[0].mxu0 %v2059
      %v2344 = vpop.f32.mrb[0].mxu0
      %v2345 = vadd.f32 0.0, %v2344
      %v2346 = vpop.f32.mrb[0].mxu0
      %2347 = vmatprep.mubr.f32.mxu0 0.0
      %2348 = vmatmul.mubr.f32.gmra.mrb[0].mxu0 %v2062
      %v2349 = vpop.f32.mrb[0].mxu0
      %v2350 = vadd.f32 0.0, %v2349
      %v2351 = vpop.f32.mrb[0].mxu0
      %2352 = vmatprep.mubr.f32.mxu0 0.0
      %2353 = vmatmul.mubr.f32.gmra.mrb[0].mxu0 %v2065
      %v2354 = vpop.f32.mrb[0].mxu0
      %v2355 = vadd.f32 0.0, %v2354
      %v2356 = vpop.f32.mrb[0].mxu0
      %2357 = vmatprep.mubr.f32.mxu0 0.0
      %2358 = vmatmul.mubr.f32.gmra.mrb[0].mxu0 %v2068
      %v2359 = vpop.f32.mrb[0].mxu0
      %v2360 = vadd.f32 0.0, %v2359
      %v2361 = vpop.f32.mrb[0].mxu0
      %2362 = vmatprep.mubr.f32.mxu0 0.0
      %2363 = vmatmul.mubr.f32.gmra.mrb[0].mxu0 %v2071
      %v2364 = vpop.f32.mrb[0].mxu0
      %v2365 = vadd.f32 0.0, %v2364
      %v2366 = vpop.f32.mrb[0].mxu0
      %2367 = vmatprep.mubr.f32.mxu0 0.0
      %2368 = vmatmul.mubr.f32.gmra.mrb[0].mxu0 %v2074
      %v2369 = vpop.f32.mrb[0].mxu0
      %v2370 = vadd.f32 0.0, %v2369
      %v2371 = vpop.f32.mrb[0].mxu0
      %2372 = vmatprep.mubr.f32.mxu0 0.0
      %2373 = vmatmul.mubr.f32.gmra.mrb[0].mxu0 %v2077
      %v2374 = vpop.f32.mrb[0].mxu0
      %v2375 = vadd.f32 0.0, %v2374
      %v2376 = vpop.f32.mrb[0].mxu0
      %2377 = vmatprep.mubr.f32.mxu0 0.0
      %2378 = vmatmul.mubr.f32.gmra.mrb[0].mxu0 %v2080
      %v2379 = vpop.f32.mrb[0].mxu0
      %v2380 = vadd.f32 0.0, %v2379
      %v2381 = vpop.f32.mrb[0].mxu0
      %2382 = vmatprep.mubr.f32.mxu0 0.0
      %2383 = vmatmul.mubr.f32.gmra.mrb[0].mxu0 %v2083
      %v2384 = vpop.f32.mrb[0].mxu0
      %v2385 = vadd.f32 0.0, %v2384
      %v2386 = vpop.f32.mrb[0].mxu0
      %2387 = vmatprep.mubr.f32.mxu0 0.0
      %2388 = vmatmul.mubr.f32.gmra.mrb[0].mxu0 %v2086
      %v2389 = vpop.f32.mrb[0].mxu0
      %v2390 = vadd.f32 0.0, %v2389
      %v2391 = vpop.f32.mrb[0].mxu0
      %2392 = vmatprep.mubr.f32.mxu0 0.0
      %2393 = vmatmul.mubr.f32.gmra.mrb[0].mxu0 %v2089
      %v2394 = vpop.f32.mrb[0].mxu0
      %v2395 = vadd.f32 0.0, %v2394
      %v2396 = vpop.f32.mrb[0].mxu0
      %2397 = vmatprep.mubr.f32.mxu0 0.0
      %2398 = vmatmul.mubr.f32.gmra.mrb[0].mxu0 %v2092
      %v2399 = vpop.f32.mrb[0].mxu0
      %v2400 = vadd.f32 0.0, %v2399
      %v2401 = vpop.f32.mrb[0].mxu0
      %2402 = vmatprep.mubr.f32.mxu0 0.0
      %2403 = vmatmul.mubr.f32.gmra.mrb[0].mxu0 %v2095
      %v2404 = vpop.f32.mrb[0].mxu0
      %v2405 = vadd.f32 0.0, %v2404
      %v2406 = vpop.f32.mrb[0].mxu0
      %2407 = vmatprep.mubr.f32.mxu0 0.0
      %2408 = vmatmul.mubr.f32.gmra.mrb[0].mxu0 %v2098
      %v2409 = vpop.f32.mrb[0].mxu0
      %v2410 = vadd.f32 0.0, %v2409
      %v2411 = vpop.f32.mrb[0].mxu0
      %2412 = vmatprep.mubr.f32.mxu0 0.0
      %2413 = vmatmul.mubr.f32.gmra.mrb[0].mxu0 %v2101
      %v2414 = vpop.f32.mrb[0].mxu0
      %v2415 = vadd.f32 0.0, %v2414
      %v2416 = vpop.f32.mrb[0].mxu0
      %2417 = vmatprep.mubr.f32.mxu0 0.0
      %2418 = vmatmul.mubr.f32.gmra.mrb[0].mxu0 %v2104
      %v2419 = vpop.f32.mrb[0].mxu0
      %v2420 = vadd.f32 0.0, %v2419
      %v2421 = vpop.f32.mrb[0].mxu0
      %2422 = vmatprep.mubr.f32.mxu0 0.0
      %2423 = vmatmul.mubr.f32.gmra.mrb[0].mxu0 %v2107
      %v2424 = vpop.f32.mrb[0].mxu0
      %v2425 = vadd.f32 0.0, %v2424
      %v2426 = vpop.f32.mrb[0].mxu0
      %2427 = vmatprep.mubr.f32.mxu0 0.0
      %2428 = vmatmul.mubr.f32.gmra.mrb[0].mxu0 %v2110
      %v2429 = vpop.f32.mrb[0].mxu0
      %v2430 = vadd.f32 0.0, %v2429
      %v2431 = vpop.f32.mrb[0].mxu0
      %2432 = vmatprep.mubr.f32.mxu0 0.0
      %2433 = vmatmul.mubr.f32.gmra.mrb[0].mxu0 %v2113
      %v2434 = vpop.f32.mrb[0].mxu0
      %v2435 = vadd.f32 0.0, %v2434
      %v2436 = vpop.f32.mrb[0].mxu0
      %2437 = vmatprep.mubr.f32.mxu0 0.0
      %2438 = vmatmul.mubr.f32.gmra.mrb[0].mxu0 %v2116
      %v2439 = vpop.f32.mrb[0].mxu0
      %v2440 = vadd.f32 0.0, %v2439
      %v2441 = vpop.f32.mrb[0].mxu0
      %2442 = vmatprep.mubr.f32.mxu0 0.0
      %2443 = vmatmul.mubr.f32.gmra.mrb[0].mxu0 %v2119
      %v2444 = vpop.f32.mrb[0].mxu0
      %v2445 = vadd.f32 0.0, %v2444
      %v2446 = vpop.f32.mrb[0].mxu0
      %2447 = vmatprep.mubr.f32.mxu0 0.0
      %2448 = vmatmul.mubr.f32.gmra.mrb[0].mxu0 %v2122
      %v2449 = vpop.f32.mrb[0].mxu0
      %v2450 = vadd.f32 0.0, %v2449
      %v2451 = vpop.f32.mrb[0].mxu0
      %2452 = vmatprep.mubr.f32.mxu0 0.0
      %2453 = vmatmul.mubr.f32.gmra.mrb[0].mxu0 %v2125
      %v2454 = vpop.f32.mrb[0].mxu0
      %v2455 = vadd.f32 0.0, %v2454
      %v2456 = vpop.f32.mrb[0].mxu0
      %2457 = vmatprep.mubr.f32.mxu0 0.0
      %2458 = vmatmul.mubr.f32.gmra.mrb[0].mxu0 %v2128
      %v2459 = vpop.f32.mrb[0].mxu0
      %v2460 = vadd.f32 0.0, %v2459
      %v2461 = vpop.f32.mrb[0].mxu0
      %2462 = vmatprep.mubr.f32.mxu0 0.0
      %2463 = vmatmul.mubr.f32.gmra.mrb[0].mxu0 %v2131
      %v2464 = vpop.f32.mrb[0].mxu0
      %v2465 = vadd.f32 0.0, %v2464
      %v2466 = vpop.f32.mrb[0].mxu0
      %2467 = vmatprep.mubr.f32.mxu0 0.0
      %2468 = vmatmul.mubr.f32.gmra.mrb[0].mxu0 %v2134
      %v2469 = vpop.f32.mrb[0].mxu0
      %v2470 = vadd.f32 0.0, %v2469
      %v2471 = vpop.f32.mrb[0].mxu0
      %2472 = vmatprep.mubr.f32.mxu0 0.0
      %2473 = vmatmul.mubr.f32.gmra.mrb[0].mxu0 %v2137
      %v2474 = vpop.f32.mrb[0].mxu0
      %v2475 = vadd.f32 0.0, %v2474
      %v2476 = vpop.f32.mrb[0].mxu0
      %2477 = vmatprep.mubr.f32.mxu0 0.0
      %2478 = vmatmul.mubr.f32.gmra.mrb[0].mxu0 %v2140
      %v2479 = vpop.f32.mrb[0].mxu0
      %v2480 = vadd.f32 0.0, %v2479
      %v2481 = vpop.f32.mrb[0].mxu0
      %2482 = vmatprep.mubr.f32.mxu0 0.0
      %2483 = vmatmul.mubr.f32.gmra.mrb[0].mxu0 %v2143
      %v2484 = vpop.f32.mrb[0].mxu0
      %v2485 = vadd.f32 0.0, %v2484
      %v2486 = vpop.f32.mrb[0].mxu0
      %2487 = vmatprep.mubr.f32.mxu0 0.0
      %2488 = vmatmul.mubr.f32.gmra.mrb[0].mxu0 %v2146
      %v2489 = vpop.f32.mrb[0].mxu0
      %v2490 = vadd.f32 0.0, %v2489
      %v2491 = vpop.f32.mrb[0].mxu0
      %2492 = vmatprep.mubr.f32.mxu0 0.0
      %2493 = vmatmul.mubr.f32.gmra.mrb[0].mxu0 %v2149
      %v2494 = vpop.f32.mrb[0].mxu0
      %v2495 = vadd.f32 0.0, %v2494
      %v2496 = vpop.f32.mrb[0].mxu0
      %2497 = vmatprep.mubr.f32.mxu0 0.0
      %2498 = vmatmul.mubr.f32.gmra.mrb[0].mxu0 %v2152
      %v2499 = vpop.f32.mrb[0].mxu0
      %v2500 = vadd.f32 0.0, %v2499
      %v2501 = vpop.f32.mrb[0].mxu0
      %2502 = vmatprep.mubr.f32.mxu0 0.0
      %2503 = vmatmul.mubr.f32.gmra.mrb[0].mxu0 %v2155
      %v2504 = vpop.f32.mrb[0].mxu0
      %v2505 = vadd.f32 0.0, %v2504
      %v2506 = vpop.f32.mrb[0].mxu0
      %2507 = vmatprep.mubr.f32.mxu0 0.0
      %2508 = vmatmul.mubr.f32.gmra.mrb[0].mxu0 %v2158
      %v2509 = vpop.f32.mrb[0].mxu0
      %v2510 = vadd.f32 0.0, %v2509
      %v2511 = vpop.f32.mrb[0].mxu0
      %2512 = vmatprep.mubr.f32.mxu0 0.0
      %2513 = vmatmul.mubr.f32.gmra.mrb[0].mxu0 %v2161
      %v2514 = vpop.f32.mrb[0].mxu0
      %v2515 = vadd.f32 0.0, %v2514
      %v2516 = vpop.f32.mrb[0].mxu0
      %2517 = vmatprep.mubr.f32.mxu0 0.0
      %2518 = vmatmul.mubr.f32.gmra.mrb[0].mxu0 %v2164
      %v2519 = vpop.f32.mrb[0].mxu0
      %v2520 = vadd.f32 0.0, %v2519
      %v2521 = vpop.f32.mrb[0].mxu0
      %2522 = vmatprep.mubr.f32.mxu0 0.0
      %2523 = vmatmul.mubr.f32.gmra.mrb[0].mxu0 %v2167
      %v2524 = vpop.f32.mrb[0].mxu0
      %v2525 = vadd.f32 0.0, %v2524
      %v2526 = vpop.f32.mrb[0].mxu0
      %2527 = vmatprep.mubr.f32.mxu0 0.0
      %2528 = vmatmul.mubr.f32.gmra.mrb[0].mxu0 %v2170
      %v2529 = vpop.f32.mrb[0].mxu0
      %v2530 = vadd.f32 0.0, %v2529
      %v2531 = vpop.f32.mrb[0].mxu0
      %2532 = vmatprep.mubr.f32.mxu0 0.0
      %2533 = vmatmul.mubr.f32.gmra.mrb[0].mxu0 %v2173
      %v2534 = vpop.f32.mrb[0].mxu0
      %v2535 = vadd.f32 0.0, %v2534
      %v2536 = vpop.f32.mrb[0].mxu0
      %2537 = vmatprep.mubr.f32.mxu0 0.0
      %2538 = vmatmul.mubr.f32.gmra.mrb[0].mxu0 %v2176
      %v2539 = vpop.f32.mrb[0].mxu0
      %v2540 = vadd.f32 0.0, %v2539
      %v2541 = vpop.f32.mrb[0].mxu0
      %2542 = vmatprep.mubr.f32.mxu0 0.0
      %2543 = vmatmul.mubr.f32.gmra.mrb[0].mxu0 %v2179
      %v2544 = vpop.f32.mrb[0].mxu0
      %v2545 = vadd.f32 0.0, %v2544
      %v2546 = vpop.f32.mrb[0].mxu0
      %2547 = vmatprep.mubr.f32.mxu0 0.0
      %2548 = vmatmul.mubr.f32.gmra.mrb[0].mxu0 %v2182
      %v2549 = vpop.f32.mrb[0].mxu0
      %v2550 = vadd.f32 0.0, %v2549
      %v2551 = vpop.f32.mrb[0].mxu0
      %2552 = vmatprep.mubr.f32.mxu0 0.0
      %2553 = vmatmul.mubr.f32.gmra.mrb[0].mxu0 %v2185
      %v2554 = vpop.f32.mrb[0].mxu0
      %v2555 = vadd.f32 0.0, %v2554
      %v2556 = vpop.f32.mrb[0].mxu0
      %2557 = vmatprep.mubr.f32.mxu0 0.0
      %2558 = vmatmul.mubr.f32.gmra.mrb[0].mxu0 %v2188
      %v2559 = vpop.f32.mrb[0].mxu0
      %v2560 = vadd.f32 0.0, %v2559
      %v2561 = vpop.f32.mrb[0].mxu0
      %2562 = vmatprep.mubr.f32.mxu0 0.0
      %2563 = vmatmul.mubr.f32.gmra.mrb[0].mxu0 %v2191
      %v2564 = vpop.f32.mrb[0].mxu0
      %v2565 = vadd.f32 0.0, %v2564
      %v2566 = vpop.f32.mrb[0].mxu0
      %2567 = vmatprep.mubr.f32.mxu0 0.0
      %2568 = vmatmul.mubr.f32.gmra.mrb[0].mxu0 %v2194
      %v2569 = vpop.f32.mrb[0].mxu0
      %v2570 = vadd.f32 0.0, %v2569
      %v2571 = vpop.f32.mrb[0].mxu0
      %2572 = vmatprep.mubr.f32.mxu0 0.0
      %2573 = vmatmul.mubr.f32.gmra.mrb[0].mxu0 %v2197
      %v2574 = vpop.f32.mrb[0].mxu0
      %v2575 = vadd.f32 0.0, %v2574
      %v2576 = vpop.f32.mrb[0].mxu0
      %2577 = vmatprep.mubr.f32.mxu0 0.0
      %2578 = vmatmul.mubr.f32.gmra.mrb[0].mxu0 %v2200
      %v2579 = vpop.f32.mrb[0].mxu0
      %v2580 = vadd.f32 0.0, %v2579
      %v2581 = vpop.f32.mrb[0].mxu0
      %2582 = vmatprep.mubr.f32.mxu0 0.0
      %2583 = vmatmul.mubr.f32.gmra.mrb[0].mxu0 %v2203
      %v2584 = vpop.f32.mrb[0].mxu0
      %v2585 = vadd.f32 0.0, %v2584
      %v2586 = vpop.f32.mrb[0].mxu0
      %2587 = vmatprep.mubr.f32.mxu0 0.0
      %2588 = vmatmul.mubr.f32.gmra.mrb[0].mxu0 %v2206
      %v2589 = vpop.f32.mrb[0].mxu0
      %v2590 = vadd.f32 0.0, %v2589
      %v2591 = vpop.f32.mrb[0].mxu0
      %2592 = vdwg.mxu0
      %v2594 = vsel %vm1095, %v1816, 0
      %v2597 = vsel %vm1095, %v1817, 0
      %v2600 = vsel %vm1095, %v1818, 0
      %v2603 = vsel %vm1095, %v1819, 0
      %v2606 = vsel %vm1095, %v1820, 0
      %v2609 = vsel %vm1095, %v1821, 0
      %v2612 = vsel %vm1095, %v1822, 0
      %v2615 = vsel %vm1095, %v1823, 0
      %v2618 = vsel %vm1095, %v1824, 0
      %v2621 = vsel %vm1095, %v1825, 0
      %v2624 = vsel %vm1095, %v1826, 0
      %v2627 = vsel %vm1095, %v1827, 0
      %v2630 = vsel %vm1095, %v1828, 0
      %v2633 = vsel %vm1095, %v1829, 0
      %v2636 = vsel %vm1095, %v1830, 0
      %v2639 = vsel %vm1095, %v1831, 0
      %v2642 = vsel %vm1095, %v1832, 0
      %v2645 = vsel %vm1095, %v1833, 0
      %v2648 = vsel %vm1095, %v1834, 0
      %v2651 = vsel %vm1095, %v1835, 0
      %v2654 = vsel %vm1095, %v1836, 0
      %v2657 = vsel %vm1095, %v1837, 0
      %v2660 = vsel %vm1095, %v1838, 0
      %v2663 = vsel %vm1095, %v1839, 0
      %v2666 = vsel %vm1095, %v1840, 0
      %v2669 = vsel %vm1095, %v1841, 0
      %v2672 = vsel %vm1095, %v1842, 0
      %v2675 = vsel %vm1095, %v1843, 0
      %v2678 = vsel %vm1095, %v1844, 0
      %v2681 = vsel %vm1095, %v1845, 0
      %v2684 = vsel %vm1095, %v1846, 0
      %v2687 = vsel %vm1095, %v1847, 0
      %v2690 = vsel %vm1095, %v1848, 0
      %v2693 = vsel %vm1095, %v1849, 0
      %v2696 = vsel %vm1095, %v1850, 0
      %v2699 = vsel %vm1095, %v1851, 0
      %v2702 = vsel %vm1095, %v1852, 0
      %v2705 = vsel %vm1095, %v1853, 0
      %v2708 = vsel %vm1095, %v1854, 0
      %v2711 = vsel %vm1095, %v1855, 0
      %v2714 = vsel %vm1095, %v1856, 0
      %v2717 = vsel %vm1095, %v1857, 0
      %v2720 = vsel %vm1095, %v1858, 0
      %v2723 = vsel %vm1095, %v1859, 0
      %v2726 = vsel %vm1095, %v1860, 0
      %v2729 = vsel %vm1095, %v1861, 0
      %v2732 = vsel %vm1095, %v1862, 0
      %v2735 = vsel %vm1095, %v1863, 0
      %v2738 = vsel %vm1095, %v1864, 0
      %v2741 = vsel %vm1095, %v1865, 0
      %v2744 = vsel %vm1095, %v1866, 0
      %v2747 = vsel %vm1095, %v1867, 0
      %v2750 = vsel %vm1095, %v1868, 0
      %v2753 = vsel %vm1095, %v1869, 0
      %v2756 = vsel %vm1095, %v1870, 0
      %v2759 = vsel %vm1095, %v1871, 0
      %v2762 = vsel %vm1095, %v1872, 0
      %v2765 = vsel %vm1095, %v1873, 0
      %v2768 = vsel %vm1095, %v1874, 0
      %v2771 = vsel %vm1095, %v1875, 0
      %v2774 = vsel %vm1095, %v1876, 0
      %v2777 = vsel %vm1095, %v1877, 0
      %v2780 = vsel %vm1095, %v1878, 0
      %v2783 = vsel %vm1095, %v1879, 0
      %2785 = vmatprep.subr.mxu0 0.0
      %2786 = vmatpush1.msra.mxu0 %v1944
      %2787 = vmatprep.subr.mxu0 0.0
      %2788 = vmatpush1.msra.mxu0 %v1945
      %2789 = vmatprep.subr.mxu0 0.0
      %2790 = vmatpush1.msra.mxu0 %v1946
      %2791 = vmatprep.subr.mxu0 0.0
      %2792 = vmatpush1.msra.mxu0 %v1947
      %2793 = vmatprep.subr.mxu0 0.0
      %2794 = vmatpush1.msra.mxu0 0.0
      %2795 = vmatprep.subr.mxu0 0.0
      %2796 = vmatpush1.msra.mxu0 0.0
      %2797 = vmatprep.subr.mxu0 0.0
      %2798 = vmatpush1.msra.mxu0 0.0
      %2799 = vmatprep.subr.mxu0 0.0
      %2800 = vmatpush1.msra.mxu0 0.0
      %2801 = vmatprep.subr.mxu0 0.0
      %2802 = vmatpush1.msra.mxu0 0.0
      %2803 = vmatprep.subr.mxu0 0.0
      %2804 = vmatpush1.msra.mxu0 0.0
      %2805 = vmatprep.subr.mxu0 0.0
      %2806 = vmatpush1.msra.mxu0 0.0
      %2807 = vmatprep.subr.mxu0 0.0
      %2808 = vmatpush1.msra.mxu0 0.0
      %2809 = vmatprep.subr.mxu0 0.0
      %2810 = vmatpush1.msra.mxu0 0.0
      %2811 = vmatprep.subr.mxu0 0.0
      %2812 = vmatpush1.msra.mxu0 0.0
      %2813 = vmatprep.subr.mxu0 0.0
      %2814 = vmatpush1.msra.mxu0 0.0
      %2815 = vmatprep.subr.mxu0 0.0
      %2816 = vmatpush1.msra.mxu0 0.0
      %2817 = vmatprep.subr.mxu0 0.0
      %2818 = vmatpush1.msra.mxu0 0.0
      %2819 = vmatprep.subr.mxu0 0.0
      %2820 = vmatpush1.msra.mxu0 0.0
      %2821 = vmatprep.subr.mxu0 0.0
      %2822 = vmatpush1.msra.mxu0 0.0
      %2823 = vmatprep.subr.mxu0 0.0
      %2824 = vmatpush1.msra.mxu0 0.0
      %2825 = vmatprep.subr.mxu0 0.0
      %2826 = vmatpush1.msra.mxu0 0.0
      %2827 = vmatprep.subr.mxu0 0.0
      %2828 = vmatpush1.msra.mxu0 0.0
      %2829 = vmatprep.subr.mxu0 0.0
      %2830 = vmatpush1.msra.mxu0 0.0
      %2831 = vmatprep.subr.mxu0 0.0
      %2832 = vmatpush1.msra.mxu0 0.0
      %2833 = vmatprep.subr.mxu0 0.0
      %2834 = vmatpush1.msra.mxu0 0.0
      %2835 = vmatprep.subr.mxu0 0.0
      %2836 = vmatpush1.msra.mxu0 0.0
      %2837 = vmatprep.subr.mxu0 0.0
      %2838 = vmatpush1.msra.mxu0 0.0
      %2839 = vmatprep.subr.mxu0 0.0
      %2840 = vmatpush1.msra.mxu0 0.0
      %2841 = vmatprep.subr.mxu0 0.0
      %2842 = vmatpush1.msra.mxu0 0.0
      %2843 = vmatprep.subr.mxu0 0.0
      %2844 = vmatpush1.msra.mxu0 0.0
      %2845 = vmatprep.subr.mxu0 0.0
      %2846 = vmatpush1.msra.mxu0 0.0
      %2847 = vmatprep.subr.mxu0 0.0
      %2848 = vmatpush1.msra.mxu0 0.0
      %2849 = vmatprep.mubr.f32.mxu0 0.0
      %2850 = vmatmul.mubr.f32.gmra.mrb[0].mxu0 %v2594
      %v2851 = vpop.f32.mrb[0].mxu0
      %v2852 = vadd.f32 %v2275, %v2851
      %v2853 = vpop.f32.mrb[0].mxu0
      %2854 = vmatprep.mubr.f32.mxu0 0.0
      %2855 = vmatmul.mubr.f32.gmra.mrb[0].mxu0 %v2597
      %v2856 = vpop.f32.mrb[0].mxu0
      %v2857 = vadd.f32 %v2280, %v2856
      %v2858 = vpop.f32.mrb[0].mxu0
      %2859 = vmatprep.mubr.f32.mxu0 0.0
      %2860 = vmatmul.mubr.f32.gmra.mrb[0].mxu0 %v2600
      %v2861 = vpop.f32.mrb[0].mxu0
      %v2862 = vadd.f32 %v2285, %v2861
      %v2863 = vpop.f32.mrb[0].mxu0
      %2864 = vmatprep.mubr.f32.mxu0 0.0
      %2865 = vmatmul.mubr.f32.gmra.mrb[0].mxu0 %v2603
      %v2866 = vpop.f32.mrb[0].mxu0
      %v2867 = vadd.f32 %v2290, %v2866
      %v2868 = vpop.f32.mrb[0].mxu0
      %2869 = vmatprep.mubr.f32.mxu0 0.0
      %2870 = vmatmul.mubr.f32.gmra.mrb[0].mxu0 %v2606
      %v2871 = vpop.f32.mrb[0].mxu0
      %v2872 = vadd.f32 %v2295, %v2871
      %v2873 = vpop.f32.mrb[0].mxu0
      %2874 = vmatprep.mubr.f32.mxu0 0.0
      %2875 = vmatmul.mubr.f32.gmra.mrb[0].mxu0 %v2609
      %v2876 = vpop.f32.mrb[0].mxu0
      %v2877 = vadd.f32 %v2300, %v2876
      %v2878 = vpop.f32.mrb[0].mxu0
      %2879 = vmatprep.mubr.f32.mxu0 0.0
      %2880 = vmatmul.mubr.f32.gmra.mrb[0].mxu0 %v2612
      %v2881 = vpop.f32.mrb[0].mxu0
      %v2882 = vadd.f32 %v2305, %v2881
      %v2883 = vpop.f32.mrb[0].mxu0
      %2884 = vmatprep.mubr.f32.mxu0 0.0
      %2885 = vmatmul.mubr.f32.gmra.mrb[0].mxu0 %v2615
      %v2886 = vpop.f32.mrb[0].mxu0
      %v2887 = vadd.f32 %v2310, %v2886
      %v2888 = vpop.f32.mrb[0].mxu0
      %2889 = vmatprep.mubr.f32.mxu0 0.0
      %2890 = vmatmul.mubr.f32.gmra.mrb[0].mxu0 %v2618
      %v2891 = vpop.f32.mrb[0].mxu0
      %v2892 = vadd.f32 %v2315, %v2891
      %v2893 = vpop.f32.mrb[0].mxu0
      %2894 = vmatprep.mubr.f32.mxu0 0.0
      %2895 = vmatmul.mubr.f32.gmra.mrb[0].mxu0 %v2621
      %v2896 = vpop.f32.mrb[0].mxu0
      %v2897 = vadd.f32 %v2320, %v2896
      %v2898 = vpop.f32.mrb[0].mxu0
      %2899 = vmatprep.mubr.f32.mxu0 0.0
      %2900 = vmatmul.mubr.f32.gmra.mrb[0].mxu0 %v2624
      %v2901 = vpop.f32.mrb[0].mxu0
      %v2902 = vadd.f32 %v2325, %v2901
      %v2903 = vpop.f32.mrb[0].mxu0
      %2904 = vmatprep.mubr.f32.mxu0 0.0
      %2905 = vmatmul.mubr.f32.gmra.mrb[0].mxu0 %v2627
      %v2906 = vpop.f32.mrb[0].mxu0
      %v2907 = vadd.f32 %v2330, %v2906
      %v2908 = vpop.f32.mrb[0].mxu0
      %2909 = vmatprep.mubr.f32.mxu0 0.0
      %2910 = vmatmul.mubr.f32.gmra.mrb[0].mxu0 %v2630
      %v2911 = vpop.f32.mrb[0].mxu0
      %v2912 = vadd.f32 %v2335, %v2911
      %v2913 = vpop.f32.mrb[0].mxu0
      %2914 = vmatprep.mubr.f32.mxu0 0.0
      %2915 = vmatmul.mubr.f32.gmra.mrb[0].mxu0 %v2633
      %v2916 = vpop.f32.mrb[0].mxu0
      %v2917 = vadd.f32 %v2340, %v2916
      %v2918 = vpop.f32.mrb[0].mxu0
      %2919 = vmatprep.mubr.f32.mxu0 0.0
      %2920 = vmatmul.mubr.f32.gmra.mrb[0].mxu0 %v2636
      %v2921 = vpop.f32.mrb[0].mxu0
      %v2922 = vadd.f32 %v2345, %v2921
      %v2923 = vpop.f32.mrb[0].mxu0
      %2924 = vmatprep.mubr.f32.mxu0 0.0
      %2925 = vmatmul.mubr.f32.gmra.mrb[0].mxu0 %v2639
      %v2926 = vpop.f32.mrb[0].mxu0
      %v2927 = vadd.f32 %v2350, %v2926
      %v2928 = vpop.f32.mrb[0].mxu0
      %2929 = vmatprep.mubr.f32.mxu0 0.0
      %2930 = vmatmul.mubr.f32.gmra.mrb[0].mxu0 %v2642
      %v2931 = vpop.f32.mrb[0].mxu0
      %v2932 = vadd.f32 %v2355, %v2931
      %v2933 = vpop.f32.mrb[0].mxu0
      %2934 = vmatprep.mubr.f32.mxu0 0.0
      %2935 = vmatmul.mubr.f32.gmra.mrb[0].mxu0 %v2645
      %v2936 = vpop.f32.mrb[0].mxu0
      %v2937 = vadd.f32 %v2360, %v2936
      %v2938 = vpop.f32.mrb[0].mxu0
      %2939 = vmatprep.mubr.f32.mxu0 0.0
      %2940 = vmatmul.mubr.f32.gmra.mrb[0].mxu0 %v2648
      %v2941 = vpop.f32.mrb[0].mxu0
      %v2942 = vadd.f32 %v2365, %v2941
      %v2943 = vpop.f32.mrb[0].mxu0
      %2944 = vmatprep.mubr.f32.mxu0 0.0
      %2945 = vmatmul.mubr.f32.gmra.mrb[0].mxu0 %v2651
      %v2946 = vpop.f32.mrb[0].mxu0
      %v2947 = vadd.f32 %v2370, %v2946
      %v2948 = vpop.f32.mrb[0].mxu0
      %2949 = vmatprep.mubr.f32.mxu0 0.0
      %2950 = vmatmul.mubr.f32.gmra.mrb[0].mxu0 %v2654
      %v2951 = vpop.f32.mrb[0].mxu0
      %v2952 = vadd.f32 %v2375, %v2951
      %v2953 = vpop.f32.mrb[0].mxu0
      %2954 = vmatprep.mubr.f32.mxu0 0.0
      %2955 = vmatmul.mubr.f32.gmra.mrb[0].mxu0 %v2657
      %v2956 = vpop.f32.mrb[0].mxu0
      %v2957 = vadd.f32 %v2380, %v2956
      %v2958 = vpop.f32.mrb[0].mxu0
      %2959 = vmatprep.mubr.f32.mxu0 0.0
      %2960 = vmatmul.mubr.f32.gmra.mrb[0].mxu0 %v2660
      %v2961 = vpop.f32.mrb[0].mxu0
      %v2962 = vadd.f32 %v2385, %v2961
      %v2963 = vpop.f32.mrb[0].mxu0
      %2964 = vmatprep.mubr.f32.mxu0 0.0
      %2965 = vmatmul.mubr.f32.gmra.mrb[0].mxu0 %v2663
      %v2966 = vpop.f32.mrb[0].mxu0
      %v2967 = vadd.f32 %v2390, %v2966
      %v2968 = vpop.f32.mrb[0].mxu0
      %2969 = vmatprep.mubr.f32.mxu0 0.0
      %2970 = vmatmul.mubr.f32.gmra.mrb[0].mxu0 %v2666
      %v2971 = vpop.f32.mrb[0].mxu0
      %v2972 = vadd.f32 %v2395, %v2971
      %v2973 = vpop.f32.mrb[0].mxu0
      %2974 = vmatprep.mubr.f32.mxu0 0.0
      %2975 = vmatmul.mubr.f32.gmra.mrb[0].mxu0 %v2669
      %v2976 = vpop.f32.mrb[0].mxu0
      %v2977 = vadd.f32 %v2400, %v2976
      %v2978 = vpop.f32.mrb[0].mxu0
      %2979 = vmatprep.mubr.f32.mxu0 0.0
      %2980 = vmatmul.mubr.f32.gmra.mrb[0].mxu0 %v2672
      %v2981 = vpop.f32.mrb[0].mxu0
      %v2982 = vadd.f32 %v2405, %v2981
      %v2983 = vpop.f32.mrb[0].mxu0
      %2984 = vmatprep.mubr.f32.mxu0 0.0
      %2985 = vmatmul.mubr.f32.gmra.mrb[0].mxu0 %v2675
      %v2986 = vpop.f32.mrb[0].mxu0
      %v2987 = vadd.f32 %v2410, %v2986
      %v2988 = vpop.f32.mrb[0].mxu0
      %2989 = vmatprep.mubr.f32.mxu0 0.0
      %2990 = vmatmul.mubr.f32.gmra.mrb[0].mxu0 %v2678
      %v2991 = vpop.f32.mrb[0].mxu0
      %v2992 = vadd.f32 %v2415, %v2991
      %v2993 = vpop.f32.mrb[0].mxu0
      %2994 = vmatprep.mubr.f32.mxu0 0.0
      %2995 = vmatmul.mubr.f32.gmra.mrb[0].mxu0 %v2681
      %v2996 = vpop.f32.mrb[0].mxu0
      %v2997 = vadd.f32 %v2420, %v2996
      %v2998 = vpop.f32.mrb[0].mxu0
      %2999 = vmatprep.mubr.f32.mxu0 0.0
      %3000 = vmatmul.mubr.f32.gmra.mrb[0].mxu0 %v2684
      %v3001 = vpop.f32.mrb[0].mxu0
      %v3002 = vadd.f32 %v2425, %v3001
      %v3003 = vpop.f32.mrb[0].mxu0
      %3004 = vmatprep.mubr.f32.mxu0 0.0
      %3005 = vmatmul.mubr.f32.gmra.mrb[0].mxu0 %v2687
      %v3006 = vpop.f32.mrb[0].mxu0
      %v3007 = vadd.f32 %v2430, %v3006
      %v3008 = vpop.f32.mrb[0].mxu0
      %3009 = vmatprep.mubr.f32.mxu0 0.0
      %3010 = vmatmul.mubr.f32.gmra.mrb[0].mxu0 %v2690
      %v3011 = vpop.f32.mrb[0].mxu0
      %v3012 = vadd.f32 %v2435, %v3011
      %v3013 = vpop.f32.mrb[0].mxu0
      %3014 = vmatprep.mubr.f32.mxu0 0.0
      %3015 = vmatmul.mubr.f32.gmra.mrb[0].mxu0 %v2693
      %v3016 = vpop.f32.mrb[0].mxu0
      %v3017 = vadd.f32 %v2440, %v3016
      %v3018 = vpop.f32.mrb[0].mxu0
      %3019 = vmatprep.mubr.f32.mxu0 0.0
      %3020 = vmatmul.mubr.f32.gmra.mrb[0].mxu0 %v2696
      %v3021 = vpop.f32.mrb[0].mxu0
      %v3022 = vadd.f32 %v2445, %v3021
      %v3023 = vpop.f32.mrb[0].mxu0
      %3024 = vmatprep.mubr.f32.mxu0 0.0
      %3025 = vmatmul.mubr.f32.gmra.mrb[0].mxu0 %v2699
      %v3026 = vpop.f32.mrb[0].mxu0
      %v3027 = vadd.f32 %v2450, %v3026
      %v3028 = vpop.f32.mrb[0].mxu0
      %3029 = vmatprep.mubr.f32.mxu0 0.0
      %3030 = vmatmul.mubr.f32.gmra.mrb[0].mxu0 %v2702
      %v3031 = vpop.f32.mrb[0].mxu0
      %v3032 = vadd.f32 %v2455, %v3031
      %v3033 = vpop.f32.mrb[0].mxu0
      %3034 = vmatprep.mubr.f32.mxu0 0.0
      %3035 = vmatmul.mubr.f32.gmra.mrb[0].mxu0 %v2705
      %v3036 = vpop.f32.mrb[0].mxu0
      %v3037 = vadd.f32 %v2460, %v3036
      %v3038 = vpop.f32.mrb[0].mxu0
      %3039 = vmatprep.mubr.f32.mxu0 0.0
      %3040 = vmatmul.mubr.f32.gmra.mrb[0].mxu0 %v2708
      %v3041 = vpop.f32.mrb[0].mxu0
      %v3042 = vadd.f32 %v2465, %v3041
      %v3043 = vpop.f32.mrb[0].mxu0
      %3044 = vmatprep.mubr.f32.mxu0 0.0
      %3045 = vmatmul.mubr.f32.gmra.mrb[0].mxu0 %v2711
      %v3046 = vpop.f32.mrb[0].mxu0
      %v3047 = vadd.f32 %v2470, %v3046
      %v3048 = vpop.f32.mrb[0].mxu0
      %3049 = vmatprep.mubr.f32.mxu0 0.0
      %3050 = vmatmul.mubr.f32.gmra.mrb[0].mxu0 %v2714
      %v3051 = vpop.f32.mrb[0].mxu0
      %v3052 = vadd.f32 %v2475, %v3051
      %v3053 = vpop.f32.mrb[0].mxu0
      %3054 = vmatprep.mubr.f32.mxu0 0.0
      %3055 = vmatmul.mubr.f32.gmra.mrb[0].mxu0 %v2717
      %v3056 = vpop.f32.mrb[0].mxu0
      %v3057 = vadd.f32 %v2480, %v3056
      %v3058 = vpop.f32.mrb[0].mxu0
      %3059 = vmatprep.mubr.f32.mxu0 0.0
      %3060 = vmatmul.mubr.f32.gmra.mrb[0].mxu0 %v2720
      %v3061 = vpop.f32.mrb[0].mxu0
      %v3062 = vadd.f32 %v2485, %v3061
      %v3063 = vpop.f32.mrb[0].mxu0
      %3064 = vmatprep.mubr.f32.mxu0 0.0
      %3065 = vmatmul.mubr.f32.gmra.mrb[0].mxu0 %v2723
      %v3066 = vpop.f32.mrb[0].mxu0
      %v3067 = vadd.f32 %v2490, %v3066
      %v3068 = vpop.f32.mrb[0].mxu0
      %3069 = vmatprep.mubr.f32.mxu0 0.0
      %3070 = vmatmul.mubr.f32.gmra.mrb[0].mxu0 %v2726
      %v3071 = vpop.f32.mrb[0].mxu0
      %v3072 = vadd.f32 %v2495, %v3071
      %v3073 = vpop.f32.mrb[0].mxu0
      %3074 = vmatprep.mubr.f32.mxu0 0.0
      %3075 = vmatmul.mubr.f32.gmra.mrb[0].mxu0 %v2729
      %v3076 = vpop.f32.mrb[0].mxu0
      %v3077 = vadd.f32 %v2500, %v3076
      %v3078 = vpop.f32.mrb[0].mxu0
      %3079 = vmatprep.mubr.f32.mxu0 0.0
      %3080 = vmatmul.mubr.f32.gmra.mrb[0].mxu0 %v2732
      %v3081 = vpop.f32.mrb[0].mxu0
      %v3082 = vadd.f32 %v2505, %v3081
      %v3083 = vpop.f32.mrb[0].mxu0
      %3084 = vmatprep.mubr.f32.mxu0 0.0
      %3085 = vmatmul.mubr.f32.gmra.mrb[0].mxu0 %v2735
      %v3086 = vpop.f32.mrb[0].mxu0
      %v3087 = vadd.f32 %v2510, %v3086
      %v3088 = vpop.f32.mrb[0].mxu0
      %3089 = vmatprep.mubr.f32.mxu0 0.0
      %3090 = vmatmul.mubr.f32.gmra.mrb[0].mxu0 %v2738
      %v3091 = vpop.f32.mrb[0].mxu0
      %v3092 = vadd.f32 %v2515, %v3091
      %v3093 = vpop.f32.mrb[0].mxu0
      %3094 = vmatprep.mubr.f32.mxu0 0.0
      %3095 = vmatmul.mubr.f32.gmra.mrb[0].mxu0 %v2741
      %v3096 = vpop.f32.mrb[0].mxu0
      %v3097 = vadd.f32 %v2520, %v3096
      %v3098 = vpop.f32.mrb[0].mxu0
      %3099 = vmatprep.mubr.f32.mxu0 0.0
      %3100 = vmatmul.mubr.f32.gmra.mrb[0].mxu0 %v2744
      %v3101 = vpop.f32.mrb[0].mxu0
      %v3102 = vadd.f32 %v2525, %v3101
      %v3103 = vpop.f32.mrb[0].mxu0
      %3104 = vmatprep.mubr.f32.mxu0 0.0
      %3105 = vmatmul.mubr.f32.gmra.mrb[0].mxu0 %v2747
      %v3106 = vpop.f32.mrb[0].mxu0
      %v3107 = vadd.f32 %v2530, %v3106
      %v3108 = vpop.f32.mrb[0].mxu0
      %3109 = vmatprep.mubr.f32.mxu0 0.0
      %3110 = vmatmul.mubr.f32.gmra.mrb[0].mxu0 %v2750
      %v3111 = vpop.f32.mrb[0].mxu0
      %v3112 = vadd.f32 %v2535, %v3111
      %v3113 = vpop.f32.mrb[0].mxu0
      %3114 = vmatprep.mubr.f32.mxu0 0.0
      %3115 = vmatmul.mubr.f32.gmra.mrb[0].mxu0 %v2753
      %v3116 = vpop.f32.mrb[0].mxu0
      %v3117 = vadd.f32 %v2540, %v3116
      %v3118 = vpop.f32.mrb[0].mxu0
      %3119 = vmatprep.mubr.f32.mxu0 0.0
      %3120 = vmatmul.mubr.f32.gmra.mrb[0].mxu0 %v2756
      %v3121 = vpop.f32.mrb[0].mxu0
      %v3122 = vadd.f32 %v2545, %v3121
      %v3123 = vpop.f32.mrb[0].mxu0
      %3124 = vmatprep.mubr.f32.mxu0 0.0
      %3125 = vmatmul.mubr.f32.gmra.mrb[0].mxu0 %v2759
      %v3126 = vpop.f32.mrb[0].mxu0
      %v3127 = vadd.f32 %v2550, %v3126
      %v3128 = vpop.f32.mrb[0].mxu0
      %3129 = vmatprep.mubr.f32.mxu0 0.0
      %3130 = vmatmul.mubr.f32.gmra.mrb[0].mxu0 %v2762
      %v3131 = vpop.f32.mrb[0].mxu0
      %v3132 = vadd.f32 %v2555, %v3131
      %v3133 = vpop.f32.mrb[0].mxu0
      %3134 = vmatprep.mubr.f32.mxu0 0.0
      %3135 = vmatmul.mubr.f32.gmra.mrb[0].mxu0 %v2765
      %v3136 = vpop.f32.mrb[0].mxu0
      %v3137 = vadd.f32 %v2560, %v3136
      %v3138 = vpop.f32.mrb[0].mxu0
      %3139 = vmatprep.mubr.f32.mxu0 0.0
      %3140 = vmatmul.mubr.f32.gmra.mrb[0].mxu0 %v2768
      %v3141 = vpop.f32.mrb[0].mxu0
      %v3142 = vadd.f32 %v2565, %v3141
      %v3143 = vpop.f32.mrb[0].mxu0
      %3144 = vmatprep.mubr.f32.mxu0 0.0
      %3145 = vmatmul.mubr.f32.gmra.mrb[0].mxu0 %v2771
      %v3146 = vpop.f32.mrb[0].mxu0
      %v3147 = vadd.f32 %v2570, %v3146
      %v3148 = vpop.f32.mrb[0].mxu0
      %3149 = vmatprep.mubr.f32.mxu0 0.0
      %3150 = vmatmul.mubr.f32.gmra.mrb[0].mxu0 %v2774
      %v3151 = vpop.f32.mrb[0].mxu0
      %v3152 = vadd.f32 %v2575, %v3151
      %v3153 = vpop.f32.mrb[0].mxu0
      %3154 = vmatprep.mubr.f32.mxu0 0.0
      %3155 = vmatmul.mubr.f32.gmra.mrb[0].mxu0 %v2777
      %v3156 = vpop.f32.mrb[0].mxu0
      %v3157 = vadd.f32 %v2580, %v3156
      %v3158 = vpop.f32.mrb[0].mxu0
      %3159 = vmatprep.mubr.f32.mxu0 0.0
      %3160 = vmatmul.mubr.f32.gmra.mrb[0].mxu0 %v2780
      %v3161 = vpop.f32.mrb[0].mxu0
      %v3162 = vadd.f32 %v2585, %v3161
      %v3163 = vpop.f32.mrb[0].mxu0
      %3164 = vmatprep.mubr.f32.mxu0 0.0
      %3165 = vmatmul.mubr.f32.gmra.mrb[0].mxu0 %v2783
      %v3166 = vpop.f32.mrb[0].mxu0
      %v3167 = vadd.f32 %v2590, %v3166
      %v3168 = vpop.f32.mrb[0].mxu0
      %3169 = vdwg.mxu0
      %v3170 = vld [vmem:[#allocation2 + $0x8] sm:$0xff]
      %v3171 = vld [vmem:[#allocation2 + $0x10] sm:$0xff]
      %v3172 = vld [vmem:[#allocation2 + $0x18] sm:$0xff]
      %v3173 = vld [vmem:[#allocation2 + $0x20] sm:$0xff]
      %v3174 = vld [vmem:[#allocation2 + $0x28] sm:$0xff]
      %v3175 = vld [vmem:[#allocation2 + $0x30] sm:$0xff]
      %v3176 = vld [vmem:[#allocation2 + $0x38] sm:$0xff]
      %v3177 = vld [vmem:[#allocation2 + $0x40] sm:$0xff]
      %v3178 = vld [vmem:[#allocation2 + $0x48] sm:$0xff]
      %v3179 = vld [vmem:[#allocation2 + $0x50] sm:$0xff]
      %v3180 = vld [vmem:[#allocation2 + $0x58] sm:$0xff]
      %v3181 = vld [vmem:[#allocation2 + $0x60] sm:$0xff]
      %v3182 = vld [vmem:[#allocation2 + $0x68] sm:$0xff]
      %v3183 = vld [vmem:[#allocation2 + $0x70] sm:$0xff]
      %v3184 = vld [vmem:[#allocation2 + $0x78] sm:$0xff]
      %v3185 = vld [vmem:[#allocation2 + $0x80] sm:$0xff]
      %v3186 = vld [vmem:[#allocation2 + $0x88] sm:$0xff]
      %v3187 = vld [vmem:[#allocation2 + $0x90] sm:$0xff]
      %v3188 = vld [vmem:[#allocation2 + $0x98] sm:$0xff]
      %v3189 = vld [vmem:[#allocation2 + $0xa0] sm:$0xff]
      %v3190 = vld [vmem:[#allocation2 + $0xa8] sm:$0xff]
      %v3191 = vld [vmem:[#allocation2 + $0xb0] sm:$0xff]
      %v3192 = vld [vmem:[#allocation2 + $0xb8] sm:$0xff]
      %v3193 = vld [vmem:[#allocation2 + $0xc0] sm:$0xff]
      %v3194 = vld [vmem:[#allocation2 + $0xc8] sm:$0xff]
      %v3195 = vld [vmem:[#allocation2 + $0xd0] sm:$0xff]
      %v3196 = vld [vmem:[#allocation2 + $0xd8] sm:$0xff]
      %v3197 = vld [vmem:[#allocation2 + $0xe0] sm:$0xff]
      %v3198 = vld [vmem:[#allocation2 + $0xe8] sm:$0xff]
      %v3199 = vld [vmem:[#allocation2 + $0xf0] sm:$0xff]
      %v3200 = vld [vmem:[#allocation2 + $0xf8] sm:$0xff]
      %v3201 = vld [vmem:[#allocation2 + $0x100] sm:$0xff]
      %v3202 = vld [vmem:[#allocation2 + $0x108] sm:$0xff]
      %v3203 = vld [vmem:[#allocation2 + $0x110] sm:$0xff]
      %v3204 = vld [vmem:[#allocation2 + $0x118] sm:$0xff]
      %v3205 = vld [vmem:[#allocation2 + $0x120] sm:$0xff]
      %v3206 = vld [vmem:[#allocation2 + $0x128] sm:$0xff]
      %v3207 = vld [vmem:[#allocation2 + $0x130] sm:$0xff]
      %v3208 = vld [vmem:[#allocation2 + $0x138] sm:$0xff]
      %v3209 = vld [vmem:[#allocation2 + $0x140] sm:$0xff]
      %v3210 = vld [vmem:[#allocation2 + $0x148] sm:$0xff]
      %v3211 = vld [vmem:[#allocation2 + $0x150] sm:$0xff]
      %v3212 = vld [vmem:[#allocation2 + $0x158] sm:$0xff]
      %v3213 = vld [vmem:[#allocation2 + $0x160] sm:$0xff]
      %v3214 = vld [vmem:[#allocation2 + $0x168] sm:$0xff]
      %v3215 = vld [vmem:[#allocation2 + $0x170] sm:$0xff]
      %v3216 = vld [vmem:[#allocation2 + $0x178] sm:$0xff]
      %v3217 = vld [vmem:[#allocation2 + $0x180] sm:$0xff]
      %v3218 = vld [vmem:[#allocation2 + $0x188] sm:$0xff]
      %v3219 = vld [vmem:[#allocation2 + $0x190] sm:$0xff]
      %v3220 = vld [vmem:[#allocation2 + $0x198] sm:$0xff]
      %v3221 = vld [vmem:[#allocation2 + $0x1a0] sm:$0xff]
      %v3222 = vld [vmem:[#allocation2 + $0x1a8] sm:$0xff]
      %v3223 = vld [vmem:[#allocation2 + $0x1b0] sm:$0xff]
      %v3224 = vld [vmem:[#allocation2 + $0x1b8] sm:$0xff]
      %v3225 = vld [vmem:[#allocation2 + $0x1c0] sm:$0xff]
      %v3226 = vld [vmem:[#allocation2 + $0x1c8] sm:$0xff]
      %v3227 = vld [vmem:[#allocation2 + $0x1d0] sm:$0xff]
      %v3228 = vld [vmem:[#allocation2 + $0x1d8] sm:$0xff]
      %v3229 = vld [vmem:[#allocation2 + $0x1e0] sm:$0xff]
      %v3230 = vld [vmem:[#allocation2 + $0x1e8] sm:$0xff]
      %v3231 = vld [vmem:[#allocation2 + $0x1f0] sm:$0xff]
      %v3232 = vld [vmem:[#allocation2 + $0x1f8] sm:$0xff]
      %v3233 = vld [vmem:[#allocation2 + $0x200] sm:$0xff]
      %v3234 = vld [vmem:[%s1 + $0x28] sm:$0xff]
      %v3235 = vld [vmem:[%s1 + $0x30] sm:$0xff]
      %v3236 = vld [vmem:[%s1 + $0x38] sm:$0xff]
      %v3237 = vld [vmem:[%s1 + $0x40] sm:$0xff]
      %v3239 = vsel %vm1095, %v3170, 0
      %v3242 = vsel %vm1095, %v3171, 0
      %v3245 = vsel %vm1095, %v3172, 0
      %v3248 = vsel %vm1095, %v3173, 0
      %v3251 = vsel %vm1095, %v3174, 0
      %v3254 = vsel %vm1095, %v3175, 0
      %v3257 = vsel %vm1095, %v3176, 0
      %v3260 = vsel %vm1095, %v3177, 0
      %v3263 = vsel %vm1095, %v3178, 0
      %v3266 = vsel %vm1095, %v3179, 0
      %v3269 = vsel %vm1095, %v3180, 0
      %v3272 = vsel %vm1095, %v3181, 0
      %v3275 = vsel %vm1095, %v3182, 0
      %v3278 = vsel %vm1095, %v3183, 0
      %v3281 = vsel %vm1095, %v3184, 0
      %v3284 = vsel %vm1095, %v3185, 0
      %v3287 = vsel %vm1095, %v3186, 0
      %v3290 = vsel %vm1095, %v3187, 0
      %v3293 = vsel %vm1095, %v3188, 0
      %v3296 = vsel %vm1095, %v3189, 0
      %v3299 = vsel %vm1095, %v3190, 0
      %v3302 = vsel %vm1095, %v3191, 0
      %v3305 = vsel %vm1095, %v3192, 0
      %v3308 = vsel %vm1095, %v3193, 0
      %v3311 = vsel %vm1095, %v3194, 0
      %v3314 = vsel %vm1095, %v3195, 0
      %v3317 = vsel %vm1095, %v3196, 0
      %v3320 = vsel %vm1095, %v3197, 0
      %v3323 = vsel %vm1095, %v3198, 0
      %v3326 = vsel %vm1095, %v3199, 0
      %v3329 = vsel %vm1095, %v3200, 0
      %v3332 = vsel %vm1095, %v3201, 0
      %v3335 = vsel %vm1095, %v3202, 0
      %v3338 = vsel %vm1095, %v3203, 0
      %v3341 = vsel %vm1095, %v3204, 0
      %v3344 = vsel %vm1095, %v3205, 0
      %v3347 = vsel %vm1095, %v3206, 0
      %v3350 = vsel %vm1095, %v3207, 0
      %v3353 = vsel %vm1095, %v3208, 0
      %v3356 = vsel %vm1095, %v3209, 0
      %v3359 = vsel %vm1095, %v3210, 0
      %v3362 = vsel %vm1095, %v3211, 0
      %v3365 = vsel %vm1095, %v3212, 0
      %v3368 = vsel %vm1095, %v3213, 0
      %v3371 = vsel %vm1095, %v3214, 0
      %v3374 = vsel %vm1095, %v3215, 0
      %v3377 = vsel %vm1095, %v3216, 0
      %v3380 = vsel %vm1095, %v3217, 0
      %v3383 = vsel %vm1095, %v3218, 0
      %v3386 = vsel %vm1095, %v3219, 0
      %v3389 = vsel %vm1095, %v3220, 0
      %v3392 = vsel %vm1095, %v3221, 0
      %v3395 = vsel %vm1095, %v3222, 0
      %v3398 = vsel %vm1095, %v3223, 0
      %v3401 = vsel %vm1095, %v3224, 0
      %v3404 = vsel %vm1095, %v3225, 0
      %v3407 = vsel %vm1095, %v3226, 0
      %v3410 = vsel %vm1095, %v3227, 0
      %v3413 = vsel %vm1095, %v3228, 0
      %v3416 = vsel %vm1095, %v3229, 0
      %v3419 = vsel %vm1095, %v3230, 0
      %v3422 = vsel %vm1095, %v3231, 0
      %v3425 = vsel %vm1095, %v3232, 0
      %v3428 = vsel %vm1095, %v3233, 0
      %3430 = vmatprep.subr.mxu0 0.0
      %3431 = vmatpush1.msra.mxu0 %v3234
      %3432 = vmatprep.subr.mxu0 0.0
      %3433 = vmatpush1.msra.mxu0 %v3235
      %3434 = vmatprep.subr.mxu0 0.0
      %3435 = vmatpush1.msra.mxu0 %v3236
      %3436 = vmatprep.subr.mxu0 0.0
      %3437 = vmatpush1.msra.mxu0 %v3237
      %3438 = vmatprep.subr.mxu0 0.0
      %3439 = vmatpush1.msra.mxu0 0.0
      %3440 = vmatprep.subr.mxu0 0.0
      %3441 = vmatpush1.msra.mxu0 0.0
      %3442 = vmatprep.subr.mxu0 0.0
      %3443 = vmatpush1.msra.mxu0 0.0
      %3444 = vmatprep.subr.mxu0 0.0
      %3445 = vmatpush1.msra.mxu0 0.0
      %3446 = vmatprep.subr.mxu0 0.0
      %3447 = vmatpush1.msra.mxu0 0.0
      %3448 = vmatprep.subr.mxu0 0.0
      %3449 = vmatpush1.msra.mxu0 0.0
      %3450 = vmatprep.subr.mxu0 0.0
      %3451 = vmatpush1.msra.mxu0 0.0
      %3452 = vmatprep.subr.mxu0 0.0
      %3453 = vmatpush1.msra.mxu0 0.0
      %3454 = vmatprep.subr.mxu0 0.0
      %3455 = vmatpush1.msra.mxu0 0.0
      %3456 = vmatprep.subr.mxu0 0.0
      %3457 = vmatpush1.msra.mxu0 0.0
      %3458 = vmatprep.subr.mxu0 0.0
      %3459 = vmatpush1.msra.mxu0 0.0
      %3460 = vmatprep.subr.mxu0 0.0
      %3461 = vmatpush1.msra.mxu0 0.0
      %3462 = vmatprep.subr.mxu0 0.0
      %3463 = vmatpush1.msra.mxu0 0.0
      %3464 = vmatprep.subr.mxu0 0.0
      %3465 = vmatpush1.msra.mxu0 0.0
      %3466 = vmatprep.subr.mxu0 0.0
      %3467 = vmatpush1.msra.mxu0 0.0
      %3468 = vmatprep.subr.mxu0 0.0
      %3469 = vmatpush1.msra.mxu0 0.0
      %3470 = vmatprep.subr.mxu0 0.0
      %3471 = vmatpush1.msra.mxu0 0.0
      %3472 = vmatprep.subr.mxu0 0.0
      %3473 = vmatpush1.msra.mxu0 0.0
      %3474 = vmatprep.subr.mxu0 0.0
      %3475 = vmatpush1.msra.mxu0 0.0
      %3476 = vmatprep.subr.mxu0 0.0
      %3477 = vmatpush1.msra.mxu0 0.0
      %3478 = vmatprep.subr.mxu0 0.0
      %3479 = vmatpush1.msra.mxu0 0.0
      %3480 = vmatprep.subr.mxu0 0.0
      %3481 = vmatpush1.msra.mxu0 0.0
      %3482 = vmatprep.subr.mxu0 0.0
      %3483 = vmatpush1.msra.mxu0 0.0
      %3484 = vmatprep.subr.mxu0 0.0
      %3485 = vmatpush1.msra.mxu0 0.0
      %3486 = vmatprep.subr.mxu0 0.0
      %3487 = vmatpush1.msra.mxu0 0.0
      %3488 = vmatprep.subr.mxu0 0.0
      %3489 = vmatpush1.msra.mxu0 0.0
      %3490 = vmatprep.subr.mxu0 0.0
      %3491 = vmatpush1.msra.mxu0 0.0
      %3492 = vmatprep.subr.mxu0 0.0
      %3493 = vmatpush1.msra.mxu0 0.0
      %3494 = vmatprep.mubr.f32.mxu0 0.0
      %3495 = vmatmul.mubr.f32.gmra.mrb[0].mxu0 %v3239
      %v3496 = vpop.f32.mrb[0].mxu0
      %v3497 = vadd.f32 0.0, %v3496
      %v3498 = vpop.f32.mrb[0].mxu0
      %3499 = vmatprep.mubr.f32.mxu0 0.0
      %3500 = vmatmul.mubr.f32.gmra.mrb[0].mxu0 %v3242
      %v3501 = vpop.f32.mrb[0].mxu0
      %v3502 = vadd.f32 0.0, %v3501
      %v3503 = vpop.f32.mrb[0].mxu0
      %3504 = vmatprep.mubr.f32.mxu0 0.0
      %3505 = vmatmul.mubr.f32.gmra.mrb[0].mxu0 %v3245
      %v3506 = vpop.f32.mrb[0].mxu0
      %v3507 = vadd.f32 0.0, %v3506
      %v3508 = vpop.f32.mrb[0].mxu0
      %3509 = vmatprep.mubr.f32.mxu0 0.0
      %3510 = vmatmul.mubr.f32.gmra.mrb[0].mxu0 %v3248
      %v3511 = vpop.f32.mrb[0].mxu0
      %v3512 = vadd.f32 0.0, %v3511
      %v3513 = vpop.f32.mrb[0].mxu0
      %3514 = vmatprep.mubr.f32.mxu0 0.0
      %3515 = vmatmul.mubr.f32.gmra.mrb[0].mxu0 %v3251
      %v3516 = vpop.f32.mrb[0].mxu0
      %v3517 = vadd.f32 0.0, %v3516
      %v3518 = vpop.f32.mrb[0].mxu0
      %3519 = vmatprep.mubr.f32.mxu0 0.0
      %3520 = vmatmul.mubr.f32.gmra.mrb[0].mxu0 %v3254
      %v3521 = vpop.f32.mrb[0].mxu0
      %v3522 = vadd.f32 0.0, %v3521
      %v3523 = vpop.f32.mrb[0].mxu0
      %3524 = vmatprep.mubr.f32.mxu0 0.0
      %3525 = vmatmul.mubr.f32.gmra.mrb[0].mxu0 %v3257
      %v3526 = vpop.f32.mrb[0].mxu0
      %v3527 = vadd.f32 0.0, %v3526
      %v3528 = vpop.f32.mrb[0].mxu0
      %3529 = vmatprep.mubr.f32.mxu0 0.0
      %3530 = vmatmul.mubr.f32.gmra.mrb[0].mxu0 %v3260
      %v3531 = vpop.f32.mrb[0].mxu0
      %v3532 = vadd.f32 0.0, %v3531
      %v3533 = vpop.f32.mrb[0].mxu0
      %3534 = vmatprep.mubr.f32.mxu0 0.0
      %3535 = vmatmul.mubr.f32.gmra.mrb[0].mxu0 %v3263
      %v3536 = vpop.f32.mrb[0].mxu0
      %v3537 = vadd.f32 0.0, %v3536
      %v3538 = vpop.f32.mrb[0].mxu0
      %3539 = vmatprep.mubr.f32.mxu0 0.0
      %3540 = vmatmul.mubr.f32.gmra.mrb[0].mxu0 %v3266
      %v3541 = vpop.f32.mrb[0].mxu0
      %v3542 = vadd.f32 0.0, %v3541
      %v3543 = vpop.f32.mrb[0].mxu0
      %3544 = vmatprep.mubr.f32.mxu0 0.0
      %3545 = vmatmul.mubr.f32.gmra.mrb[0].mxu0 %v3269
      %v3546 = vpop.f32.mrb[0].mxu0
      %v3547 = vadd.f32 0.0, %v3546
      %v3548 = vpop.f32.mrb[0].mxu0
      %3549 = vmatprep.mubr.f32.mxu0 0.0
      %3550 = vmatmul.mubr.f32.gmra.mrb[0].mxu0 %v3272
      %v3551 = vpop.f32.mrb[0].mxu0
      %v3552 = vadd.f32 0.0, %v3551
      %v3553 = vpop.f32.mrb[0].mxu0
      %3554 = vmatprep.mubr.f32.mxu0 0.0
      %3555 = vmatmul.mubr.f32.gmra.mrb[0].mxu0 %v3275
      %v3556 = vpop.f32.mrb[0].mxu0
      %v3557 = vadd.f32 0.0, %v3556
      %v3558 = vpop.f32.mrb[0].mxu0
      %3559 = vmatprep.mubr.f32.mxu0 0.0
      %3560 = vmatmul.mubr.f32.gmra.mrb[0].mxu0 %v3278
      %v3561 = vpop.f32.mrb[0].mxu0
      %v3562 = vadd.f32 0.0, %v3561
      %v3563 = vpop.f32.mrb[0].mxu0
      %3564 = vmatprep.mubr.f32.mxu0 0.0
      %3565 = vmatmul.mubr.f32.gmra.mrb[0].mxu0 %v3281
      %v3566 = vpop.f32.mrb[0].mxu0
      %v3567 = vadd.f32 0.0, %v3566
      %v3568 = vpop.f32.mrb[0].mxu0
      %3569 = vmatprep.mubr.f32.mxu0 0.0
      %3570 = vmatmul.mubr.f32.gmra.mrb[0].mxu0 %v3284
      %v3571 = vpop.f32.mrb[0].mxu0
      %v3572 = vadd.f32 0.0, %v3571
      %v3573 = vpop.f32.mrb[0].mxu0
      %3574 = vmatprep.mubr.f32.mxu0 0.0
      %3575 = vmatmul.mubr.f32.gmra.mrb[0].mxu0 %v3287
      %v3576 = vpop.f32.mrb[0].mxu0
      %v3577 = vadd.f32 0.0, %v3576
      %v3578 = vpop.f32.mrb[0].mxu0
      %3579 = vmatprep.mubr.f32.mxu0 0.0
      %3580 = vmatmul.mubr.f32.gmra.mrb[0].mxu0 %v3290
      %v3581 = vpop.f32.mrb[0].mxu0
      %v3582 = vadd.f32 0.0, %v3581
      %v3583 = vpop.f32.mrb[0].mxu0
      %3584 = vmatprep.mubr.f32.mxu0 0.0
      %3585 = vmatmul.mubr.f32.gmra.mrb[0].mxu0 %v3293
      %v3586 = vpop.f32.mrb[0].mxu0
      %v3587 = vadd.f32 0.0, %v3586
      %v3588 = vpop.f32.mrb[0].mxu0
      %3589 = vmatprep.mubr.f32.mxu0 0.0
      %3590 = vmatmul.mubr.f32.gmra.mrb[0].mxu0 %v3296
      %v3591 = vpop.f32.mrb[0].mxu0
      %v3592 = vadd.f32 0.0, %v3591
      %v3593 = vpop.f32.mrb[0].mxu0
      %3594 = vmatprep.mubr.f32.mxu0 0.0
      %3595 = vmatmul.mubr.f32.gmra.mrb[0].mxu0 %v3299
      %v3596 = vpop.f32.mrb[0].mxu0
      %v3597 = vadd.f32 0.0, %v3596
      %v3598 = vpop.f32.mrb[0].mxu0
      %3599 = vmatprep.mubr.f32.mxu0 0.0
      %3600 = vmatmul.mubr.f32.gmra.mrb[0].mxu0 %v3302
      %v3601 = vpop.f32.mrb[0].mxu0
      %v3602 = vadd.f32 0.0, %v3601
      %v3603 = vpop.f32.mrb[0].mxu0
      %3604 = vmatprep.mubr.f32.mxu0 0.0
      %3605 = vmatmul.mubr.f32.gmra.mrb[0].mxu0 %v3305
      %v3606 = vpop.f32.mrb[0].mxu0
      %v3607 = vadd.f32 0.0, %v3606
      %v3608 = vpop.f32.mrb[0].mxu0
      %3609 = vmatprep.mubr.f32.mxu0 0.0
      %3610 = vmatmul.mubr.f32.gmra.mrb[0].mxu0 %v3308
      %v3611 = vpop.f32.mrb[0].mxu0
      %v3612 = vadd.f32 0.0, %v3611
      %v3613 = vpop.f32.mrb[0].mxu0
      %3614 = vmatprep.mubr.f32.mxu0 0.0
      %3615 = vmatmul.mubr.f32.gmra.mrb[0].mxu0 %v3311
      %v3616 = vpop.f32.mrb[0].mxu0
      %v3617 = vadd.f32 0.0, %v3616
      %v3618 = vpop.f32.mrb[0].mxu0
      %3619 = vmatprep.mubr.f32.mxu0 0.0
      %3620 = vmatmul.mubr.f32.gmra.mrb[0].mxu0 %v3314
      %v3621 = vpop.f32.mrb[0].mxu0
      %v3622 = vadd.f32 0.0, %v3621
      %v3623 = vpop.f32.mrb[0].mxu0
      %3624 = vmatprep.mubr.f32.mxu0 0.0
      %3625 = vmatmul.mubr.f32.gmra.mrb[0].mxu0 %v3317
      %v3626 = vpop.f32.mrb[0].mxu0
      %v3627 = vadd.f32 0.0, %v3626
      %v3628 = vpop.f32.mrb[0].mxu0
      %3629 = vmatprep.mubr.f32.mxu0 0.0
      %3630 = vmatmul.mubr.f32.gmra.mrb[0].mxu0 %v3320
      %v3631 = vpop.f32.mrb[0].mxu0
      %v3632 = vadd.f32 0.0, %v3631
      %v3633 = vpop.f32.mrb[0].mxu0
      %3634 = vmatprep.mubr.f32.mxu0 0.0
      %3635 = vmatmul.mubr.f32.gmra.mrb[0].mxu0 %v3323
      %v3636 = vpop.f32.mrb[0].mxu0
      %v3637 = vadd.f32 0.0, %v3636
      %v3638 = vpop.f32.mrb[0].mxu0
      %3639 = vmatprep.mubr.f32.mxu0 0.0
      %3640 = vmatmul.mubr.f32.gmra.mrb[0].mxu0 %v3326
      %v3641 = vpop.f32.mrb[0].mxu0
      %v3642 = vadd.f32 0.0, %v3641
      %v3643 = vpop.f32.mrb[0].mxu0
      %3644 = vmatprep.mubr.f32.mxu0 0.0
      %3645 = vmatmul.mubr.f32.gmra.mrb[0].mxu0 %v3329
      %v3646 = vpop.f32.mrb[0].mxu0
      %v3647 = vadd.f32 0.0, %v3646
      %v3648 = vpop.f32.mrb[0].mxu0
      %3649 = vmatprep.mubr.f32.mxu0 0.0
      %3650 = vmatmul.mubr.f32.gmra.mrb[0].mxu0 %v3332
      %v3651 = vpop.f32.mrb[0].mxu0
      %v3652 = vadd.f32 0.0, %v3651
      %v3653 = vpop.f32.mrb[0].mxu0
      %3654 = vmatprep.mubr.f32.mxu0 0.0
      %3655 = vmatmul.mubr.f32.gmra.mrb[0].mxu0 %v3335
      %v3656 = vpop.f32.mrb[0].mxu0
      %v3657 = vadd.f32 0.0, %v3656
      %v3658 = vpop.f32.mrb[0].mxu0
      %3659 = vmatprep.mubr.f32.mxu0 0.0
      %3660 = vmatmul.mubr.f32.gmra.mrb[0].mxu0 %v3338
      %v3661 = vpop.f32.mrb[0].mxu0
      %v3662 = vadd.f32 0.0, %v3661
      %v3663 = vpop.f32.mrb[0].mxu0
      %3664 = vmatprep.mubr.f32.mxu0 0.0
      %3665 = vmatmul.mubr.f32.gmra.mrb[0].mxu0 %v3341
      %v3666 = vpop.f32.mrb[0].mxu0
      %v3667 = vadd.f32 0.0, %v3666
      %v3668 = vpop.f32.mrb[0].mxu0
      %3669 = vmatprep.mubr.f32.mxu0 0.0
      %3670 = vmatmul.mubr.f32.gmra.mrb[0].mxu0 %v3344
      %v3671 = vpop.f32.mrb[0].mxu0
      %v3672 = vadd.f32 0.0, %v3671
      %v3673 = vpop.f32.mrb[0].mxu0
      %3674 = vmatprep.mubr.f32.mxu0 0.0
      %3675 = vmatmul.mubr.f32.gmra.mrb[0].mxu0 %v3347
      %v3676 = vpop.f32.mrb[0].mxu0
      %v3677 = vadd.f32 0.0, %v3676
      %v3678 = vpop.f32.mrb[0].mxu0
      %3679 = vmatprep.mubr.f32.mxu0 0.0
      %3680 = vmatmul.mubr.f32.gmra.mrb[0].mxu0 %v3350
      %v3681 = vpop.f32.mrb[0].mxu0
      %v3682 = vadd.f32 0.0, %v3681
      %v3683 = vpop.f32.mrb[0].mxu0
      %3684 = vmatprep.mubr.f32.mxu0 0.0
      %3685 = vmatmul.mubr.f32.gmra.mrb[0].mxu0 %v3353
      %v3686 = vpop.f32.mrb[0].mxu0
      %v3687 = vadd.f32 0.0, %v3686
      %v3688 = vpop.f32.mrb[0].mxu0
      %3689 = vmatprep.mubr.f32.mxu0 0.0
      %3690 = vmatmul.mubr.f32.gmra.mrb[0].mxu0 %v3356
      %v3691 = vpop.f32.mrb[0].mxu0
      %v3692 = vadd.f32 0.0, %v3691
      %v3693 = vpop.f32.mrb[0].mxu0
      %3694 = vmatprep.mubr.f32.mxu0 0.0
      %3695 = vmatmul.mubr.f32.gmra.mrb[0].mxu0 %v3359
      %v3696 = vpop.f32.mrb[0].mxu0
      %v3697 = vadd.f32 0.0, %v3696
      %v3698 = vpop.f32.mrb[0].mxu0
      %3699 = vmatprep.mubr.f32.mxu0 0.0
      %3700 = vmatmul.mubr.f32.gmra.mrb[0].mxu0 %v3362
      %v3701 = vpop.f32.mrb[0].mxu0
      %v3702 = vadd.f32 0.0, %v3701
      %v3703 = vpop.f32.mrb[0].mxu0
      %3704 = vmatprep.mubr.f32.mxu0 0.0
      %3705 = vmatmul.mubr.f32.gmra.mrb[0].mxu0 %v3365
      %v3706 = vpop.f32.mrb[0].mxu0
      %v3707 = vadd.f32 0.0, %v3706
      %v3708 = vpop.f32.mrb[0].mxu0
      %3709 = vmatprep.mubr.f32.mxu0 0.0
      %3710 = vmatmul.mubr.f32.gmra.mrb[0].mxu0 %v3368
      %v3711 = vpop.f32.mrb[0].mxu0
      %v3712 = vadd.f32 0.0, %v3711
      %v3713 = vpop.f32.mrb[0].mxu0
      %3714 = vmatprep.mubr.f32.mxu0 0.0
      %3715 = vmatmul.mubr.f32.gmra.mrb[0].mxu0 %v3371
      %v3716 = vpop.f32.mrb[0].mxu0
      %v3717 = vadd.f32 0.0, %v3716
      %v3718 = vpop.f32.mrb[0].mxu0
      %3719 = vmatprep.mubr.f32.mxu0 0.0
      %3720 = vmatmul.mubr.f32.gmra.mrb[0].mxu0 %v3374
      %v3721 = vpop.f32.mrb[0].mxu0
      %v3722 = vadd.f32 0.0, %v3721
      %v3723 = vpop.f32.mrb[0].mxu0
      %3724 = vmatprep.mubr.f32.mxu0 0.0
      %3725 = vmatmul.mubr.f32.gmra.mrb[0].mxu0 %v3377
      %v3726 = vpop.f32.mrb[0].mxu0
      %v3727 = vadd.f32 0.0, %v3726
      %v3728 = vpop.f32.mrb[0].mxu0
      %3729 = vmatprep.mubr.f32.mxu0 0.0
      %3730 = vmatmul.mubr.f32.gmra.mrb[0].mxu0 %v3380
      %v3731 = vpop.f32.mrb[0].mxu0
      %v3732 = vadd.f32 0.0, %v3731
      %v3733 = vpop.f32.mrb[0].mxu0
      %3734 = vmatprep.mubr.f32.mxu0 0.0
      %3735 = vmatmul.mubr.f32.gmra.mrb[0].mxu0 %v3383
      %v3736 = vpop.f32.mrb[0].mxu0
      %v3737 = vadd.f32 0.0, %v3736
      %v3738 = vpop.f32.mrb[0].mxu0
      %3739 = vmatprep.mubr.f32.mxu0 0.0
      %3740 = vmatmul.mubr.f32.gmra.mrb[0].mxu0 %v3386
      %v3741 = vpop.f32.mrb[0].mxu0
      %v3742 = vadd.f32 0.0, %v3741
      %v3743 = vpop.f32.mrb[0].mxu0
      %3744 = vmatprep.mubr.f32.mxu0 0.0
      %3745 = vmatmul.mubr.f32.gmra.mrb[0].mxu0 %v3389
      %v3746 = vpop.f32.mrb[0].mxu0
      %v3747 = vadd.f32 0.0, %v3746
      %v3748 = vpop.f32.mrb[0].mxu0
      %3749 = vmatprep.mubr.f32.mxu0 0.0
      %3750 = vmatmul.mubr.f32.gmra.mrb[0].mxu0 %v3392
      %v3751 = vpop.f32.mrb[0].mxu0
      %v3752 = vadd.f32 0.0, %v3751
      %v3753 = vpop.f32.mrb[0].mxu0
      %3754 = vmatprep.mubr.f32.mxu0 0.0
      %3755 = vmatmul.mubr.f32.gmra.mrb[0].mxu0 %v3395
      %v3756 = vpop.f32.mrb[0].mxu0
      %v3757 = vadd.f32 0.0, %v3756
      %v3758 = vpop.f32.mrb[0].mxu0
      %3759 = vmatprep.mubr.f32.mxu0 0.0
      %3760 = vmatmul.mubr.f32.gmra.mrb[0].mxu0 %v3398
      %v3761 = vpop.f32.mrb[0].mxu0
      %v3762 = vadd.f32 0.0, %v3761
      %v3763 = vpop.f32.mrb[0].mxu0
      %3764 = vmatprep.mubr.f32.mxu0 0.0
      %3765 = vmatmul.mubr.f32.gmra.mrb[0].mxu0 %v3401
      %v3766 = vpop.f32.mrb[0].mxu0
      %v3767 = vadd.f32 0.0, %v3766
      %v3768 = vpop.f32.mrb[0].mxu0
      %3769 = vmatprep.mubr.f32.mxu0 0.0
      %3770 = vmatmul.mubr.f32.gmra.mrb[0].mxu0 %v3404
      %v3771 = vpop.f32.mrb[0].mxu0
      %v3772 = vadd.f32 0.0, %v3771
      %v3773 = vpop.f32.mrb[0].mxu0
      %3774 = vmatprep.mubr.f32.mxu0 0.0
      %3775 = vmatmul.mubr.f32.gmra.mrb[0].mxu0 %v3407
      %v3776 = vpop.f32.mrb[0].mxu0
      %v3777 = vadd.f32 0.0, %v3776
      %v3778 = vpop.f32.mrb[0].mxu0
      %3779 = vmatprep.mubr.f32.mxu0 0.0
      %3780 = vmatmul.mubr.f32.gmra.mrb[0].mxu0 %v3410
      %v3781 = vpop.f32.mrb[0].mxu0
      %v3782 = vadd.f32 0.0, %v3781
      %v3783 = vpop.f32.mrb[0].mxu0
      %3784 = vmatprep.mubr.f32.mxu0 0.0
      %3785 = vmatmul.mubr.f32.gmra.mrb[0].mxu0 %v3413
      %v3786 = vpop.f32.mrb[0].mxu0
      %v3787 = vadd.f32 0.0, %v3786
      %v3788 = vpop.f32.mrb[0].mxu0
      %3789 = vmatprep.mubr.f32.mxu0 0.0
      %3790 = vmatmul.mubr.f32.gmra.mrb[0].mxu0 %v3416
      %v3791 = vpop.f32.mrb[0].mxu0
      %v3792 = vadd.f32 0.0, %v3791
      %v3793 = vpop.f32.mrb[0].mxu0
      %3794 = vmatprep.mubr.f32.mxu0 0.0
      %3795 = vmatmul.mubr.f32.gmra.mrb[0].mxu0 %v3419
      %v3796 = vpop.f32.mrb[0].mxu0
      %v3797 = vadd.f32 0.0, %v3796
      %v3798 = vpop.f32.mrb[0].mxu0
      %3799 = vmatprep.mubr.f32.mxu0 0.0
      %3800 = vmatmul.mubr.f32.gmra.mrb[0].mxu0 %v3422
      %v3801 = vpop.f32.mrb[0].mxu0
      %v3802 = vadd.f32 0.0, %v3801
      %v3803 = vpop.f32.mrb[0].mxu0
      %3804 = vmatprep.mubr.f32.mxu0 0.0
      %3805 = vmatmul.mubr.f32.gmra.mrb[0].mxu0 %v3425
      %v3806 = vpop.f32.mrb[0].mxu0
      %v3807 = vadd.f32 0.0, %v3806
      %v3808 = vpop.f32.mrb[0].mxu0
      %3809 = vmatprep.mubr.f32.mxu0 0.0
      %3810 = vmatmul.mubr.f32.gmra.mrb[0].mxu0 %v3428
      %v3811 = vpop.f32.mrb[0].mxu0
      %v3812 = vadd.f32 0.0, %v3811
      %v3813 = vpop.f32.mrb[0].mxu0
      %3814 = vdwg.mxu0
      %v3815 = vadd.f32 %v2852, %v3497
      %v3816 = vadd.f32 %v2857, %v3502
      %v3817 = vadd.f32 %v2862, %v3507
      %v3818 = vadd.f32 %v2867, %v3512
      %v3819 = vadd.f32 %v2872, %v3517
      %v3820 = vadd.f32 %v2877, %v3522
      %v3821 = vadd.f32 %v2882, %v3527
      %v3822 = vadd.f32 %v2887, %v3532
      %v3823 = vadd.f32 %v2892, %v3537
      %v3824 = vadd.f32 %v2897, %v3542
      %v3825 = vadd.f32 %v2902, %v3547
      %v3826 = vadd.f32 %v2907, %v3552
      %v3827 = vadd.f32 %v2912, %v3557
      %v3828 = vadd.f32 %v2917, %v3562
      %v3829 = vadd.f32 %v2922, %v3567
      %v3830 = vadd.f32 %v2927, %v3572
      %v3831 = vadd.f32 %v2932, %v3577
      %v3832 = vadd.f32 %v2937, %v3582
      %v3833 = vadd.f32 %v2942, %v3587
      %v3834 = vadd.f32 %v2947, %v3592
      %v3835 = vadd.f32 %v2952, %v3597
      %v3836 = vadd.f32 %v2957, %v3602
      %v3837 = vadd.f32 %v2962, %v3607
      %v3838 = vadd.f32 %v2967, %v3612
      %v3839 = vadd.f32 %v2972, %v3617
      %v3840 = vadd.f32 %v2977, %v3622
      %v3841 = vadd.f32 %v2982, %v3627
      %v3842 = vadd.f32 %v2987, %v3632
      %v3843 = vadd.f32 %v2992, %v3637
      %v3844 = vadd.f32 %v2997, %v3642
      %v3845 = vadd.f32 %v3002, %v3647
      %v3846 = vadd.f32 %v3007, %v3652
      %v3847 = vadd.f32 %v3012, %v3657
      %v3848 = vadd.f32 %v3017, %v3662
      %v3849 = vadd.f32 %v3022, %v3667
      %v3850 = vadd.f32 %v3027, %v3672
      %v3851 = vadd.f32 %v3032, %v3677
      %v3852 = vadd.f32 %v3037, %v3682
      %v3853 = vadd.f32 %v3042, %v3687
      %v3854 = vadd.f32 %v3047, %v3692
      %v3855 = vadd.f32 %v3052, %v3697
      %v3856 = vadd.f32 %v3057, %v3702
      %v3857 = vadd.f32 %v3062, %v3707
      %v3858 = vadd.f32 %v3067, %v3712
      %v3859 = vadd.f32 %v3072, %v3717
      %v3860 = vadd.f32 %v3077, %v3722
      %v3861 = vadd.f32 %v3082, %v3727
      %v3862 = vadd.f32 %v3087, %v3732
      %v3863 = vadd.f32 %v3092, %v3737
      %v3864 = vadd.f32 %v3097, %v3742
      %v3865 = vadd.f32 %v3102, %v3747
      %v3866 = vadd.f32 %v3107, %v3752
      %v3867 = vadd.f32 %v3112, %v3757
      %v3868 = vadd.f32 %v3117, %v3762
      %v3869 = vadd.f32 %v3122, %v3767
      %v3870 = vadd.f32 %v3127, %v3772
      %v3871 = vadd.f32 %v3132, %v3777
      %v3872 = vadd.f32 %v3137, %v3782
      %v3873 = vadd.f32 %v3142, %v3787
      %v3874 = vadd.f32 %v3147, %v3792
      %v3875 = vadd.f32 %v3152, %v3797
      %v3876 = vadd.f32 %v3157, %v3802
      %v3877 = vadd.f32 %v3162, %v3807
      %v3878 = vadd.f32 %v3167, %v3812
      %v3879 = vld [vmem:[#allocation2 + $0xf] sm:$0xff]
      %v3880 = vld [vmem:[#allocation2 + $0x17] sm:$0xff]
      %v3881 = vld [vmem:[#allocation2 + $0x1f] sm:$0xff]
      %v3882 = vld [vmem:[#allocation2 + $0x27] sm:$0xff]
      %v3883 = vld [vmem:[#allocation2 + $0x2f] sm:$0xff]
      %v3884 = vld [vmem:[#allocation2 + $0x37] sm:$0xff]
      %v3885 = vld [vmem:[#allocation2 + $0x3f] sm:$0xff]
      %v3886 = vld [vmem:[#allocation2 + $0x47] sm:$0xff]
      %v3887 = vld [vmem:[#allocation2 + $0x4f] sm:$0xff]
      %v3888 = vld [vmem:[#allocation2 + $0x57] sm:$0xff]
      %v3889 = vld [vmem:[#allocation2 + $0x5f] sm:$0xff]
      %v3890 = vld [vmem:[#allocation2 + $0x67] sm:$0xff]
      %v3891 = vld [vmem:[#allocation2 + $0x6f] sm:$0xff]
      %v3892 = vld [vmem:[#allocation2 + $0x77] sm:$0xff]
      %v3893 = vld [vmem:[#allocation2 + $0x7f] sm:$0xff]
      %v3894 = vld [vmem:[#allocation2 + $0x87] sm:$0xff]
      %v3895 = vld [vmem:[#allocation2 + $0x8f] sm:$0xff]
      %v3896 = vld [vmem:[#allocation2 + $0x97] sm:$0xff]
      %v3897 = vld [vmem:[#allocation2 + $0x9f] sm:$0xff]
      %v3898 = vld [vmem:[#allocation2 + $0xa7] sm:$0xff]
      %v3899 = vld [vmem:[#allocation2 + $0xaf] sm:$0xff]
      %v3900 = vld [vmem:[#allocation2 + $0xb7] sm:$0xff]
      %v3901 = vld [vmem:[#allocation2 + $0xbf] sm:$0xff]
      %v3902 = vld [vmem:[#allocation2 + $0xc7] sm:$0xff]
      %v3903 = vld [vmem:[#allocation2 + $0xcf] sm:$0xff]
      %v3904 = vld [vmem:[#allocation2 + $0xd7] sm:$0xff]
      %v3905 = vld [vmem:[#allocation2 + $0xdf] sm:$0xff]
      %v3906 = vld [vmem:[#allocation2 + $0xe7] sm:$0xff]
      %v3907 = vld [vmem:[#allocation2 + $0xef] sm:$0xff]
      %v3908 = vld [vmem:[#allocation2 + $0xf7] sm:$0xff]
      %v3909 = vld [vmem:[#allocation2 + $0xff] sm:$0xff]
      %v3910 = vld [vmem:[#allocation2 + $0x107] sm:$0xff]
      %v3911 = vld [vmem:[#allocation2 + $0x10f] sm:$0xff]
      %v3912 = vld [vmem:[#allocation2 + $0x117] sm:$0xff]
      %v3913 = vld [vmem:[#allocation2 + $0x11f] sm:$0xff]
      %v3914 = vld [vmem:[#allocation2 + $0x127] sm:$0xff]
      %v3915 = vld [vmem:[#allocation2 + $0x12f] sm:$0xff]
      %v3916 = vld [vmem:[#allocation2 + $0x137] sm:$0xff]
      %v3917 = vld [vmem:[#allocation2 + $0x13f] sm:$0xff]
      %v3918 = vld [vmem:[#allocation2 + $0x147] sm:$0xff]
      %v3919 = vld [vmem:[#allocation2 + $0x14f] sm:$0xff]
      %v3920 = vld [vmem:[#allocation2 + $0x157] sm:$0xff]
      %v3921 = vld [vmem:[#allocation2 + $0x15f] sm:$0xff]
      %v3922 = vld [vmem:[#allocation2 + $0x167] sm:$0xff]
      %v3923 = vld [vmem:[#allocation2 + $0x16f] sm:$0xff]
      %v3924 = vld [vmem:[#allocation2 + $0x177] sm:$0xff]
      %v3925 = vld [vmem:[#allocation2 + $0x17f] sm:$0xff]
      %v3926 = vld [vmem:[#allocation2 + $0x187] sm:$0xff]
      %v3927 = vld [vmem:[#allocation2 + $0x18f] sm:$0xff]
      %v3928 = vld [vmem:[#allocation2 + $0x197] sm:$0xff]
      %v3929 = vld [vmem:[#allocation2 + $0x19f] sm:$0xff]
      %v3930 = vld [vmem:[#allocation2 + $0x1a7] sm:$0xff]
      %v3931 = vld [vmem:[#allocation2 + $0x1af] sm:$0xff]
      %v3932 = vld [vmem:[#allocation2 + $0x1b7] sm:$0xff]
      %v3933 = vld [vmem:[#allocation2 + $0x1bf] sm:$0xff]
      %v3934 = vld [vmem:[#allocation2 + $0x1c7] sm:$0xff]
      %v3935 = vld [vmem:[#allocation2 + $0x1cf] sm:$0xff]
      %v3936 = vld [vmem:[#allocation2 + $0x1d7] sm:$0xff]
      %v3937 = vld [vmem:[#allocation2 + $0x1df] sm:$0xff]
      %v3938 = vld [vmem:[#allocation2 + $0x1e7] sm:$0xff]
      %v3939 = vld [vmem:[#allocation2 + $0x1ef] sm:$0xff]
      %v3940 = vld [vmem:[#allocation2 + $0x1f7] sm:$0xff]
      %v3941 = vld [vmem:[#allocation2 + $0x1ff] sm:$0xff]
      %v3942 = vld [vmem:[#allocation2 + $0x207] sm:$0xff]
      %v3943 = vld [vmem:[%s1 + $0x48] sm:$0xff]
      %v3944 = vld [vmem:[%s1 + $0x50] sm:$0xff]
      %v3945 = vld [vmem:[%s1 + $0x58] sm:$0xff]
      %v3946 = vld [vmem:[%s1 + $0x60] sm:$0xff]
      %v3948 = vsel %vm1095, %v3879, 0
      %v3951 = vsel %vm1095, %v3880, 0
      %v3954 = vsel %vm1095, %v3881, 0
      %v3957 = vsel %vm1095, %v3882, 0
      %v3960 = vsel %vm1095, %v3883, 0
      %v3963 = vsel %vm1095, %v3884, 0
      %v3966 = vsel %vm1095, %v3885, 0
      %v3969 = vsel %vm1095, %v3886, 0
      %v3972 = vsel %vm1095, %v3887, 0
      %v3975 = vsel %vm1095, %v3888, 0
      %v3978 = vsel %vm1095, %v3889, 0
      %v3981 = vsel %vm1095, %v3890, 0
      %v3984 = vsel %vm1095, %v3891, 0
      %v3987 = vsel %vm1095, %v3892, 0
      %v3990 = vsel %vm1095, %v3893, 0
      %v3993 = vsel %vm1095, %v3894, 0
      %v3996 = vsel %vm1095, %v3895, 0
      %v3999 = vsel %vm1095, %v3896, 0
      %v4002 = vsel %vm1095, %v3897, 0
      %v4005 = vsel %vm1095, %v3898, 0
      %v4008 = vsel %vm1095, %v3899, 0
      %v4011 = vsel %vm1095, %v3900, 0
      %v4014 = vsel %vm1095, %v3901, 0
      %v4017 = vsel %vm1095, %v3902, 0
      %v4020 = vsel %vm1095, %v3903, 0
      %v4023 = vsel %vm1095, %v3904, 0
      %v4026 = vsel %vm1095, %v3905, 0
      %v4029 = vsel %vm1095, %v3906, 0
      %v4032 = vsel %vm1095, %v3907, 0
      %v4035 = vsel %vm1095, %v3908, 0
      %v4038 = vsel %vm1095, %v3909, 0
      %v4041 = vsel %vm1095, %v3910, 0
      %v4044 = vsel %vm1095, %v3911, 0
      %v4047 = vsel %vm1095, %v3912, 0
      %v4050 = vsel %vm1095, %v3913, 0
      %v4053 = vsel %vm1095, %v3914, 0
      %v4056 = vsel %vm1095, %v3915, 0
      %v4059 = vsel %vm1095, %v3916, 0
      %v4062 = vsel %vm1095, %v3917, 0
      %v4065 = vsel %vm1095, %v3918, 0
      %v4068 = vsel %vm1095, %v3919, 0
      %v4071 = vsel %vm1095, %v3920, 0
      %v4074 = vsel %vm1095, %v3921, 0
      %v4077 = vsel %vm1095, %v3922, 0
      %v4080 = vsel %vm1095, %v3923, 0
      %v4083 = vsel %vm1095, %v3924, 0
      %v4086 = vsel %vm1095, %v3925, 0
      %v4089 = vsel %vm1095, %v3926, 0
      %v4092 = vsel %vm1095, %v3927, 0
      %v4095 = vsel %vm1095, %v3928, 0
      %v4098 = vsel %vm1095, %v3929, 0
      %v4101 = vsel %vm1095, %v3930, 0
      %v4104 = vsel %vm1095, %v3931, 0
      %v4107 = vsel %vm1095, %v3932, 0
      %v4110 = vsel %vm1095, %v3933, 0
      %v4113 = vsel %vm1095, %v3934, 0
      %v4116 = vsel %vm1095, %v3935, 0
      %v4119 = vsel %vm1095, %v3936, 0
      %v4122 = vsel %vm1095, %v3937, 0
      %v4125 = vsel %vm1095, %v3938, 0
      %v4128 = vsel %vm1095, %v3939, 0
      %v4131 = vsel %vm1095, %v3940, 0
      %v4134 = vsel %vm1095, %v3941, 0
      %v4137 = vsel %vm1095, %v3942, 0
      %4139 = vmatprep.subr.mxu0 0.0
      %4140 = vmatpush1.msra.mxu0 %v3943
      %4141 = vmatprep.subr.mxu0 0.0
      %4142 = vmatpush1.msra.mxu0 %v3944
      %4143 = vmatprep.subr.mxu0 0.0
      %4144 = vmatpush1.msra.mxu0 %v3945
      %4145 = vmatprep.subr.mxu0 0.0
      %4146 = vmatpush1.msra.mxu0 %v3946
      %4147 = vmatprep.subr.mxu0 0.0
      %4148 = vmatpush1.msra.mxu0 0.0
      %4149 = vmatprep.subr.mxu0 0.0
      %4150 = vmatpush1.msra.mxu0 0.0
      %4151 = vmatprep.subr.mxu0 0.0
      %4152 = vmatpush1.msra.mxu0 0.0
      %4153 = vmatprep.subr.mxu0 0.0
      %4154 = vmatpush1.msra.mxu0 0.0
      %4155 = vmatprep.subr.mxu0 0.0
      %4156 = vmatpush1.msra.mxu0 0.0
      %4157 = vmatprep.subr.mxu0 0.0
      %4158 = vmatpush1.msra.mxu0 0.0
      %4159 = vmatprep.subr.mxu0 0.0
      %4160 = vmatpush1.msra.mxu0 0.0
      %4161 = vmatprep.subr.mxu0 0.0
      %4162 = vmatpush1.msra.mxu0 0.0
      %4163 = vmatprep.subr.mxu0 0.0
      %4164 = vmatpush1.msra.mxu0 0.0
      %4165 = vmatprep.subr.mxu0 0.0
      %4166 = vmatpush1.msra.mxu0 0.0
      %4167 = vmatprep.subr.mxu0 0.0
      %4168 = vmatpush1.msra.mxu0 0.0
      %4169 = vmatprep.subr.mxu0 0.0
      %4170 = vmatpush1.msra.mxu0 0.0
      %4171 = vmatprep.subr.mxu0 0.0
      %4172 = vmatpush1.msra.mxu0 0.0
      %4173 = vmatprep.subr.mxu0 0.0
      %4174 = vmatpush1.msra.mxu0 0.0
      %4175 = vmatprep.subr.mxu0 0.0
      %4176 = vmatpush1.msra.mxu0 0.0
      %4177 = vmatprep.subr.mxu0 0.0
      %4178 = vmatpush1.msra.mxu0 0.0
      %4179 = vmatprep.subr.mxu0 0.0
      %4180 = vmatpush1.msra.mxu0 0.0
      %4181 = vmatprep.subr.mxu0 0.0
      %4182 = vmatpush1.msra.mxu0 0.0
      %4183 = vmatprep.subr.mxu0 0.0
      %4184 = vmatpush1.msra.mxu0 0.0
      %4185 = vmatprep.subr.mxu0 0.0
      %4186 = vmatpush1.msra.mxu0 0.0
      %4187 = vmatprep.subr.mxu0 0.0
      %4188 = vmatpush1.msra.mxu0 0.0
      %4189 = vmatprep.subr.mxu0 0.0
      %4190 = vmatpush1.msra.mxu0 0.0
      %4191 = vmatprep.subr.mxu0 0.0
      %4192 = vmatpush1.msra.mxu0 0.0
      %4193 = vmatprep.subr.mxu0 0.0
      %4194 = vmatpush1.msra.mxu0 0.0
      %4195 = vmatprep.subr.mxu0 0.0
      %4196 = vmatpush1.msra.mxu0 0.0
      %4197 = vmatprep.subr.mxu0 0.0
      %4198 = vmatpush1.msra.mxu0 0.0
      %4199 = vmatprep.subr.mxu0 0.0
      %4200 = vmatpush1.msra.mxu0 0.0
      %4201 = vmatprep.subr.mxu0 0.0
      %4202 = vmatpush1.msra.mxu0 0.0
      %4203 = vmatprep.mubr.f32.mxu0 0.0
      %4204 = vmatmul.mubr.f32.gmra.mrb[0].mxu0 %v3948
      %v4205 = vpop.f32.mrb[0].mxu0
      %v4206 = vadd.f32 0.0, %v4205
      %v4207 = vpop.f32.mrb[0].mxu0
      %4208 = vmatprep.mubr.f32.mxu0 0.0
      %4209 = vmatmul.mubr.f32.gmra.mrb[0].mxu0 %v3951
      %v4210 = vpop.f32.mrb[0].mxu0
      %v4211 = vadd.f32 0.0, %v4210
      %v4212 = vpop.f32.mrb[0].mxu0
      %4213 = vmatprep.mubr.f32.mxu0 0.0
      %4214 = vmatmul.mubr.f32.gmra.mrb[0].mxu0 %v3954
      %v4215 = vpop.f32.mrb[0].mxu0
      %v4216 = vadd.f32 0.0, %v4215
      %v4217 = vpop.f32.mrb[0].mxu0
      %4218 = vmatprep.mubr.f32.mxu0 0.0
      %4219 = vmatmul.mubr.f32.gmra.mrb[0].mxu0 %v3957
      %v4220 = vpop.f32.mrb[0].mxu0
      %v4221 = vadd.f32 0.0, %v4220
      %v4222 = vpop.f32.mrb[0].mxu0
      %4223 = vmatprep.mubr.f32.mxu0 0.0
      %4224 = vmatmul.mubr.f32.gmra.mrb[0].mxu0 %v3960
      %v4225 = vpop.f32.mrb[0].mxu0
      %v4226 = vadd.f32 0.0, %v4225
      %v4227 = vpop.f32.mrb[0].mxu0
      %4228 = vmatprep.mubr.f32.mxu0 0.0
      %4229 = vmatmul.mubr.f32.gmra.mrb[0].mxu0 %v3963
      %v4230 = vpop.f32.mrb[0].mxu0
      %v4231 = vadd.f32 0.0, %v4230
      %v4232 = vpop.f32.mrb[0].mxu0
      %4233 = vmatprep.mubr.f32.mxu0 0.0
      %4234 = vmatmul.mubr.f32.gmra.mrb[0].mxu0 %v3966
      %v4235 = vpop.f32.mrb[0].mxu0
      %v4236 = vadd.f32 0.0, %v4235
      %v4237 = vpop.f32.mrb[0].mxu0
      %4238 = vmatprep.mubr.f32.mxu0 0.0
      %4239 = vmatmul.mubr.f32.gmra.mrb[0].mxu0 %v3969
      %v4240 = vpop.f32.mrb[0].mxu0
      %v4241 = vadd.f32 0.0, %v4240
      %v4242 = vpop.f32.mrb[0].mxu0
      %4243 = vmatprep.mubr.f32.mxu0 0.0
      %4244 = vmatmul.mubr.f32.gmra.mrb[0].mxu0 %v3972
      %v4245 = vpop.f32.mrb[0].mxu0
      %v4246 = vadd.f32 0.0, %v4245
      %v4247 = vpop.f32.mrb[0].mxu0
      %4248 = vmatprep.mubr.f32.mxu0 0.0
      %4249 = vmatmul.mubr.f32.gmra.mrb[0].mxu0 %v3975
      %v4250 = vpop.f32.mrb[0].mxu0
      %v4251 = vadd.f32 0.0, %v4250
      %v4252 = vpop.f32.mrb[0].mxu0
      %4253 = vmatprep.mubr.f32.mxu0 0.0
      %4254 = vmatmul.mubr.f32.gmra.mrb[0].mxu0 %v3978
      %v4255 = vpop.f32.mrb[0].mxu0
      %v4256 = vadd.f32 0.0, %v4255
      %v4257 = vpop.f32.mrb[0].mxu0
      %4258 = vmatprep.mubr.f32.mxu0 0.0
      %4259 = vmatmul.mubr.f32.gmra.mrb[0].mxu0 %v3981
      %v4260 = vpop.f32.mrb[0].mxu0
      %v4261 = vadd.f32 0.0, %v4260
      %v4262 = vpop.f32.mrb[0].mxu0
      %4263 = vmatprep.mubr.f32.mxu0 0.0
      %4264 = vmatmul.mubr.f32.gmra.mrb[0].mxu0 %v3984
      %v4265 = vpop.f32.mrb[0].mxu0
      %v4266 = vadd.f32 0.0, %v4265
      %v4267 = vpop.f32.mrb[0].mxu0
      %4268 = vmatprep.mubr.f32.mxu0 0.0
      %4269 = vmatmul.mubr.f32.gmra.mrb[0].mxu0 %v3987
      %v4270 = vpop.f32.mrb[0].mxu0
      %v4271 = vadd.f32 0.0, %v4270
      %v4272 = vpop.f32.mrb[0].mxu0
      %4273 = vmatprep.mubr.f32.mxu0 0.0
      %4274 = vmatmul.mubr.f32.gmra.mrb[0].mxu0 %v3990
      %v4275 = vpop.f32.mrb[0].mxu0
      %v4276 = vadd.f32 0.0, %v4275
      %v4277 = vpop.f32.mrb[0].mxu0
      %4278 = vmatprep.mubr.f32.mxu0 0.0
      %4279 = vmatmul.mubr.f32.gmra.mrb[0].mxu0 %v3993
      %v4280 = vpop.f32.mrb[0].mxu0
      %v4281 = vadd.f32 0.0, %v4280
      %v4282 = vpop.f32.mrb[0].mxu0
      %4283 = vmatprep.mubr.f32.mxu0 0.0
      %4284 = vmatmul.mubr.f32.gmra.mrb[0].mxu0 %v3996
      %v4285 = vpop.f32.mrb[0].mxu0
      %v4286 = vadd.f32 0.0, %v4285
      %v4287 = vpop.f32.mrb[0].mxu0
      %4288 = vmatprep.mubr.f32.mxu0 0.0
      %4289 = vmatmul.mubr.f32.gmra.mrb[0].mxu0 %v3999
      %v4290 = vpop.f32.mrb[0].mxu0
      %v4291 = vadd.f32 0.0, %v4290
      %v4292 = vpop.f32.mrb[0].mxu0
      %4293 = vmatprep.mubr.f32.mxu0 0.0
      %4294 = vmatmul.mubr.f32.gmra.mrb[0].mxu0 %v4002
      %v4295 = vpop.f32.mrb[0].mxu0
      %v4296 = vadd.f32 0.0, %v4295
      %v4297 = vpop.f32.mrb[0].mxu0
      %4298 = vmatprep.mubr.f32.mxu0 0.0
      %4299 = vmatmul.mubr.f32.gmra.mrb[0].mxu0 %v4005
      %v4300 = vpop.f32.mrb[0].mxu0
      %v4301 = vadd.f32 0.0, %v4300
      %v4302 = vpop.f32.mrb[0].mxu0
      %4303 = vmatprep.mubr.f32.mxu0 0.0
      %4304 = vmatmul.mubr.f32.gmra.mrb[0].mxu0 %v4008
      %v4305 = vpop.f32.mrb[0].mxu0
      %v4306 = vadd.f32 0.0, %v4305
      %v4307 = vpop.f32.mrb[0].mxu0
      %4308 = vmatprep.mubr.f32.mxu0 0.0
      %4309 = vmatmul.mubr.f32.gmra.mrb[0].mxu0 %v4011
      %v4310 = vpop.f32.mrb[0].mxu0
      %v4311 = vadd.f32 0.0, %v4310
      %v4312 = vpop.f32.mrb[0].mxu0
      %4313 = vmatprep.mubr.f32.mxu0 0.0
      %4314 = vmatmul.mubr.f32.gmra.mrb[0].mxu0 %v4014
      %v4315 = vpop.f32.mrb[0].mxu0
      %v4316 = vadd.f32 0.0, %v4315
      %v4317 = vpop.f32.mrb[0].mxu0
      %4318 = vmatprep.mubr.f32.mxu0 0.0
      %4319 = vmatmul.mubr.f32.gmra.mrb[0].mxu0 %v4017
      %v4320 = vpop.f32.mrb[0].mxu0
      %v4321 = vadd.f32 0.0, %v4320
      %v4322 = vpop.f32.mrb[0].mxu0
      %4323 = vmatprep.mubr.f32.mxu0 0.0
      %4324 = vmatmul.mubr.f32.gmra.mrb[0].mxu0 %v4020
      %v4325 = vpop.f32.mrb[0].mxu0
      %v4326 = vadd.f32 0.0, %v4325
      %v4327 = vpop.f32.mrb[0].mxu0
      %4328 = vmatprep.mubr.f32.mxu0 0.0
      %4329 = vmatmul.mubr.f32.gmra.mrb[0].mxu0 %v4023
      %v4330 = vpop.f32.mrb[0].mxu0
      %v4331 = vadd.f32 0.0, %v4330
      %v4332 = vpop.f32.mrb[0].mxu0
      %4333 = vmatprep.mubr.f32.mxu0 0.0
      %4334 = vmatmul.mubr.f32.gmra.mrb[0].mxu0 %v4026
      %v4335 = vpop.f32.mrb[0].mxu0
      %v4336 = vadd.f32 0.0, %v4335
      %v4337 = vpop.f32.mrb[0].mxu0
      %4338 = vmatprep.mubr.f32.mxu0 0.0
      %4339 = vmatmul.mubr.f32.gmra.mrb[0].mxu0 %v4029
      %v4340 = vpop.f32.mrb[0].mxu0
      %v4341 = vadd.f32 0.0, %v4340
      %v4342 = vpop.f32.mrb[0].mxu0
      %4343 = vmatprep.mubr.f32.mxu0 0.0
      %4344 = vmatmul.mubr.f32.gmra.mrb[0].mxu0 %v4032
      %v4345 = vpop.f32.mrb[0].mxu0
      %v4346 = vadd.f32 0.0, %v4345
      %v4347 = vpop.f32.mrb[0].mxu0
      %4348 = vmatprep.mubr.f32.mxu0 0.0
      %4349 = vmatmul.mubr.f32.gmra.mrb[0].mxu0 %v4035
      %v4350 = vpop.f32.mrb[0].mxu0
      %v4351 = vadd.f32 0.0, %v4350
      %v4352 = vpop.f32.mrb[0].mxu0
      %4353 = vmatprep.mubr.f32.mxu0 0.0
      %4354 = vmatmul.mubr.f32.gmra.mrb[0].mxu0 %v4038
      %v4355 = vpop.f32.mrb[0].mxu0
      %v4356 = vadd.f32 0.0, %v4355
      %v4357 = vpop.f32.mrb[0].mxu0
      %4358 = vmatprep.mubr.f32.mxu0 0.0
      %4359 = vmatmul.mubr.f32.gmra.mrb[0].mxu0 %v4041
      %v4360 = vpop.f32.mrb[0].mxu0
      %v4361 = vadd.f32 0.0, %v4360
      %v4362 = vpop.f32.mrb[0].mxu0
      %4363 = vmatprep.mubr.f32.mxu0 0.0
      %4364 = vmatmul.mubr.f32.gmra.mrb[0].mxu0 %v4044
      %v4365 = vpop.f32.mrb[0].mxu0
      %v4366 = vadd.f32 0.0, %v4365
      %v4367 = vpop.f32.mrb[0].mxu0
      %4368 = vmatprep.mubr.f32.mxu0 0.0
      %4369 = vmatmul.mubr.f32.gmra.mrb[0].mxu0 %v4047
      %v4370 = vpop.f32.mrb[0].mxu0
      %v4371 = vadd.f32 0.0, %v4370
      %v4372 = vpop.f32.mrb[0].mxu0
      %4373 = vmatprep.mubr.f32.mxu0 0.0
      %4374 = vmatmul.mubr.f32.gmra.mrb[0].mxu0 %v4050
      %v4375 = vpop.f32.mrb[0].mxu0
      %v4376 = vadd.f32 0.0, %v4375
      %v4377 = vpop.f32.mrb[0].mxu0
      %4378 = vmatprep.mubr.f32.mxu0 0.0
      %4379 = vmatmul.mubr.f32.gmra.mrb[0].mxu0 %v4053
      %v4380 = vpop.f32.mrb[0].mxu0
      %v4381 = vadd.f32 0.0, %v4380
      %v4382 = vpop.f32.mrb[0].mxu0
      %4383 = vmatprep.mubr.f32.mxu0 0.0
      %4384 = vmatmul.mubr.f32.gmra.mrb[0].mxu0 %v4056
      %v4385 = vpop.f32.mrb[0].mxu0
      %v4386 = vadd.f32 0.0, %v4385
      %v4387 = vpop.f32.mrb[0].mxu0
      %4388 = vmatprep.mubr.f32.mxu0 0.0
      %4389 = vmatmul.mubr.f32.gmra.mrb[0].mxu0 %v4059
      %v4390 = vpop.f32.mrb[0].mxu0
      %v4391 = vadd.f32 0.0, %v4390
      %v4392 = vpop.f32.mrb[0].mxu0
      %4393 = vmatprep.mubr.f32.mxu0 0.0
      %4394 = vmatmul.mubr.f32.gmra.mrb[0].mxu0 %v4062
      %v4395 = vpop.f32.mrb[0].mxu0
      %v4396 = vadd.f32 0.0, %v4395
      %v4397 = vpop.f32.mrb[0].mxu0
      %4398 = vmatprep.mubr.f32.mxu0 0.0
      %4399 = vmatmul.mubr.f32.gmra.mrb[0].mxu0 %v4065
      %v4400 = vpop.f32.mrb[0].mxu0
      %v4401 = vadd.f32 0.0, %v4400
      %v4402 = vpop.f32.mrb[0].mxu0
      %4403 = vmatprep.mubr.f32.mxu0 0.0
      %4404 = vmatmul.mubr.f32.gmra.mrb[0].mxu0 %v4068
      %v4405 = vpop.f32.mrb[0].mxu0
      %v4406 = vadd.f32 0.0, %v4405
      %v4407 = vpop.f32.mrb[0].mxu0
      %4408 = vmatprep.mubr.f32.mxu0 0.0
      %4409 = vmatmul.mubr.f32.gmra.mrb[0].mxu0 %v4071
      %v4410 = vpop.f32.mrb[0].mxu0
      %v4411 = vadd.f32 0.0, %v4410
      %v4412 = vpop.f32.mrb[0].mxu0
      %4413 = vmatprep.mubr.f32.mxu0 0.0
      %4414 = vmatmul.mubr.f32.gmra.mrb[0].mxu0 %v4074
      %v4415 = vpop.f32.mrb[0].mxu0
      %v4416 = vadd.f32 0.0, %v4415
      %v4417 = vpop.f32.mrb[0].mxu0
      %4418 = vmatprep.mubr.f32.mxu0 0.0
      %4419 = vmatmul.mubr.f32.gmra.mrb[0].mxu0 %v4077
      %v4420 = vpop.f32.mrb[0].mxu0
      %v4421 = vadd.f32 0.0, %v4420
      %v4422 = vpop.f32.mrb[0].mxu0
      %4423 = vmatprep.mubr.f32.mxu0 0.0
      %4424 = vmatmul.mubr.f32.gmra.mrb[0].mxu0 %v4080
      %v4425 = vpop.f32.mrb[0].mxu0
      %v4426 = vadd.f32 0.0, %v4425
      %v4427 = vpop.f32.mrb[0].mxu0
      %4428 = vmatprep.mubr.f32.mxu0 0.0
      %4429 = vmatmul.mubr.f32.gmra.mrb[0].mxu0 %v4083
      %v4430 = vpop.f32.mrb[0].mxu0
      %v4431 = vadd.f32 0.0, %v4430
      %v4432 = vpop.f32.mrb[0].mxu0
      %4433 = vmatprep.mubr.f32.mxu0 0.0
      %4434 = vmatmul.mubr.f32.gmra.mrb[0].mxu0 %v4086
      %v4435 = vpop.f32.mrb[0].mxu0
      %v4436 = vadd.f32 0.0, %v4435
      %v4437 = vpop.f32.mrb[0].mxu0
      %4438 = vmatprep.mubr.f32.mxu0 0.0
      %4439 = vmatmul.mubr.f32.gmra.mrb[0].mxu0 %v4089
      %v4440 = vpop.f32.mrb[0].mxu0
      %v4441 = vadd.f32 0.0, %v4440
      %v4442 = vpop.f32.mrb[0].mxu0
      %4443 = vmatprep.mubr.f32.mxu0 0.0
      %4444 = vmatmul.mubr.f32.gmra.mrb[0].mxu0 %v4092
      %v4445 = vpop.f32.mrb[0].mxu0
      %v4446 = vadd.f32 0.0, %v4445
      %v4447 = vpop.f32.mrb[0].mxu0
      %4448 = vmatprep.mubr.f32.mxu0 0.0
      %4449 = vmatmul.mubr.f32.gmra.mrb[0].mxu0 %v4095
      %v4450 = vpop.f32.mrb[0].mxu0
      %v4451 = vadd.f32 0.0, %v4450
      %v4452 = vpop.f32.mrb[0].mxu0
      %4453 = vmatprep.mubr.f32.mxu0 0.0
      %4454 = vmatmul.mubr.f32.gmra.mrb[0].mxu0 %v4098
      %v4455 = vpop.f32.mrb[0].mxu0
      %v4456 = vadd.f32 0.0, %v4455
      %v4457 = vpop.f32.mrb[0].mxu0
      %4458 = vmatprep.mubr.f32.mxu0 0.0
      %4459 = vmatmul.mubr.f32.gmra.mrb[0].mxu0 %v4101
      %v4460 = vpop.f32.mrb[0].mxu0
      %v4461 = vadd.f32 0.0, %v4460
      %v4462 = vpop.f32.mrb[0].mxu0
      %4463 = vmatprep.mubr.f32.mxu0 0.0
      %4464 = vmatmul.mubr.f32.gmra.mrb[0].mxu0 %v4104
      %v4465 = vpop.f32.mrb[0].mxu0
      %v4466 = vadd.f32 0.0, %v4465
      %v4467 = vpop.f32.mrb[0].mxu0
      %4468 = vmatprep.mubr.f32.mxu0 0.0
      %4469 = vmatmul.mubr.f32.gmra.mrb[0].mxu0 %v4107
      %v4470 = vpop.f32.mrb[0].mxu0
      %v4471 = vadd.f32 0.0, %v4470
      %v4472 = vpop.f32.mrb[0].mxu0
      %4473 = vmatprep.mubr.f32.mxu0 0.0
      %4474 = vmatmul.mubr.f32.gmra.mrb[0].mxu0 %v4110
      %v4475 = vpop.f32.mrb[0].mxu0
      %v4476 = vadd.f32 0.0, %v4475
      %v4477 = vpop.f32.mrb[0].mxu0
      %4478 = vmatprep.mubr.f32.mxu0 0.0
      %4479 = vmatmul.mubr.f32.gmra.mrb[0].mxu0 %v4113
      %v4480 = vpop.f32.mrb[0].mxu0
      %v4481 = vadd.f32 0.0, %v4480
      %v4482 = vpop.f32.mrb[0].mxu0
      %4483 = vmatprep.mubr.f32.mxu0 0.0
      %4484 = vmatmul.mubr.f32.gmra.mrb[0].mxu0 %v4116
      %v4485 = vpop.f32.mrb[0].mxu0
      %v4486 = vadd.f32 0.0, %v4485
      %v4487 = vpop.f32.mrb[0].mxu0
      %4488 = vmatprep.mubr.f32.mxu0 0.0
      %4489 = vmatmul.mubr.f32.gmra.mrb[0].mxu0 %v4119
      %v4490 = vpop.f32.mrb[0].mxu0
      %v4491 = vadd.f32 0.0, %v4490
      %v4492 = vpop.f32.mrb[0].mxu0
      %4493 = vmatprep.mubr.f32.mxu0 0.0
      %4494 = vmatmul.mubr.f32.gmra.mrb[0].mxu0 %v4122
      %v4495 = vpop.f32.mrb[0].mxu0
      %v4496 = vadd.f32 0.0, %v4495
      %v4497 = vpop.f32.mrb[0].mxu0
      %4498 = vmatprep.mubr.f32.mxu0 0.0
      %4499 = vmatmul.mubr.f32.gmra.mrb[0].mxu0 %v4125
      %v4500 = vpop.f32.mrb[0].mxu0
      %v4501 = vadd.f32 0.0, %v4500
      %v4502 = vpop.f32.mrb[0].mxu0
      %4503 = vmatprep.mubr.f32.mxu0 0.0
      %4504 = vmatmul.mubr.f32.gmra.mrb[0].mxu0 %v4128
      %v4505 = vpop.f32.mrb[0].mxu0
      %v4506 = vadd.f32 0.0, %v4505
      %v4507 = vpop.f32.mrb[0].mxu0
      %4508 = vmatprep.mubr.f32.mxu0 0.0
      %4509 = vmatmul.mubr.f32.gmra.mrb[0].mxu0 %v4131
      %v4510 = vpop.f32.mrb[0].mxu0
      %v4511 = vadd.f32 0.0, %v4510
      %v4512 = vpop.f32.mrb[0].mxu0
      %4513 = vmatprep.mubr.f32.mxu0 0.0
      %4514 = vmatmul.mubr.f32.gmra.mrb[0].mxu0 %v4134
      %v4515 = vpop.f32.mrb[0].mxu0
      %v4516 = vadd.f32 0.0, %v4515
      %v4517 = vpop.f32.mrb[0].mxu0
      %4518 = vmatprep.mubr.f32.mxu0 0.0
      %4519 = vmatmul.mubr.f32.gmra.mrb[0].mxu0 %v4137
      %v4520 = vpop.f32.mrb[0].mxu0
      %v4521 = vadd.f32 0.0, %v4520
      %v4522 = vpop.f32.mrb[0].mxu0
      %4523 = vdwg.mxu0
      %v4524 = vadd.f32 %v3815, %v4206
      %v4525 = vadd.f32 %v3816, %v4211
      %v4526 = vadd.f32 %v3817, %v4216
      %v4527 = vadd.f32 %v3818, %v4221
      %v4528 = vadd.f32 %v3819, %v4226
      %v4529 = vadd.f32 %v3820, %v4231
      %v4530 = vadd.f32 %v3821, %v4236
      %v4531 = vadd.f32 %v3822, %v4241
      %v4532 = vadd.f32 %v3823, %v4246
      %v4533 = vadd.f32 %v3824, %v4251
      %v4534 = vadd.f32 %v3825, %v4256
      %v4535 = vadd.f32 %v3826, %v4261
      %v4536 = vadd.f32 %v3827, %v4266
      %v4537 = vadd.f32 %v3828, %v4271
      %v4538 = vadd.f32 %v3829, %v4276
      %v4539 = vadd.f32 %v3830, %v4281
      %v4540 = vadd.f32 %v3831, %v4286
      %v4541 = vadd.f32 %v3832, %v4291
      %v4542 = vadd.f32 %v3833, %v4296
      %v4543 = vadd.f32 %v3834, %v4301
      %v4544 = vadd.f32 %v3835, %v4306
      %v4545 = vadd.f32 %v3836, %v4311
      %v4546 = vadd.f32 %v3837, %v4316
      %v4547 = vadd.f32 %v3838, %v4321
      %v4548 = vadd.f32 %v3839, %v4326
      %v4549 = vadd.f32 %v3840, %v4331
      %v4550 = vadd.f32 %v3841, %v4336
      %v4551 = vadd.f32 %v3842, %v4341
      %v4552 = vadd.f32 %v3843, %v4346
      %v4553 = vadd.f32 %v3844, %v4351
      %v4554 = vadd.f32 %v3845, %v4356
      %v4555 = vadd.f32 %v3846, %v4361
      %v4556 = vadd.f32 %v3847, %v4366
      %v4557 = vadd.f32 %v3848, %v4371
      %v4558 = vadd.f32 %v3849, %v4376
      %v4559 = vadd.f32 %v3850, %v4381
      %v4560 = vadd.f32 %v3851, %v4386
      %v4561 = vadd.f32 %v3852, %v4391
      %v4562 = vadd.f32 %v3853, %v4396
      %v4563 = vadd.f32 %v3854, %v4401
      %v4564 = vadd.f32 %v3855, %v4406
      %v4565 = vadd.f32 %v3856, %v4411
      %v4566 = vadd.f32 %v3857, %v4416
      %v4567 = vadd.f32 %v3858, %v4421
      %v4568 = vadd.f32 %v3859, %v4426
      %v4569 = vadd.f32 %v3860, %v4431
      %v4570 = vadd.f32 %v3861, %v4436
      %v4571 = vadd.f32 %v3862, %v4441
      %v4572 = vadd.f32 %v3863, %v4446
      %v4573 = vadd.f32 %v3864, %v4451
      %v4574 = vadd.f32 %v3865, %v4456
      %v4575 = vadd.f32 %v3866, %v4461
      %v4576 = vadd.f32 %v3867, %v4466
      %v4577 = vadd.f32 %v3868, %v4471
      %v4578 = vadd.f32 %v3869, %v4476
      %v4579 = vadd.f32 %v3870, %v4481
      %v4580 = vadd.f32 %v3871, %v4486
      %v4581 = vadd.f32 %v3872, %v4491
      %v4582 = vadd.f32 %v3873, %v4496
      %v4583 = vadd.f32 %v3874, %v4501
      %v4584 = vadd.f32 %v3875, %v4506
      %v4585 = vadd.f32 %v3876, %v4511
      %v4586 = vadd.f32 %v3877, %v4516
      %v4587 = vadd.f32 %v3878, %v4521
      %v4588 = vld [vmem:[%s1 + $0x110] sm:$0x1]
      %v4589 = vlaneseq
      %v4590 = vshrl.u32 %v4589, 7
      %v4591 = vsub.s32 0, %v4590
      %v4592 = vrot.slane %v4588, %v4591
      %v4593 = vadd.f32 %v4524, %v4592
      %v4594 = vadd.f32 %v4525, %v4592
      %v4595 = vadd.f32 %v4526, %v4592
      %v4596 = vadd.f32 %v4527, %v4592
      %v4597 = vadd.f32 %v4528, %v4592
      %v4598 = vadd.f32 %v4529, %v4592
      %v4599 = vadd.f32 %v4530, %v4592
      %v4600 = vadd.f32 %v4531, %v4592
      %v4601 = vadd.f32 %v4532, %v4592
      %v4602 = vadd.f32 %v4533, %v4592
      %v4603 = vadd.f32 %v4534, %v4592
      %v4604 = vadd.f32 %v4535, %v4592
      %v4605 = vadd.f32 %v4536, %v4592
      %v4606 = vadd.f32 %v4537, %v4592
      %v4607 = vadd.f32 %v4538, %v4592
      %v4608 = vadd.f32 %v4539, %v4592
      %v4609 = vadd.f32 %v4540, %v4592
      %v4610 = vadd.f32 %v4541, %v4592
      %v4611 = vadd.f32 %v4542, %v4592
      %v4612 = vadd.f32 %v4543, %v4592
      %v4613 = vadd.f32 %v4544, %v4592
      %v4614 = vadd.f32 %v4545, %v4592
      %v4615 = vadd.f32 %v4546, %v4592
      %v4616 = vadd.f32 %v4547, %v4592
      %v4617 = vadd.f32 %v4548, %v4592
      %v4618 = vadd.f32 %v4549, %v4592
      %v4619 = vadd.f32 %v4550, %v4592
      %v4620 = vadd.f32 %v4551, %v4592
      %v4621 = vadd.f32 %v4552, %v4592
      %v4622 = vadd.f32 %v4553, %v4592
      %v4623 = vadd.f32 %v4554, %v4592
      %v4624 = vadd.f32 %v4555, %v4592
      %v4625 = vadd.f32 %v4556, %v4592
      %v4626 = vadd.f32 %v4557, %v4592
      %v4627 = vadd.f32 %v4558, %v4592
      %v4628 = vadd.f32 %v4559, %v4592
      %v4629 = vadd.f32 %v4560, %v4592
      %v4630 = vadd.f32 %v4561, %v4592
      %v4631 = vadd.f32 %v4562, %v4592
      %v4632 = vadd.f32 %v4563, %v4592
      %v4633 = vadd.f32 %v4564, %v4592
      %v4634 = vadd.f32 %v4565, %v4592
      %v4635 = vadd.f32 %v4566, %v4592
      %v4636 = vadd.f32 %v4567, %v4592
      %v4637 = vadd.f32 %v4568, %v4592
      %v4638 = vadd.f32 %v4569, %v4592
      %v4639 = vadd.f32 %v4570, %v4592
      %v4640 = vadd.f32 %v4571, %v4592
      %v4641 = vadd.f32 %v4572, %v4592
      %v4642 = vadd.f32 %v4573, %v4592
      %v4643 = vadd.f32 %v4574, %v4592
      %v4644 = vadd.f32 %v4575, %v4592
      %v4645 = vadd.f32 %v4576, %v4592
      %v4646 = vadd.f32 %v4577, %v4592
      %v4647 = vadd.f32 %v4578, %v4592
      %v4648 = vadd.f32 %v4579, %v4592
      %v4649 = vadd.f32 %v4580, %v4592
      %v4650 = vadd.f32 %v4581, %v4592
      %v4651 = vadd.f32 %v4582, %v4592
      %v4652 = vadd.f32 %v4583, %v4592
      %v4653 = vadd.f32 %v4584, %v4592
      %v4654 = vadd.f32 %v4585, %v4592
      %v4655 = vadd.f32 %v4586, %v4592
      %v4656 = vadd.f32 %v4587, %v4592
      %v4657 = vmax.f32 %v4593, 0.0
      %v4658 = vmax.f32 %v4594, 0.0
      %v4659 = vmax.f32 %v4595, 0.0
      %v4660 = vmax.f32 %v4596, 0.0
      %v4661 = vmax.f32 %v4597, 0.0
      %v4662 = vmax.f32 %v4598, 0.0
      %v4663 = vmax.f32 %v4599, 0.0
      %v4664 = vmax.f32 %v4600, 0.0
      %v4665 = vmax.f32 %v4601, 0.0
      %v4666 = vmax.f32 %v4602, 0.0
      %v4667 = vmax.f32 %v4603, 0.0
      %v4668 = vmax.f32 %v4604, 0.0
      %v4669 = vmax.f32 %v4605, 0.0
      %v4670 = vmax.f32 %v4606, 0.0
      %v4671 = vmax.f32 %v4607, 0.0
      %v4672 = vmax.f32 %v4608, 0.0
      %v4673 = vmax.f32 %v4609, 0.0
      %v4674 = vmax.f32 %v4610, 0.0
      %v4675 = vmax.f32 %v4611, 0.0
      %v4676 = vmax.f32 %v4612, 0.0
      %v4677 = vmax.f32 %v4613, 0.0
      %v4678 = vmax.f32 %v4614, 0.0
      %v4679 = vmax.f32 %v4615, 0.0
      %v4680 = vmax.f32 %v4616, 0.0
      %v4681 = vmax.f32 %v4617, 0.0
      %v4682 = vmax.f32 %v4618, 0.0
      %v4683 = vmax.f32 %v4619, 0.0
      %v4684 = vmax.f32 %v4620, 0.0
      %v4685 = vmax.f32 %v4621, 0.0
      %v4686 = vmax.f32 %v4622, 0.0
      %v4687 = vmax.f32 %v4623, 0.0
      %v4688 = vmax.f32 %v4624, 0.0
      %v4689 = vmax.f32 %v4625, 0.0
      %v4690 = vmax.f32 %v4626, 0.0
      %v4691 = vmax.f32 %v4627, 0.0
      %v4692 = vmax.f32 %v4628, 0.0
      %v4693 = vmax.f32 %v4629, 0.0
      %v4694 = vmax.f32 %v4630, 0.0
      %v4695 = vmax.f32 %v4631, 0.0
      %v4696 = vmax.f32 %v4632, 0.0
      %v4697 = vmax.f32 %v4633, 0.0
      %v4698 = vmax.f32 %v4634, 0.0
      %v4699 = vmax.f32 %v4635, 0.0
      %v4700 = vmax.f32 %v4636, 0.0
      %v4701 = vmax.f32 %v4637, 0.0
      %v4702 = vmax.f32 %v4638, 0.0
      %v4703 = vmax.f32 %v4639, 0.0
      %v4704 = vmax.f32 %v4640, 0.0
      %v4705 = vmax.f32 %v4641, 0.0
      %v4706 = vmax.f32 %v4642, 0.0
      %v4707 = vmax.f32 %v4643, 0.0
      %v4708 = vmax.f32 %v4644, 0.0
      %v4709 = vmax.f32 %v4645, 0.0
      %v4710 = vmax.f32 %v4646, 0.0
      %v4711 = vmax.f32 %v4647, 0.0
      %v4712 = vmax.f32 %v4648, 0.0
      %v4713 = vmax.f32 %v4649, 0.0
      %v4714 = vmax.f32 %v4650, 0.0
      %v4715 = vmax.f32 %v4651, 0.0
      %v4716 = vmax.f32 %v4652, 0.0
      %v4717 = vmax.f32 %v4653, 0.0
      %v4718 = vmax.f32 %v4654, 0.0
      %v4719 = vmax.f32 %v4655, 0.0
      %v4720 = vmax.f32 %v4656, 0.0
      %v4721 = vmul.f32 %v4657, %v1031
      %v4722 = vmul.f32 %v4658, %v1032
      %v4723 = vmul.f32 %v4659, %v1033
      %v4724 = vmul.f32 %v4660, %v1034
      %v4725 = vmul.f32 %v4661, %v1035
      %v4726 = vmul.f32 %v4662, %v1036
      %v4727 = vmul.f32 %v4663, %v1037
      %v4728 = vmul.f32 %v4664, %v1038
      %v4729 = vmul.f32 %v4665, %v1039
      %v4730 = vmul.f32 %v4666, %v1040
      %v4731 = vmul.f32 %v4667, %v1041
      %v4732 = vmul.f32 %v4668, %v1042
      %v4733 = vmul.f32 %v4669, %v1043
      %v4734 = vmul.f32 %v4670, %v1044
      %v4735 = vmul.f32 %v4671, %v1045
      %v4736 = vmul.f32 %v4672, %v1046
      %v4737 = vmul.f32 %v4673, %v1047
      %v4738 = vmul.f32 %v4674, %v1048
      %v4739 = vmul.f32 %v4675, %v1049
      %v4740 = vmul.f32 %v4676, %v1050
      %v4741 = vmul.f32 %v4677, %v1051
      %v4742 = vmul.f32 %v4678, %v1052
      %v4743 = vmul.f32 %v4679, %v1053
      %v4744 = vmul.f32 %v4680, %v1054
      %v4745 = vmul.f32 %v4681, %v1055
      %v4746 = vmul.f32 %v4682, %v1056
      %v4747 = vmul.f32 %v4683, %v1057
      %v4748 = vmul.f32 %v4684, %v1058
      %v4749 = vmul.f32 %v4685, %v1059
      %v4750 = vmul.f32 %v4686, %v1060
      %v4751 = vmul.f32 %v4687, %v1061
      %v4752 = vmul.f32 %v4688, %v1062
      %v4753 = vmul.f32 %v4689, %v1063
      %v4754 = vmul.f32 %v4690, %v1064
      %v4755 = vmul.f32 %v4691, %v1065
      %v4756 = vmul.f32 %v4692, %v1066
      %v4757 = vmul.f32 %v4693, %v1067
      %v4758 = vmul.f32 %v4694, %v1068
      %v4759 = vmul.f32 %v4695, %v1069
      %v4760 = vmul.f32 %v4696, %v1070
      %v4761 = vmul.f32 %v4697, %v1071
      %v4762 = vmul.f32 %v4698, %v1072
      %v4763 = vmul.f32 %v4699, %v1073
      %v4764 = vmul.f32 %v4700, %v1074
      %v4765 = vmul.f32 %v4701, %v1075
      %v4766 = vmul.f32 %v4702, %v1076
      %v4767 = vmul.f32 %v4703, %v1077
      %v4768 = vmul.f32 %v4704, %v1078
      %v4769 = vmul.f32 %v4705, %v1079
      %v4770 = vmul.f32 %v4706, %v1080
      %v4771 = vmul.f32 %v4707, %v1081
      %v4772 = vmul.f32 %v4708, %v1082
      %v4773 = vmul.f32 %v4709, %v1083
      %v4774 = vmul.f32 %v4710, %v1084
      %v4775 = vmul.f32 %v4711, %v1085
      %v4776 = vmul.f32 %v4712, %v1086
      %v4777 = vmul.f32 %v4713, %v1087
      %v4778 = vmul.f32 %v4714, %v1088
      %v4779 = vmul.f32 %v4715, %v1089
      %v4780 = vmul.f32 %v4716, %v1090
      %v4781 = vmul.f32 %v4717, %v1091
      %v4782 = vmul.f32 %v4718, %v1092
      %v4783 = vmul.f32 %v4719, %v1093
      %v4784 = vmul.f32 %v4720, %v1094
      %4785 = vst.msk [vmem:[#allocation2 + $0x10] sm:$0xff] %vm1095, %v4721
      %4786 = vst.msk [vmem:[#allocation2 + $0x18] sm:$0xff] %vm1095, %v4722
      %4787 = vst.msk [vmem:[#allocation2 + $0x20] sm:$0xff] %vm1095, %v4723
      %4788 = vst.msk [vmem:[#allocation2 + $0x28] sm:$0xff] %vm1095, %v4724
      %4789 = vst.msk [vmem:[#allocation2 + $0x30] sm:$0xff] %vm1095, %v4725
      %4790 = vst.msk [vmem:[#allocation2 + $0x38] sm:$0xff] %vm1095, %v4726
      %4791 = vst.msk [vmem:[#allocation2 + $0x40] sm:$0xff] %vm1095, %v4727
      %4792 = vst.msk [vmem:[#allocation2 + $0x48] sm:$0xff] %vm1095, %v4728
      %4793 = vst.msk [vmem:[#allocation2 + $0x50] sm:$0xff] %vm1095, %v4729
      %4794 = vst.msk [vmem:[#allocation2 + $0x58] sm:$0xff] %vm1095, %v4730
      %4795 = vst.msk [vmem:[#allocation2 + $0x60] sm:$0xff] %vm1095, %v4731
      %4796 = vst.msk [vmem:[#allocation2 + $0x68] sm:$0xff] %vm1095, %v4732
      %4797 = vst.msk [vmem:[#allocation2 + $0x70] sm:$0xff] %vm1095, %v4733
      %4798 = vst.msk [vmem:[#allocation2 + $0x78] sm:$0xff] %vm1095, %v4734
      %4799 = vst.msk [vmem:[#allocation2 + $0x80] sm:$0xff] %vm1095, %v4735
      %4800 = vst.msk [vmem:[#allocation2 + $0x88] sm:$0xff] %vm1095, %v4736
      %4801 = vst.msk [vmem:[#allocation2 + $0x90] sm:$0xff] %vm1095, %v4737
      %4802 = vst.msk [vmem:[#allocation2 + $0x98] sm:$0xff] %vm1095, %v4738
      %4803 = vst.msk [vmem:[#allocation2 + $0xa0] sm:$0xff] %vm1095, %v4739
      %4804 = vst.msk [vmem:[#allocation2 + $0xa8] sm:$0xff] %vm1095, %v4740
      %4805 = vst.msk [vmem:[#allocation2 + $0xb0] sm:$0xff] %vm1095, %v4741
      %4806 = vst.msk [vmem:[#allocation2 + $0xb8] sm:$0xff] %vm1095, %v4742
      %4807 = vst.msk [vmem:[#allocation2 + $0xc0] sm:$0xff] %vm1095, %v4743
      %4808 = vst.msk [vmem:[#allocation2 + $0xc8] sm:$0xff] %vm1095, %v4744
      %4809 = vst.msk [vmem:[#allocation2 + $0xd0] sm:$0xff] %vm1095, %v4745
      %4810 = vst.msk [vmem:[#allocation2 + $0xd8] sm:$0xff] %vm1095, %v4746
      %4811 = vst.msk [vmem:[#allocation2 + $0xe0] sm:$0xff] %vm1095, %v4747
      %4812 = vst.msk [vmem:[#allocation2 + $0xe8] sm:$0xff] %vm1095, %v4748
      %4813 = vst.msk [vmem:[#allocation2 + $0xf0] sm:$0xff] %vm1095, %v4749
      %4814 = vst.msk [vmem:[#allocation2 + $0xf8] sm:$0xff] %vm1095, %v4750
      %4815 = vst.msk [vmem:[#allocation2 + $0x100] sm:$0xff] %vm1095, %v4751
      %4816 = vst.msk [vmem:[#allocation2 + $0x108] sm:$0xff] %vm1095, %v4752
      %4817 = vst.msk [vmem:[#allocation2 + $0x110] sm:$0xff] %vm1095, %v4753
      %4818 = vst.msk [vmem:[#allocation2 + $0x118] sm:$0xff] %vm1095, %v4754
      %4819 = vst.msk [vmem:[#allocation2 + $0x120] sm:$0xff] %vm1095, %v4755
      %4820 = vst.msk [vmem:[#allocation2 + $0x128] sm:$0xff] %vm1095, %v4756
      %4821 = vst.msk [vmem:[#allocation2 + $0x130] sm:$0xff] %vm1095, %v4757
      %4822 = vst.msk [vmem:[#allocation2 + $0x138] sm:$0xff] %vm1095, %v4758
      %4823 = vst.msk [vmem:[#allocation2 + $0x140] sm:$0xff] %vm1095, %v4759
      %4824 = vst.msk [vmem:[#allocation2 + $0x148] sm:$0xff] %vm1095, %v4760
      %4825 = vst.msk [vmem:[#allocation2 + $0x150] sm:$0xff] %vm1095, %v4761
      %4826 = vst.msk [vmem:[#allocation2 + $0x158] sm:$0xff] %vm1095, %v4762
      %4827 = vst.msk [vmem:[#allocation2 + $0x160] sm:$0xff] %vm1095, %v4763
      %4828 = vst.msk [vmem:[#allocation2 + $0x168] sm:$0xff] %vm1095, %v4764
      %4829 = vst.msk [vmem:[#allocation2 + $0x170] sm:$0xff] %vm1095, %v4765
      %4830 = vst.msk [vmem:[#allocation2 + $0x178] sm:$0xff] %vm1095, %v4766
      %4831 = vst.msk [vmem:[#allocation2 + $0x180] sm:$0xff] %vm1095, %v4767
      %4832 = vst.msk [vmem:[#allocation2 + $0x188] sm:$0xff] %vm1095, %v4768
      %4833 = vst.msk [vmem:[#allocation2 + $0x190] sm:$0xff] %vm1095, %v4769
      %4834 = vst.msk [vmem:[#allocation2 + $0x198] sm:$0xff] %vm1095, %v4770
      %4835 = vst.msk [vmem:[#allocation2 + $0x1a0] sm:$0xff] %vm1095, %v4771
      %4836 = vst.msk [vmem:[#allocation2 + $0x1a8] sm:$0xff] %vm1095, %v4772
      %4837 = vst.msk [vmem:[#allocation2 + $0x1b0] sm:$0xff] %vm1095, %v4773
      %4838 = vst.msk [vmem:[#allocation2 + $0x1b8] sm:$0xff] %vm1095, %v4774
      %4839 = vst.msk [vmem:[#allocation2 + $0x1c0] sm:$0xff] %vm1095, %v4775
      %4840 = vst.msk [vmem:[#allocation2 + $0x1c8] sm:$0xff] %vm1095, %v4776
      %4841 = vst.msk [vmem:[#allocation2 + $0x1d0] sm:$0xff] %vm1095, %v4777
      %4842 = vst.msk [vmem:[#allocation2 + $0x1d8] sm:$0xff] %vm1095, %v4778
      %4843 = vst.msk [vmem:[#allocation2 + $0x1e0] sm:$0xff] %vm1095, %v4779
      %4844 = vst.msk [vmem:[#allocation2 + $0x1e8] sm:$0xff] %vm1095, %v4780
      %4845 = vst.msk [vmem:[#allocation2 + $0x1f0] sm:$0xff] %vm1095, %v4781
      %4846 = vst.msk [vmem:[#allocation2 + $0x1f8] sm:$0xff] %vm1095, %v4782
      %4847 = vst.msk [vmem:[#allocation2 + $0x200] sm:$0xff] %vm1095, %v4783
      %4848 = vst.msk [vmem:[#allocation2 + $0x208] sm:$0xff] %vm1095, %v4784
      %v4849 = vld [vmem:[#allocation2 + $0x11] sm:$0xff]
      %v4850 = vld [vmem:[#allocation2 + $0x19] sm:$0xff]
      %v4851 = vld [vmem:[#allocation2 + $0x21] sm:$0xff]
      %v4852 = vld [vmem:[#allocation2 + $0x29] sm:$0xff]
      %v4853 = vld [vmem:[#allocation2 + $0x31] sm:$0xff]
      %v4854 = vld [vmem:[#allocation2 + $0x39] sm:$0xff]
      %v4855 = vld [vmem:[#allocation2 + $0x41] sm:$0xff]
      %v4856 = vld [vmem:[#allocation2 + $0x49] sm:$0xff]
      %v4857 = vld [vmem:[#allocation2 + $0x51] sm:$0xff]
      %v4858 = vld [vmem:[#allocation2 + $0x59] sm:$0xff]
      %v4859 = vld [vmem:[#allocation2 + $0x61] sm:$0xff]
      %v4860 = vld [vmem:[#allocation2 + $0x69] sm:$0xff]
      %v4861 = vld [vmem:[#allocation2 + $0x71] sm:$0xff]
      %v4862 = vld [vmem:[#allocation2 + $0x79] sm:$0xff]
      %v4863 = vld [vmem:[#allocation2 + $0x81] sm:$0xff]
      %v4864 = vld [vmem:[#allocation2 + $0x89] sm:$0xff]
      %v4865 = vld [vmem:[#allocation2 + $0x91] sm:$0xff]
      %v4866 = vld [vmem:[#allocation2 + $0x99] sm:$0xff]
      %v4867 = vld [vmem:[#allocation2 + $0xa1] sm:$0xff]
      %v4868 = vld [vmem:[#allocation2 + $0xa9] sm:$0xff]
      %v4869 = vld [vmem:[#allocation2 + $0xb1] sm:$0xff]
      %v4870 = vld [vmem:[#allocation2 + $0xb9] sm:$0xff]
      %v4871 = vld [vmem:[#allocation2 + $0xc1] sm:$0xff]
      %v4872 = vld [vmem:[#allocation2 + $0xc9] sm:$0xff]
      %v4873 = vld [vmem:[#allocation2 + $0xd1] sm:$0xff]
      %v4874 = vld [vmem:[#allocation2 + $0xd9] sm:$0xff]
      %v4875 = vld [vmem:[#allocation2 + $0xe1] sm:$0xff]
      %v4876 = vld [vmem:[#allocation2 + $0xe9] sm:$0xff]
      %v4877 = vld [vmem:[#allocation2 + $0xf1] sm:$0xff]
      %v4878 = vld [vmem:[#allocation2 + $0xf9] sm:$0xff]
      %v4879 = vld [vmem:[#allocation2 + $0x101] sm:$0xff]
      %v4880 = vld [vmem:[#allocation2 + $0x109] sm:$0xff]
      %v4881 = vld [vmem:[#allocation2 + $0x111] sm:$0xff]
      %v4882 = vld [vmem:[#allocation2 + $0x119] sm:$0xff]
      %v4883 = vld [vmem:[#allocation2 + $0x121] sm:$0xff]
      %v4884 = vld [vmem:[#allocation2 + $0x129] sm:$0xff]
      %v4885 = vld [vmem:[#allocation2 + $0x131] sm:$0xff]
      %v4886 = vld [vmem:[#allocation2 + $0x139] sm:$0xff]
      %v4887 = vld [vmem:[#allocation2 + $0x141] sm:$0xff]
      %v4888 = vld [vmem:[#allocation2 + $0x149] sm:$0xff]
      %v4889 = vld [vmem:[#allocation2 + $0x151] sm:$0xff]
      %v4890 = vld [vmem:[#allocation2 + $0x159] sm:$0xff]
      %v4891 = vld [vmem:[#allocation2 + $0x161] sm:$0xff]
      %v4892 = vld [vmem:[#allocation2 + $0x169] sm:$0xff]
      %v4893 = vld [vmem:[#allocation2 + $0x171] sm:$0xff]
      %v4894 = vld [vmem:[#allocation2 + $0x179] sm:$0xff]
      %v4895 = vld [vmem:[#allocation2 + $0x181] sm:$0xff]
      %v4896 = vld [vmem:[#allocation2 + $0x189] sm:$0xff]
      %v4897 = vld [vmem:[#allocation2 + $0x191] sm:$0xff]
      %v4898 = vld [vmem:[#allocation2 + $0x199] sm:$0xff]
      %v4899 = vld [vmem:[#allocation2 + $0x1a1] sm:$0xff]
      %v4900 = vld [vmem:[#allocation2 + $0x1a9] sm:$0xff]
      %v4901 = vld [vmem:[#allocation2 + $0x1b1] sm:$0xff]
      %v4902 = vld [vmem:[#allocation2 + $0x1b9] sm:$0xff]
      %v4903 = vld [vmem:[#allocation2 + $0x1c1] sm:$0xff]
      %v4904 = vld [vmem:[#allocation2 + $0x1c9] sm:$0xff]
      %v4905 = vld [vmem:[#allocation2 + $0x1d1] sm:$0xff]
      %v4906 = vld [vmem:[#allocation2 + $0x1d9] sm:$0xff]
      %v4907 = vld [vmem:[#allocation2 + $0x1e1] sm:$0xff]
      %v4908 = vld [vmem:[#allocation2 + $0x1e9] sm:$0xff]
      %v4909 = vld [vmem:[#allocation2 + $0x1f1] sm:$0xff]
      %v4910 = vld [vmem:[#allocation2 + $0x1f9] sm:$0xff]
      %v4911 = vld [vmem:[#allocation2 + $0x201] sm:$0xff]
      %v4912 = vld [vmem:[#allocation2 + $0x209] sm:$0xff]
      %v4913 = vmax.f32 %v4721, %v4849
      %v4914 = vmax.f32 %v4722, %v4850
      %v4915 = vmax.f32 %v4723, %v4851
      %v4916 = vmax.f32 %v4724, %v4852
      %v4917 = vmax.f32 %v4725, %v4853
      %v4918 = vmax.f32 %v4726, %v4854
      %v4919 = vmax.f32 %v4727, %v4855
      %v4920 = vmax.f32 %v4728, %v4856
      %v4921 = vmax.f32 %v4729, %v4857
      %v4922 = vmax.f32 %v4730, %v4858
      %v4923 = vmax.f32 %v4731, %v4859
      %v4924 = vmax.f32 %v4732, %v4860
      %v4925 = vmax.f32 %v4733, %v4861
      %v4926 = vmax.f32 %v4734, %v4862
      %v4927 = vmax.f32 %v4735, %v4863
      %v4928 = vmax.f32 %v4736, %v4864
      %v4929 = vmax.f32 %v4737, %v4865
      %v4930 = vmax.f32 %v4738, %v4866
      %v4931 = vmax.f32 %v4739, %v4867
      %v4932 = vmax.f32 %v4740, %v4868
      %v4933 = vmax.f32 %v4741, %v4869
      %v4934 = vmax.f32 %v4742, %v4870
      %v4935 = vmax.f32 %v4743, %v4871
      %v4936 = vmax.f32 %v4744, %v4872
      %v4937 = vmax.f32 %v4745, %v4873
      %v4938 = vmax.f32 %v4746, %v4874
      %v4939 = vmax.f32 %v4747, %v4875
      %v4940 = vmax.f32 %v4748, %v4876
      %v4941 = vmax.f32 %v4749, %v4877
      %v4942 = vmax.f32 %v4750, %v4878
      %v4943 = vmax.f32 %v4751, %v4879
      %v4944 = vmax.f32 %v4752, %v4880
      %v4945 = vmax.f32 %v4753, %v4881
      %v4946 = vmax.f32 %v4754, %v4882
      %v4947 = vmax.f32 %v4755, %v4883
      %v4948 = vmax.f32 %v4756, %v4884
      %v4949 = vmax.f32 %v4757, %v4885
      %v4950 = vmax.f32 %v4758, %v4886
      %v4951 = vmax.f32 %v4759, %v4887
      %v4952 = vmax.f32 %v4760, %v4888
      %v4953 = vmax.f32 %v4761, %v4889
      %v4954 = vmax.f32 %v4762, %v4890
      %v4955 = vmax.f32 %v4763, %v4891
      %v4956 = vmax.f32 %v4764, %v4892
      %v4957 = vmax.f32 %v4765, %v4893
      %v4958 = vmax.f32 %v4766, %v4894
      %v4959 = vmax.f32 %v4767, %v4895
      %v4960 = vmax.f32 %v4768, %v4896
      %v4961 = vmax.f32 %v4769, %v4897
      %v4962 = vmax.f32 %v4770, %v4898
      %v4963 = vmax.f32 %v4771, %v4899
      %v4964 = vmax.f32 %v4772, %v4900
      %v4965 = vmax.f32 %v4773, %v4901
      %v4966 = vmax.f32 %v4774, %v4902
      %v4967 = vmax.f32 %v4775, %v4903
      %v4968 = vmax.f32 %v4776, %v4904
      %v4969 = vmax.f32 %v4777, %v4905
      %v4970 = vmax.f32 %v4778, %v4906
      %v4971 = vmax.f32 %v4779, %v4907
      %v4972 = vmax.f32 %v4780, %v4908
      %v4973 = vmax.f32 %v4781, %v4909
      %v4974 = vmax.f32 %v4782, %v4910
      %v4975 = vmax.f32 %v4783, %v4911
      %v4976 = vmax.f32 %v4784, %v4912
      %v4977 = vld [vmem:[#allocation2 + $0x18] sm:$0xff]
      %v4978 = vld [vmem:[#allocation2 + $0x20] sm:$0xff]
      %v4979 = vld [vmem:[#allocation2 + $0x28] sm:$0xff]
      %v4980 = vld [vmem:[#allocation2 + $0x30] sm:$0xff]
      %v4981 = vld [vmem:[#allocation2 + $0x38] sm:$0xff]
      %v4982 = vld [vmem:[#allocation2 + $0x40] sm:$0xff]
      %v4983 = vld [vmem:[#allocation2 + $0x48] sm:$0xff]
      %v4984 = vld [vmem:[#allocation2 + $0x50] sm:$0xff]
      %v4985 = vld [vmem:[#allocation2 + $0x58] sm:$0xff]
      %v4986 = vld [vmem:[#allocation2 + $0x60] sm:$0xff]
      %v4987 = vld [vmem:[#allocation2 + $0x68] sm:$0xff]
      %v4988 = vld [vmem:[#allocation2 + $0x70] sm:$0xff]
      %v4989 = vld [vmem:[#allocation2 + $0x78] sm:$0xff]
      %v4990 = vld [vmem:[#allocation2 + $0x80] sm:$0xff]
      %v4991 = vld [vmem:[#allocation2 + $0x88] sm:$0xff]
      %v4992 = vld [vmem:[#allocation2 + $0x90] sm:$0xff]
      %v4993 = vld [vmem:[#allocation2 + $0x98] sm:$0xff]
      %v4994 = vld [vmem:[#allocation2 + $0xa0] sm:$0xff]
      %v4995 = vld [vmem:[#allocation2 + $0xa8] sm:$0xff]
      %v4996 = vld [vmem:[#allocation2 + $0xb0] sm:$0xff]
      %v4997 = vld [vmem:[#allocation2 + $0xb8] sm:$0xff]
      %v4998 = vld [vmem:[#allocation2 + $0xc0] sm:$0xff]
      %v4999 = vld [vmem:[#allocation2 + $0xc8] sm:$0xff]
      %v5000 = vld [vmem:[#allocation2 + $0xd0] sm:$0xff]
      %v5001 = vld [vmem:[#allocation2 + $0xd8] sm:$0xff]
      %v5002 = vld [vmem:[#allocation2 + $0xe0] sm:$0xff]
      %v5003 = vld [vmem:[#allocation2 + $0xe8] sm:$0xff]
      %v5004 = vld [vmem:[#allocation2 + $0xf0] sm:$0xff]
      %v5005 = vld [vmem:[#allocation2 + $0xf8] sm:$0xff]
      %v5006 = vld [vmem:[#allocation2 + $0x100] sm:$0xff]
      %v5007 = vld [vmem:[#allocation2 + $0x108] sm:$0xff]
      %v5008 = vld [vmem:[#allocation2 + $0x110] sm:$0xff]
      %v5009 = vld [vmem:[#allocation2 + $0x118] sm:$0xff]
      %v5010 = vld [vmem:[#allocation2 + $0x120] sm:$0xff]
      %v5011 = vld [vmem:[#allocation2 + $0x128] sm:$0xff]
      %v5012 = vld [vmem:[#allocation2 + $0x130] sm:$0xff]
      %v5013 = vld [vmem:[#allocation2 + $0x138] sm:$0xff]
      %v5014 = vld [vmem:[#allocation2 + $0x140] sm:$0xff]
      %v5015 = vld [vmem:[#allocation2 + $0x148] sm:$0xff]
      %v5016 = vld [vmem:[#allocation2 + $0x150] sm:$0xff]
      %v5017 = vld [vmem:[#allocation2 + $0x158] sm:$0xff]
      %v5018 = vld [vmem:[#allocation2 + $0x160] sm:$0xff]
      %v5019 = vld [vmem:[#allocation2 + $0x168] sm:$0xff]
      %v5020 = vld [vmem:[#allocation2 + $0x170] sm:$0xff]
      %v5021 = vld [vmem:[#allocation2 + $0x178] sm:$0xff]
      %v5022 = vld [vmem:[#allocation2 + $0x180] sm:$0xff]
      %v5023 = vld [vmem:[#allocation2 + $0x188] sm:$0xff]
      %v5024 = vld [vmem:[#allocation2 + $0x190] sm:$0xff]
      %v5025 = vld [vmem:[#allocation2 + $0x198] sm:$0xff]
      %v5026 = vld [vmem:[#allocation2 + $0x1a0] sm:$0xff]
      %v5027 = vld [vmem:[#allocation2 + $0x1a8] sm:$0xff]
      %v5028 = vld [vmem:[#allocation2 + $0x1b0] sm:$0xff]
      %v5029 = vld [vmem:[#allocation2 + $0x1b8] sm:$0xff]
      %v5030 = vld [vmem:[#allocation2 + $0x1c0] sm:$0xff]
      %v5031 = vld [vmem:[#allocation2 + $0x1c8] sm:$0xff]
      %v5032 = vld [vmem:[#allocation2 + $0x1d0] sm:$0xff]
      %v5033 = vld [vmem:[#allocation2 + $0x1d8] sm:$0xff]
      %v5034 = vld [vmem:[#allocation2 + $0x1e0] sm:$0xff]
      %v5035 = vld [vmem:[#allocation2 + $0x1e8] sm:$0xff]
      %v5036 = vld [vmem:[#allocation2 + $0x1f0] sm:$0xff]
      %v5037 = vld [vmem:[#allocation2 + $0x1f8] sm:$0xff]
      %v5038 = vld [vmem:[#allocation2 + $0x200] sm:$0xff]
      %v5039 = vld [vmem:[#allocation2 + $0x208] sm:$0xff]
      %v5040 = vld [vmem:[#allocation2 + $0x210] sm:$0xff]
      %v5041 = vmax.f32 %v4913, %v4977
      %v5042 = vmax.f32 %v4914, %v4978
      %v5043 = vmax.f32 %v4915, %v4979
      %v5044 = vmax.f32 %v4916, %v4980
      %v5045 = vmax.f32 %v4917, %v4981
      %v5046 = vmax.f32 %v4918, %v4982
      %v5047 = vmax.f32 %v4919, %v4983
      %v5048 = vmax.f32 %v4920, %v4984
      %v5049 = vmax.f32 %v4921, %v4985
      %v5050 = vmax.f32 %v4922, %v4986
      %v5051 = vmax.f32 %v4923, %v4987
      %v5052 = vmax.f32 %v4924, %v4988
      %v5053 = vmax.f32 %v4925, %v4989
      %v5054 = vmax.f32 %v4926, %v4990
      %v5055 = vmax.f32 %v4927, %v4991
      %v5056 = vmax.f32 %v4928, %v4992
      %v5057 = vmax.f32 %v4929, %v4993
      %v5058 = vmax.f32 %v4930, %v4994
      %v5059 = vmax.f32 %v4931, %v4995
      %v5060 = vmax.f32 %v4932, %v4996
      %v5061 = vmax.f32 %v4933, %v4997
      %v5062 = vmax.f32 %v4934, %v4998
      %v5063 = vmax.f32 %v4935, %v4999
      %v5064 = vmax.f32 %v4936, %v5000
      %v5065 = vmax.f32 %v4937, %v5001
      %v5066 = vmax.f32 %v4938, %v5002
      %v5067 = vmax.f32 %v4939, %v5003
      %v5068 = vmax.f32 %v4940, %v5004
      %v5069 = vmax.f32 %v4941, %v5005
      %v5070 = vmax.f32 %v4942, %v5006
      %v5071 = vmax.f32 %v4943, %v5007
      %v5072 = vmax.f32 %v4944, %v5008
      %v5073 = vmax.f32 %v4945, %v5009
      %v5074 = vmax.f32 %v4946, %v5010
      %v5075 = vmax.f32 %v4947, %v5011
      %v5076 = vmax.f32 %v4948, %v5012
      %v5077 = vmax.f32 %v4949, %v5013
      %v5078 = vmax.f32 %v4950, %v5014
      %v5079 = vmax.f32 %v4951, %v5015
      %v5080 = vmax.f32 %v4952, %v5016
      %v5081 = vmax.f32 %v4953, %v5017
      %v5082 = vmax.f32 %v4954, %v5018
      %v5083 = vmax.f32 %v4955, %v5019
      %v5084 = vmax.f32 %v4956, %v5020
      %v5085 = vmax.f32 %v4957, %v5021
      %v5086 = vmax.f32 %v4958, %v5022
      %v5087 = vmax.f32 %v4959, %v5023
      %v5088 = vmax.f32 %v4960, %v5024
      %v5089 = vmax.f32 %v4961, %v5025
      %v5090 = vmax.f32 %v4962, %v5026
      %v5091 = vmax.f32 %v4963, %v5027
      %v5092 = vmax.f32 %v4964, %v5028
      %v5093 = vmax.f32 %v4965, %v5029
      %v5094 = vmax.f32 %v4966, %v5030
      %v5095 = vmax.f32 %v4967, %v5031
      %v5096 = vmax.f32 %v4968, %v5032
      %v5097 = vmax.f32 %v4969, %v5033
      %v5098 = vmax.f32 %v4970, %v5034
      %v5099 = vmax.f32 %v4971, %v5035
      %v5100 = vmax.f32 %v4972, %v5036
      %v5101 = vmax.f32 %v4973, %v5037
      %v5102 = vmax.f32 %v4974, %v5038
      %v5103 = vmax.f32 %v4975, %v5039
      %v5104 = vmax.f32 %v4976, %v5040
      %v5105 = vld [vmem:[#allocation2 + $0x211] sm:$0xff]
      %v5106 = vmax.f32 %v5041, %v4850
      %v5107 = vmax.f32 %v5042, %v4851
      %v5108 = vmax.f32 %v5043, %v4852
      %v5109 = vmax.f32 %v5044, %v4853
      %v5110 = vmax.f32 %v5045, %v4854
      %v5111 = vmax.f32 %v5046, %v4855
      %v5112 = vmax.f32 %v5047, %v4856
      %v5113 = vmax.f32 %v5048, %v4857
      %v5114 = vmax.f32 %v5049, %v4858
      %v5115 = vmax.f32 %v5050, %v4859
      %v5116 = vmax.f32 %v5051, %v4860
      %v5117 = vmax.f32 %v5052, %v4861
      %v5118 = vmax.f32 %v5053, %v4862
      %v5119 = vmax.f32 %v5054, %v4863
      %v5120 = vmax.f32 %v5055, %v4864
      %v5121 = vmax.f32 %v5056, %v4865
      %v5122 = vmax.f32 %v5057, %v4866
      %v5123 = vmax.f32 %v5058, %v4867
      %v5124 = vmax.f32 %v5059, %v4868
      %v5125 = vmax.f32 %v5060, %v4869
      %v5126 = vmax.f32 %v5061, %v4870
      %v5127 = vmax.f32 %v5062, %v4871
      %v5128 = vmax.f32 %v5063, %v4872
      %v5129 = vmax.f32 %v5064, %v4873
      %v5130 = vmax.f32 %v5065, %v4874
      %v5131 = vmax.f32 %v5066, %v4875
      %v5132 = vmax.f32 %v5067, %v4876
      %v5133 = vmax.f32 %v5068, %v4877
      %v5134 = vmax.f32 %v5069, %v4878
      %v5135 = vmax.f32 %v5070, %v4879
      %v5136 = vmax.f32 %v5071, %v4880
      %v5137 = vmax.f32 %v5072, %v4881
      %v5138 = vmax.f32 %v5073, %v4882
      %v5139 = vmax.f32 %v5074, %v4883
      %v5140 = vmax.f32 %v5075, %v4884
      %v5141 = vmax.f32 %v5076, %v4885
      %v5142 = vmax.f32 %v5077, %v4886
      %v5143 = vmax.f32 %v5078, %v4887
      %v5144 = vmax.f32 %v5079, %v4888
      %v5145 = vmax.f32 %v5080, %v4889
      %v5146 = vmax.f32 %v5081, %v4890
      %v5147 = vmax.f32 %v5082, %v4891
      %v5148 = vmax.f32 %v5083, %v4892
      %v5149 = vmax.f32 %v5084, %v4893
      %v5150 = vmax.f32 %v5085, %v4894
      %v5151 = vmax.f32 %v5086, %v4895
      %v5152 = vmax.f32 %v5087, %v4896
      %v5153 = vmax.f32 %v5088, %v4897
      %v5154 = vmax.f32 %v5089, %v4898
      %v5155 = vmax.f32 %v5090, %v4899
      %v5156 = vmax.f32 %v5091, %v4900
      %v5157 = vmax.f32 %v5092, %v4901
      %v5158 = vmax.f32 %v5093, %v4902
      %v5159 = vmax.f32 %v5094, %v4903
      %v5160 = vmax.f32 %v5095, %v4904
      %v5161 = vmax.f32 %v5096, %v4905
      %v5162 = vmax.f32 %v5097, %v4906
      %v5163 = vmax.f32 %v5098, %v4907
      %v5164 = vmax.f32 %v5099, %v4908
      %v5165 = vmax.f32 %v5100, %v4909
      %v5166 = vmax.f32 %v5101, %v4910
      %v5167 = vmax.f32 %v5102, %v4911
      %v5168 = vmax.f32 %v5103, %v4912
      %v5169 = vmax.f32 %v5104, %v5105
      %v5170 = vmul.f32 %v5106, %v711
      %v5171 = vmul.f32 %v5107, %v712
      %v5172 = vmul.f32 %v5108, %v713
      %v5173 = vmul.f32 %v5109, %v714
      %v5174 = vmul.f32 %v5110, %v715
      %v5175 = vmul.f32 %v5111, %v716
      %v5176 = vmul.f32 %v5112, %v717
      %v5177 = vmul.f32 %v5113, %v718
      %v5178 = vmul.f32 %v5114, %v719
      %v5179 = vmul.f32 %v5115, %v720
      %v5180 = vmul.f32 %v5116, %v721
      %v5181 = vmul.f32 %v5117, %v722
      %v5182 = vmul.f32 %v5118, %v723
      %v5183 = vmul.f32 %v5119, %v724
      %v5184 = vmul.f32 %v5120, %v725
      %v5185 = vmul.f32 %v5121, %v726
      %v5186 = vmul.f32 %v5122, %v727
      %v5187 = vmul.f32 %v5123, %v728
      %v5188 = vmul.f32 %v5124, %v729
      %v5189 = vmul.f32 %v5125, %v730
      %v5190 = vmul.f32 %v5126, %v731
      %v5191 = vmul.f32 %v5127, %v732
      %v5192 = vmul.f32 %v5128, %v733
      %v5193 = vmul.f32 %v5129, %v734
      %v5194 = vmul.f32 %v5130, %v735
      %v5195 = vmul.f32 %v5131, %v736
      %v5196 = vmul.f32 %v5132, %v737
      %v5197 = vmul.f32 %v5133, %v738
      %v5198 = vmul.f32 %v5134, %v739
      %v5199 = vmul.f32 %v5135, %v740
      %v5200 = vmul.f32 %v5136, %v741
      %v5201 = vmul.f32 %v5137, %v742
      %v5202 = vmul.f32 %v5138, %v743
      %v5203 = vmul.f32 %v5139, %v744
      %v5204 = vmul.f32 %v5140, %v745
      %v5205 = vmul.f32 %v5141, %v746
      %v5206 = vmul.f32 %v5142, %v747
      %v5207 = vmul.f32 %v5143, %v748
      %v5208 = vmul.f32 %v5144, %v749
      %v5209 = vmul.f32 %v5145, %v750
      %v5210 = vmul.f32 %v5146, %v751
      %v5211 = vmul.f32 %v5147, %v752
      %v5212 = vmul.f32 %v5148, %v753
      %v5213 = vmul.f32 %v5149, %v754
      %v5214 = vmul.f32 %v5150, %v755
      %v5215 = vmul.f32 %v5151, %v756
      %v5216 = vmul.f32 %v5152, %v757
      %v5217 = vmul.f32 %v5153, %v758
      %v5218 = vmul.f32 %v5154, %v759
      %v5219 = vmul.f32 %v5155, %v760
      %v5220 = vmul.f32 %v5156, %v761
      %v5221 = vmul.f32 %v5157, %v762
      %v5222 = vmul.f32 %v5158, %v763
      %v5223 = vmul.f32 %v5159, %v764
      %v5224 = vmul.f32 %v5160, %v765
      %v5225 = vmul.f32 %v5161, %v766
      %v5226 = vmul.f32 %v5162, %v767
      %v5227 = vmul.f32 %v5163, %v768
      %v5228 = vmul.f32 %v5164, %v769
      %v5229 = vmul.f32 %v5165, %v770
      %v5230 = vmul.f32 %v5166, %v771
      %v5231 = vmul.f32 %v5167, %v772
      %v5232 = vmul.f32 %v5168, %v773
      %v5233 = vmul.f32 %v5169, %v774
      %5234 = vst.msk [vmem:[#allocation2 + $0x10] sm:$0xff] %vm1095, %v5170
      %5235 = vst.msk [vmem:[#allocation2 + $0x18] sm:$0xff] %vm1095, %v5171
      %5236 = vst.msk [vmem:[#allocation2 + $0x20] sm:$0xff] %vm1095, %v5172
      %5237 = vst.msk [vmem:[#allocation2 + $0x28] sm:$0xff] %vm1095, %v5173
      %5238 = vst.msk [vmem:[#allocation2 + $0x30] sm:$0xff] %vm1095, %v5174
      %5239 = vst.msk [vmem:[#allocation2 + $0x38] sm:$0xff] %vm1095, %v5175
      %5240 = vst.msk [vmem:[#allocation2 + $0x40] sm:$0xff] %vm1095, %v5176
      %5241 = vst.msk [vmem:[#allocation2 + $0x48] sm:$0xff] %vm1095, %v5177
      %5242 = vst.msk [vmem:[#allocation2 + $0x50] sm:$0xff] %vm1095, %v5178
      %5243 = vst.msk [vmem:[#allocation2 + $0x58] sm:$0xff] %vm1095, %v5179
      %5244 = vst.msk [vmem:[#allocation2 + $0x60] sm:$0xff] %vm1095, %v5180
      %5245 = vst.msk [vmem:[#allocation2 + $0x68] sm:$0xff] %vm1095, %v5181
      %5246 = vst.msk [vmem:[#allocation2 + $0x70] sm:$0xff] %vm1095, %v5182
      %5247 = vst.msk [vmem:[#allocation2 + $0x78] sm:$0xff] %vm1095, %v5183
      %5248 = vst.msk [vmem:[#allocation2 + $0x80] sm:$0xff] %vm1095, %v5184
      %5249 = vst.msk [vmem:[#allocation2 + $0x88] sm:$0xff] %vm1095, %v5185
      %5250 = vst.msk [vmem:[#allocation2 + $0x90] sm:$0xff] %vm1095, %v5186
      %5251 = vst.msk [vmem:[#allocation2 + $0x98] sm:$0xff] %vm1095, %v5187
      %5252 = vst.msk [vmem:[#allocation2 + $0xa0] sm:$0xff] %vm1095, %v5188
      %5253 = vst.msk [vmem:[#allocation2 + $0xa8] sm:$0xff] %vm1095, %v5189
      %5254 = vst.msk [vmem:[#allocation2 + $0xb0] sm:$0xff] %vm1095, %v5190
      %5255 = vst.msk [vmem:[#allocation2 + $0xb8] sm:$0xff] %vm1095, %v5191
      %5256 = vst.msk [vmem:[#allocation2 + $0xc0] sm:$0xff] %vm1095, %v5192
      %5257 = vst.msk [vmem:[#allocation2 + $0xc8] sm:$0xff] %vm1095, %v5193
      %5258 = vst.msk [vmem:[#allocation2 + $0xd0] sm:$0xff] %vm1095, %v5194
      %5259 = vst.msk [vmem:[#allocation2 + $0xd8] sm:$0xff] %vm1095, %v5195
      %5260 = vst.msk [vmem:[#allocation2 + $0xe0] sm:$0xff] %vm1095, %v5196
      %5261 = vst.msk [vmem:[#allocation2 + $0xe8] sm:$0xff] %vm1095, %v5197
      %5262 = vst.msk [vmem:[#allocation2 + $0xf0] sm:$0xff] %vm1095, %v5198
      %5263 = vst.msk [vmem:[#allocation2 + $0xf8] sm:$0xff] %vm1095, %v5199
      %5264 = vst.msk [vmem:[#allocation2 + $0x100] sm:$0xff] %vm1095, %v5200
      %5265 = vst.msk [vmem:[#allocation2 + $0x108] sm:$0xff] %vm1095, %v5201
      %5266 = vst.msk [vmem:[#allocation2 + $0x110] sm:$0xff] %vm1095, %v5202
      %5267 = vst.msk [vmem:[#allocation2 + $0x118] sm:$0xff] %vm1095, %v5203
      %5268 = vst.msk [vmem:[#allocation2 + $0x120] sm:$0xff] %vm1095, %v5204
      %5269 = vst.msk [vmem:[#allocation2 + $0x128] sm:$0xff] %vm1095, %v5205
      %5270 = vst.msk [vmem:[#allocation2 + $0x130] sm:$0xff] %vm1095, %v5206
      %5271 = vst.msk [vmem:[#allocation2 + $0x138] sm:$0xff] %vm1095, %v5207
      %5272 = vst.msk [vmem:[#allocation2 + $0x140] sm:$0xff] %vm1095, %v5208
      %5273 = vst.msk [vmem:[#allocation2 + $0x148] sm:$0xff] %vm1095, %v5209
      %5274 = vst.msk [vmem:[#allocation2 + $0x150] sm:$0xff] %vm1095, %v5210
      %5275 = vst.msk [vmem:[#allocation2 + $0x158] sm:$0xff] %vm1095, %v5211
      %5276 = vst.msk [vmem:[#allocation2 + $0x160] sm:$0xff] %vm1095, %v5212
      %5277 = vst.msk [vmem:[#allocation2 + $0x168] sm:$0xff] %vm1095, %v5213
      %5278 = vst.msk [vmem:[#allocation2 + $0x170] sm:$0xff] %vm1095, %v5214
      %5279 = vst.msk [vmem:[#allocation2 + $0x178] sm:$0xff] %vm1095, %v5215
      %5280 = vst.msk [vmem:[#allocation2 + $0x180] sm:$0xff] %vm1095, %v5216
      %5281 = vst.msk [vmem:[#allocation2 + $0x188] sm:$0xff] %vm1095, %v5217
      %5282 = vst.msk [vmem:[#allocation2 + $0x190] sm:$0xff] %vm1095, %v5218
      %5283 = vst.msk [vmem:[#allocation2 + $0x198] sm:$0xff] %vm1095, %v5219
      %5284 = vst.msk [vmem:[#allocation2 + $0x1a0] sm:$0xff] %vm1095, %v5220
      %5285 = vst.msk [vmem:[#allocation2 + $0x1a8] sm:$0xff] %vm1095, %v5221
      %5286 = vst.msk [vmem:[#allocation2 + $0x1b0] sm:$0xff] %vm1095, %v5222
      %5287 = vst.msk [vmem:[#allocation2 + $0x1b8] sm:$0xff] %vm1095, %v5223
      %5288 = vst.msk [vmem:[#allocation2 + $0x1c0] sm:$0xff] %vm1095, %v5224
      %5289 = vst.msk [vmem:[#allocation2 + $0x1c8] sm:$0xff] %vm1095, %v5225
      %5290 = vst.msk [vmem:[#allocation2 + $0x1d0] sm:$0xff] %vm1095, %v5226
      %5291 = vst.msk [vmem:[#allocation2 + $0x1d8] sm:$0xff] %vm1095, %v5227
      %5292 = vst.msk [vmem:[#allocation2 + $0x1e0] sm:$0xff] %vm1095, %v5228
      %5293 = vst.msk [vmem:[#allocation2 + $0x1e8] sm:$0xff] %vm1095, %v5229
      %5294 = vst.msk [vmem:[#allocation2 + $0x1f0] sm:$0xff] %vm1095, %v5230
      %5295 = vst.msk [vmem:[#allocation2 + $0x1f8] sm:$0xff] %vm1095, %v5231
      %5296 = vst.msk [vmem:[#allocation2 + $0x200] sm:$0xff] %vm1095, %v5232
      %5297 = vst.msk [vmem:[#allocation2 + $0x208] sm:$0xff] %vm1095, %v5233
      %v5298 = vld [vmem:[%s1 + $0xe8] sm:$0xff]
      %v5299 = vld [vmem:[%s1 + $0xf0] sm:$0xff]
      %v5300 = vld [vmem:[%s1 + $0xf8] sm:$0xff]
      %v5301 = vld [vmem:[%s1 + $0x100] sm:$0xff]
      %v5302 = vld [vmem:[#allocation2 + $0x7] sm:$0xff]
      %v5303 = vld [vmem:[#allocation2 + $0xf] sm:$0xff]
      %v5304 = vld [vmem:[#allocation2 + $0x17] sm:$0xff]
      %v5305 = vld [vmem:[#allocation2 + $0x1f] sm:$0xff]
      %v5306 = vld [vmem:[#allocation2 + $0x27] sm:$0xff]
      %v5307 = vld [vmem:[#allocation2 + $0x2f] sm:$0xff]
      %v5308 = vld [vmem:[#allocation2 + $0x37] sm:$0xff]
      %v5309 = vld [vmem:[#allocation2 + $0x3f] sm:$0xff]
      %v5310 = vld [vmem:[#allocation2 + $0x47] sm:$0xff]
      %v5311 = vld [vmem:[#allocation2 + $0x4f] sm:$0xff]
      %v5312 = vld [vmem:[#allocation2 + $0x57] sm:$0xff]
      %v5313 = vld [vmem:[#allocation2 + $0x5f] sm:$0xff]
      %v5314 = vld [vmem:[#allocation2 + $0x67] sm:$0xff]
      %v5315 = vld [vmem:[#allocation2 + $0x6f] sm:$0xff]
      %v5316 = vld [vmem:[#allocation2 + $0x77] sm:$0xff]
      %v5317 = vld [vmem:[#allocation2 + $0x7f] sm:$0xff]
      %v5318 = vld [vmem:[#allocation2 + $0x87] sm:$0xff]
      %v5319 = vld [vmem:[#allocation2 + $0x8f] sm:$0xff]
      %v5320 = vld [vmem:[#allocation2 + $0x97] sm:$0xff]
      %v5321 = vld [vmem:[#allocation2 + $0x9f] sm:$0xff]
      %v5322 = vld [vmem:[#allocation2 + $0xa7] sm:$0xff]
      %v5323 = vld [vmem:[#allocation2 + $0xaf] sm:$0xff]
      %v5324 = vld [vmem:[#allocation2 + $0xb7] sm:$0xff]
      %v5325 = vld [vmem:[#allocation2 + $0xbf] sm:$0xff]
      %v5326 = vld [vmem:[#allocation2 + $0xc7] sm:$0xff]
      %v5327 = vld [vmem:[#allocation2 + $0xcf] sm:$0xff]
      %v5328 = vld [vmem:[#allocation2 + $0xd7] sm:$0xff]
      %v5329 = vld [vmem:[#allocation2 + $0xdf] sm:$0xff]
      %v5330 = vld [vmem:[#allocation2 + $0xe7] sm:$0xff]
      %v5331 = vld [vmem:[#allocation2 + $0xef] sm:$0xff]
      %v5332 = vld [vmem:[#allocation2 + $0xf7] sm:$0xff]
      %v5333 = vld [vmem:[#allocation2 + $0xff] sm:$0xff]
      %v5334 = vld [vmem:[#allocation2 + $0x107] sm:$0xff]
      %v5335 = vld [vmem:[#allocation2 + $0x10f] sm:$0xff]
      %v5336 = vld [vmem:[#allocation2 + $0x117] sm:$0xff]
      %v5337 = vld [vmem:[#allocation2 + $0x11f] sm:$0xff]
      %v5338 = vld [vmem:[#allocation2 + $0x127] sm:$0xff]
      %v5339 = vld [vmem:[#allocation2 + $0x12f] sm:$0xff]
      %v5340 = vld [vmem:[#allocation2 + $0x137] sm:$0xff]
      %v5341 = vld [vmem:[#allocation2 + $0x13f] sm:$0xff]
      %v5342 = vld [vmem:[#allocation2 + $0x147] sm:$0xff]
      %v5343 = vld [vmem:[#allocation2 + $0x14f] sm:$0xff]
      %v5344 = vld [vmem:[#allocation2 + $0x157] sm:$0xff]
      %v5345 = vld [vmem:[#allocation2 + $0x15f] sm:$0xff]
      %v5346 = vld [vmem:[#allocation2 + $0x167] sm:$0xff]
      %v5347 = vld [vmem:[#allocation2 + $0x16f] sm:$0xff]
      %v5348 = vld [vmem:[#allocation2 + $0x177] sm:$0xff]
      %v5349 = vld [vmem:[#allocation2 + $0x17f] sm:$0xff]
      %v5350 = vld [vmem:[#allocation2 + $0x187] sm:$0xff]
      %v5351 = vld [vmem:[#allocation2 + $0x18f] sm:$0xff]
      %v5352 = vld [vmem:[#allocation2 + $0x197] sm:$0xff]
      %v5353 = vld [vmem:[#allocation2 + $0x19f] sm:$0xff]
      %v5354 = vld [vmem:[#allocation2 + $0x1a7] sm:$0xff]
      %v5355 = vld [vmem:[#allocation2 + $0x1af] sm:$0xff]
      %v5356 = vld [vmem:[#allocation2 + $0x1b7] sm:$0xff]
      %v5357 = vld [vmem:[#allocation2 + $0x1bf] sm:$0xff]
      %v5358 = vld [vmem:[#allocation2 + $0x1c7] sm:$0xff]
      %v5359 = vld [vmem:[#allocation2 + $0x1cf] sm:$0xff]
      %v5360 = vld [vmem:[#allocation2 + $0x1d7] sm:$0xff]
      %v5361 = vld [vmem:[#allocation2 + $0x1df] sm:$0xff]
      %v5362 = vld [vmem:[#allocation2 + $0x1e7] sm:$0xff]
      %v5363 = vld [vmem:[#allocation2 + $0x1ef] sm:$0xff]
      %v5364 = vld [vmem:[#allocation2 + $0x1f7] sm:$0xff]
      %v5365 = vld [vmem:[#allocation2 + $0x1ff] sm:$0xff]
      %v5366 = vld [vmem:[%s1 + $0x88] sm:$0xff]
      %v5367 = vld [vmem:[%s1 + $0x90] sm:$0xff]
      %v5368 = vld [vmem:[%s1 + $0x98] sm:$0xff]
      %v5369 = vld [vmem:[%s1 + $0xa0] sm:$0xff]
      %v5371 = vsel %vm1095, %v5302, 0
      %v5374 = vsel %vm1095, %v5303, 0
      %v5377 = vsel %vm1095, %v5304, 0
      %v5380 = vsel %vm1095, %v5305, 0
      %v5383 = vsel %vm1095, %v5306, 0
      %v5386 = vsel %vm1095, %v5307, 0
      %v5389 = vsel %vm1095, %v5308, 0
      %v5392 = vsel %vm1095, %v5309, 0
      %v5395 = vsel %vm1095, %v5310, 0
      %v5398 = vsel %vm1095, %v5311, 0
      %v5401 = vsel %vm1095, %v5312, 0
      %v5404 = vsel %vm1095, %v5313, 0
      %v5407 = vsel %vm1095, %v5314, 0
      %v5410 = vsel %vm1095, %v5315, 0
      %v5413 = vsel %vm1095, %v5316, 0
      %v5416 = vsel %vm1095, %v5317, 0
      %v5419 = vsel %vm1095, %v5318, 0
      %v5422 = vsel %vm1095, %v5319, 0
      %v5425 = vsel %vm1095, %v5320, 0
      %v5428 = vsel %vm1095, %v5321, 0
      %v5431 = vsel %vm1095, %v5322, 0
      %v5434 = vsel %vm1095, %v5323, 0
      %v5437 = vsel %vm1095, %v5324, 0
      %v5440 = vsel %vm1095, %v5325, 0
      %v5443 = vsel %vm1095, %v5326, 0
      %v5446 = vsel %vm1095, %v5327, 0
      %v5449 = vsel %vm1095, %v5328, 0
      %v5452 = vsel %vm1095, %v5329, 0
      %v5455 = vsel %vm1095, %v5330, 0
      %v5458 = vsel %vm1095, %v5331, 0
      %v5461 = vsel %vm1095, %v5332, 0
      %v5464 = vsel %vm1095, %v5333, 0
      %v5467 = vsel %vm1095, %v5334, 0
      %v5470 = vsel %vm1095, %v5335, 0
      %v5473 = vsel %vm1095, %v5336, 0
      %v5476 = vsel %vm1095, %v5337, 0
      %v5479 = vsel %vm1095, %v5338, 0
      %v5482 = vsel %vm1095, %v5339, 0
      %v5485 = vsel %vm1095, %v5340, 0
      %v5488 = vsel %vm1095, %v5341, 0
      %v5491 = vsel %vm1095, %v5342, 0
      %v5494 = vsel %vm1095, %v5343, 0
      %v5497 = vsel %vm1095, %v5344, 0
      %v5500 = vsel %vm1095, %v5345, 0
      %v5503 = vsel %vm1095, %v5346, 0
      %v5506 = vsel %vm1095, %v5347, 0
      %v5509 = vsel %vm1095, %v5348, 0
      %v5512 = vsel %vm1095, %v5349, 0
      %v5515 = vsel %vm1095, %v5350, 0
      %v5518 = vsel %vm1095, %v5351, 0
      %v5521 = vsel %vm1095, %v5352, 0
      %v5524 = vsel %vm1095, %v5353, 0
      %v5527 = vsel %vm1095, %v5354, 0
      %v5530 = vsel %vm1095, %v5355, 0
      %v5533 = vsel %vm1095, %v5356, 0
      %v5536 = vsel %vm1095, %v5357, 0
      %v5539 = vsel %vm1095, %v5358, 0
      %v5542 = vsel %vm1095, %v5359, 0
      %v5545 = vsel %vm1095, %v5360, 0
      %v5548 = vsel %vm1095, %v5361, 0
      %v5551 = vsel %vm1095, %v5362, 0
      %v5554 = vsel %vm1095, %v5363, 0
      %v5557 = vsel %vm1095, %v5364, 0
      %v5560 = vsel %vm1095, %v5365, 0
      %5562 = vmatprep.subr.mxu0 0.0
      %5563 = vmatpush1.msra.mxu0 %v5366
      %5564 = vmatprep.subr.mxu0 0.0
      %5565 = vmatpush1.msra.mxu0 %v5367
      %5566 = vmatprep.subr.mxu0 0.0
      %5567 = vmatpush1.msra.mxu0 %v5368
      %5568 = vmatprep.subr.mxu0 0.0
      %5569 = vmatpush1.msra.mxu0 %v5369
      %5570 = vmatprep.subr.mxu0 0.0
      %5571 = vmatpush1.msra.mxu0 0.0
      %5572 = vmatprep.subr.mxu0 0.0
      %5573 = vmatpush1.msra.mxu0 0.0
      %5574 = vmatprep.subr.mxu0 0.0
      %5575 = vmatpush1.msra.mxu0 0.0
      %5576 = vmatprep.subr.mxu0 0.0
      %5577 = vmatpush1.msra.mxu0 0.0
      %5578 = vmatprep.subr.mxu0 0.0
      %5579 = vmatpush1.msra.mxu0 0.0
      %5580 = vmatprep.subr.mxu0 0.0
      %5581 = vmatpush1.msra.mxu0 0.0
      %5582 = vmatprep.subr.mxu0 0.0
      %5583 = vmatpush1.msra.mxu0 0.0
      %5584 = vmatprep.subr.mxu0 0.0
      %5585 = vmatpush1.msra.mxu0 0.0
      %5586 = vmatprep.subr.mxu0 0.0
      %5587 = vmatpush1.msra.mxu0 0.0
      %5588 = vmatprep.subr.mxu0 0.0
      %5589 = vmatpush1.msra.mxu0 0.0
      %5590 = vmatprep.subr.mxu0 0.0
      %5591 = vmatpush1.msra.mxu0 0.0
      %5592 = vmatprep.subr.mxu0 0.0
      %5593 = vmatpush1.msra.mxu0 0.0
      %5594 = vmatprep.subr.mxu0 0.0
      %5595 = vmatpush1.msra.mxu0 0.0
      %5596 = vmatprep.subr.mxu0 0.0
      %5597 = vmatpush1.msra.mxu0 0.0
      %5598 = vmatprep.subr.mxu0 0.0
      %5599 = vmatpush1.msra.mxu0 0.0
      %5600 = vmatprep.subr.mxu0 0.0
      %5601 = vmatpush1.msra.mxu0 0.0
      %5602 = vmatprep.subr.mxu0 0.0
      %5603 = vmatpush1.msra.mxu0 0.0
      %5604 = vmatprep.subr.mxu0 0.0
      %5605 = vmatpush1.msra.mxu0 0.0
      %5606 = vmatprep.subr.mxu0 0.0
      %5607 = vmatpush1.msra.mxu0 0.0
      %5608 = vmatprep.subr.mxu0 0.0
      %5609 = vmatpush1.msra.mxu0 0.0
      %5610 = vmatprep.subr.mxu0 0.0
      %5611 = vmatpush1.msra.mxu0 0.0
      %5612 = vmatprep.subr.mxu0 0.0
      %5613 = vmatpush1.msra.mxu0 0.0
      %5614 = vmatprep.subr.mxu0 0.0
      %5615 = vmatpush1.msra.mxu0 0.0
      %5616 = vmatprep.subr.mxu0 0.0
      %5617 = vmatpush1.msra.mxu0 0.0
      %5618 = vmatprep.subr.mxu0 0.0
      %5619 = vmatpush1.msra.mxu0 0.0
      %5620 = vmatprep.subr.mxu0 0.0
      %5621 = vmatpush1.msra.mxu0 0.0
      %5622 = vmatprep.subr.mxu0 0.0
      %5623 = vmatpush1.msra.mxu0 0.0
      %5624 = vmatprep.subr.mxu0 0.0
      %5625 = vmatpush1.msra.mxu0 0.0
      %5626 = vmatprep.mubr.f32.mxu0 0.0
      %5627 = vmatmul.mubr.f32.gmra.mrb[0].mxu0 %v5371
      %v5628 = vpop.f32.mrb[0].mxu0
      %v5629 = vadd.f32 0.0, %v5628
      %v5630 = vpop.f32.mrb[0].mxu0
      %5631 = vmatprep.mubr.f32.mxu0 0.0
      %5632 = vmatmul.mubr.f32.gmra.mrb[0].mxu0 %v5374
      %v5633 = vpop.f32.mrb[0].mxu0
      %v5634 = vadd.f32 0.0, %v5633
      %v5635 = vpop.f32.mrb[0].mxu0
      %5636 = vmatprep.mubr.f32.mxu0 0.0
      %5637 = vmatmul.mubr.f32.gmra.mrb[0].mxu0 %v5377
      %v5638 = vpop.f32.mrb[0].mxu0
      %v5639 = vadd.f32 0.0, %v5638
      %v5640 = vpop.f32.mrb[0].mxu0
      %5641 = vmatprep.mubr.f32.mxu0 0.0
      %5642 = vmatmul.mubr.f32.gmra.mrb[0].mxu0 %v5380
      %v5643 = vpop.f32.mrb[0].mxu0
      %v5644 = vadd.f32 0.0, %v5643
      %v5645 = vpop.f32.mrb[0].mxu0
      %5646 = vmatprep.mubr.f32.mxu0 0.0
      %5647 = vmatmul.mubr.f32.gmra.mrb[0].mxu0 %v5383
      %v5648 = vpop.f32.mrb[0].mxu0
      %v5649 = vadd.f32 0.0, %v5648
      %v5650 = vpop.f32.mrb[0].mxu0
      %5651 = vmatprep.mubr.f32.mxu0 0.0
      %5652 = vmatmul.mubr.f32.gmra.mrb[0].mxu0 %v5386
      %v5653 = vpop.f32.mrb[0].mxu0
      %v5654 = vadd.f32 0.0, %v5653
      %v5655 = vpop.f32.mrb[0].mxu0
      %5656 = vmatprep.mubr.f32.mxu0 0.0
      %5657 = vmatmul.mubr.f32.gmra.mrb[0].mxu0 %v5389
      %v5658 = vpop.f32.mrb[0].mxu0
      %v5659 = vadd.f32 0.0, %v5658
      %v5660 = vpop.f32.mrb[0].mxu0
      %5661 = vmatprep.mubr.f32.mxu0 0.0
      %5662 = vmatmul.mubr.f32.gmra.mrb[0].mxu0 %v5392
      %v5663 = vpop.f32.mrb[0].mxu0
      %v5664 = vadd.f32 0.0, %v5663
      %v5665 = vpop.f32.mrb[0].mxu0
      %5666 = vmatprep.mubr.f32.mxu0 0.0
      %5667 = vmatmul.mubr.f32.gmra.mrb[0].mxu0 %v5395
      %v5668 = vpop.f32.mrb[0].mxu0
      %v5669 = vadd.f32 0.0, %v5668
      %v5670 = vpop.f32.mrb[0].mxu0
      %5671 = vmatprep.mubr.f32.mxu0 0.0
      %5672 = vmatmul.mubr.f32.gmra.mrb[0].mxu0 %v5398
      %v5673 = vpop.f32.mrb[0].mxu0
      %v5674 = vadd.f32 0.0, %v5673
      %v5675 = vpop.f32.mrb[0].mxu0
      %5676 = vmatprep.mubr.f32.mxu0 0.0
      %5677 = vmatmul.mubr.f32.gmra.mrb[0].mxu0 %v5401
      %v5678 = vpop.f32.mrb[0].mxu0
      %v5679 = vadd.f32 0.0, %v5678
      %v5680 = vpop.f32.mrb[0].mxu0
      %5681 = vmatprep.mubr.f32.mxu0 0.0
      %5682 = vmatmul.mubr.f32.gmra.mrb[0].mxu0 %v5404
      %v5683 = vpop.f32.mrb[0].mxu0
      %v5684 = vadd.f32 0.0, %v5683
      %v5685 = vpop.f32.mrb[0].mxu0
      %5686 = vmatprep.mubr.f32.mxu0 0.0
      %5687 = vmatmul.mubr.f32.gmra.mrb[0].mxu0 %v5407
      %v5688 = vpop.f32.mrb[0].mxu0
      %v5689 = vadd.f32 0.0, %v5688
      %v5690 = vpop.f32.mrb[0].mxu0
      %5691 = vmatprep.mubr.f32.mxu0 0.0
      %5692 = vmatmul.mubr.f32.gmra.mrb[0].mxu0 %v5410
      %v5693 = vpop.f32.mrb[0].mxu0
      %v5694 = vadd.f32 0.0, %v5693
      %v5695 = vpop.f32.mrb[0].mxu0
      %5696 = vmatprep.mubr.f32.mxu0 0.0
      %5697 = vmatmul.mubr.f32.gmra.mrb[0].mxu0 %v5413
      %v5698 = vpop.f32.mrb[0].mxu0
      %v5699 = vadd.f32 0.0, %v5698
      %v5700 = vpop.f32.mrb[0].mxu0
      %5701 = vmatprep.mubr.f32.mxu0 0.0
      %5702 = vmatmul.mubr.f32.gmra.mrb[0].mxu0 %v5416
      %v5703 = vpop.f32.mrb[0].mxu0
      %v5704 = vadd.f32 0.0, %v5703
      %v5705 = vpop.f32.mrb[0].mxu0
      %5706 = vmatprep.mubr.f32.mxu0 0.0
      %5707 = vmatmul.mubr.f32.gmra.mrb[0].mxu0 %v5419
      %v5708 = vpop.f32.mrb[0].mxu0
      %v5709 = vadd.f32 0.0, %v5708
      %v5710 = vpop.f32.mrb[0].mxu0
      %5711 = vmatprep.mubr.f32.mxu0 0.0
      %5712 = vmatmul.mubr.f32.gmra.mrb[0].mxu0 %v5422
      %v5713 = vpop.f32.mrb[0].mxu0
      %v5714 = vadd.f32 0.0, %v5713
      %v5715 = vpop.f32.mrb[0].mxu0
      %5716 = vmatprep.mubr.f32.mxu0 0.0
      %5717 = vmatmul.mubr.f32.gmra.mrb[0].mxu0 %v5425
      %v5718 = vpop.f32.mrb[0].mxu0
      %v5719 = vadd.f32 0.0, %v5718
      %v5720 = vpop.f32.mrb[0].mxu0
      %5721 = vmatprep.mubr.f32.mxu0 0.0
      %5722 = vmatmul.mubr.f32.gmra.mrb[0].mxu0 %v5428
      %v5723 = vpop.f32.mrb[0].mxu0
      %v5724 = vadd.f32 0.0, %v5723
      %v5725 = vpop.f32.mrb[0].mxu0
      %5726 = vmatprep.mubr.f32.mxu0 0.0
      %5727 = vmatmul.mubr.f32.gmra.mrb[0].mxu0 %v5431
      %v5728 = vpop.f32.mrb[0].mxu0
      %v5729 = vadd.f32 0.0, %v5728
      %v5730 = vpop.f32.mrb[0].mxu0
      %5731 = vmatprep.mubr.f32.mxu0 0.0
      %5732 = vmatmul.mubr.f32.gmra.mrb[0].mxu0 %v5434
      %v5733 = vpop.f32.mrb[0].mxu0
      %v5734 = vadd.f32 0.0, %v5733
      %v5735 = vpop.f32.mrb[0].mxu0
      %5736 = vmatprep.mubr.f32.mxu0 0.0
      %5737 = vmatmul.mubr.f32.gmra.mrb[0].mxu0 %v5437
      %v5738 = vpop.f32.mrb[0].mxu0
      %v5739 = vadd.f32 0.0, %v5738
      %v5740 = vpop.f32.mrb[0].mxu0
      %5741 = vmatprep.mubr.f32.mxu0 0.0
      %5742 = vmatmul.mubr.f32.gmra.mrb[0].mxu0 %v5440
      %v5743 = vpop.f32.mrb[0].mxu0
      %v5744 = vadd.f32 0.0, %v5743
      %v5745 = vpop.f32.mrb[0].mxu0
      %5746 = vmatprep.mubr.f32.mxu0 0.0
      %5747 = vmatmul.mubr.f32.gmra.mrb[0].mxu0 %v5443
      %v5748 = vpop.f32.mrb[0].mxu0
      %v5749 = vadd.f32 0.0, %v5748
      %v5750 = vpop.f32.mrb[0].mxu0
      %5751 = vmatprep.mubr.f32.mxu0 0.0
      %5752 = vmatmul.mubr.f32.gmra.mrb[0].mxu0 %v5446
      %v5753 = vpop.f32.mrb[0].mxu0
      %v5754 = vadd.f32 0.0, %v5753
      %v5755 = vpop.f32.mrb[0].mxu0
      %5756 = vmatprep.mubr.f32.mxu0 0.0
      %5757 = vmatmul.mubr.f32.gmra.mrb[0].mxu0 %v5449
      %v5758 = vpop.f32.mrb[0].mxu0
      %v5759 = vadd.f32 0.0, %v5758
      %v5760 = vpop.f32.mrb[0].mxu0
      %5761 = vmatprep.mubr.f32.mxu0 0.0
      %5762 = vmatmul.mubr.f32.gmra.mrb[0].mxu0 %v5452
      %v5763 = vpop.f32.mrb[0].mxu0
      %v5764 = vadd.f32 0.0, %v5763
      %v5765 = vpop.f32.mrb[0].mxu0
      %5766 = vmatprep.mubr.f32.mxu0 0.0
      %5767 = vmatmul.mubr.f32.gmra.mrb[0].mxu0 %v5455
      %v5768 = vpop.f32.mrb[0].mxu0
      %v5769 = vadd.f32 0.0, %v5768
      %v5770 = vpop.f32.mrb[0].mxu0
      %5771 = vmatprep.mubr.f32.mxu0 0.0
      %5772 = vmatmul.mubr.f32.gmra.mrb[0].mxu0 %v5458
      %v5773 = vpop.f32.mrb[0].mxu0
      %v5774 = vadd.f32 0.0, %v5773
      %v5775 = vpop.f32.mrb[0].mxu0
      %5776 = vmatprep.mubr.f32.mxu0 0.0
      %5777 = vmatmul.mubr.f32.gmra.mrb[0].mxu0 %v5461
      %v5778 = vpop.f32.mrb[0].mxu0
      %v5779 = vadd.f32 0.0, %v5778
      %v5780 = vpop.f32.mrb[0].mxu0
      %5781 = vmatprep.mubr.f32.mxu0 0.0
      %5782 = vmatmul.mubr.f32.gmra.mrb[0].mxu0 %v5464
      %v5783 = vpop.f32.mrb[0].mxu0
      %v5784 = vadd.f32 0.0, %v5783
      %v5785 = vpop.f32.mrb[0].mxu0
      %5786 = vmatprep.mubr.f32.mxu0 0.0
      %5787 = vmatmul.mubr.f32.gmra.mrb[0].mxu0 %v5467
      %v5788 = vpop.f32.mrb[0].mxu0
      %v5789 = vadd.f32 0.0, %v5788
      %v5790 = vpop.f32.mrb[0].mxu0
      %5791 = vmatprep.mubr.f32.mxu0 0.0
      %5792 = vmatmul.mubr.f32.gmra.mrb[0].mxu0 %v5470
      %v5793 = vpop.f32.mrb[0].mxu0
      %v5794 = vadd.f32 0.0, %v5793
      %v5795 = vpop.f32.mrb[0].mxu0
      %5796 = vmatprep.mubr.f32.mxu0 0.0
      %5797 = vmatmul.mubr.f32.gmra.mrb[0].mxu0 %v5473
      %v5798 = vpop.f32.mrb[0].mxu0
      %v5799 = vadd.f32 0.0, %v5798
      %v5800 = vpop.f32.mrb[0].mxu0
      %5801 = vmatprep.mubr.f32.mxu0 0.0
      %5802 = vmatmul.mubr.f32.gmra.mrb[0].mxu0 %v5476
      %v5803 = vpop.f32.mrb[0].mxu0
      %v5804 = vadd.f32 0.0, %v5803
      %v5805 = vpop.f32.mrb[0].mxu0
      %5806 = vmatprep.mubr.f32.mxu0 0.0
      %5807 = vmatmul.mubr.f32.gmra.mrb[0].mxu0 %v5479
      %v5808 = vpop.f32.mrb[0].mxu0
      %v5809 = vadd.f32 0.0, %v5808
      %v5810 = vpop.f32.mrb[0].mxu0
      %5811 = vmatprep.mubr.f32.mxu0 0.0
      %5812 = vmatmul.mubr.f32.gmra.mrb[0].mxu0 %v5482
      %v5813 = vpop.f32.mrb[0].mxu0
      %v5814 = vadd.f32 0.0, %v5813
      %v5815 = vpop.f32.mrb[0].mxu0
      %5816 = vmatprep.mubr.f32.mxu0 0.0
      %5817 = vmatmul.mubr.f32.gmra.mrb[0].mxu0 %v5485
      %v5818 = vpop.f32.mrb[0].mxu0
      %v5819 = vadd.f32 0.0, %v5818
      %v5820 = vpop.f32.mrb[0].mxu0
      %5821 = vmatprep.mubr.f32.mxu0 0.0
      %5822 = vmatmul.mubr.f32.gmra.mrb[0].mxu0 %v5488
      %v5823 = vpop.f32.mrb[0].mxu0
      %v5824 = vadd.f32 0.0, %v5823
      %v5825 = vpop.f32.mrb[0].mxu0
      %5826 = vmatprep.mubr.f32.mxu0 0.0
      %5827 = vmatmul.mubr.f32.gmra.mrb[0].mxu0 %v5491
      %v5828 = vpop.f32.mrb[0].mxu0
      %v5829 = vadd.f32 0.0, %v5828
      %v5830 = vpop.f32.mrb[0].mxu0
      %5831 = vmatprep.mubr.f32.mxu0 0.0
      %5832 = vmatmul.mubr.f32.gmra.mrb[0].mxu0 %v5494
      %v5833 = vpop.f32.mrb[0].mxu0
      %v5834 = vadd.f32 0.0, %v5833
      %v5835 = vpop.f32.mrb[0].mxu0
      %5836 = vmatprep.mubr.f32.mxu0 0.0
      %5837 = vmatmul.mubr.f32.gmra.mrb[0].mxu0 %v5497
      %v5838 = vpop.f32.mrb[0].mxu0
      %v5839 = vadd.f32 0.0, %v5838
      %v5840 = vpop.f32.mrb[0].mxu0
      %5841 = vmatprep.mubr.f32.mxu0 0.0
      %5842 = vmatmul.mubr.f32.gmra.mrb[0].mxu0 %v5500
      %v5843 = vpop.f32.mrb[0].mxu0
      %v5844 = vadd.f32 0.0, %v5843
      %v5845 = vpop.f32.mrb[0].mxu0
      %5846 = vmatprep.mubr.f32.mxu0 0.0
      %5847 = vmatmul.mubr.f32.gmra.mrb[0].mxu0 %v5503
      %v5848 = vpop.f32.mrb[0].mxu0
      %v5849 = vadd.f32 0.0, %v5848
      %v5850 = vpop.f32.mrb[0].mxu0
      %5851 = vmatprep.mubr.f32.mxu0 0.0
      %5852 = vmatmul.mubr.f32.gmra.mrb[0].mxu0 %v5506
      %v5853 = vpop.f32.mrb[0].mxu0
      %v5854 = vadd.f32 0.0, %v5853
      %v5855 = vpop.f32.mrb[0].mxu0
      %5856 = vmatprep.mubr.f32.mxu0 0.0
      %5857 = vmatmul.mubr.f32.gmra.mrb[0].mxu0 %v5509
      %v5858 = vpop.f32.mrb[0].mxu0
      %v5859 = vadd.f32 0.0, %v5858
      %v5860 = vpop.f32.mrb[0].mxu0
      %5861 = vmatprep.mubr.f32.mxu0 0.0
      %5862 = vmatmul.mubr.f32.gmra.mrb[0].mxu0 %v5512
      %v5863 = vpop.f32.mrb[0].mxu0
      %v5864 = vadd.f32 0.0, %v5863
      %v5865 = vpop.f32.mrb[0].mxu0
      %5866 = vmatprep.mubr.f32.mxu0 0.0
      %5867 = vmatmul.mubr.f32.gmra.mrb[0].mxu0 %v5515
      %v5868 = vpop.f32.mrb[0].mxu0
      %v5869 = vadd.f32 0.0, %v5868
      %v5870 = vpop.f32.mrb[0].mxu0
      %5871 = vmatprep.mubr.f32.mxu0 0.0
      %5872 = vmatmul.mubr.f32.gmra.mrb[0].mxu0 %v5518
      %v5873 = vpop.f32.mrb[0].mxu0
      %v5874 = vadd.f32 0.0, %v5873
      %v5875 = vpop.f32.mrb[0].mxu0
      %5876 = vmatprep.mubr.f32.mxu0 0.0
      %5877 = vmatmul.mubr.f32.gmra.mrb[0].mxu0 %v5521
      %v5878 = vpop.f32.mrb[0].mxu0
      %v5879 = vadd.f32 0.0, %v5878
      %v5880 = vpop.f32.mrb[0].mxu0
      %5881 = vmatprep.mubr.f32.mxu0 0.0
      %5882 = vmatmul.mubr.f32.gmra.mrb[0].mxu0 %v5524
      %v5883 = vpop.f32.mrb[0].mxu0
      %v5884 = vadd.f32 0.0, %v5883
      %v5885 = vpop.f32.mrb[0].mxu0
      %5886 = vmatprep.mubr.f32.mxu0 0.0
      %5887 = vmatmul.mubr.f32.gmra.mrb[0].mxu0 %v5527
      %v5888 = vpop.f32.mrb[0].mxu0
      %v5889 = vadd.f32 0.0, %v5888
      %v5890 = vpop.f32.mrb[0].mxu0
      %5891 = vmatprep.mubr.f32.mxu0 0.0
      %5892 = vmatmul.mubr.f32.gmra.mrb[0].mxu0 %v5530
      %v5893 = vpop.f32.mrb[0].mxu0
      %v5894 = vadd.f32 0.0, %v5893
      %v5895 = vpop.f32.mrb[0].mxu0
      %5896 = vmatprep.mubr.f32.mxu0 0.0
      %5897 = vmatmul.mubr.f32.gmra.mrb[0].mxu0 %v5533
      %v5898 = vpop.f32.mrb[0].mxu0
      %v5899 = vadd.f32 0.0, %v5898
      %v5900 = vpop.f32.mrb[0].mxu0
      %5901 = vmatprep.mubr.f32.mxu0 0.0
      %5902 = vmatmul.mubr.f32.gmra.mrb[0].mxu0 %v5536
      %v5903 = vpop.f32.mrb[0].mxu0
      %v5904 = vadd.f32 0.0, %v5903
      %v5905 = vpop.f32.mrb[0].mxu0
      %5906 = vmatprep.mubr.f32.mxu0 0.0
      %5907 = vmatmul.mubr.f32.gmra.mrb[0].mxu0 %v5539
      %v5908 = vpop.f32.mrb[0].mxu0
      %v5909 = vadd.f32 0.0, %v5908
      %v5910 = vpop.f32.mrb[0].mxu0
      %5911 = vmatprep.mubr.f32.mxu0 0.0
      %5912 = vmatmul.mubr.f32.gmra.mrb[0].mxu0 %v5542
      %v5913 = vpop.f32.mrb[0].mxu0
      %v5914 = vadd.f32 0.0, %v5913
      %v5915 = vpop.f32.mrb[0].mxu0
      %5916 = vmatprep.mubr.f32.mxu0 0.0
      %5917 = vmatmul.mubr.f32.gmra.mrb[0].mxu0 %v5545
      %v5918 = vpop.f32.mrb[0].mxu0
      %v5919 = vadd.f32 0.0, %v5918
      %v5920 = vpop.f32.mrb[0].mxu0
      %5921 = vmatprep.mubr.f32.mxu0 0.0
      %5922 = vmatmul.mubr.f32.gmra.mrb[0].mxu0 %v5548
      %v5923 = vpop.f32.mrb[0].mxu0
      %v5924 = vadd.f32 0.0, %v5923
      %v5925 = vpop.f32.mrb[0].mxu0
      %5926 = vmatprep.mubr.f32.mxu0 0.0
      %5927 = vmatmul.mubr.f32.gmra.mrb[0].mxu0 %v5551
      %v5928 = vpop.f32.mrb[0].mxu0
      %v5929 = vadd.f32 0.0, %v5928
      %v5930 = vpop.f32.mrb[0].mxu0
      %5931 = vmatprep.mubr.f32.mxu0 0.0
      %5932 = vmatmul.mubr.f32.gmra.mrb[0].mxu0 %v5554
      %v5933 = vpop.f32.mrb[0].mxu0
      %v5934 = vadd.f32 0.0, %v5933
      %v5935 = vpop.f32.mrb[0].mxu0
      %5936 = vmatprep.mubr.f32.mxu0 0.0
      %5937 = vmatmul.mubr.f32.gmra.mrb[0].mxu0 %v5557
      %v5938 = vpop.f32.mrb[0].mxu0
      %v5939 = vadd.f32 0.0, %v5938
      %v5940 = vpop.f32.mrb[0].mxu0
      %5941 = vmatprep.mubr.f32.mxu0 0.0
      %5942 = vmatmul.mubr.f32.gmra.mrb[0].mxu0 %v5560
      %v5943 = vpop.f32.mrb[0].mxu0
      %v5944 = vadd.f32 0.0, %v5943
      %v5945 = vpop.f32.mrb[0].mxu0
      %5946 = vdwg.mxu0
      %v5948 = vsel %vm1095, %v5170, 0
      %v5951 = vsel %vm1095, %v5171, 0
      %v5954 = vsel %vm1095, %v5172, 0
      %v5957 = vsel %vm1095, %v5173, 0
      %v5960 = vsel %vm1095, %v5174, 0
      %v5963 = vsel %vm1095, %v5175, 0
      %v5966 = vsel %vm1095, %v5176, 0
      %v5969 = vsel %vm1095, %v5177, 0
      %v5972 = vsel %vm1095, %v5178, 0
      %v5975 = vsel %vm1095, %v5179, 0
      %v5978 = vsel %vm1095, %v5180, 0
      %v5981 = vsel %vm1095, %v5181, 0
      %v5984 = vsel %vm1095, %v5182, 0
      %v5987 = vsel %vm1095, %v5183, 0
      %v5990 = vsel %vm1095, %v5184, 0
      %v5993 = vsel %vm1095, %v5185, 0
      %v5996 = vsel %vm1095, %v5186, 0
      %v5999 = vsel %vm1095, %v5187, 0
      %v6002 = vsel %vm1095, %v5188, 0
      %v6005 = vsel %vm1095, %v5189, 0
      %v6008 = vsel %vm1095, %v5190, 0
      %v6011 = vsel %vm1095, %v5191, 0
      %v6014 = vsel %vm1095, %v5192, 0
      %v6017 = vsel %vm1095, %v5193, 0
      %v6020 = vsel %vm1095, %v5194, 0
      %v6023 = vsel %vm1095, %v5195, 0
      %v6026 = vsel %vm1095, %v5196, 0
      %v6029 = vsel %vm1095, %v5197, 0
      %v6032 = vsel %vm1095, %v5198, 0
      %v6035 = vsel %vm1095, %v5199, 0
      %v6038 = vsel %vm1095, %v5200, 0
      %v6041 = vsel %vm1095, %v5201, 0
      %v6044 = vsel %vm1095, %v5202, 0
      %v6047 = vsel %vm1095, %v5203, 0
      %v6050 = vsel %vm1095, %v5204, 0
      %v6053 = vsel %vm1095, %v5205, 0
      %v6056 = vsel %vm1095, %v5206, 0
      %v6059 = vsel %vm1095, %v5207, 0
      %v6062 = vsel %vm1095, %v5208, 0
      %v6065 = vsel %vm1095, %v5209, 0
      %v6068 = vsel %vm1095, %v5210, 0
      %v6071 = vsel %vm1095, %v5211, 0
      %v6074 = vsel %vm1095, %v5212, 0
      %v6077 = vsel %vm1095, %v5213, 0
      %v6080 = vsel %vm1095, %v5214, 0
      %v6083 = vsel %vm1095, %v5215, 0
      %v6086 = vsel %vm1095, %v5216, 0
      %v6089 = vsel %vm1095, %v5217, 0
      %v6092 = vsel %vm1095, %v5218, 0
      %v6095 = vsel %vm1095, %v5219, 0
      %v6098 = vsel %vm1095, %v5220, 0
      %v6101 = vsel %vm1095, %v5221, 0
      %v6104 = vsel %vm1095, %v5222, 0
      %v6107 = vsel %vm1095, %v5223, 0
      %v6110 = vsel %vm1095, %v5224, 0
      %v6113 = vsel %vm1095, %v5225, 0
      %v6116 = vsel %vm1095, %v5226, 0
      %v6119 = vsel %vm1095, %v5227, 0
      %v6122 = vsel %vm1095, %v5228, 0
      %v6125 = vsel %vm1095, %v5229, 0
      %v6128 = vsel %vm1095, %v5230, 0
      %v6131 = vsel %vm1095, %v5231, 0
      %v6134 = vsel %vm1095, %v5232, 0
      %v6137 = vsel %vm1095, %v5233, 0
      %6139 = vmatprep.subr.mxu0 0.0
      %6140 = vmatpush1.msra.mxu0 %v5298
      %6141 = vmatprep.subr.mxu0 0.0
      %6142 = vmatpush1.msra.mxu0 %v5299
      %6143 = vmatprep.subr.mxu0 0.0
      %6144 = vmatpush1.msra.mxu0 %v5300
      %6145 = vmatprep.subr.mxu0 0.0
      %6146 = vmatpush1.msra.mxu0 %v5301
      %6147 = vmatprep.subr.mxu0 0.0
      %6148 = vmatpush1.msra.mxu0 0.0
      %6149 = vmatprep.subr.mxu0 0.0
      %6150 = vmatpush1.msra.mxu0 0.0
      %6151 = vmatprep.subr.mxu0 0.0
      %6152 = vmatpush1.msra.mxu0 0.0
      %6153 = vmatprep.subr.mxu0 0.0
      %6154 = vmatpush1.msra.mxu0 0.0
      %6155 = vmatprep.subr.mxu0 0.0
      %6156 = vmatpush1.msra.mxu0 0.0
      %6157 = vmatprep.subr.mxu0 0.0
      %6158 = vmatpush1.msra.mxu0 0.0
      %6159 = vmatprep.subr.mxu0 0.0
      %6160 = vmatpush1.msra.mxu0 0.0
      %6161 = vmatprep.subr.mxu0 0.0
      %6162 = vmatpush1.msra.mxu0 0.0
      %6163 = vmatprep.subr.mxu0 0.0
      %6164 = vmatpush1.msra.mxu0 0.0
      %6165 = vmatprep.subr.mxu0 0.0
      %6166 = vmatpush1.msra.mxu0 0.0
      %6167 = vmatprep.subr.mxu0 0.0
      %6168 = vmatpush1.msra.mxu0 0.0
      %6169 = vmatprep.subr.mxu0 0.0
      %6170 = vmatpush1.msra.mxu0 0.0
      %6171 = vmatprep.subr.mxu0 0.0
      %6172 = vmatpush1.msra.mxu0 0.0
      %6173 = vmatprep.subr.mxu0 0.0
      %6174 = vmatpush1.msra.mxu0 0.0
      %6175 = vmatprep.subr.mxu0 0.0
      %6176 = vmatpush1.msra.mxu0 0.0
      %6177 = vmatprep.subr.mxu0 0.0
      %6178 = vmatpush1.msra.mxu0 0.0
      %6179 = vmatprep.subr.mxu0 0.0
      %6180 = vmatpush1.msra.mxu0 0.0
      %6181 = vmatprep.subr.mxu0 0.0
      %6182 = vmatpush1.msra.mxu0 0.0
      %6183 = vmatprep.subr.mxu0 0.0
      %6184 = vmatpush1.msra.mxu0 0.0
      %6185 = vmatprep.subr.mxu0 0.0
      %6186 = vmatpush1.msra.mxu0 0.0
      %6187 = vmatprep.subr.mxu0 0.0
      %6188 = vmatpush1.msra.mxu0 0.0
      %6189 = vmatprep.subr.mxu0 0.0
      %6190 = vmatpush1.msra.mxu0 0.0
      %6191 = vmatprep.subr.mxu0 0.0
      %6192 = vmatpush1.msra.mxu0 0.0
      %6193 = vmatprep.subr.mxu0 0.0
      %6194 = vmatpush1.msra.mxu0 0.0
      %6195 = vmatprep.subr.mxu0 0.0
      %6196 = vmatpush1.msra.mxu0 0.0
      %6197 = vmatprep.subr.mxu0 0.0
      %6198 = vmatpush1.msra.mxu0 0.0
      %6199 = vmatprep.subr.mxu0 0.0
      %6200 = vmatpush1.msra.mxu0 0.0
      %6201 = vmatprep.subr.mxu0 0.0
      %6202 = vmatpush1.msra.mxu0 0.0
      %6203 = vmatprep.mubr.f32.mxu0 0.0
      %6204 = vmatmul.mubr.f32.gmra.mrb[0].mxu0 %v5948
      %v6205 = vpop.f32.mrb[0].mxu0
      %v6206 = vadd.f32 %v5629, %v6205
      %v6207 = vpop.f32.mrb[0].mxu0
      %6208 = vmatprep.mubr.f32.mxu0 0.0
      %6209 = vmatmul.mubr.f32.gmra.mrb[0].mxu0 %v5951
      %v6210 = vpop.f32.mrb[0].mxu0
      %v6211 = vadd.f32 %v5634, %v6210
      %v6212 = vpop.f32.mrb[0].mxu0
      %6213 = vmatprep.mubr.f32.mxu0 0.0
      %6214 = vmatmul.mubr.f32.gmra.mrb[0].mxu0 %v5954
      %v6215 = vpop.f32.mrb[0].mxu0
      %v6216 = vadd.f32 %v5639, %v6215
      %v6217 = vpop.f32.mrb[0].mxu0
      %6218 = vmatprep.mubr.f32.mxu0 0.0
      %6219 = vmatmul.mubr.f32.gmra.mrb[0].mxu0 %v5957
      %v6220 = vpop.f32.mrb[0].mxu0
      %v6221 = vadd.f32 %v5644, %v6220
      %v6222 = vpop.f32.mrb[0].mxu0
      %6223 = vmatprep.mubr.f32.mxu0 0.0
      %6224 = vmatmul.mubr.f32.gmra.mrb[0].mxu0 %v5960
      %v6225 = vpop.f32.mrb[0].mxu0
      %v6226 = vadd.f32 %v5649, %v6225
      %v6227 = vpop.f32.mrb[0].mxu0
      %6228 = vmatprep.mubr.f32.mxu0 0.0
      %6229 = vmatmul.mubr.f32.gmra.mrb[0].mxu0 %v5963
      %v6230 = vpop.f32.mrb[0].mxu0
      %v6231 = vadd.f32 %v5654, %v6230
      %v6232 = vpop.f32.mrb[0].mxu0
      %6233 = vmatprep.mubr.f32.mxu0 0.0
      %6234 = vmatmul.mubr.f32.gmra.mrb[0].mxu0 %v5966
      %v6235 = vpop.f32.mrb[0].mxu0
      %v6236 = vadd.f32 %v5659, %v6235
      %v6237 = vpop.f32.mrb[0].mxu0
      %6238 = vmatprep.mubr.f32.mxu0 0.0
      %6239 = vmatmul.mubr.f32.gmra.mrb[0].mxu0 %v5969
      %v6240 = vpop.f32.mrb[0].mxu0
      %v6241 = vadd.f32 %v5664, %v6240
      %v6242 = vpop.f32.mrb[0].mxu0
      %6243 = vmatprep.mubr.f32.mxu0 0.0
      %6244 = vmatmul.mubr.f32.gmra.mrb[0].mxu0 %v5972
      %v6245 = vpop.f32.mrb[0].mxu0
      %v6246 = vadd.f32 %v5669, %v6245
      %v6247 = vpop.f32.mrb[0].mxu0
      %6248 = vmatprep.mubr.f32.mxu0 0.0
      %6249 = vmatmul.mubr.f32.gmra.mrb[0].mxu0 %v5975
      %v6250 = vpop.f32.mrb[0].mxu0
      %v6251 = vadd.f32 %v5674, %v6250
      %v6252 = vpop.f32.mrb[0].mxu0
      %6253 = vmatprep.mubr.f32.mxu0 0.0
      %6254 = vmatmul.mubr.f32.gmra.mrb[0].mxu0 %v5978
      %v6255 = vpop.f32.mrb[0].mxu0
      %v6256 = vadd.f32 %v5679, %v6255
      %v6257 = vpop.f32.mrb[0].mxu0
      %6258 = vmatprep.mubr.f32.mxu0 0.0
      %6259 = vmatmul.mubr.f32.gmra.mrb[0].mxu0 %v5981
      %v6260 = vpop.f32.mrb[0].mxu0
      %v6261 = vadd.f32 %v5684, %v6260
      %v6262 = vpop.f32.mrb[0].mxu0
      %6263 = vmatprep.mubr.f32.mxu0 0.0
      %6264 = vmatmul.mubr.f32.gmra.mrb[0].mxu0 %v5984
      %v6265 = vpop.f32.mrb[0].mxu0
      %v6266 = vadd.f32 %v5689, %v6265
      %v6267 = vpop.f32.mrb[0].mxu0
      %6268 = vmatprep.mubr.f32.mxu0 0.0
      %6269 = vmatmul.mubr.f32.gmra.mrb[0].mxu0 %v5987
      %v6270 = vpop.f32.mrb[0].mxu0
      %v6271 = vadd.f32 %v5694, %v6270
      %v6272 = vpop.f32.mrb[0].mxu0
      %6273 = vmatprep.mubr.f32.mxu0 0.0
      %6274 = vmatmul.mubr.f32.gmra.mrb[0].mxu0 %v5990
      %v6275 = vpop.f32.mrb[0].mxu0
      %v6276 = vadd.f32 %v5699, %v6275
      %v6277 = vpop.f32.mrb[0].mxu0
      %6278 = vmatprep.mubr.f32.mxu0 0.0
      %6279 = vmatmul.mubr.f32.gmra.mrb[0].mxu0 %v5993
      %v6280 = vpop.f32.mrb[0].mxu0
      %v6281 = vadd.f32 %v5704, %v6280
      %v6282 = vpop.f32.mrb[0].mxu0
      %6283 = vmatprep.mubr.f32.mxu0 0.0
      %6284 = vmatmul.mubr.f32.gmra.mrb[0].mxu0 %v5996
      %v6285 = vpop.f32.mrb[0].mxu0
      %v6286 = vadd.f32 %v5709, %v6285
      %v6287 = vpop.f32.mrb[0].mxu0
      %6288 = vmatprep.mubr.f32.mxu0 0.0
      %6289 = vmatmul.mubr.f32.gmra.mrb[0].mxu0 %v5999
      %v6290 = vpop.f32.mrb[0].mxu0
      %v6291 = vadd.f32 %v5714, %v6290
      %v6292 = vpop.f32.mrb[0].mxu0
      %6293 = vmatprep.mubr.f32.mxu0 0.0
      %6294 = vmatmul.mubr.f32.gmra.mrb[0].mxu0 %v6002
      %v6295 = vpop.f32.mrb[0].mxu0
      %v6296 = vadd.f32 %v5719, %v6295
      %v6297 = vpop.f32.mrb[0].mxu0
      %6298 = vmatprep.mubr.f32.mxu0 0.0
      %6299 = vmatmul.mubr.f32.gmra.mrb[0].mxu0 %v6005
      %v6300 = vpop.f32.mrb[0].mxu0
      %v6301 = vadd.f32 %v5724, %v6300
      %v6302 = vpop.f32.mrb[0].mxu0
      %6303 = vmatprep.mubr.f32.mxu0 0.0
      %6304 = vmatmul.mubr.f32.gmra.mrb[0].mxu0 %v6008
      %v6305 = vpop.f32.mrb[0].mxu0
      %v6306 = vadd.f32 %v5729, %v6305
      %v6307 = vpop.f32.mrb[0].mxu0
      %6308 = vmatprep.mubr.f32.mxu0 0.0
      %6309 = vmatmul.mubr.f32.gmra.mrb[0].mxu0 %v6011
      %v6310 = vpop.f32.mrb[0].mxu0
      %v6311 = vadd.f32 %v5734, %v6310
      %v6312 = vpop.f32.mrb[0].mxu0
      %6313 = vmatprep.mubr.f32.mxu0 0.0
      %6314 = vmatmul.mubr.f32.gmra.mrb[0].mxu0 %v6014
      %v6315 = vpop.f32.mrb[0].mxu0
      %v6316 = vadd.f32 %v5739, %v6315
      %v6317 = vpop.f32.mrb[0].mxu0
      %6318 = vmatprep.mubr.f32.mxu0 0.0
      %6319 = vmatmul.mubr.f32.gmra.mrb[0].mxu0 %v6017
      %v6320 = vpop.f32.mrb[0].mxu0
      %v6321 = vadd.f32 %v5744, %v6320
      %v6322 = vpop.f32.mrb[0].mxu0
      %6323 = vmatprep.mubr.f32.mxu0 0.0
      %6324 = vmatmul.mubr.f32.gmra.mrb[0].mxu0 %v6020
      %v6325 = vpop.f32.mrb[0].mxu0
      %v6326 = vadd.f32 %v5749, %v6325
      %v6327 = vpop.f32.mrb[0].mxu0
      %6328 = vmatprep.mubr.f32.mxu0 0.0
      %6329 = vmatmul.mubr.f32.gmra.mrb[0].mxu0 %v6023
      %v6330 = vpop.f32.mrb[0].mxu0
      %v6331 = vadd.f32 %v5754, %v6330
      %v6332 = vpop.f32.mrb[0].mxu0
      %6333 = vmatprep.mubr.f32.mxu0 0.0
      %6334 = vmatmul.mubr.f32.gmra.mrb[0].mxu0 %v6026
      %v6335 = vpop.f32.mrb[0].mxu0
      %v6336 = vadd.f32 %v5759, %v6335
      %v6337 = vpop.f32.mrb[0].mxu0
      %6338 = vmatprep.mubr.f32.mxu0 0.0
      %6339 = vmatmul.mubr.f32.gmra.mrb[0].mxu0 %v6029
      %v6340 = vpop.f32.mrb[0].mxu0
      %v6341 = vadd.f32 %v5764, %v6340
      %v6342 = vpop.f32.mrb[0].mxu0
      %6343 = vmatprep.mubr.f32.mxu0 0.0
      %6344 = vmatmul.mubr.f32.gmra.mrb[0].mxu0 %v6032
      %v6345 = vpop.f32.mrb[0].mxu0
      %v6346 = vadd.f32 %v5769, %v6345
      %v6347 = vpop.f32.mrb[0].mxu0
      %6348 = vmatprep.mubr.f32.mxu0 0.0
      %6349 = vmatmul.mubr.f32.gmra.mrb[0].mxu0 %v6035
      %v6350 = vpop.f32.mrb[0].mxu0
      %v6351 = vadd.f32 %v5774, %v6350
      %v6352 = vpop.f32.mrb[0].mxu0
      %6353 = vmatprep.mubr.f32.mxu0 0.0
      %6354 = vmatmul.mubr.f32.gmra.mrb[0].mxu0 %v6038
      %v6355 = vpop.f32.mrb[0].mxu0
      %v6356 = vadd.f32 %v5779, %v6355
      %v6357 = vpop.f32.mrb[0].mxu0
      %6358 = vmatprep.mubr.f32.mxu0 0.0
      %6359 = vmatmul.mubr.f32.gmra.mrb[0].mxu0 %v6041
      %v6360 = vpop.f32.mrb[0].mxu0
      %v6361 = vadd.f32 %v5784, %v6360
      %v6362 = vpop.f32.mrb[0].mxu0
      %6363 = vmatprep.mubr.f32.mxu0 0.0
      %6364 = vmatmul.mubr.f32.gmra.mrb[0].mxu0 %v6044
      %v6365 = vpop.f32.mrb[0].mxu0
      %v6366 = vadd.f32 %v5789, %v6365
      %v6367 = vpop.f32.mrb[0].mxu0
      %6368 = vmatprep.mubr.f32.mxu0 0.0
      %6369 = vmatmul.mubr.f32.gmra.mrb[0].mxu0 %v6047
      %v6370 = vpop.f32.mrb[0].mxu0
      %v6371 = vadd.f32 %v5794, %v6370
      %v6372 = vpop.f32.mrb[0].mxu0
      %6373 = vmatprep.mubr.f32.mxu0 0.0
      %6374 = vmatmul.mubr.f32.gmra.mrb[0].mxu0 %v6050
      %v6375 = vpop.f32.mrb[0].mxu0
      %v6376 = vadd.f32 %v5799, %v6375
      %v6377 = vpop.f32.mrb[0].mxu0
      %6378 = vmatprep.mubr.f32.mxu0 0.0
      %6379 = vmatmul.mubr.f32.gmra.mrb[0].mxu0 %v6053
      %v6380 = vpop.f32.mrb[0].mxu0
      %v6381 = vadd.f32 %v5804, %v6380
      %v6382 = vpop.f32.mrb[0].mxu0
      %6383 = vmatprep.mubr.f32.mxu0 0.0
      %6384 = vmatmul.mubr.f32.gmra.mrb[0].mxu0 %v6056
      %v6385 = vpop.f32.mrb[0].mxu0
      %v6386 = vadd.f32 %v5809, %v6385
      %v6387 = vpop.f32.mrb[0].mxu0
      %6388 = vmatprep.mubr.f32.mxu0 0.0
      %6389 = vmatmul.mubr.f32.gmra.mrb[0].mxu0 %v6059
      %v6390 = vpop.f32.mrb[0].mxu0
      %v6391 = vadd.f32 %v5814, %v6390
      %v6392 = vpop.f32.mrb[0].mxu0
      %6393 = vmatprep.mubr.f32.mxu0 0.0
      %6394 = vmatmul.mubr.f32.gmra.mrb[0].mxu0 %v6062
      %v6395 = vpop.f32.mrb[0].mxu0
      %v6396 = vadd.f32 %v5819, %v6395
      %v6397 = vpop.f32.mrb[0].mxu0
      %6398 = vmatprep.mubr.f32.mxu0 0.0
      %6399 = vmatmul.mubr.f32.gmra.mrb[0].mxu0 %v6065
      %v6400 = vpop.f32.mrb[0].mxu0
      %v6401 = vadd.f32 %v5824, %v6400
      %v6402 = vpop.f32.mrb[0].mxu0
      %6403 = vmatprep.mubr.f32.mxu0 0.0
      %6404 = vmatmul.mubr.f32.gmra.mrb[0].mxu0 %v6068
      %v6405 = vpop.f32.mrb[0].mxu0
      %v6406 = vadd.f32 %v5829, %v6405
      %v6407 = vpop.f32.mrb[0].mxu0
      %6408 = vmatprep.mubr.f32.mxu0 0.0
      %6409 = vmatmul.mubr.f32.gmra.mrb[0].mxu0 %v6071
      %v6410 = vpop.f32.mrb[0].mxu0
      %v6411 = vadd.f32 %v5834, %v6410
      %v6412 = vpop.f32.mrb[0].mxu0
      %6413 = vmatprep.mubr.f32.mxu0 0.0
      %6414 = vmatmul.mubr.f32.gmra.mrb[0].mxu0 %v6074
      %v6415 = vpop.f32.mrb[0].mxu0
      %v6416 = vadd.f32 %v5839, %v6415
      %v6417 = vpop.f32.mrb[0].mxu0
      %6418 = vmatprep.mubr.f32.mxu0 0.0
      %6419 = vmatmul.mubr.f32.gmra.mrb[0].mxu0 %v6077
      %v6420 = vpop.f32.mrb[0].mxu0
      %v6421 = vadd.f32 %v5844, %v6420
      %v6422 = vpop.f32.mrb[0].mxu0
      %6423 = vmatprep.mubr.f32.mxu0 0.0
      %6424 = vmatmul.mubr.f32.gmra.mrb[0].mxu0 %v6080
      %v6425 = vpop.f32.mrb[0].mxu0
      %v6426 = vadd.f32 %v5849, %v6425
      %v6427 = vpop.f32.mrb[0].mxu0
      %6428 = vmatprep.mubr.f32.mxu0 0.0
      %6429 = vmatmul.mubr.f32.gmra.mrb[0].mxu0 %v6083
      %v6430 = vpop.f32.mrb[0].mxu0
      %v6431 = vadd.f32 %v5854, %v6430
      %v6432 = vpop.f32.mrb[0].mxu0
      %6433 = vmatprep.mubr.f32.mxu0 0.0
      %6434 = vmatmul.mubr.f32.gmra.mrb[0].mxu0 %v6086
      %v6435 = vpop.f32.mrb[0].mxu0
      %v6436 = vadd.f32 %v5859, %v6435
      %v6437 = vpop.f32.mrb[0].mxu0
      %6438 = vmatprep.mubr.f32.mxu0 0.0
      %6439 = vmatmul.mubr.f32.gmra.mrb[0].mxu0 %v6089
      %v6440 = vpop.f32.mrb[0].mxu0
      %v6441 = vadd.f32 %v5864, %v6440
      %v6442 = vpop.f32.mrb[0].mxu0
      %6443 = vmatprep.mubr.f32.mxu0 0.0
      %6444 = vmatmul.mubr.f32.gmra.mrb[0].mxu0 %v6092
      %v6445 = vpop.f32.mrb[0].mxu0
      %v6446 = vadd.f32 %v5869, %v6445
      %v6447 = vpop.f32.mrb[0].mxu0
      %6448 = vmatprep.mubr.f32.mxu0 0.0
      %6449 = vmatmul.mubr.f32.gmra.mrb[0].mxu0 %v6095
      %v6450 = vpop.f32.mrb[0].mxu0
      %v6451 = vadd.f32 %v5874, %v6450
      %v6452 = vpop.f32.mrb[0].mxu0
      %6453 = vmatprep.mubr.f32.mxu0 0.0
      %6454 = vmatmul.mubr.f32.gmra.mrb[0].mxu0 %v6098
      %v6455 = vpop.f32.mrb[0].mxu0
      %v6456 = vadd.f32 %v5879, %v6455
      %v6457 = vpop.f32.mrb[0].mxu0
      %6458 = vmatprep.mubr.f32.mxu0 0.0
      %6459 = vmatmul.mubr.f32.gmra.mrb[0].mxu0 %v6101
      %v6460 = vpop.f32.mrb[0].mxu0
      %v6461 = vadd.f32 %v5884, %v6460
      %v6462 = vpop.f32.mrb[0].mxu0
      %6463 = vmatprep.mubr.f32.mxu0 0.0
      %6464 = vmatmul.mubr.f32.gmra.mrb[0].mxu0 %v6104
      %v6465 = vpop.f32.mrb[0].mxu0
      %v6466 = vadd.f32 %v5889, %v6465
      %v6467 = vpop.f32.mrb[0].mxu0
      %6468 = vmatprep.mubr.f32.mxu0 0.0
      %6469 = vmatmul.mubr.f32.gmra.mrb[0].mxu0 %v6107
      %v6470 = vpop.f32.mrb[0].mxu0
      %v6471 = vadd.f32 %v5894, %v6470
      %v6472 = vpop.f32.mrb[0].mxu0
      %6473 = vmatprep.mubr.f32.mxu0 0.0
      %6474 = vmatmul.mubr.f32.gmra.mrb[0].mxu0 %v6110
      %v6475 = vpop.f32.mrb[0].mxu0
      %v6476 = vadd.f32 %v5899, %v6475
      %v6477 = vpop.f32.mrb[0].mxu0
      %6478 = vmatprep.mubr.f32.mxu0 0.0
      %6479 = vmatmul.mubr.f32.gmra.mrb[0].mxu0 %v6113
      %v6480 = vpop.f32.mrb[0].mxu0
      %v6481 = vadd.f32 %v5904, %v6480
      %v6482 = vpop.f32.mrb[0].mxu0
      %6483 = vmatprep.mubr.f32.mxu0 0.0
      %6484 = vmatmul.mubr.f32.gmra.mrb[0].mxu0 %v6116
      %v6485 = vpop.f32.mrb[0].mxu0
      %v6486 = vadd.f32 %v5909, %v6485
      %v6487 = vpop.f32.mrb[0].mxu0
      %6488 = vmatprep.mubr.f32.mxu0 0.0
      %6489 = vmatmul.mubr.f32.gmra.mrb[0].mxu0 %v6119
      %v6490 = vpop.f32.mrb[0].mxu0
      %v6491 = vadd.f32 %v5914, %v6490
      %v6492 = vpop.f32.mrb[0].mxu0
      %6493 = vmatprep.mubr.f32.mxu0 0.0
      %6494 = vmatmul.mubr.f32.gmra.mrb[0].mxu0 %v6122
      %v6495 = vpop.f32.mrb[0].mxu0
      %v6496 = vadd.f32 %v5919, %v6495
      %v6497 = vpop.f32.mrb[0].mxu0
      %6498 = vmatprep.mubr.f32.mxu0 0.0
      %6499 = vmatmul.mubr.f32.gmra.mrb[0].mxu0 %v6125
      %v6500 = vpop.f32.mrb[0].mxu0
      %v6501 = vadd.f32 %v5924, %v6500
      %v6502 = vpop.f32.mrb[0].mxu0
      %6503 = vmatprep.mubr.f32.mxu0 0.0
      %6504 = vmatmul.mubr.f32.gmra.mrb[0].mxu0 %v6128
      %v6505 = vpop.f32.mrb[0].mxu0
      %v6506 = vadd.f32 %v5929, %v6505
      %v6507 = vpop.f32.mrb[0].mxu0
      %6508 = vmatprep.mubr.f32.mxu0 0.0
      %6509 = vmatmul.mubr.f32.gmra.mrb[0].mxu0 %v6131
      %v6510 = vpop.f32.mrb[0].mxu0
      %v6511 = vadd.f32 %v5934, %v6510
      %v6512 = vpop.f32.mrb[0].mxu0
      %6513 = vmatprep.mubr.f32.mxu0 0.0
      %6514 = vmatmul.mubr.f32.gmra.mrb[0].mxu0 %v6134
      %v6515 = vpop.f32.mrb[0].mxu0
      %v6516 = vadd.f32 %v5939, %v6515
      %v6517 = vpop.f32.mrb[0].mxu0
      %6518 = vmatprep.mubr.f32.mxu0 0.0
      %6519 = vmatmul.mubr.f32.gmra.mrb[0].mxu0 %v6137
      %v6520 = vpop.f32.mrb[0].mxu0
      %v6521 = vadd.f32 %v5944, %v6520
      %v6522 = vpop.f32.mrb[0].mxu0
      %6523 = vdwg.mxu0
      %v6524 = vld [vmem:[#allocation2 + $0x8] sm:$0xff]
      %v6525 = vld [vmem:[#allocation2 + $0x10] sm:$0xff]
      %v6526 = vld [vmem:[#allocation2 + $0x18] sm:$0xff]
      %v6527 = vld [vmem:[#allocation2 + $0x20] sm:$0xff]
      %v6528 = vld [vmem:[#allocation2 + $0x28] sm:$0xff]
      %v6529 = vld [vmem:[#allocation2 + $0x30] sm:$0xff]
      %v6530 = vld [vmem:[#allocation2 + $0x38] sm:$0xff]
      %v6531 = vld [vmem:[#allocation2 + $0x40] sm:$0xff]
      %v6532 = vld [vmem:[#allocation2 + $0x48] sm:$0xff]
      %v6533 = vld [vmem:[#allocation2 + $0x50] sm:$0xff]
      %v6534 = vld [vmem:[#allocation2 + $0x58] sm:$0xff]
      %v6535 = vld [vmem:[#allocation2 + $0x60] sm:$0xff]
      %v6536 = vld [vmem:[#allocation2 + $0x68] sm:$0xff]
      %v6537 = vld [vmem:[#allocation2 + $0x70] sm:$0xff]
      %v6538 = vld [vmem:[#allocation2 + $0x78] sm:$0xff]
      %v6539 = vld [vmem:[#allocation2 + $0x80] sm:$0xff]
      %v6540 = vld [vmem:[#allocation2 + $0x88] sm:$0xff]
      %v6541 = vld [vmem:[#allocation2 + $0x90] sm:$0xff]
      %v6542 = vld [vmem:[#allocation2 + $0x98] sm:$0xff]
      %v6543 = vld [vmem:[#allocation2 + $0xa0] sm:$0xff]
      %v6544 = vld [vmem:[#allocation2 + $0xa8] sm:$0xff]
      %v6545 = vld [vmem:[#allocation2 + $0xb0] sm:$0xff]
      %v6546 = vld [vmem:[#allocation2 + $0xb8] sm:$0xff]
      %v6547 = vld [vmem:[#allocation2 + $0xc0] sm:$0xff]
      %v6548 = vld [vmem:[#allocation2 + $0xc8] sm:$0xff]
      %v6549 = vld [vmem:[#allocation2 + $0xd0] sm:$0xff]
      %v6550 = vld [vmem:[#allocation2 + $0xd8] sm:$0xff]
      %v6551 = vld [vmem:[#allocation2 + $0xe0] sm:$0xff]
      %v6552 = vld [vmem:[#allocation2 + $0xe8] sm:$0xff]
      %v6553 = vld [vmem:[#allocation2 + $0xf0] sm:$0xff]
      %v6554 = vld [vmem:[#allocation2 + $0xf8] sm:$0xff]
      %v6555 = vld [vmem:[#allocation2 + $0x100] sm:$0xff]
      %v6556 = vld [vmem:[#allocation2 + $0x108] sm:$0xff]
      %v6557 = vld [vmem:[#allocation2 + $0x110] sm:$0xff]
      %v6558 = vld [vmem:[#allocation2 + $0x118] sm:$0xff]
      %v6559 = vld [vmem:[#allocation2 + $0x120] sm:$0xff]
      %v6560 = vld [vmem:[#allocation2 + $0x128] sm:$0xff]
      %v6561 = vld [vmem:[#allocation2 + $0x130] sm:$0xff]
      %v6562 = vld [vmem:[#allocation2 + $0x138] sm:$0xff]
      %v6563 = vld [vmem:[#allocation2 + $0x140] sm:$0xff]
      %v6564 = vld [vmem:[#allocation2 + $0x148] sm:$0xff]
      %v6565 = vld [vmem:[#allocation2 + $0x150] sm:$0xff]
      %v6566 = vld [vmem:[#allocation2 + $0x158] sm:$0xff]
      %v6567 = vld [vmem:[#allocation2 + $0x160] sm:$0xff]
      %v6568 = vld [vmem:[#allocation2 + $0x168] sm:$0xff]
      %v6569 = vld [vmem:[#allocation2 + $0x170] sm:$0xff]
      %v6570 = vld [vmem:[#allocation2 + $0x178] sm:$0xff]
      %v6571 = vld [vmem:[#allocation2 + $0x180] sm:$0xff]
      %v6572 = vld [vmem:[#allocation2 + $0x188] sm:$0xff]
      %v6573 = vld [vmem:[#allocation2 + $0x190] sm:$0xff]
      %v6574 = vld [vmem:[#allocation2 + $0x198] sm:$0xff]
      %v6575 = vld [vmem:[#allocation2 + $0x1a0] sm:$0xff]
      %v6576 = vld [vmem:[#allocation2 + $0x1a8] sm:$0xff]
      %v6577 = vld [vmem:[#allocation2 + $0x1b0] sm:$0xff]
      %v6578 = vld [vmem:[#allocation2 + $0x1b8] sm:$0xff]
      %v6579 = vld [vmem:[#allocation2 + $0x1c0] sm:$0xff]
      %v6580 = vld [vmem:[#allocation2 + $0x1c8] sm:$0xff]
      %v6581 = vld [vmem:[#allocation2 + $0x1d0] sm:$0xff]
      %v6582 = vld [vmem:[#allocation2 + $0x1d8] sm:$0xff]
      %v6583 = vld [vmem:[#allocation2 + $0x1e0] sm:$0xff]
      %v6584 = vld [vmem:[#allocation2 + $0x1e8] sm:$0xff]
      %v6585 = vld [vmem:[#allocation2 + $0x1f0] sm:$0xff]
      %v6586 = vld [vmem:[#allocation2 + $0x1f8] sm:$0xff]
      %v6587 = vld [vmem:[#allocation2 + $0x200] sm:$0xff]
      %v6588 = vld [vmem:[%s1 + $0xa8] sm:$0xff]
      %v6589 = vld [vmem:[%s1 + $0xb0] sm:$0xff]
      %v6590 = vld [vmem:[%s1 + $0xb8] sm:$0xff]
      %v6591 = vld [vmem:[%s1 + $0xc0] sm:$0xff]
      %v6593 = vsel %vm1095, %v6524, 0
      %v6596 = vsel %vm1095, %v6525, 0
      %v6599 = vsel %vm1095, %v6526, 0
      %v6602 = vsel %vm1095, %v6527, 0
      %v6605 = vsel %vm1095, %v6528, 0
      %v6608 = vsel %vm1095, %v6529, 0
      %v6611 = vsel %vm1095, %v6530, 0
      %v6614 = vsel %vm1095, %v6531, 0
      %v6617 = vsel %vm1095, %v6532, 0
      %v6620 = vsel %vm1095, %v6533, 0
      %v6623 = vsel %vm1095, %v6534, 0
      %v6626 = vsel %vm1095, %v6535, 0
      %v6629 = vsel %vm1095, %v6536, 0
      %v6632 = vsel %vm1095, %v6537, 0
      %v6635 = vsel %vm1095, %v6538, 0
      %v6638 = vsel %vm1095, %v6539, 0
      %v6641 = vsel %vm1095, %v6540, 0
      %v6644 = vsel %vm1095, %v6541, 0
      %v6647 = vsel %vm1095, %v6542, 0
      %v6650 = vsel %vm1095, %v6543, 0
      %v6653 = vsel %vm1095, %v6544, 0
      %v6656 = vsel %vm1095, %v6545, 0
      %v6659 = vsel %vm1095, %v6546, 0
      %v6662 = vsel %vm1095, %v6547, 0
      %v6665 = vsel %vm1095, %v6548, 0
      %v6668 = vsel %vm1095, %v6549, 0
      %v6671 = vsel %vm1095, %v6550, 0
      %v6674 = vsel %vm1095, %v6551, 0
      %v6677 = vsel %vm1095, %v6552, 0
      %v6680 = vsel %vm1095, %v6553, 0
      %v6683 = vsel %vm1095, %v6554, 0
      %v6686 = vsel %vm1095, %v6555, 0
      %v6689 = vsel %vm1095, %v6556, 0
      %v6692 = vsel %vm1095, %v6557, 0
      %v6695 = vsel %vm1095, %v6558, 0
      %v6698 = vsel %vm1095, %v6559, 0
      %v6701 = vsel %vm1095, %v6560, 0
      %v6704 = vsel %vm1095, %v6561, 0
      %v6707 = vsel %vm1095, %v6562, 0
      %v6710 = vsel %vm1095, %v6563, 0
      %v6713 = vsel %vm1095, %v6564, 0
      %v6716 = vsel %vm1095, %v6565, 0
      %v6719 = vsel %vm1095, %v6566, 0
      %v6722 = vsel %vm1095, %v6567, 0
      %v6725 = vsel %vm1095, %v6568, 0
      %v6728 = vsel %vm1095, %v6569, 0
      %v6731 = vsel %vm1095, %v6570, 0
      %v6734 = vsel %vm1095, %v6571, 0
      %v6737 = vsel %vm1095, %v6572, 0
      %v6740 = vsel %vm1095, %v6573, 0
      %v6743 = vsel %vm1095, %v6574, 0
      %v6746 = vsel %vm1095, %v6575, 0
      %v6749 = vsel %vm1095, %v6576, 0
      %v6752 = vsel %vm1095, %v6577, 0
      %v6755 = vsel %vm1095, %v6578, 0
      %v6758 = vsel %vm1095, %v6579, 0
      %v6761 = vsel %vm1095, %v6580, 0
      %v6764 = vsel %vm1095, %v6581, 0
      %v6767 = vsel %vm1095, %v6582, 0
      %v6770 = vsel %vm1095, %v6583, 0
      %v6773 = vsel %vm1095, %v6584, 0
      %v6776 = vsel %vm1095, %v6585, 0
      %v6779 = vsel %vm1095, %v6586, 0
      %v6782 = vsel %vm1095, %v6587, 0
      %6784 = vmatprep.subr.mxu0 0.0
      %6785 = vmatpush1.msra.mxu0 %v6588
      %6786 = vmatprep.subr.mxu0 0.0
      %6787 = vmatpush1.msra.mxu0 %v6589
      %6788 = vmatprep.subr.mxu0 0.0
      %6789 = vmatpush1.msra.mxu0 %v6590
      %6790 = vmatprep.subr.mxu0 0.0
      %6791 = vmatpush1.msra.mxu0 %v6591
      %6792 = vmatprep.subr.mxu0 0.0
      %6793 = vmatpush1.msra.mxu0 0.0
      %6794 = vmatprep.subr.mxu0 0.0
      %6795 = vmatpush1.msra.mxu0 0.0
      %6796 = vmatprep.subr.mxu0 0.0
      %6797 = vmatpush1.msra.mxu0 0.0
      %6798 = vmatprep.subr.mxu0 0.0
      %6799 = vmatpush1.msra.mxu0 0.0
      %6800 = vmatprep.subr.mxu0 0.0
      %6801 = vmatpush1.msra.mxu0 0.0
      %6802 = vmatprep.subr.mxu0 0.0
      %6803 = vmatpush1.msra.mxu0 0.0
      %6804 = vmatprep.subr.mxu0 0.0
      %6805 = vmatpush1.msra.mxu0 0.0
      %6806 = vmatprep.subr.mxu0 0.0
      %6807 = vmatpush1.msra.mxu0 0.0
      %6808 = vmatprep.subr.mxu0 0.0
      %6809 = vmatpush1.msra.mxu0 0.0
      %6810 = vmatprep.subr.mxu0 0.0
      %6811 = vmatpush1.msra.mxu0 0.0
      %6812 = vmatprep.subr.mxu0 0.0
      %6813 = vmatpush1.msra.mxu0 0.0
      %6814 = vmatprep.subr.mxu0 0.0
      %6815 = vmatpush1.msra.mxu0 0.0
      %6816 = vmatprep.subr.mxu0 0.0
      %6817 = vmatpush1.msra.mxu0 0.0
      %6818 = vmatprep.subr.mxu0 0.0
      %6819 = vmatpush1.msra.mxu0 0.0
      %6820 = vmatprep.subr.mxu0 0.0
      %6821 = vmatpush1.msra.mxu0 0.0
      %6822 = vmatprep.subr.mxu0 0.0
      %6823 = vmatpush1.msra.mxu0 0.0
      %6824 = vmatprep.subr.mxu0 0.0
      %6825 = vmatpush1.msra.mxu0 0.0
      %6826 = vmatprep.subr.mxu0 0.0
      %6827 = vmatpush1.msra.mxu0 0.0
      %6828 = vmatprep.subr.mxu0 0.0
      %6829 = vmatpush1.msra.mxu0 0.0
      %6830 = vmatprep.subr.mxu0 0.0
      %6831 = vmatpush1.msra.mxu0 0.0
      %6832 = vmatprep.subr.mxu0 0.0
      %6833 = vmatpush1.msra.mxu0 0.0
      %6834 = vmatprep.subr.mxu0 0.0
      %6835 = vmatpush1.msra.mxu0 0.0
      %6836 = vmatprep.subr.mxu0 0.0
      %6837 = vmatpush1.msra.mxu0 0.0
      %6838 = vmatprep.subr.mxu0 0.0
      %6839 = vmatpush1.msra.mxu0 0.0
      %6840 = vmatprep.subr.mxu0 0.0
      %6841 = vmatpush1.msra.mxu0 0.0
      %6842 = vmatprep.subr.mxu0 0.0
      %6843 = vmatpush1.msra.mxu0 0.0
      %6844 = vmatprep.subr.mxu0 0.0
      %6845 = vmatpush1.msra.mxu0 0.0
      %6846 = vmatprep.subr.mxu0 0.0
      %6847 = vmatpush1.msra.mxu0 0.0
      %6848 = vmatprep.mubr.f32.mxu0 0.0
      %6849 = vmatmul.mubr.f32.gmra.mrb[0].mxu0 %v6593
      %v6850 = vpop.f32.mrb[0].mxu0
      %v6851 = vadd.f32 0.0, %v6850
      %v6852 = vpop.f32.mrb[0].mxu0
      %6853 = vmatprep.mubr.f32.mxu0 0.0
      %6854 = vmatmul.mubr.f32.gmra.mrb[0].mxu0 %v6596
      %v6855 = vpop.f32.mrb[0].mxu0
      %v6856 = vadd.f32 0.0, %v6855
      %v6857 = vpop.f32.mrb[0].mxu0
      %6858 = vmatprep.mubr.f32.mxu0 0.0
      %6859 = vmatmul.mubr.f32.gmra.mrb[0].mxu0 %v6599
      %v6860 = vpop.f32.mrb[0].mxu0
      %v6861 = vadd.f32 0.0, %v6860
      %v6862 = vpop.f32.mrb[0].mxu0
      %6863 = vmatprep.mubr.f32.mxu0 0.0
      %6864 = vmatmul.mubr.f32.gmra.mrb[0].mxu0 %v6602
      %v6865 = vpop.f32.mrb[0].mxu0
      %v6866 = vadd.f32 0.0, %v6865
      %v6867 = vpop.f32.mrb[0].mxu0
      %6868 = vmatprep.mubr.f32.mxu0 0.0
      %6869 = vmatmul.mubr.f32.gmra.mrb[0].mxu0 %v6605
      %v6870 = vpop.f32.mrb[0].mxu0
      %v6871 = vadd.f32 0.0, %v6870
      %v6872 = vpop.f32.mrb[0].mxu0
      %6873 = vmatprep.mubr.f32.mxu0 0.0
      %6874 = vmatmul.mubr.f32.gmra.mrb[0].mxu0 %v6608
      %v6875 = vpop.f32.mrb[0].mxu0
      %v6876 = vadd.f32 0.0, %v6875
      %v6877 = vpop.f32.mrb[0].mxu0
      %6878 = vmatprep.mubr.f32.mxu0 0.0
      %6879 = vmatmul.mubr.f32.gmra.mrb[0].mxu0 %v6611
      %v6880 = vpop.f32.mrb[0].mxu0
      %v6881 = vadd.f32 0.0, %v6880
      %v6882 = vpop.f32.mrb[0].mxu0
      %6883 = vmatprep.mubr.f32.mxu0 0.0
      %6884 = vmatmul.mubr.f32.gmra.mrb[0].mxu0 %v6614
      %v6885 = vpop.f32.mrb[0].mxu0
      %v6886 = vadd.f32 0.0, %v6885
      %v6887 = vpop.f32.mrb[0].mxu0
      %6888 = vmatprep.mubr.f32.mxu0 0.0
      %6889 = vmatmul.mubr.f32.gmra.mrb[0].mxu0 %v6617
      %v6890 = vpop.f32.mrb[0].mxu0
      %v6891 = vadd.f32 0.0, %v6890
      %v6892 = vpop.f32.mrb[0].mxu0
      %6893 = vmatprep.mubr.f32.mxu0 0.0
      %6894 = vmatmul.mubr.f32.gmra.mrb[0].mxu0 %v6620
      %v6895 = vpop.f32.mrb[0].mxu0
      %v6896 = vadd.f32 0.0, %v6895
      %v6897 = vpop.f32.mrb[0].mxu0
      %6898 = vmatprep.mubr.f32.mxu0 0.0
      %6899 = vmatmul.mubr.f32.gmra.mrb[0].mxu0 %v6623
      %v6900 = vpop.f32.mrb[0].mxu0
      %v6901 = vadd.f32 0.0, %v6900
      %v6902 = vpop.f32.mrb[0].mxu0
      %6903 = vmatprep.mubr.f32.mxu0 0.0
      %6904 = vmatmul.mubr.f32.gmra.mrb[0].mxu0 %v6626
      %v6905 = vpop.f32.mrb[0].mxu0
      %v6906 = vadd.f32 0.0, %v6905
      %v6907 = vpop.f32.mrb[0].mxu0
      %6908 = vmatprep.mubr.f32.mxu0 0.0
      %6909 = vmatmul.mubr.f32.gmra.mrb[0].mxu0 %v6629
      %v6910 = vpop.f32.mrb[0].mxu0
      %v6911 = vadd.f32 0.0, %v6910
      %v6912 = vpop.f32.mrb[0].mxu0
      %6913 = vmatprep.mubr.f32.mxu0 0.0
      %6914 = vmatmul.mubr.f32.gmra.mrb[0].mxu0 %v6632
      %v6915 = vpop.f32.mrb[0].mxu0
      %v6916 = vadd.f32 0.0, %v6915
      %v6917 = vpop.f32.mrb[0].mxu0
      %6918 = vmatprep.mubr.f32.mxu0 0.0
      %6919 = vmatmul.mubr.f32.gmra.mrb[0].mxu0 %v6635
      %v6920 = vpop.f32.mrb[0].mxu0
      %v6921 = vadd.f32 0.0, %v6920
      %v6922 = vpop.f32.mrb[0].mxu0
      %6923 = vmatprep.mubr.f32.mxu0 0.0
      %6924 = vmatmul.mubr.f32.gmra.mrb[0].mxu0 %v6638
      %v6925 = vpop.f32.mrb[0].mxu0
      %v6926 = vadd.f32 0.0, %v6925
      %v6927 = vpop.f32.mrb[0].mxu0
      %6928 = vmatprep.mubr.f32.mxu0 0.0
      %6929 = vmatmul.mubr.f32.gmra.mrb[0].mxu0 %v6641
      %v6930 = vpop.f32.mrb[0].mxu0
      %v6931 = vadd.f32 0.0, %v6930
      %v6932 = vpop.f32.mrb[0].mxu0
      %6933 = vmatprep.mubr.f32.mxu0 0.0
      %6934 = vmatmul.mubr.f32.gmra.mrb[0].mxu0 %v6644
      %v6935 = vpop.f32.mrb[0].mxu0
      %v6936 = vadd.f32 0.0, %v6935
      %v6937 = vpop.f32.mrb[0].mxu0
      %6938 = vmatprep.mubr.f32.mxu0 0.0
      %6939 = vmatmul.mubr.f32.gmra.mrb[0].mxu0 %v6647
      %v6940 = vpop.f32.mrb[0].mxu0
      %v6941 = vadd.f32 0.0, %v6940
      %v6942 = vpop.f32.mrb[0].mxu0
      %6943 = vmatprep.mubr.f32.mxu0 0.0
      %6944 = vmatmul.mubr.f32.gmra.mrb[0].mxu0 %v6650
      %v6945 = vpop.f32.mrb[0].mxu0
      %v6946 = vadd.f32 0.0, %v6945
      %v6947 = vpop.f32.mrb[0].mxu0
      %6948 = vmatprep.mubr.f32.mxu0 0.0
      %6949 = vmatmul.mubr.f32.gmra.mrb[0].mxu0 %v6653
      %v6950 = vpop.f32.mrb[0].mxu0
      %v6951 = vadd.f32 0.0, %v6950
      %v6952 = vpop.f32.mrb[0].mxu0
      %6953 = vmatprep.mubr.f32.mxu0 0.0
      %6954 = vmatmul.mubr.f32.gmra.mrb[0].mxu0 %v6656
      %v6955 = vpop.f32.mrb[0].mxu0
      %v6956 = vadd.f32 0.0, %v6955
      %v6957 = vpop.f32.mrb[0].mxu0
      %6958 = vmatprep.mubr.f32.mxu0 0.0
      %6959 = vmatmul.mubr.f32.gmra.mrb[0].mxu0 %v6659
      %v6960 = vpop.f32.mrb[0].mxu0
      %v6961 = vadd.f32 0.0, %v6960
      %v6962 = vpop.f32.mrb[0].mxu0
      %6963 = vmatprep.mubr.f32.mxu0 0.0
      %6964 = vmatmul.mubr.f32.gmra.mrb[0].mxu0 %v6662
      %v6965 = vpop.f32.mrb[0].mxu0
      %v6966 = vadd.f32 0.0, %v6965
      %v6967 = vpop.f32.mrb[0].mxu0
      %6968 = vmatprep.mubr.f32.mxu0 0.0
      %6969 = vmatmul.mubr.f32.gmra.mrb[0].mxu0 %v6665
      %v6970 = vpop.f32.mrb[0].mxu0
      %v6971 = vadd.f32 0.0, %v6970
      %v6972 = vpop.f32.mrb[0].mxu0
      %6973 = vmatprep.mubr.f32.mxu0 0.0
      %6974 = vmatmul.mubr.f32.gmra.mrb[0].mxu0 %v6668
      %v6975 = vpop.f32.mrb[0].mxu0
      %v6976 = vadd.f32 0.0, %v6975
      %v6977 = vpop.f32.mrb[0].mxu0
      %6978 = vmatprep.mubr.f32.mxu0 0.0
      %6979 = vmatmul.mubr.f32.gmra.mrb[0].mxu0 %v6671
      %v6980 = vpop.f32.mrb[0].mxu0
      %v6981 = vadd.f32 0.0, %v6980
      %v6982 = vpop.f32.mrb[0].mxu0
      %6983 = vmatprep.mubr.f32.mxu0 0.0
      %6984 = vmatmul.mubr.f32.gmra.mrb[0].mxu0 %v6674
      %v6985 = vpop.f32.mrb[0].mxu0
      %v6986 = vadd.f32 0.0, %v6985
      %v6987 = vpop.f32.mrb[0].mxu0
      %6988 = vmatprep.mubr.f32.mxu0 0.0
      %6989 = vmatmul.mubr.f32.gmra.mrb[0].mxu0 %v6677
      %v6990 = vpop.f32.mrb[0].mxu0
      %v6991 = vadd.f32 0.0, %v6990
      %v6992 = vpop.f32.mrb[0].mxu0
      %6993 = vmatprep.mubr.f32.mxu0 0.0
      %6994 = vmatmul.mubr.f32.gmra.mrb[0].mxu0 %v6680
      %v6995 = vpop.f32.mrb[0].mxu0
      %v6996 = vadd.f32 0.0, %v6995
      %v6997 = vpop.f32.mrb[0].mxu0
      %6998 = vmatprep.mubr.f32.mxu0 0.0
      %6999 = vmatmul.mubr.f32.gmra.mrb[0].mxu0 %v6683
      %v7000 = vpop.f32.mrb[0].mxu0
      %v7001 = vadd.f32 0.0, %v7000
      %v7002 = vpop.f32.mrb[0].mxu0
      %7003 = vmatprep.mubr.f32.mxu0 0.0
      %7004 = vmatmul.mubr.f32.gmra.mrb[0].mxu0 %v6686
      %v7005 = vpop.f32.mrb[0].mxu0
      %v7006 = vadd.f32 0.0, %v7005
      %v7007 = vpop.f32.mrb[0].mxu0
      %7008 = vmatprep.mubr.f32.mxu0 0.0
      %7009 = vmatmul.mubr.f32.gmra.mrb[0].mxu0 %v6689
      %v7010 = vpop.f32.mrb[0].mxu0
      %v7011 = vadd.f32 0.0, %v7010
      %v7012 = vpop.f32.mrb[0].mxu0
      %7013 = vmatprep.mubr.f32.mxu0 0.0
      %7014 = vmatmul.mubr.f32.gmra.mrb[0].mxu0 %v6692
      %v7015 = vpop.f32.mrb[0].mxu0
      %v7016 = vadd.f32 0.0, %v7015
      %v7017 = vpop.f32.mrb[0].mxu0
      %7018 = vmatprep.mubr.f32.mxu0 0.0
      %7019 = vmatmul.mubr.f32.gmra.mrb[0].mxu0 %v6695
      %v7020 = vpop.f32.mrb[0].mxu0
      %v7021 = vadd.f32 0.0, %v7020
      %v7022 = vpop.f32.mrb[0].mxu0
      %7023 = vmatprep.mubr.f32.mxu0 0.0
      %7024 = vmatmul.mubr.f32.gmra.mrb[0].mxu0 %v6698
      %v7025 = vpop.f32.mrb[0].mxu0
      %v7026 = vadd.f32 0.0, %v7025
      %v7027 = vpop.f32.mrb[0].mxu0
      %7028 = vmatprep.mubr.f32.mxu0 0.0
      %7029 = vmatmul.mubr.f32.gmra.mrb[0].mxu0 %v6701
      %v7030 = vpop.f32.mrb[0].mxu0
      %v7031 = vadd.f32 0.0, %v7030
      %v7032 = vpop.f32.mrb[0].mxu0
      %7033 = vmatprep.mubr.f32.mxu0 0.0
      %7034 = vmatmul.mubr.f32.gmra.mrb[0].mxu0 %v6704
      %v7035 = vpop.f32.mrb[0].mxu0
      %v7036 = vadd.f32 0.0, %v7035
      %v7037 = vpop.f32.mrb[0].mxu0
      %7038 = vmatprep.mubr.f32.mxu0 0.0
      %7039 = vmatmul.mubr.f32.gmra.mrb[0].mxu0 %v6707
      %v7040 = vpop.f32.mrb[0].mxu0
      %v7041 = vadd.f32 0.0, %v7040
      %v7042 = vpop.f32.mrb[0].mxu0
      %7043 = vmatprep.mubr.f32.mxu0 0.0
      %7044 = vmatmul.mubr.f32.gmra.mrb[0].mxu0 %v6710
      %v7045 = vpop.f32.mrb[0].mxu0
      %v7046 = vadd.f32 0.0, %v7045
      %v7047 = vpop.f32.mrb[0].mxu0
      %7048 = vmatprep.mubr.f32.mxu0 0.0
      %7049 = vmatmul.mubr.f32.gmra.mrb[0].mxu0 %v6713
      %v7050 = vpop.f32.mrb[0].mxu0
      %v7051 = vadd.f32 0.0, %v7050
      %v7052 = vpop.f32.mrb[0].mxu0
      %7053 = vmatprep.mubr.f32.mxu0 0.0
      %7054 = vmatmul.mubr.f32.gmra.mrb[0].mxu0 %v6716
      %v7055 = vpop.f32.mrb[0].mxu0
      %v7056 = vadd.f32 0.0, %v7055
      %v7057 = vpop.f32.mrb[0].mxu0
      %7058 = vmatprep.mubr.f32.mxu0 0.0
      %7059 = vmatmul.mubr.f32.gmra.mrb[0].mxu0 %v6719
      %v7060 = vpop.f32.mrb[0].mxu0
      %v7061 = vadd.f32 0.0, %v7060
      %v7062 = vpop.f32.mrb[0].mxu0
      %7063 = vmatprep.mubr.f32.mxu0 0.0
      %7064 = vmatmul.mubr.f32.gmra.mrb[0].mxu0 %v6722
      %v7065 = vpop.f32.mrb[0].mxu0
      %v7066 = vadd.f32 0.0, %v7065
      %v7067 = vpop.f32.mrb[0].mxu0
      %7068 = vmatprep.mubr.f32.mxu0 0.0
      %7069 = vmatmul.mubr.f32.gmra.mrb[0].mxu0 %v6725
      %v7070 = vpop.f32.mrb[0].mxu0
      %v7071 = vadd.f32 0.0, %v7070
      %v7072 = vpop.f32.mrb[0].mxu0
      %7073 = vmatprep.mubr.f32.mxu0 0.0
      %7074 = vmatmul.mubr.f32.gmra.mrb[0].mxu0 %v6728
      %v7075 = vpop.f32.mrb[0].mxu0
      %v7076 = vadd.f32 0.0, %v7075
      %v7077 = vpop.f32.mrb[0].mxu0
      %7078 = vmatprep.mubr.f32.mxu0 0.0
      %7079 = vmatmul.mubr.f32.gmra.mrb[0].mxu0 %v6731
      %v7080 = vpop.f32.mrb[0].mxu0
      %v7081 = vadd.f32 0.0, %v7080
      %v7082 = vpop.f32.mrb[0].mxu0
      %7083 = vmatprep.mubr.f32.mxu0 0.0
      %7084 = vmatmul.mubr.f32.gmra.mrb[0].mxu0 %v6734
      %v7085 = vpop.f32.mrb[0].mxu0
      %v7086 = vadd.f32 0.0, %v7085
      %v7087 = vpop.f32.mrb[0].mxu0
      %7088 = vmatprep.mubr.f32.mxu0 0.0
      %7089 = vmatmul.mubr.f32.gmra.mrb[0].mxu0 %v6737
      %v7090 = vpop.f32.mrb[0].mxu0
      %v7091 = vadd.f32 0.0, %v7090
      %v7092 = vpop.f32.mrb[0].mxu0
      %7093 = vmatprep.mubr.f32.mxu0 0.0
      %7094 = vmatmul.mubr.f32.gmra.mrb[0].mxu0 %v6740
      %v7095 = vpop.f32.mrb[0].mxu0
      %v7096 = vadd.f32 0.0, %v7095
      %v7097 = vpop.f32.mrb[0].mxu0
      %7098 = vmatprep.mubr.f32.mxu0 0.0
      %7099 = vmatmul.mubr.f32.gmra.mrb[0].mxu0 %v6743
      %v7100 = vpop.f32.mrb[0].mxu0
      %v7101 = vadd.f32 0.0, %v7100
      %v7102 = vpop.f32.mrb[0].mxu0
      %7103 = vmatprep.mubr.f32.mxu0 0.0
      %7104 = vmatmul.mubr.f32.gmra.mrb[0].mxu0 %v6746
      %v7105 = vpop.f32.mrb[0].mxu0
      %v7106 = vadd.f32 0.0, %v7105
      %v7107 = vpop.f32.mrb[0].mxu0
      %7108 = vmatprep.mubr.f32.mxu0 0.0
      %7109 = vmatmul.mubr.f32.gmra.mrb[0].mxu0 %v6749
      %v7110 = vpop.f32.mrb[0].mxu0
      %v7111 = vadd.f32 0.0, %v7110
      %v7112 = vpop.f32.mrb[0].mxu0
      %7113 = vmatprep.mubr.f32.mxu0 0.0
      %7114 = vmatmul.mubr.f32.gmra.mrb[0].mxu0 %v6752
      %v7115 = vpop.f32.mrb[0].mxu0
      %v7116 = vadd.f32 0.0, %v7115
      %v7117 = vpop.f32.mrb[0].mxu0
      %7118 = vmatprep.mubr.f32.mxu0 0.0
      %7119 = vmatmul.mubr.f32.gmra.mrb[0].mxu0 %v6755
      %v7120 = vpop.f32.mrb[0].mxu0
      %v7121 = vadd.f32 0.0, %v7120
      %v7122 = vpop.f32.mrb[0].mxu0
      %7123 = vmatprep.mubr.f32.mxu0 0.0
      %7124 = vmatmul.mubr.f32.gmra.mrb[0].mxu0 %v6758
      %v7125 = vpop.f32.mrb[0].mxu0
      %v7126 = vadd.f32 0.0, %v7125
      %v7127 = vpop.f32.mrb[0].mxu0
      %7128 = vmatprep.mubr.f32.mxu0 0.0
      %7129 = vmatmul.mubr.f32.gmra.mrb[0].mxu0 %v6761
      %v7130 = vpop.f32.mrb[0].mxu0
      %v7131 = vadd.f32 0.0, %v7130
      %v7132 = vpop.f32.mrb[0].mxu0
      %7133 = vmatprep.mubr.f32.mxu0 0.0
      %7134 = vmatmul.mubr.f32.gmra.mrb[0].mxu0 %v6764
      %v7135 = vpop.f32.mrb[0].mxu0
      %v7136 = vadd.f32 0.0, %v7135
      %v7137 = vpop.f32.mrb[0].mxu0
      %7138 = vmatprep.mubr.f32.mxu0 0.0
      %7139 = vmatmul.mubr.f32.gmra.mrb[0].mxu0 %v6767
      %v7140 = vpop.f32.mrb[0].mxu0
      %v7141 = vadd.f32 0.0, %v7140
      %v7142 = vpop.f32.mrb[0].mxu0
      %7143 = vmatprep.mubr.f32.mxu0 0.0
      %7144 = vmatmul.mubr.f32.gmra.mrb[0].mxu0 %v6770
      %v7145 = vpop.f32.mrb[0].mxu0
      %v7146 = vadd.f32 0.0, %v7145
      %v7147 = vpop.f32.mrb[0].mxu0
      %7148 = vmatprep.mubr.f32.mxu0 0.0
      %7149 = vmatmul.mubr.f32.gmra.mrb[0].mxu0 %v6773
      %v7150 = vpop.f32.mrb[0].mxu0
      %v7151 = vadd.f32 0.0, %v7150
      %v7152 = vpop.f32.mrb[0].mxu0
      %7153 = vmatprep.mubr.f32.mxu0 0.0
      %7154 = vmatmul.mubr.f32.gmra.mrb[0].mxu0 %v6776
      %v7155 = vpop.f32.mrb[0].mxu0
      %v7156 = vadd.f32 0.0, %v7155
      %v7157 = vpop.f32.mrb[0].mxu0
      %7158 = vmatprep.mubr.f32.mxu0 0.0
      %7159 = vmatmul.mubr.f32.gmra.mrb[0].mxu0 %v6779
      %v7160 = vpop.f32.mrb[0].mxu0
      %v7161 = vadd.f32 0.0, %v7160
      %v7162 = vpop.f32.mrb[0].mxu0
      %7163 = vmatprep.mubr.f32.mxu0 0.0
      %7164 = vmatmul.mubr.f32.gmra.mrb[0].mxu0 %v6782
      %v7165 = vpop.f32.mrb[0].mxu0
      %v7166 = vadd.f32 0.0, %v7165
      %v7167 = vpop.f32.mrb[0].mxu0
      %7168 = vdwg.mxu0
      %v7169 = vadd.f32 %v6206, %v6851
      %v7170 = vadd.f32 %v6211, %v6856
      %v7171 = vadd.f32 %v6216, %v6861
      %v7172 = vadd.f32 %v6221, %v6866
      %v7173 = vadd.f32 %v6226, %v6871
      %v7174 = vadd.f32 %v6231, %v6876
      %v7175 = vadd.f32 %v6236, %v6881
      %v7176 = vadd.f32 %v6241, %v6886
      %v7177 = vadd.f32 %v6246, %v6891
      %v7178 = vadd.f32 %v6251, %v6896
      %v7179 = vadd.f32 %v6256, %v6901
      %v7180 = vadd.f32 %v6261, %v6906
      %v7181 = vadd.f32 %v6266, %v6911
      %v7182 = vadd.f32 %v6271, %v6916
      %v7183 = vadd.f32 %v6276, %v6921
      %v7184 = vadd.f32 %v6281, %v6926
      %v7185 = vadd.f32 %v6286, %v6931
      %v7186 = vadd.f32 %v6291, %v6936
      %v7187 = vadd.f32 %v6296, %v6941
      %v7188 = vadd.f32 %v6301, %v6946
      %v7189 = vadd.f32 %v6306, %v6951
      %v7190 = vadd.f32 %v6311, %v6956
      %v7191 = vadd.f32 %v6316, %v6961
      %v7192 = vadd.f32 %v6321, %v6966
      %v7193 = vadd.f32 %v6326, %v6971
      %v7194 = vadd.f32 %v6331, %v6976
      %v7195 = vadd.f32 %v6336, %v6981
      %v7196 = vadd.f32 %v6341, %v6986
      %v7197 = vadd.f32 %v6346, %v6991
      %v7198 = vadd.f32 %v6351, %v6996
      %v7199 = vadd.f32 %v6356, %v7001
      %v7200 = vadd.f32 %v6361, %v7006
      %v7201 = vadd.f32 %v6366, %v7011
      %v7202 = vadd.f32 %v6371, %v7016
      %v7203 = vadd.f32 %v6376, %v7021
      %v7204 = vadd.f32 %v6381, %v7026
      %v7205 = vadd.f32 %v6386, %v7031
      %v7206 = vadd.f32 %v6391, %v7036
      %v7207 = vadd.f32 %v6396, %v7041
      %v7208 = vadd.f32 %v6401, %v7046
      %v7209 = vadd.f32 %v6406, %v7051
      %v7210 = vadd.f32 %v6411, %v7056
      %v7211 = vadd.f32 %v6416, %v7061
      %v7212 = vadd.f32 %v6421, %v7066
      %v7213 = vadd.f32 %v6426, %v7071
      %v7214 = vadd.f32 %v6431, %v7076
      %v7215 = vadd.f32 %v6436, %v7081
      %v7216 = vadd.f32 %v6441, %v7086
      %v7217 = vadd.f32 %v6446, %v7091
      %v7218 = vadd.f32 %v6451, %v7096
      %v7219 = vadd.f32 %v6456, %v7101
      %v7220 = vadd.f32 %v6461, %v7106
      %v7221 = vadd.f32 %v6466, %v7111
      %v7222 = vadd.f32 %v6471, %v7116
      %v7223 = vadd.f32 %v6476, %v7121
      %v7224 = vadd.f32 %v6481, %v7126
      %v7225 = vadd.f32 %v6486, %v7131
      %v7226 = vadd.f32 %v6491, %v7136
      %v7227 = vadd.f32 %v6496, %v7141
      %v7228 = vadd.f32 %v6501, %v7146
      %v7229 = vadd.f32 %v6506, %v7151
      %v7230 = vadd.f32 %v6511, %v7156
      %v7231 = vadd.f32 %v6516, %v7161
      %v7232 = vadd.f32 %v6521, %v7166
      %v7233 = vld [vmem:[#allocation2 + $0xf] sm:$0xff]
      %v7234 = vld [vmem:[#allocation2 + $0x17] sm:$0xff]
      %v7235 = vld [vmem:[#allocation2 + $0x1f] sm:$0xff]
      %v7236 = vld [vmem:[#allocation2 + $0x27] sm:$0xff]
      %v7237 = vld [vmem:[#allocation2 + $0x2f] sm:$0xff]
      %v7238 = vld [vmem:[#allocation2 + $0x37] sm:$0xff]
      %v7239 = vld [vmem:[#allocation2 + $0x3f] sm:$0xff]
      %v7240 = vld [vmem:[#allocation2 + $0x47] sm:$0xff]
      %v7241 = vld [vmem:[#allocation2 + $0x4f] sm:$0xff]
      %v7242 = vld [vmem:[#allocation2 + $0x57] sm:$0xff]
      %v7243 = vld [vmem:[#allocation2 + $0x5f] sm:$0xff]
      %v7244 = vld [vmem:[#allocation2 + $0x67] sm:$0xff]
      %v7245 = vld [vmem:[#allocation2 + $0x6f] sm:$0xff]
      %v7246 = vld [vmem:[#allocation2 + $0x77] sm:$0xff]
      %v7247 = vld [vmem:[#allocation2 + $0x7f] sm:$0xff]
      %v7248 = vld [vmem:[#allocation2 + $0x87] sm:$0xff]
      %v7249 = vld [vmem:[#allocation2 + $0x8f] sm:$0xff]
      %v7250 = vld [vmem:[#allocation2 + $0x97] sm:$0xff]
      %v7251 = vld [vmem:[#allocation2 + $0x9f] sm:$0xff]
      %v7252 = vld [vmem:[#allocation2 + $0xa7] sm:$0xff]
      %v7253 = vld [vmem:[#allocation2 + $0xaf] sm:$0xff]
      %v7254 = vld [vmem:[#allocation2 + $0xb7] sm:$0xff]
      %v7255 = vld [vmem:[#allocation2 + $0xbf] sm:$0xff]
      %v7256 = vld [vmem:[#allocation2 + $0xc7] sm:$0xff]
      %v7257 = vld [vmem:[#allocation2 + $0xcf] sm:$0xff]
      %v7258 = vld [vmem:[#allocation2 + $0xd7] sm:$0xff]
      %v7259 = vld [vmem:[#allocation2 + $0xdf] sm:$0xff]
      %v7260 = vld [vmem:[#allocation2 + $0xe7] sm:$0xff]
      %v7261 = vld [vmem:[#allocation2 + $0xef] sm:$0xff]
      %v7262 = vld [vmem:[#allocation2 + $0xf7] sm:$0xff]
      %v7263 = vld [vmem:[#allocation2 + $0xff] sm:$0xff]
      %v7264 = vld [vmem:[#allocation2 + $0x107] sm:$0xff]
      %v7265 = vld [vmem:[#allocation2 + $0x10f] sm:$0xff]
      %v7266 = vld [vmem:[#allocation2 + $0x117] sm:$0xff]
      %v7267 = vld [vmem:[#allocation2 + $0x11f] sm:$0xff]
      %v7268 = vld [vmem:[#allocation2 + $0x127] sm:$0xff]
      %v7269 = vld [vmem:[#allocation2 + $0x12f] sm:$0xff]
      %v7270 = vld [vmem:[#allocation2 + $0x137] sm:$0xff]
      %v7271 = vld [vmem:[#allocation2 + $0x13f] sm:$0xff]
      %v7272 = vld [vmem:[#allocation2 + $0x147] sm:$0xff]
      %v7273 = vld [vmem:[#allocation2 + $0x14f] sm:$0xff]
      %v7274 = vld [vmem:[#allocation2 + $0x157] sm:$0xff]
      %v7275 = vld [vmem:[#allocation2 + $0x15f] sm:$0xff]
      %v7276 = vld [vmem:[#allocation2 + $0x167] sm:$0xff]
      %v7277 = vld [vmem:[#allocation2 + $0x16f] sm:$0xff]
      %v7278 = vld [vmem:[#allocation2 + $0x177] sm:$0xff]
      %v7279 = vld [vmem:[#allocation2 + $0x17f] sm:$0xff]
      %v7280 = vld [vmem:[#allocation2 + $0x187] sm:$0xff]
      %v7281 = vld [vmem:[#allocation2 + $0x18f] sm:$0xff]
      %v7282 = vld [vmem:[#allocation2 + $0x197] sm:$0xff]
      %v7283 = vld [vmem:[#allocation2 + $0x19f] sm:$0xff]
      %v7284 = vld [vmem:[#allocation2 + $0x1a7] sm:$0xff]
      %v7285 = vld [vmem:[#allocation2 + $0x1af] sm:$0xff]
      %v7286 = vld [vmem:[#allocation2 + $0x1b7] sm:$0xff]
      %v7287 = vld [vmem:[#allocation2 + $0x1bf] sm:$0xff]
      %v7288 = vld [vmem:[#allocation2 + $0x1c7] sm:$0xff]
      %v7289 = vld [vmem:[#allocation2 + $0x1cf] sm:$0xff]
      %v7290 = vld [vmem:[#allocation2 + $0x1d7] sm:$0xff]
      %v7291 = vld [vmem:[#allocation2 + $0x1df] sm:$0xff]
      %v7292 = vld [vmem:[#allocation2 + $0x1e7] sm:$0xff]
      %v7293 = vld [vmem:[#allocation2 + $0x1ef] sm:$0xff]
      %v7294 = vld [vmem:[#allocation2 + $0x1f7] sm:$0xff]
      %v7295 = vld [vmem:[#allocation2 + $0x1ff] sm:$0xff]
      %v7296 = vld [vmem:[#allocation2 + $0x207] sm:$0xff]
      %v7297 = vld [vmem:[%s1 + $0xc8] sm:$0xff]
      %v7298 = vld [vmem:[%s1 + $0xd0] sm:$0xff]
      %v7299 = vld [vmem:[%s1 + $0xd8] sm:$0xff]
      %v7300 = vld [vmem:[%s1 + $0xe0] sm:$0xff]
      %v7302 = vsel %vm1095, %v7233, 0
      %v7305 = vsel %vm1095, %v7234, 0
      %v7308 = vsel %vm1095, %v7235, 0
      %v7311 = vsel %vm1095, %v7236, 0
      %v7314 = vsel %vm1095, %v7237, 0
      %v7317 = vsel %vm1095, %v7238, 0
      %v7320 = vsel %vm1095, %v7239, 0
      %v7323 = vsel %vm1095, %v7240, 0
      %v7326 = vsel %vm1095, %v7241, 0
      %v7329 = vsel %vm1095, %v7242, 0
      %v7332 = vsel %vm1095, %v7243, 0
      %v7335 = vsel %vm1095, %v7244, 0
      %v7338 = vsel %vm1095, %v7245, 0
      %v7341 = vsel %vm1095, %v7246, 0
      %v7344 = vsel %vm1095, %v7247, 0
      %v7347 = vsel %vm1095, %v7248, 0
      %v7350 = vsel %vm1095, %v7249, 0
      %v7353 = vsel %vm1095, %v7250, 0
      %v7356 = vsel %vm1095, %v7251, 0
      %v7359 = vsel %vm1095, %v7252, 0
      %v7362 = vsel %vm1095, %v7253, 0
      %v7365 = vsel %vm1095, %v7254, 0
      %v7368 = vsel %vm1095, %v7255, 0
      %v7371 = vsel %vm1095, %v7256, 0
      %v7374 = vsel %vm1095, %v7257, 0
      %v7377 = vsel %vm1095, %v7258, 0
      %v7380 = vsel %vm1095, %v7259, 0
      %v7383 = vsel %vm1095, %v7260, 0
      %v7386 = vsel %vm1095, %v7261, 0
      %v7389 = vsel %vm1095, %v7262, 0
      %v7392 = vsel %vm1095, %v7263, 0
      %v7395 = vsel %vm1095, %v7264, 0
      %v7398 = vsel %vm1095, %v7265, 0
      %v7401 = vsel %vm1095, %v7266, 0
      %v7404 = vsel %vm1095, %v7267, 0
      %v7407 = vsel %vm1095, %v7268, 0
      %v7410 = vsel %vm1095, %v7269, 0
      %v7413 = vsel %vm1095, %v7270, 0
      %v7416 = vsel %vm1095, %v7271, 0
      %v7419 = vsel %vm1095, %v7272, 0
      %v7422 = vsel %vm1095, %v7273, 0
      %v7425 = vsel %vm1095, %v7274, 0
      %v7428 = vsel %vm1095, %v7275, 0
      %v7431 = vsel %vm1095, %v7276, 0
      %v7434 = vsel %vm1095, %v7277, 0
      %v7437 = vsel %vm1095, %v7278, 0
      %v7440 = vsel %vm1095, %v7279, 0
      %v7443 = vsel %vm1095, %v7280, 0
      %v7446 = vsel %vm1095, %v7281, 0
      %v7449 = vsel %vm1095, %v7282, 0
      %v7452 = vsel %vm1095, %v7283, 0
      %v7455 = vsel %vm1095, %v7284, 0
      %v7458 = vsel %vm1095, %v7285, 0
      %v7461 = vsel %vm1095, %v7286, 0
      %v7464 = vsel %vm1095, %v7287, 0
      %v7467 = vsel %vm1095, %v7288, 0
      %v7470 = vsel %vm1095, %v7289, 0
      %v7473 = vsel %vm1095, %v7290, 0
      %v7476 = vsel %vm1095, %v7291, 0
      %v7479 = vsel %vm1095, %v7292, 0
      %v7482 = vsel %vm1095, %v7293, 0
      %v7485 = vsel %vm1095, %v7294, 0
      %v7488 = vsel %vm1095, %v7295, 0
      %v7491 = vsel %vm1095, %v7296, 0
      %7493 = vmatprep.subr.mxu0 0.0
      %7494 = vmatpush1.msra.mxu0 %v7297
      %7495 = vmatprep.subr.mxu0 0.0
      %7496 = vmatpush1.msra.mxu0 %v7298
      %7497 = vmatprep.subr.mxu0 0.0
      %7498 = vmatpush1.msra.mxu0 %v7299
      %7499 = vmatprep.subr.mxu0 0.0
      %7500 = vmatpush1.msra.mxu0 %v7300
      %7501 = vmatprep.subr.mxu0 0.0
      %7502 = vmatpush1.msra.mxu0 0.0
      %7503 = vmatprep.subr.mxu0 0.0
      %7504 = vmatpush1.msra.mxu0 0.0
      %7505 = vmatprep.subr.mxu0 0.0
      %7506 = vmatpush1.msra.mxu0 0.0
      %7507 = vmatprep.subr.mxu0 0.0
      %7508 = vmatpush1.msra.mxu0 0.0
      %7509 = vmatprep.subr.mxu0 0.0
      %7510 = vmatpush1.msra.mxu0 0.0
      %7511 = vmatprep.subr.mxu0 0.0
      %7512 = vmatpush1.msra.mxu0 0.0
      %7513 = vmatprep.subr.mxu0 0.0
      %7514 = vmatpush1.msra.mxu0 0.0
      %7515 = vmatprep.subr.mxu0 0.0
      %7516 = vmatpush1.msra.mxu0 0.0
      %7517 = vmatprep.subr.mxu0 0.0
      %7518 = vmatpush1.msra.mxu0 0.0
      %7519 = vmatprep.subr.mxu0 0.0
      %7520 = vmatpush1.msra.mxu0 0.0
      %7521 = vmatprep.subr.mxu0 0.0
      %7522 = vmatpush1.msra.mxu0 0.0
      %7523 = vmatprep.subr.mxu0 0.0
      %7524 = vmatpush1.msra.mxu0 0.0
      %7525 = vmatprep.subr.mxu0 0.0
      %7526 = vmatpush1.msra.mxu0 0.0
      %7527 = vmatprep.subr.mxu0 0.0
      %7528 = vmatpush1.msra.mxu0 0.0
      %7529 = vmatprep.subr.mxu0 0.0
      %7530 = vmatpush1.msra.mxu0 0.0
      %7531 = vmatprep.subr.mxu0 0.0
      %7532 = vmatpush1.msra.mxu0 0.0
      %7533 = vmatprep.subr.mxu0 0.0
      %7534 = vmatpush1.msra.mxu0 0.0
      %7535 = vmatprep.subr.mxu0 0.0
      %7536 = vmatpush1.msra.mxu0 0.0
      %7537 = vmatprep.subr.mxu0 0.0
      %7538 = vmatpush1.msra.mxu0 0.0
      %7539 = vmatprep.subr.mxu0 0.0
      %7540 = vmatpush1.msra.mxu0 0.0
      %7541 = vmatprep.subr.mxu0 0.0
      %7542 = vmatpush1.msra.mxu0 0.0
      %7543 = vmatprep.subr.mxu0 0.0
      %7544 = vmatpush1.msra.mxu0 0.0
      %7545 = vmatprep.subr.mxu0 0.0
      %7546 = vmatpush1.msra.mxu0 0.0
      %7547 = vmatprep.subr.mxu0 0.0
      %7548 = vmatpush1.msra.mxu0 0.0
      %7549 = vmatprep.subr.mxu0 0.0
      %7550 = vmatpush1.msra.mxu0 0.0
      %7551 = vmatprep.subr.mxu0 0.0
      %7552 = vmatpush1.msra.mxu0 0.0
      %7553 = vmatprep.subr.mxu0 0.0
      %7554 = vmatpush1.msra.mxu0 0.0
      %7555 = vmatprep.subr.mxu0 0.0
      %7556 = vmatpush1.msra.mxu0 0.0
      %7557 = vmatprep.mubr.f32.mxu0 0.0
      %7558 = vmatmul.mubr.f32.gmra.mrb[0].mxu0 %v7302
      %v7559 = vpop.f32.mrb[0].mxu0
      %v7560 = vadd.f32 0.0, %v7559
      %v7561 = vpop.f32.mrb[0].mxu0
      %7562 = vmatprep.mubr.f32.mxu0 0.0
      %7563 = vmatmul.mubr.f32.gmra.mrb[0].mxu0 %v7305
      %v7564 = vpop.f32.mrb[0].mxu0
      %v7565 = vadd.f32 0.0, %v7564
      %v7566 = vpop.f32.mrb[0].mxu0
      %7567 = vmatprep.mubr.f32.mxu0 0.0
      %7568 = vmatmul.mubr.f32.gmra.mrb[0].mxu0 %v7308
      %v7569 = vpop.f32.mrb[0].mxu0
      %v7570 = vadd.f32 0.0, %v7569
      %v7571 = vpop.f32.mrb[0].mxu0
      %7572 = vmatprep.mubr.f32.mxu0 0.0
      %7573 = vmatmul.mubr.f32.gmra.mrb[0].mxu0 %v7311
      %v7574 = vpop.f32.mrb[0].mxu0
      %v7575 = vadd.f32 0.0, %v7574
      %v7576 = vpop.f32.mrb[0].mxu0
      %7577 = vmatprep.mubr.f32.mxu0 0.0
      %7578 = vmatmul.mubr.f32.gmra.mrb[0].mxu0 %v7314
      %v7579 = vpop.f32.mrb[0].mxu0
      %v7580 = vadd.f32 0.0, %v7579
      %v7581 = vpop.f32.mrb[0].mxu0
      %7582 = vmatprep.mubr.f32.mxu0 0.0
      %7583 = vmatmul.mubr.f32.gmra.mrb[0].mxu0 %v7317
      %v7584 = vpop.f32.mrb[0].mxu0
      %v7585 = vadd.f32 0.0, %v7584
      %v7586 = vpop.f32.mrb[0].mxu0
      %7587 = vmatprep.mubr.f32.mxu0 0.0
      %7588 = vmatmul.mubr.f32.gmra.mrb[0].mxu0 %v7320
      %v7589 = vpop.f32.mrb[0].mxu0
      %v7590 = vadd.f32 0.0, %v7589
      %v7591 = vpop.f32.mrb[0].mxu0
      %7592 = vmatprep.mubr.f32.mxu0 0.0
      %7593 = vmatmul.mubr.f32.gmra.mrb[0].mxu0 %v7323
      %v7594 = vpop.f32.mrb[0].mxu0
      %v7595 = vadd.f32 0.0, %v7594
      %v7596 = vpop.f32.mrb[0].mxu0
      %7597 = vmatprep.mubr.f32.mxu0 0.0
      %7598 = vmatmul.mubr.f32.gmra.mrb[0].mxu0 %v7326
      %v7599 = vpop.f32.mrb[0].mxu0
      %v7600 = vadd.f32 0.0, %v7599
      %v7601 = vpop.f32.mrb[0].mxu0
      %7602 = vmatprep.mubr.f32.mxu0 0.0
      %7603 = vmatmul.mubr.f32.gmra.mrb[0].mxu0 %v7329
      %v7604 = vpop.f32.mrb[0].mxu0
      %v7605 = vadd.f32 0.0, %v7604
      %v7606 = vpop.f32.mrb[0].mxu0
      %7607 = vmatprep.mubr.f32.mxu0 0.0
      %7608 = vmatmul.mubr.f32.gmra.mrb[0].mxu0 %v7332
      %v7609 = vpop.f32.mrb[0].mxu0
      %v7610 = vadd.f32 0.0, %v7609
      %v7611 = vpop.f32.mrb[0].mxu0
      %7612 = vmatprep.mubr.f32.mxu0 0.0
      %7613 = vmatmul.mubr.f32.gmra.mrb[0].mxu0 %v7335
      %v7614 = vpop.f32.mrb[0].mxu0
      %v7615 = vadd.f32 0.0, %v7614
      %v7616 = vpop.f32.mrb[0].mxu0
      %7617 = vmatprep.mubr.f32.mxu0 0.0
      %7618 = vmatmul.mubr.f32.gmra.mrb[0].mxu0 %v7338
      %v7619 = vpop.f32.mrb[0].mxu0
      %v7620 = vadd.f32 0.0, %v7619
      %v7621 = vpop.f32.mrb[0].mxu0
      %7622 = vmatprep.mubr.f32.mxu0 0.0
      %7623 = vmatmul.mubr.f32.gmra.mrb[0].mxu0 %v7341
      %v7624 = vpop.f32.mrb[0].mxu0
      %v7625 = vadd.f32 0.0, %v7624
      %v7626 = vpop.f32.mrb[0].mxu0
      %7627 = vmatprep.mubr.f32.mxu0 0.0
      %7628 = vmatmul.mubr.f32.gmra.mrb[0].mxu0 %v7344
      %v7629 = vpop.f32.mrb[0].mxu0
      %v7630 = vadd.f32 0.0, %v7629
      %v7631 = vpop.f32.mrb[0].mxu0
      %7632 = vmatprep.mubr.f32.mxu0 0.0
      %7633 = vmatmul.mubr.f32.gmra.mrb[0].mxu0 %v7347
      %v7634 = vpop.f32.mrb[0].mxu0
      %v7635 = vadd.f32 0.0, %v7634
      %v7636 = vpop.f32.mrb[0].mxu0
      %7637 = vmatprep.mubr.f32.mxu0 0.0
      %7638 = vmatmul.mubr.f32.gmra.mrb[0].mxu0 %v7350
      %v7639 = vpop.f32.mrb[0].mxu0
      %v7640 = vadd.f32 0.0, %v7639
      %v7641 = vpop.f32.mrb[0].mxu0
      %7642 = vmatprep.mubr.f32.mxu0 0.0
      %7643 = vmatmul.mubr.f32.gmra.mrb[0].mxu0 %v7353
      %v7644 = vpop.f32.mrb[0].mxu0
      %v7645 = vadd.f32 0.0, %v7644
      %v7646 = vpop.f32.mrb[0].mxu0
      %7647 = vmatprep.mubr.f32.mxu0 0.0
      %7648 = vmatmul.mubr.f32.gmra.mrb[0].mxu0 %v7356
      %v7649 = vpop.f32.mrb[0].mxu0
      %v7650 = vadd.f32 0.0, %v7649
      %v7651 = vpop.f32.mrb[0].mxu0
      %7652 = vmatprep.mubr.f32.mxu0 0.0
      %7653 = vmatmul.mubr.f32.gmra.mrb[0].mxu0 %v7359
      %v7654 = vpop.f32.mrb[0].mxu0
      %v7655 = vadd.f32 0.0, %v7654
      %v7656 = vpop.f32.mrb[0].mxu0
      %7657 = vmatprep.mubr.f32.mxu0 0.0
      %7658 = vmatmul.mubr.f32.gmra.mrb[0].mxu0 %v7362
      %v7659 = vpop.f32.mrb[0].mxu0
      %v7660 = vadd.f32 0.0, %v7659
      %v7661 = vpop.f32.mrb[0].mxu0
      %7662 = vmatprep.mubr.f32.mxu0 0.0
      %7663 = vmatmul.mubr.f32.gmra.mrb[0].mxu0 %v7365
      %v7664 = vpop.f32.mrb[0].mxu0
      %v7665 = vadd.f32 0.0, %v7664
      %v7666 = vpop.f32.mrb[0].mxu0
      %7667 = vmatprep.mubr.f32.mxu0 0.0
      %7668 = vmatmul.mubr.f32.gmra.mrb[0].mxu0 %v7368
      %v7669 = vpop.f32.mrb[0].mxu0
      %v7670 = vadd.f32 0.0, %v7669
      %v7671 = vpop.f32.mrb[0].mxu0
      %7672 = vmatprep.mubr.f32.mxu0 0.0
      %7673 = vmatmul.mubr.f32.gmra.mrb[0].mxu0 %v7371
      %v7674 = vpop.f32.mrb[0].mxu0
      %v7675 = vadd.f32 0.0, %v7674
      %v7676 = vpop.f32.mrb[0].mxu0
      %7677 = vmatprep.mubr.f32.mxu0 0.0
      %7678 = vmatmul.mubr.f32.gmra.mrb[0].mxu0 %v7374
      %v7679 = vpop.f32.mrb[0].mxu0
      %v7680 = vadd.f32 0.0, %v7679
      %v7681 = vpop.f32.mrb[0].mxu0
      %7682 = vmatprep.mubr.f32.mxu0 0.0
      %7683 = vmatmul.mubr.f32.gmra.mrb[0].mxu0 %v7377
      %v7684 = vpop.f32.mrb[0].mxu0
      %v7685 = vadd.f32 0.0, %v7684
      %v7686 = vpop.f32.mrb[0].mxu0
      %7687 = vmatprep.mubr.f32.mxu0 0.0
      %7688 = vmatmul.mubr.f32.gmra.mrb[0].mxu0 %v7380
      %v7689 = vpop.f32.mrb[0].mxu0
      %v7690 = vadd.f32 0.0, %v7689
      %v7691 = vpop.f32.mrb[0].mxu0
      %7692 = vmatprep.mubr.f32.mxu0 0.0
      %7693 = vmatmul.mubr.f32.gmra.mrb[0].mxu0 %v7383
      %v7694 = vpop.f32.mrb[0].mxu0
      %v7695 = vadd.f32 0.0, %v7694
      %v7696 = vpop.f32.mrb[0].mxu0
      %7697 = vmatprep.mubr.f32.mxu0 0.0
      %7698 = vmatmul.mubr.f32.gmra.mrb[0].mxu0 %v7386
      %v7699 = vpop.f32.mrb[0].mxu0
      %v7700 = vadd.f32 0.0, %v7699
      %v7701 = vpop.f32.mrb[0].mxu0
      %7702 = vmatprep.mubr.f32.mxu0 0.0
      %7703 = vmatmul.mubr.f32.gmra.mrb[0].mxu0 %v7389
      %v7704 = vpop.f32.mrb[0].mxu0
      %v7705 = vadd.f32 0.0, %v7704
      %v7706 = vpop.f32.mrb[0].mxu0
      %7707 = vmatprep.mubr.f32.mxu0 0.0
      %7708 = vmatmul.mubr.f32.gmra.mrb[0].mxu0 %v7392
      %v7709 = vpop.f32.mrb[0].mxu0
      %v7710 = vadd.f32 0.0, %v7709
      %v7711 = vpop.f32.mrb[0].mxu0
      %7712 = vmatprep.mubr.f32.mxu0 0.0
      %7713 = vmatmul.mubr.f32.gmra.mrb[0].mxu0 %v7395
      %v7714 = vpop.f32.mrb[0].mxu0
      %v7715 = vadd.f32 0.0, %v7714
      %v7716 = vpop.f32.mrb[0].mxu0
      %7717 = vmatprep.mubr.f32.mxu0 0.0
      %7718 = vmatmul.mubr.f32.gmra.mrb[0].mxu0 %v7398
      %v7719 = vpop.f32.mrb[0].mxu0
      %v7720 = vadd.f32 0.0, %v7719
      %v7721 = vpop.f32.mrb[0].mxu0
      %7722 = vmatprep.mubr.f32.mxu0 0.0
      %7723 = vmatmul.mubr.f32.gmra.mrb[0].mxu0 %v7401
      %v7724 = vpop.f32.mrb[0].mxu0
      %v7725 = vadd.f32 0.0, %v7724
      %v7726 = vpop.f32.mrb[0].mxu0
      %7727 = vmatprep.mubr.f32.mxu0 0.0
      %7728 = vmatmul.mubr.f32.gmra.mrb[0].mxu0 %v7404
      %v7729 = vpop.f32.mrb[0].mxu0
      %v7730 = vadd.f32 0.0, %v7729
      %v7731 = vpop.f32.mrb[0].mxu0
      %7732 = vmatprep.mubr.f32.mxu0 0.0
      %7733 = vmatmul.mubr.f32.gmra.mrb[0].mxu0 %v7407
      %v7734 = vpop.f32.mrb[0].mxu0
      %v7735 = vadd.f32 0.0, %v7734
      %v7736 = vpop.f32.mrb[0].mxu0
      %7737 = vmatprep.mubr.f32.mxu0 0.0
      %7738 = vmatmul.mubr.f32.gmra.mrb[0].mxu0 %v7410
      %v7739 = vpop.f32.mrb[0].mxu0
      %v7740 = vadd.f32 0.0, %v7739
      %v7741 = vpop.f32.mrb[0].mxu0
      %7742 = vmatprep.mubr.f32.mxu0 0.0
      %7743 = vmatmul.mubr.f32.gmra.mrb[0].mxu0 %v7413
      %v7744 = vpop.f32.mrb[0].mxu0
      %v7745 = vadd.f32 0.0, %v7744
      %v7746 = vpop.f32.mrb[0].mxu0
      %7747 = vmatprep.mubr.f32.mxu0 0.0
      %7748 = vmatmul.mubr.f32.gmra.mrb[0].mxu0 %v7416
      %v7749 = vpop.f32.mrb[0].mxu0
      %v7750 = vadd.f32 0.0, %v7749
      %v7751 = vpop.f32.mrb[0].mxu0
      %7752 = vmatprep.mubr.f32.mxu0 0.0
      %7753 = vmatmul.mubr.f32.gmra.mrb[0].mxu0 %v7419
      %v7754 = vpop.f32.mrb[0].mxu0
      %v7755 = vadd.f32 0.0, %v7754
      %v7756 = vpop.f32.mrb[0].mxu0
      %7757 = vmatprep.mubr.f32.mxu0 0.0
      %7758 = vmatmul.mubr.f32.gmra.mrb[0].mxu0 %v7422
      %v7759 = vpop.f32.mrb[0].mxu0
      %v7760 = vadd.f32 0.0, %v7759
      %v7761 = vpop.f32.mrb[0].mxu0
      %7762 = vmatprep.mubr.f32.mxu0 0.0
      %7763 = vmatmul.mubr.f32.gmra.mrb[0].mxu0 %v7425
      %v7764 = vpop.f32.mrb[0].mxu0
      %v7765 = vadd.f32 0.0, %v7764
      %v7766 = vpop.f32.mrb[0].mxu0
      %7767 = vmatprep.mubr.f32.mxu0 0.0
      %7768 = vmatmul.mubr.f32.gmra.mrb[0].mxu0 %v7428
      %v7769 = vpop.f32.mrb[0].mxu0
      %v7770 = vadd.f32 0.0, %v7769
      %v7771 = vpop.f32.mrb[0].mxu0
      %7772 = vmatprep.mubr.f32.mxu0 0.0
      %7773 = vmatmul.mubr.f32.gmra.mrb[0].mxu0 %v7431
      %v7774 = vpop.f32.mrb[0].mxu0
      %v7775 = vadd.f32 0.0, %v7774
      %v7776 = vpop.f32.mrb[0].mxu0
      %7777 = vmatprep.mubr.f32.mxu0 0.0
      %7778 = vmatmul.mubr.f32.gmra.mrb[0].mxu0 %v7434
      %v7779 = vpop.f32.mrb[0].mxu0
      %v7780 = vadd.f32 0.0, %v7779
      %v7781 = vpop.f32.mrb[0].mxu0
      %7782 = vmatprep.mubr.f32.mxu0 0.0
      %7783 = vmatmul.mubr.f32.gmra.mrb[0].mxu0 %v7437
      %v7784 = vpop.f32.mrb[0].mxu0
      %v7785 = vadd.f32 0.0, %v7784
      %v7786 = vpop.f32.mrb[0].mxu0
      %7787 = vmatprep.mubr.f32.mxu0 0.0
      %7788 = vmatmul.mubr.f32.gmra.mrb[0].mxu0 %v7440
      %v7789 = vpop.f32.mrb[0].mxu0
      %v7790 = vadd.f32 0.0, %v7789
      %v7791 = vpop.f32.mrb[0].mxu0
      %7792 = vmatprep.mubr.f32.mxu0 0.0
      %7793 = vmatmul.mubr.f32.gmra.mrb[0].mxu0 %v7443
      %v7794 = vpop.f32.mrb[0].mxu0
      %v7795 = vadd.f32 0.0, %v7794
      %v7796 = vpop.f32.mrb[0].mxu0
      %7797 = vmatprep.mubr.f32.mxu0 0.0
      %7798 = vmatmul.mubr.f32.gmra.mrb[0].mxu0 %v7446
      %v7799 = vpop.f32.mrb[0].mxu0
      %v7800 = vadd.f32 0.0, %v7799
      %v7801 = vpop.f32.mrb[0].mxu0
      %7802 = vmatprep.mubr.f32.mxu0 0.0
      %7803 = vmatmul.mubr.f32.gmra.mrb[0].mxu0 %v7449
      %v7804 = vpop.f32.mrb[0].mxu0
      %v7805 = vadd.f32 0.0, %v7804
      %v7806 = vpop.f32.mrb[0].mxu0
      %7807 = vmatprep.mubr.f32.mxu0 0.0
      %7808 = vmatmul.mubr.f32.gmra.mrb[0].mxu0 %v7452
      %v7809 = vpop.f32.mrb[0].mxu0
      %v7810 = vadd.f32 0.0, %v7809
      %v7811 = vpop.f32.mrb[0].mxu0
      %7812 = vmatprep.mubr.f32.mxu0 0.0
      %7813 = vmatmul.mubr.f32.gmra.mrb[0].mxu0 %v7455
      %v7814 = vpop.f32.mrb[0].mxu0
      %v7815 = vadd.f32 0.0, %v7814
      %v7816 = vpop.f32.mrb[0].mxu0
      %7817 = vmatprep.mubr.f32.mxu0 0.0
      %7818 = vmatmul.mubr.f32.gmra.mrb[0].mxu0 %v7458
      %v7819 = vpop.f32.mrb[0].mxu0
      %v7820 = vadd.f32 0.0, %v7819
      %v7821 = vpop.f32.mrb[0].mxu0
      %7822 = vmatprep.mubr.f32.mxu0 0.0
      %7823 = vmatmul.mubr.f32.gmra.mrb[0].mxu0 %v7461
      %v7824 = vpop.f32.mrb[0].mxu0
      %v7825 = vadd.f32 0.0, %v7824
      %v7826 = vpop.f32.mrb[0].mxu0
      %7827 = vmatprep.mubr.f32.mxu0 0.0
      %7828 = vmatmul.mubr.f32.gmra.mrb[0].mxu0 %v7464
      %v7829 = vpop.f32.mrb[0].mxu0
      %v7830 = vadd.f32 0.0, %v7829
      %v7831 = vpop.f32.mrb[0].mxu0
      %7832 = vmatprep.mubr.f32.mxu0 0.0
      %7833 = vmatmul.mubr.f32.gmra.mrb[0].mxu0 %v7467
      %v7834 = vpop.f32.mrb[0].mxu0
      %v7835 = vadd.f32 0.0, %v7834
      %v7836 = vpop.f32.mrb[0].mxu0
      %7837 = vmatprep.mubr.f32.mxu0 0.0
      %7838 = vmatmul.mubr.f32.gmra.mrb[0].mxu0 %v7470
      %v7839 = vpop.f32.mrb[0].mxu0
      %v7840 = vadd.f32 0.0, %v7839
      %v7841 = vpop.f32.mrb[0].mxu0
      %7842 = vmatprep.mubr.f32.mxu0 0.0
      %7843 = vmatmul.mubr.f32.gmra.mrb[0].mxu0 %v7473
      %v7844 = vpop.f32.mrb[0].mxu0
      %v7845 = vadd.f32 0.0, %v7844
      %v7846 = vpop.f32.mrb[0].mxu0
      %7847 = vmatprep.mubr.f32.mxu0 0.0
      %7848 = vmatmul.mubr.f32.gmra.mrb[0].mxu0 %v7476
      %v7849 = vpop.f32.mrb[0].mxu0
      %v7850 = vadd.f32 0.0, %v7849
      %v7851 = vpop.f32.mrb[0].mxu0
      %7852 = vmatprep.mubr.f32.mxu0 0.0
      %7853 = vmatmul.mubr.f32.gmra.mrb[0].mxu0 %v7479
      %v7854 = vpop.f32.mrb[0].mxu0
      %v7855 = vadd.f32 0.0, %v7854
      %v7856 = vpop.f32.mrb[0].mxu0
      %7857 = vmatprep.mubr.f32.mxu0 0.0
      %7858 = vmatmul.mubr.f32.gmra.mrb[0].mxu0 %v7482
      %v7859 = vpop.f32.mrb[0].mxu0
      %v7860 = vadd.f32 0.0, %v7859
      %v7861 = vpop.f32.mrb[0].mxu0
      %7862 = vmatprep.mubr.f32.mxu0 0.0
      %7863 = vmatmul.mubr.f32.gmra.mrb[0].mxu0 %v7485
      %v7864 = vpop.f32.mrb[0].mxu0
      %v7865 = vadd.f32 0.0, %v7864
      %v7866 = vpop.f32.mrb[0].mxu0
      %7867 = vmatprep.mubr.f32.mxu0 0.0
      %7868 = vmatmul.mubr.f32.gmra.mrb[0].mxu0 %v7488
      %v7869 = vpop.f32.mrb[0].mxu0
      %v7870 = vadd.f32 0.0, %v7869
      %v7871 = vpop.f32.mrb[0].mxu0
      %7872 = vmatprep.mubr.f32.mxu0 0.0
      %7873 = vmatmul.mubr.f32.gmra.mrb[0].mxu0 %v7491
      %v7874 = vpop.f32.mrb[0].mxu0
      %v7875 = vadd.f32 0.0, %v7874
      %v7876 = vpop.f32.mrb[0].mxu0
      %7877 = vdwg.mxu0
      %v7878 = vadd.f32 %v7169, %v7560
      %v7879 = vadd.f32 %v7170, %v7565
      %v7880 = vadd.f32 %v7171, %v7570
      %v7881 = vadd.f32 %v7172, %v7575
      %v7882 = vadd.f32 %v7173, %v7580
      %v7883 = vadd.f32 %v7174, %v7585
      %v7884 = vadd.f32 %v7175, %v7590
      %v7885 = vadd.f32 %v7176, %v7595
      %v7886 = vadd.f32 %v7177, %v7600
      %v7887 = vadd.f32 %v7178, %v7605
      %v7888 = vadd.f32 %v7179, %v7610
      %v7889 = vadd.f32 %v7180, %v7615
      %v7890 = vadd.f32 %v7181, %v7620
      %v7891 = vadd.f32 %v7182, %v7625
      %v7892 = vadd.f32 %v7183, %v7630
      %v7893 = vadd.f32 %v7184, %v7635
      %v7894 = vadd.f32 %v7185, %v7640
      %v7895 = vadd.f32 %v7186, %v7645
      %v7896 = vadd.f32 %v7187, %v7650
      %v7897 = vadd.f32 %v7188, %v7655
      %v7898 = vadd.f32 %v7189, %v7660
      %v7899 = vadd.f32 %v7190, %v7665
      %v7900 = vadd.f32 %v7191, %v7670
      %v7901 = vadd.f32 %v7192, %v7675
      %v7902 = vadd.f32 %v7193, %v7680
      %v7903 = vadd.f32 %v7194, %v7685
      %v7904 = vadd.f32 %v7195, %v7690
      %v7905 = vadd.f32 %v7196, %v7695
      %v7906 = vadd.f32 %v7197, %v7700
      %v7907 = vadd.f32 %v7198, %v7705
      %v7908 = vadd.f32 %v7199, %v7710
      %v7909 = vadd.f32 %v7200, %v7715
      %v7910 = vadd.f32 %v7201, %v7720
      %v7911 = vadd.f32 %v7202, %v7725
      %v7912 = vadd.f32 %v7203, %v7730
      %v7913 = vadd.f32 %v7204, %v7735
      %v7914 = vadd.f32 %v7205, %v7740
      %v7915 = vadd.f32 %v7206, %v7745
      %v7916 = vadd.f32 %v7207, %v7750
      %v7917 = vadd.f32 %v7208, %v7755
      %v7918 = vadd.f32 %v7209, %v7760
      %v7919 = vadd.f32 %v7210, %v7765
      %v7920 = vadd.f32 %v7211, %v7770
      %v7921 = vadd.f32 %v7212, %v7775
      %v7922 = vadd.f32 %v7213, %v7780
      %v7923 = vadd.f32 %v7214, %v7785
      %v7924 = vadd.f32 %v7215, %v7790
      %v7925 = vadd.f32 %v7216, %v7795
      %v7926 = vadd.f32 %v7217, %v7800
      %v7927 = vadd.f32 %v7218, %v7805
      %v7928 = vadd.f32 %v7219, %v7810
      %v7929 = vadd.f32 %v7220, %v7815
      %v7930 = vadd.f32 %v7221, %v7820
      %v7931 = vadd.f32 %v7222, %v7825
      %v7932 = vadd.f32 %v7223, %v7830
      %v7933 = vadd.f32 %v7224, %v7835
      %v7934 = vadd.f32 %v7225, %v7840
      %v7935 = vadd.f32 %v7226, %v7845
      %v7936 = vadd.f32 %v7227, %v7850
      %v7937 = vadd.f32 %v7228, %v7855
      %v7938 = vadd.f32 %v7229, %v7860
      %v7939 = vadd.f32 %v7230, %v7865
      %v7940 = vadd.f32 %v7231, %v7870
      %v7941 = vadd.f32 %v7232, %v7875
      %v7942 = vld [vmem:[%s1 + $0x118] sm:$0x1]
      %v7943 = vlaneseq
      %v7944 = vshrl.u32 %v7943, 7
      %v7945 = vsub.s32 0, %v7944
      %v7946 = vrot.slane %v7942, %v7945
      %v7947 = vadd.f32 %v7878, %v7946
      %v7948 = vadd.f32 %v7879, %v7946
      %v7949 = vadd.f32 %v7880, %v7946
      %v7950 = vadd.f32 %v7881, %v7946
      %v7951 = vadd.f32 %v7882, %v7946
      %v7952 = vadd.f32 %v7883, %v7946
      %v7953 = vadd.f32 %v7884, %v7946
      %v7954 = vadd.f32 %v7885, %v7946
      %v7955 = vadd.f32 %v7886, %v7946
      %v7956 = vadd.f32 %v7887, %v7946
      %v7957 = vadd.f32 %v7888, %v7946
      %v7958 = vadd.f32 %v7889, %v7946
      %v7959 = vadd.f32 %v7890, %v7946
      %v7960 = vadd.f32 %v7891, %v7946
      %v7961 = vadd.f32 %v7892, %v7946
      %v7962 = vadd.f32 %v7893, %v7946
      %v7963 = vadd.f32 %v7894, %v7946
      %v7964 = vadd.f32 %v7895, %v7946
      %v7965 = vadd.f32 %v7896, %v7946
      %v7966 = vadd.f32 %v7897, %v7946
      %v7967 = vadd.f32 %v7898, %v7946
      %v7968 = vadd.f32 %v7899, %v7946
      %v7969 = vadd.f32 %v7900, %v7946
      %v7970 = vadd.f32 %v7901, %v7946
      %v7971 = vadd.f32 %v7902, %v7946
      %v7972 = vadd.f32 %v7903, %v7946
      %v7973 = vadd.f32 %v7904, %v7946
      %v7974 = vadd.f32 %v7905, %v7946
      %v7975 = vadd.f32 %v7906, %v7946
      %v7976 = vadd.f32 %v7907, %v7946
      %v7977 = vadd.f32 %v7908, %v7946
      %v7978 = vadd.f32 %v7909, %v7946
      %v7979 = vadd.f32 %v7910, %v7946
      %v7980 = vadd.f32 %v7911, %v7946
      %v7981 = vadd.f32 %v7912, %v7946
      %v7982 = vadd.f32 %v7913, %v7946
      %v7983 = vadd.f32 %v7914, %v7946
      %v7984 = vadd.f32 %v7915, %v7946
      %v7985 = vadd.f32 %v7916, %v7946
      %v7986 = vadd.f32 %v7917, %v7946
      %v7987 = vadd.f32 %v7918, %v7946
      %v7988 = vadd.f32 %v7919, %v7946
      %v7989 = vadd.f32 %v7920, %v7946
      %v7990 = vadd.f32 %v7921, %v7946
      %v7991 = vadd.f32 %v7922, %v7946
      %v7992 = vadd.f32 %v7923, %v7946
      %v7993 = vadd.f32 %v7924, %v7946
      %v7994 = vadd.f32 %v7925, %v7946
      %v7995 = vadd.f32 %v7926, %v7946
      %v7996 = vadd.f32 %v7927, %v7946
      %v7997 = vadd.f32 %v7928, %v7946
      %v7998 = vadd.f32 %v7929, %v7946
      %v7999 = vadd.f32 %v7930, %v7946
      %v8000 = vadd.f32 %v7931, %v7946
      %v8001 = vadd.f32 %v7932, %v7946
      %v8002 = vadd.f32 %v7933, %v7946
      %v8003 = vadd.f32 %v7934, %v7946
      %v8004 = vadd.f32 %v7935, %v7946
      %v8005 = vadd.f32 %v7936, %v7946
      %v8006 = vadd.f32 %v7937, %v7946
      %v8007 = vadd.f32 %v7938, %v7946
      %v8008 = vadd.f32 %v7939, %v7946
      %v8009 = vadd.f32 %v7940, %v7946
      %v8010 = vadd.f32 %v7941, %v7946
      %v8011 = vmax.f32 %v7947, 0.0
      %v8012 = vmax.f32 %v7948, 0.0
      %v8013 = vmax.f32 %v7949, 0.0
      %v8014 = vmax.f32 %v7950, 0.0
      %v8015 = vmax.f32 %v7951, 0.0
      %v8016 = vmax.f32 %v7952, 0.0
      %v8017 = vmax.f32 %v7953, 0.0
      %v8018 = vmax.f32 %v7954, 0.0
      %v8019 = vmax.f32 %v7955, 0.0
      %v8020 = vmax.f32 %v7956, 0.0
      %v8021 = vmax.f32 %v7957, 0.0
      %v8022 = vmax.f32 %v7958, 0.0
      %v8023 = vmax.f32 %v7959, 0.0
      %v8024 = vmax.f32 %v7960, 0.0
      %v8025 = vmax.f32 %v7961, 0.0
      %v8026 = vmax.f32 %v7962, 0.0
      %v8027 = vmax.f32 %v7963, 0.0
      %v8028 = vmax.f32 %v7964, 0.0
      %v8029 = vmax.f32 %v7965, 0.0
      %v8030 = vmax.f32 %v7966, 0.0
      %v8031 = vmax.f32 %v7967, 0.0
      %v8032 = vmax.f32 %v7968, 0.0
      %v8033 = vmax.f32 %v7969, 0.0
      %v8034 = vmax.f32 %v7970, 0.0
      %v8035 = vmax.f32 %v7971, 0.0
      %v8036 = vmax.f32 %v7972, 0.0
      %v8037 = vmax.f32 %v7973, 0.0
      %v8038 = vmax.f32 %v7974, 0.0
      %v8039 = vmax.f32 %v7975, 0.0
      %v8040 = vmax.f32 %v7976, 0.0
      %v8041 = vmax.f32 %v7977, 0.0
      %v8042 = vmax.f32 %v7978, 0.0
      %v8043 = vmax.f32 %v7979, 0.0
      %v8044 = vmax.f32 %v7980, 0.0
      %v8045 = vmax.f32 %v7981, 0.0
      %v8046 = vmax.f32 %v7982, 0.0
      %v8047 = vmax.f32 %v7983, 0.0
      %v8048 = vmax.f32 %v7984, 0.0
      %v8049 = vmax.f32 %v7985, 0.0
      %v8050 = vmax.f32 %v7986, 0.0
      %v8051 = vmax.f32 %v7987, 0.0
      %v8052 = vmax.f32 %v7988, 0.0
      %v8053 = vmax.f32 %v7989, 0.0
      %v8054 = vmax.f32 %v7990, 0.0
      %v8055 = vmax.f32 %v7991, 0.0
      %v8056 = vmax.f32 %v7992, 0.0
      %v8057 = vmax.f32 %v7993, 0.0
      %v8058 = vmax.f32 %v7994, 0.0
      %v8059 = vmax.f32 %v7995, 0.0
      %v8060 = vmax.f32 %v7996, 0.0
      %v8061 = vmax.f32 %v7997, 0.0
      %v8062 = vmax.f32 %v7998, 0.0
      %v8063 = vmax.f32 %v7999, 0.0
      %v8064 = vmax.f32 %v8000, 0.0
      %v8065 = vmax.f32 %v8001, 0.0
      %v8066 = vmax.f32 %v8002, 0.0
      %v8067 = vmax.f32 %v8003, 0.0
      %v8068 = vmax.f32 %v8004, 0.0
      %v8069 = vmax.f32 %v8005, 0.0
      %v8070 = vmax.f32 %v8006, 0.0
      %v8071 = vmax.f32 %v8007, 0.0
      %v8072 = vmax.f32 %v8008, 0.0
      %v8073 = vmax.f32 %v8009, 0.0
      %v8074 = vmax.f32 %v8010, 0.0
      %v8075 = vmul.f32 %v8011, %v1031
      %v8076 = vmul.f32 %v8012, %v1032
      %v8077 = vmul.f32 %v8013, %v1033
      %v8078 = vmul.f32 %v8014, %v1034
      %v8079 = vmul.f32 %v8015, %v1035
      %v8080 = vmul.f32 %v8016, %v1036
      %v8081 = vmul.f32 %v8017, %v1037
      %v8082 = vmul.f32 %v8018, %v1038
      %v8083 = vmul.f32 %v8019, %v1039
      %v8084 = vmul.f32 %v8020, %v1040
      %v8085 = vmul.f32 %v8021, %v1041
      %v8086 = vmul.f32 %v8022, %v1042
      %v8087 = vmul.f32 %v8023, %v1043
      %v8088 = vmul.f32 %v8024, %v1044
      %v8089 = vmul.f32 %v8025, %v1045
      %v8090 = vmul.f32 %v8026, %v1046
      %v8091 = vmul.f32 %v8027, %v1047
      %v8092 = vmul.f32 %v8028, %v1048
      %v8093 = vmul.f32 %v8029, %v1049
      %v8094 = vmul.f32 %v8030, %v1050
      %v8095 = vmul.f32 %v8031, %v1051
      %v8096 = vmul.f32 %v8032, %v1052
      %v8097 = vmul.f32 %v8033, %v1053
      %v8098 = vmul.f32 %v8034, %v1054
      %v8099 = vmul.f32 %v8035, %v1055
      %v8100 = vmul.f32 %v8036, %v1056
      %v8101 = vmul.f32 %v8037, %v1057
      %v8102 = vmul.f32 %v8038, %v1058
      %v8103 = vmul.f32 %v8039, %v1059
      %v8104 = vmul.f32 %v8040, %v1060
      %v8105 = vmul.f32 %v8041, %v1061
      %v8106 = vmul.f32 %v8042, %v1062
      %v8107 = vmul.f32 %v8043, %v1063
      %v8108 = vmul.f32 %v8044, %v1064
      %v8109 = vmul.f32 %v8045, %v1065
      %v8110 = vmul.f32 %v8046, %v1066
      %v8111 = vmul.f32 %v8047, %v1067
      %v8112 = vmul.f32 %v8048, %v1068
      %v8113 = vmul.f32 %v8049, %v1069
      %v8114 = vmul.f32 %v8050, %v1070
      %v8115 = vmul.f32 %v8051, %v1071
      %v8116 = vmul.f32 %v8052, %v1072
      %v8117 = vmul.f32 %v8053, %v1073
      %v8118 = vmul.f32 %v8054, %v1074
      %v8119 = vmul.f32 %v8055, %v1075
      %v8120 = vmul.f32 %v8056, %v1076
      %v8121 = vmul.f32 %v8057, %v1077
      %v8122 = vmul.f32 %v8058, %v1078
      %v8123 = vmul.f32 %v8059, %v1079
      %v8124 = vmul.f32 %v8060, %v1080
      %v8125 = vmul.f32 %v8061, %v1081
      %v8126 = vmul.f32 %v8062, %v1082
      %v8127 = vmul.f32 %v8063, %v1083
      %v8128 = vmul.f32 %v8064, %v1084
      %v8129 = vmul.f32 %v8065, %v1085
      %v8130 = vmul.f32 %v8066, %v1086
      %v8131 = vmul.f32 %v8067, %v1087
      %v8132 = vmul.f32 %v8068, %v1088
      %v8133 = vmul.f32 %v8069, %v1089
      %v8134 = vmul.f32 %v8070, %v1090
      %v8135 = vmul.f32 %v8071, %v1091
      %v8136 = vmul.f32 %v8072, %v1092
      %v8137 = vmul.f32 %v8073, %v1093
      %v8138 = vmul.f32 %v8074, %v1094
      %8139 = vst.msk [vmem:[#allocation2 + $0x10] sm:$0xff] %vm1095, %v8075
      %8140 = vst.msk [vmem:[#allocation2 + $0x18] sm:$0xff] %vm1095, %v8076
      %8141 = vst.msk [vmem:[#allocation2 + $0x20] sm:$0xff] %vm1095, %v8077
      %8142 = vst.msk [vmem:[#allocation2 + $0x28] sm:$0xff] %vm1095, %v8078
      %8143 = vst.msk [vmem:[#allocation2 + $0x30] sm:$0xff] %vm1095, %v8079
      %8144 = vst.msk [vmem:[#allocation2 + $0x38] sm:$0xff] %vm1095, %v8080
      %8145 = vst.msk [vmem:[#allocation2 + $0x40] sm:$0xff] %vm1095, %v8081
      %8146 = vst.msk [vmem:[#allocation2 + $0x48] sm:$0xff] %vm1095, %v8082
      %8147 = vst.msk [vmem:[#allocation2 + $0x50] sm:$0xff] %vm1095, %v8083
      %8148 = vst.msk [vmem:[#allocation2 + $0x58] sm:$0xff] %vm1095, %v8084
      %8149 = vst.msk [vmem:[#allocation2 + $0x60] sm:$0xff] %vm1095, %v8085
      %8150 = vst.msk [vmem:[#allocation2 + $0x68] sm:$0xff] %vm1095, %v8086
      %8151 = vst.msk [vmem:[#allocation2 + $0x70] sm:$0xff] %vm1095, %v8087
      %8152 = vst.msk [vmem:[#allocation2 + $0x78] sm:$0xff] %vm1095, %v8088
      %8153 = vst.msk [vmem:[#allocation2 + $0x80] sm:$0xff] %vm1095, %v8089
      %8154 = vst.msk [vmem:[#allocation2 + $0x88] sm:$0xff] %vm1095, %v8090
      %8155 = vst.msk [vmem:[#allocation2 + $0x90] sm:$0xff] %vm1095, %v8091
      %8156 = vst.msk [vmem:[#allocation2 + $0x98] sm:$0xff] %vm1095, %v8092
      %8157 = vst.msk [vmem:[#allocation2 + $0xa0] sm:$0xff] %vm1095, %v8093
      %8158 = vst.msk [vmem:[#allocation2 + $0xa8] sm:$0xff] %vm1095, %v8094
      %8159 = vst.msk [vmem:[#allocation2 + $0xb0] sm:$0xff] %vm1095, %v8095
      %8160 = vst.msk [vmem:[#allocation2 + $0xb8] sm:$0xff] %vm1095, %v8096
      %8161 = vst.msk [vmem:[#allocation2 + $0xc0] sm:$0xff] %vm1095, %v8097
      %8162 = vst.msk [vmem:[#allocation2 + $0xc8] sm:$0xff] %vm1095, %v8098
      %8163 = vst.msk [vmem:[#allocation2 + $0xd0] sm:$0xff] %vm1095, %v8099
      %8164 = vst.msk [vmem:[#allocation2 + $0xd8] sm:$0xff] %vm1095, %v8100
      %8165 = vst.msk [vmem:[#allocation2 + $0xe0] sm:$0xff] %vm1095, %v8101
      %8166 = vst.msk [vmem:[#allocation2 + $0xe8] sm:$0xff] %vm1095, %v8102
      %8167 = vst.msk [vmem:[#allocation2 + $0xf0] sm:$0xff] %vm1095, %v8103
      %8168 = vst.msk [vmem:[#allocation2 + $0xf8] sm:$0xff] %vm1095, %v8104
      %8169 = vst.msk [vmem:[#allocation2 + $0x100] sm:$0xff] %vm1095, %v8105
      %8170 = vst.msk [vmem:[#allocation2 + $0x108] sm:$0xff] %vm1095, %v8106
      %8171 = vst.msk [vmem:[#allocation2 + $0x110] sm:$0xff] %vm1095, %v8107
      %8172 = vst.msk [vmem:[#allocation2 + $0x118] sm:$0xff] %vm1095, %v8108
      %8173 = vst.msk [vmem:[#allocation2 + $0x120] sm:$0xff] %vm1095, %v8109
      %8174 = vst.msk [vmem:[#allocation2 + $0x128] sm:$0xff] %vm1095, %v8110
      %8175 = vst.msk [vmem:[#allocation2 + $0x130] sm:$0xff] %vm1095, %v8111
      %8176 = vst.msk [vmem:[#allocation2 + $0x138] sm:$0xff] %vm1095, %v8112
      %8177 = vst.msk [vmem:[#allocation2 + $0x140] sm:$0xff] %vm1095, %v8113
      %8178 = vst.msk [vmem:[#allocation2 + $0x148] sm:$0xff] %vm1095, %v8114
      %8179 = vst.msk [vmem:[#allocation2 + $0x150] sm:$0xff] %vm1095, %v8115
      %8180 = vst.msk [vmem:[#allocation2 + $0x158] sm:$0xff] %vm1095, %v8116
      %8181 = vst.msk [vmem:[#allocation2 + $0x160] sm:$0xff] %vm1095, %v8117
      %8182 = vst.msk [vmem:[#allocation2 + $0x168] sm:$0xff] %vm1095, %v8118
      %8183 = vst.msk [vmem:[#allocation2 + $0x170] sm:$0xff] %vm1095, %v8119
      %8184 = vst.msk [vmem:[#allocation2 + $0x178] sm:$0xff] %vm1095, %v8120
      %8185 = vst.msk [vmem:[#allocation2 + $0x180] sm:$0xff] %vm1095, %v8121
      %8186 = vst.msk [vmem:[#allocation2 + $0x188] sm:$0xff] %vm1095, %v8122
      %8187 = vst.msk [vmem:[#allocation2 + $0x190] sm:$0xff] %vm1095, %v8123
      %8188 = vst.msk [vmem:[#allocation2 + $0x198] sm:$0xff] %vm1095, %v8124
      %8189 = vst.msk [vmem:[#allocation2 + $0x1a0] sm:$0xff] %vm1095, %v8125
      %8190 = vst.msk [vmem:[#allocation2 + $0x1a8] sm:$0xff] %vm1095, %v8126
      %8191 = vst.msk [vmem:[#allocation2 + $0x1b0] sm:$0xff] %vm1095, %v8127
      %8192 = vst.msk [vmem:[#allocation2 + $0x1b8] sm:$0xff] %vm1095, %v8128
      %8193 = vst.msk [vmem:[#allocation2 + $0x1c0] sm:$0xff] %vm1095, %v8129
      %8194 = vst.msk [vmem:[#allocation2 + $0x1c8] sm:$0xff] %vm1095, %v8130
      %8195 = vst.msk [vmem:[#allocation2 + $0x1d0] sm:$0xff] %vm1095, %v8131
      %8196 = vst.msk [vmem:[#allocation2 + $0x1d8] sm:$0xff] %vm1095, %v8132
      %8197 = vst.msk [vmem:[#allocation2 + $0x1e0] sm:$0xff] %vm1095, %v8133
      %8198 = vst.msk [vmem:[#allocation2 + $0x1e8] sm:$0xff] %vm1095, %v8134
      %8199 = vst.msk [vmem:[#allocation2 + $0x1f0] sm:$0xff] %vm1095, %v8135
      %8200 = vst.msk [vmem:[#allocation2 + $0x1f8] sm:$0xff] %vm1095, %v8136
      %8201 = vst.msk [vmem:[#allocation2 + $0x200] sm:$0xff] %vm1095, %v8137
      %8202 = vst.msk [vmem:[#allocation2 + $0x208] sm:$0xff] %vm1095, %v8138
      %v8203 = vld [vmem:[#allocation2 + $0x11] sm:$0xff]
      %v8204 = vld [vmem:[#allocation2 + $0x19] sm:$0xff]
      %v8205 = vld [vmem:[#allocation2 + $0x21] sm:$0xff]
      %v8206 = vld [vmem:[#allocation2 + $0x29] sm:$0xff]
      %v8207 = vld [vmem:[#allocation2 + $0x31] sm:$0xff]
      %v8208 = vld [vmem:[#allocation2 + $0x39] sm:$0xff]
      %v8209 = vld [vmem:[#allocation2 + $0x41] sm:$0xff]
      %v8210 = vld [vmem:[#allocation2 + $0x49] sm:$0xff]
      %v8211 = vld [vmem:[#allocation2 + $0x51] sm:$0xff]
      %v8212 = vld [vmem:[#allocation2 + $0x59] sm:$0xff]
      %v8213 = vld [vmem:[#allocation2 + $0x61] sm:$0xff]
      %v8214 = vld [vmem:[#allocation2 + $0x69] sm:$0xff]
      %v8215 = vld [vmem:[#allocation2 + $0x71] sm:$0xff]
      %v8216 = vld [vmem:[#allocation2 + $0x79] sm:$0xff]
      %v8217 = vld [vmem:[#allocation2 + $0x81] sm:$0xff]
      %v8218 = vld [vmem:[#allocation2 + $0x89] sm:$0xff]
      %v8219 = vld [vmem:[#allocation2 + $0x91] sm:$0xff]
      %v8220 = vld [vmem:[#allocation2 + $0x99] sm:$0xff]
      %v8221 = vld [vmem:[#allocation2 + $0xa1] sm:$0xff]
      %v8222 = vld [vmem:[#allocation2 + $0xa9] sm:$0xff]
      %v8223 = vld [vmem:[#allocation2 + $0xb1] sm:$0xff]
      %v8224 = vld [vmem:[#allocation2 + $0xb9] sm:$0xff]
      %v8225 = vld [vmem:[#allocation2 + $0xc1] sm:$0xff]
      %v8226 = vld [vmem:[#allocation2 + $0xc9] sm:$0xff]
      %v8227 = vld [vmem:[#allocation2 + $0xd1] sm:$0xff]
      %v8228 = vld [vmem:[#allocation2 + $0xd9] sm:$0xff]
      %v8229 = vld [vmem:[#allocation2 + $0xe1] sm:$0xff]
      %v8230 = vld [vmem:[#allocation2 + $0xe9] sm:$0xff]
      %v8231 = vld [vmem:[#allocation2 + $0xf1] sm:$0xff]
      %v8232 = vld [vmem:[#allocation2 + $0xf9] sm:$0xff]
      %v8233 = vld [vmem:[#allocation2 + $0x101] sm:$0xff]
      %v8234 = vld [vmem:[#allocation2 + $0x109] sm:$0xff]
      %v8235 = vld [vmem:[#allocation2 + $0x111] sm:$0xff]
      %v8236 = vld [vmem:[#allocation2 + $0x119] sm:$0xff]
      %v8237 = vld [vmem:[#allocation2 + $0x121] sm:$0xff]
      %v8238 = vld [vmem:[#allocation2 + $0x129] sm:$0xff]
      %v8239 = vld [vmem:[#allocation2 + $0x131] sm:$0xff]
      %v8240 = vld [vmem:[#allocation2 + $0x139] sm:$0xff]
      %v8241 = vld [vmem:[#allocation2 + $0x141] sm:$0xff]
      %v8242 = vld [vmem:[#allocation2 + $0x149] sm:$0xff]
      %v8243 = vld [vmem:[#allocation2 + $0x151] sm:$0xff]
      %v8244 = vld [vmem:[#allocation2 + $0x159] sm:$0xff]
      %v8245 = vld [vmem:[#allocation2 + $0x161] sm:$0xff]
      %v8246 = vld [vmem:[#allocation2 + $0x169] sm:$0xff]
      %v8247 = vld [vmem:[#allocation2 + $0x171] sm:$0xff]
      %v8248 = vld [vmem:[#allocation2 + $0x179] sm:$0xff]
      %v8249 = vld [vmem:[#allocation2 + $0x181] sm:$0xff]
      %v8250 = vld [vmem:[#allocation2 + $0x189] sm:$0xff]
      %v8251 = vld [vmem:[#allocation2 + $0x191] sm:$0xff]
      %v8252 = vld [vmem:[#allocation2 + $0x199] sm:$0xff]
      %v8253 = vld [vmem:[#allocation2 + $0x1a1] sm:$0xff]
      %v8254 = vld [vmem:[#allocation2 + $0x1a9] sm:$0xff]
      %v8255 = vld [vmem:[#allocation2 + $0x1b1] sm:$0xff]
      %v8256 = vld [vmem:[#allocation2 + $0x1b9] sm:$0xff]
      %v8257 = vld [vmem:[#allocation2 + $0x1c1] sm:$0xff]
      %v8258 = vld [vmem:[#allocation2 + $0x1c9] sm:$0xff]
      %v8259 = vld [vmem:[#allocation2 + $0x1d1] sm:$0xff]
      %v8260 = vld [vmem:[#allocation2 + $0x1d9] sm:$0xff]
      %v8261 = vld [vmem:[#allocation2 + $0x1e1] sm:$0xff]
      %v8262 = vld [vmem:[#allocation2 + $0x1e9] sm:$0xff]
      %v8263 = vld [vmem:[#allocation2 + $0x1f1] sm:$0xff]
      %v8264 = vld [vmem:[#allocation2 + $0x1f9] sm:$0xff]
      %v8265 = vld [vmem:[#allocation2 + $0x201] sm:$0xff]
      %v8266 = vld [vmem:[#allocation2 + $0x209] sm:$0xff]
      %v8267 = vmax.f32 %v8075, %v8203
      %v8268 = vmax.f32 %v8076, %v8204
      %v8269 = vmax.f32 %v8077, %v8205
      %v8270 = vmax.f32 %v8078, %v8206
      %v8271 = vmax.f32 %v8079, %v8207
      %v8272 = vmax.f32 %v8080, %v8208
      %v8273 = vmax.f32 %v8081, %v8209
      %v8274 = vmax.f32 %v8082, %v8210
      %v8275 = vmax.f32 %v8083, %v8211
      %v8276 = vmax.f32 %v8084, %v8212
      %v8277 = vmax.f32 %v8085, %v8213
      %v8278 = vmax.f32 %v8086, %v8214
      %v8279 = vmax.f32 %v8087, %v8215
      %v8280 = vmax.f32 %v8088, %v8216
      %v8281 = vmax.f32 %v8089, %v8217
      %v8282 = vmax.f32 %v8090, %v8218
      %v8283 = vmax.f32 %v8091, %v8219
      %v8284 = vmax.f32 %v8092, %v8220
      %v8285 = vmax.f32 %v8093, %v8221
      %v8286 = vmax.f32 %v8094, %v8222
      %v8287 = vmax.f32 %v8095, %v8223
      %v8288 = vmax.f32 %v8096, %v8224
      %v8289 = vmax.f32 %v8097, %v8225
      %v8290 = vmax.f32 %v8098, %v8226
      %v8291 = vmax.f32 %v8099, %v8227
      %v8292 = vmax.f32 %v8100, %v8228
      %v8293 = vmax.f32 %v8101, %v8229
      %v8294 = vmax.f32 %v8102, %v8230
      %v8295 = vmax.f32 %v8103, %v8231
      %v8296 = vmax.f32 %v8104, %v8232
      %v8297 = vmax.f32 %v8105, %v8233
      %v8298 = vmax.f32 %v8106, %v8234
      %v8299 = vmax.f32 %v8107, %v8235
      %v8300 = vmax.f32 %v8108, %v8236
      %v8301 = vmax.f32 %v8109, %v8237
      %v8302 = vmax.f32 %v8110, %v8238
      %v8303 = vmax.f32 %v8111, %v8239
      %v8304 = vmax.f32 %v8112, %v8240
      %v8305 = vmax.f32 %v8113, %v8241
      %v8306 = vmax.f32 %v8114, %v8242
      %v8307 = vmax.f32 %v8115, %v8243
      %v8308 = vmax.f32 %v8116, %v8244
      %v8309 = vmax.f32 %v8117, %v8245
      %v8310 = vmax.f32 %v8118, %v8246
      %v8311 = vmax.f32 %v8119, %v8247
      %v8312 = vmax.f32 %v8120, %v8248
      %v8313 = vmax.f32 %v8121, %v8249
      %v8314 = vmax.f32 %v8122, %v8250
      %v8315 = vmax.f32 %v8123, %v8251
      %v8316 = vmax.f32 %v8124, %v8252
      %v8317 = vmax.f32 %v8125, %v8253
      %v8318 = vmax.f32 %v8126, %v8254
      %v8319 = vmax.f32 %v8127, %v8255
      %v8320 = vmax.f32 %v8128, %v8256
      %v8321 = vmax.f32 %v8129, %v8257
      %v8322 = vmax.f32 %v8130, %v8258
      %v8323 = vmax.f32 %v8131, %v8259
      %v8324 = vmax.f32 %v8132, %v8260
      %v8325 = vmax.f32 %v8133, %v8261
      %v8326 = vmax.f32 %v8134, %v8262
      %v8327 = vmax.f32 %v8135, %v8263
      %v8328 = vmax.f32 %v8136, %v8264
      %v8329 = vmax.f32 %v8137, %v8265
      %v8330 = vmax.f32 %v8138, %v8266
      %v8331 = vld [vmem:[#allocation2 + $0x18] sm:$0xff]
      %v8332 = vld [vmem:[#allocation2 + $0x20] sm:$0xff]
      %v8333 = vld [vmem:[#allocation2 + $0x28] sm:$0xff]
      %v8334 = vld [vmem:[#allocation2 + $0x30] sm:$0xff]
      %v8335 = vld [vmem:[#allocation2 + $0x38] sm:$0xff]
      %v8336 = vld [vmem:[#allocation2 + $0x40] sm:$0xff]
      %v8337 = vld [vmem:[#allocation2 + $0x48] sm:$0xff]
      %v8338 = vld [vmem:[#allocation2 + $0x50] sm:$0xff]
      %v8339 = vld [vmem:[#allocation2 + $0x58] sm:$0xff]
      %v8340 = vld [vmem:[#allocation2 + $0x60] sm:$0xff]
      %v8341 = vld [vmem:[#allocation2 + $0x68] sm:$0xff]
      %v8342 = vld [vmem:[#allocation2 + $0x70] sm:$0xff]
      %v8343 = vld [vmem:[#allocation2 + $0x78] sm:$0xff]
      %v8344 = vld [vmem:[#allocation2 + $0x80] sm:$0xff]
      %v8345 = vld [vmem:[#allocation2 + $0x88] sm:$0xff]
      %v8346 = vld [vmem:[#allocation2 + $0x90] sm:$0xff]
      %v8347 = vld [vmem:[#allocation2 + $0x98] sm:$0xff]
      %v8348 = vld [vmem:[#allocation2 + $0xa0] sm:$0xff]
      %v8349 = vld [vmem:[#allocation2 + $0xa8] sm:$0xff]
      %v8350 = vld [vmem:[#allocation2 + $0xb0] sm:$0xff]
      %v8351 = vld [vmem:[#allocation2 + $0xb8] sm:$0xff]
      %v8352 = vld [vmem:[#allocation2 + $0xc0] sm:$0xff]
      %v8353 = vld [vmem:[#allocation2 + $0xc8] sm:$0xff]
      %v8354 = vld [vmem:[#allocation2 + $0xd0] sm:$0xff]
      %v8355 = vld [vmem:[#allocation2 + $0xd8] sm:$0xff]
      %v8356 = vld [vmem:[#allocation2 + $0xe0] sm:$0xff]
      %v8357 = vld [vmem:[#allocation2 + $0xe8] sm:$0xff]
      %v8358 = vld [vmem:[#allocation2 + $0xf0] sm:$0xff]
      %v8359 = vld [vmem:[#allocation2 + $0xf8] sm:$0xff]
      %v8360 = vld [vmem:[#allocation2 + $0x100] sm:$0xff]
      %v8361 = vld [vmem:[#allocation2 + $0x108] sm:$0xff]
      %v8362 = vld [vmem:[#allocation2 + $0x110] sm:$0xff]
      %v8363 = vld [vmem:[#allocation2 + $0x118] sm:$0xff]
      %v8364 = vld [vmem:[#allocation2 + $0x120] sm:$0xff]
      %v8365 = vld [vmem:[#allocation2 + $0x128] sm:$0xff]
      %v8366 = vld [vmem:[#allocation2 + $0x130] sm:$0xff]
      %v8367 = vld [vmem:[#allocation2 + $0x138] sm:$0xff]
      %v8368 = vld [vmem:[#allocation2 + $0x140] sm:$0xff]
      %v8369 = vld [vmem:[#allocation2 + $0x148] sm:$0xff]
      %v8370 = vld [vmem:[#allocation2 + $0x150] sm:$0xff]
      %v8371 = vld [vmem:[#allocation2 + $0x158] sm:$0xff]
      %v8372 = vld [vmem:[#allocation2 + $0x160] sm:$0xff]
      %v8373 = vld [vmem:[#allocation2 + $0x168] sm:$0xff]
      %v8374 = vld [vmem:[#allocation2 + $0x170] sm:$0xff]
      %v8375 = vld [vmem:[#allocation2 + $0x178] sm:$0xff]
      %v8376 = vld [vmem:[#allocation2 + $0x180] sm:$0xff]
      %v8377 = vld [vmem:[#allocation2 + $0x188] sm:$0xff]
      %v8378 = vld [vmem:[#allocation2 + $0x190] sm:$0xff]
      %v8379 = vld [vmem:[#allocation2 + $0x198] sm:$0xff]
      %v8380 = vld [vmem:[#allocation2 + $0x1a0] sm:$0xff]
      %v8381 = vld [vmem:[#allocation2 + $0x1a8] sm:$0xff]
      %v8382 = vld [vmem:[#allocation2 + $0x1b0] sm:$0xff]
      %v8383 = vld [vmem:[#allocation2 + $0x1b8] sm:$0xff]
      %v8384 = vld [vmem:[#allocation2 + $0x1c0] sm:$0xff]
      %v8385 = vld [vmem:[#allocation2 + $0x1c8] sm:$0xff]
      %v8386 = vld [vmem:[#allocation2 + $0x1d0] sm:$0xff]
      %v8387 = vld [vmem:[#allocation2 + $0x1d8] sm:$0xff]
      %v8388 = vld [vmem:[#allocation2 + $0x1e0] sm:$0xff]
      %v8389 = vld [vmem:[#allocation2 + $0x1e8] sm:$0xff]
      %v8390 = vld [vmem:[#allocation2 + $0x1f0] sm:$0xff]
      %v8391 = vld [vmem:[#allocation2 + $0x1f8] sm:$0xff]
      %v8392 = vld [vmem:[#allocation2 + $0x200] sm:$0xff]
      %v8393 = vld [vmem:[#allocation2 + $0x208] sm:$0xff]
      %v8394 = vld [vmem:[#allocation2 + $0x210] sm:$0xff]
      %v8395 = vmax.f32 %v8267, %v8331
      %v8396 = vmax.f32 %v8268, %v8332
      %v8397 = vmax.f32 %v8269, %v8333
      %v8398 = vmax.f32 %v8270, %v8334
      %v8399 = vmax.f32 %v8271, %v8335
      %v8400 = vmax.f32 %v8272, %v8336
      %v8401 = vmax.f32 %v8273, %v8337
      %v8402 = vmax.f32 %v8274, %v8338
      %v8403 = vmax.f32 %v8275, %v8339
      %v8404 = vmax.f32 %v8276, %v8340
      %v8405 = vmax.f32 %v8277, %v8341
      %v8406 = vmax.f32 %v8278, %v8342
      %v8407 = vmax.f32 %v8279, %v8343
      %v8408 = vmax.f32 %v8280, %v8344
      %v8409 = vmax.f32 %v8281, %v8345
      %v8410 = vmax.f32 %v8282, %v8346
      %v8411 = vmax.f32 %v8283, %v8347
      %v8412 = vmax.f32 %v8284, %v8348
      %v8413 = vmax.f32 %v8285, %v8349
      %v8414 = vmax.f32 %v8286, %v8350
      %v8415 = vmax.f32 %v8287, %v8351
      %v8416 = vmax.f32 %v8288, %v8352
      %v8417 = vmax.f32 %v8289, %v8353
      %v8418 = vmax.f32 %v8290, %v8354
      %v8419 = vmax.f32 %v8291, %v8355
      %v8420 = vmax.f32 %v8292, %v8356
      %v8421 = vmax.f32 %v8293, %v8357
      %v8422 = vmax.f32 %v8294, %v8358
      %v8423 = vmax.f32 %v8295, %v8359
      %v8424 = vmax.f32 %v8296, %v8360
      %v8425 = vmax.f32 %v8297, %v8361
      %v8426 = vmax.f32 %v8298, %v8362
      %v8427 = vmax.f32 %v8299, %v8363
      %v8428 = vmax.f32 %v8300, %v8364
      %v8429 = vmax.f32 %v8301, %v8365
      %v8430 = vmax.f32 %v8302, %v8366
      %v8431 = vmax.f32 %v8303, %v8367
      %v8432 = vmax.f32 %v8304, %v8368
      %v8433 = vmax.f32 %v8305, %v8369
      %v8434 = vmax.f32 %v8306, %v8370
      %v8435 = vmax.f32 %v8307, %v8371
      %v8436 = vmax.f32 %v8308, %v8372
      %v8437 = vmax.f32 %v8309, %v8373
      %v8438 = vmax.f32 %v8310, %v8374
      %v8439 = vmax.f32 %v8311, %v8375
      %v8440 = vmax.f32 %v8312, %v8376
      %v8441 = vmax.f32 %v8313, %v8377
      %v8442 = vmax.f32 %v8314, %v8378
      %v8443 = vmax.f32 %v8315, %v8379
      %v8444 = vmax.f32 %v8316, %v8380
      %v8445 = vmax.f32 %v8317, %v8381
      %v8446 = vmax.f32 %v8318, %v8382
      %v8447 = vmax.f32 %v8319, %v8383
      %v8448 = vmax.f32 %v8320, %v8384
      %v8449 = vmax.f32 %v8321, %v8385
      %v8450 = vmax.f32 %v8322, %v8386
      %v8451 = vmax.f32 %v8323, %v8387
      %v8452 = vmax.f32 %v8324, %v8388
      %v8453 = vmax.f32 %v8325, %v8389
      %v8454 = vmax.f32 %v8326, %v8390
      %v8455 = vmax.f32 %v8327, %v8391
      %v8456 = vmax.f32 %v8328, %v8392
      %v8457 = vmax.f32 %v8329, %v8393
      %v8458 = vmax.f32 %v8330, %v8394
      %v8459 = vld [vmem:[#allocation2 + $0x211] sm:$0xff]
      %v8460 = vmax.f32 %v8395, %v8204
      %v8461 = vmax.f32 %v8396, %v8205
      %v8462 = vmax.f32 %v8397, %v8206
      %v8463 = vmax.f32 %v8398, %v8207
      %v8464 = vmax.f32 %v8399, %v8208
      %v8465 = vmax.f32 %v8400, %v8209
      %v8466 = vmax.f32 %v8401, %v8210
      %v8467 = vmax.f32 %v8402, %v8211
      %v8468 = vmax.f32 %v8403, %v8212
      %v8469 = vmax.f32 %v8404, %v8213
      %v8470 = vmax.f32 %v8405, %v8214
      %v8471 = vmax.f32 %v8406, %v8215
      %v8472 = vmax.f32 %v8407, %v8216
      %v8473 = vmax.f32 %v8408, %v8217
      %v8474 = vmax.f32 %v8409, %v8218
      %v8475 = vmax.f32 %v8410, %v8219
      %v8476 = vmax.f32 %v8411, %v8220
      %v8477 = vmax.f32 %v8412, %v8221
      %v8478 = vmax.f32 %v8413, %v8222
      %v8479 = vmax.f32 %v8414, %v8223
      %v8480 = vmax.f32 %v8415, %v8224
      %v8481 = vmax.f32 %v8416, %v8225
      %v8482 = vmax.f32 %v8417, %v8226
      %v8483 = vmax.f32 %v8418, %v8227
      %v8484 = vmax.f32 %v8419, %v8228
      %v8485 = vmax.f32 %v8420, %v8229
      %v8486 = vmax.f32 %v8421, %v8230
      %v8487 = vmax.f32 %v8422, %v8231
      %v8488 = vmax.f32 %v8423, %v8232
      %v8489 = vmax.f32 %v8424, %v8233
      %v8490 = vmax.f32 %v8425, %v8234
      %v8491 = vmax.f32 %v8426, %v8235
      %v8492 = vmax.f32 %v8427, %v8236
      %v8493 = vmax.f32 %v8428, %v8237
      %v8494 = vmax.f32 %v8429, %v8238
      %v8495 = vmax.f32 %v8430, %v8239
      %v8496 = vmax.f32 %v8431, %v8240
      %v8497 = vmax.f32 %v8432, %v8241
      %v8498 = vmax.f32 %v8433, %v8242
      %v8499 = vmax.f32 %v8434, %v8243
      %v8500 = vmax.f32 %v8435, %v8244
      %v8501 = vmax.f32 %v8436, %v8245
      %v8502 = vmax.f32 %v8437, %v8246
      %v8503 = vmax.f32 %v8438, %v8247
      %v8504 = vmax.f32 %v8439, %v8248
      %v8505 = vmax.f32 %v8440, %v8249
      %v8506 = vmax.f32 %v8441, %v8250
      %v8507 = vmax.f32 %v8442, %v8251
      %v8508 = vmax.f32 %v8443, %v8252
      %v8509 = vmax.f32 %v8444, %v8253
      %v8510 = vmax.f32 %v8445, %v8254
      %v8511 = vmax.f32 %v8446, %v8255
      %v8512 = vmax.f32 %v8447, %v8256
      %v8513 = vmax.f32 %v8448, %v8257
      %v8514 = vmax.f32 %v8449, %v8258
      %v8515 = vmax.f32 %v8450, %v8259
      %v8516 = vmax.f32 %v8451, %v8260
      %v8517 = vmax.f32 %v8452, %v8261
      %v8518 = vmax.f32 %v8453, %v8262
      %v8519 = vmax.f32 %v8454, %v8263
      %v8520 = vmax.f32 %v8455, %v8264
      %v8521 = vmax.f32 %v8456, %v8265
      %v8522 = vmax.f32 %v8457, %v8266
      %v8523 = vmax.f32 %v8458, %v8459
      %v8524 = vmul.f32 %v8460, %v711
      %v8525 = vmul.f32 %v8461, %v712
      %v8526 = vmul.f32 %v8462, %v713
      %v8527 = vmul.f32 %v8463, %v714
      %v8528 = vmul.f32 %v8464, %v715
      %v8529 = vmul.f32 %v8465, %v716
      %v8530 = vmul.f32 %v8466, %v717
      %v8531 = vmul.f32 %v8467, %v718
      %v8532 = vmul.f32 %v8468, %v719
      %v8533 = vmul.f32 %v8469, %v720
      %v8534 = vmul.f32 %v8470, %v721
      %v8535 = vmul.f32 %v8471, %v722
      %v8536 = vmul.f32 %v8472, %v723
      %v8537 = vmul.f32 %v8473, %v724
      %v8538 = vmul.f32 %v8474, %v725
      %v8539 = vmul.f32 %v8475, %v726
      %v8540 = vmul.f32 %v8476, %v727
      %v8541 = vmul.f32 %v8477, %v728
      %v8542 = vmul.f32 %v8478, %v729
      %v8543 = vmul.f32 %v8479, %v730
      %v8544 = vmul.f32 %v8480, %v731
      %v8545 = vmul.f32 %v8481, %v732
      %v8546 = vmul.f32 %v8482, %v733
      %v8547 = vmul.f32 %v8483, %v734
      %v8548 = vmul.f32 %v8484, %v735
      %v8549 = vmul.f32 %v8485, %v736
      %v8550 = vmul.f32 %v8486, %v737
      %v8551 = vmul.f32 %v8487, %v738
      %v8552 = vmul.f32 %v8488, %v739
      %v8553 = vmul.f32 %v8489, %v740
      %v8554 = vmul.f32 %v8490, %v741
      %v8555 = vmul.f32 %v8491, %v742
      %v8556 = vmul.f32 %v8492, %v743
      %v8557 = vmul.f32 %v8493, %v744
      %v8558 = vmul.f32 %v8494, %v745
      %v8559 = vmul.f32 %v8495, %v746
      %v8560 = vmul.f32 %v8496, %v747
      %v8561 = vmul.f32 %v8497, %v748
      %v8562 = vmul.f32 %v8498, %v749
      %v8563 = vmul.f32 %v8499, %v750
      %v8564 = vmul.f32 %v8500, %v751
      %v8565 = vmul.f32 %v8501, %v752
      %v8566 = vmul.f32 %v8502, %v753
      %v8567 = vmul.f32 %v8503, %v754
      %v8568 = vmul.f32 %v8504, %v755
      %v8569 = vmul.f32 %v8505, %v756
      %v8570 = vmul.f32 %v8506, %v757
      %v8571 = vmul.f32 %v8507, %v758
      %v8572 = vmul.f32 %v8508, %v759
      %v8573 = vmul.f32 %v8509, %v760
      %v8574 = vmul.f32 %v8510, %v761
      %v8575 = vmul.f32 %v8511, %v762
      %v8576 = vmul.f32 %v8512, %v763
      %v8577 = vmul.f32 %v8513, %v764
      %v8578 = vmul.f32 %v8514, %v765
      %v8579 = vmul.f32 %v8515, %v766
      %v8580 = vmul.f32 %v8516, %v767
      %v8581 = vmul.f32 %v8517, %v768
      %v8582 = vmul.f32 %v8518, %v769
      %v8583 = vmul.f32 %v8519, %v770
      %v8584 = vmul.f32 %v8520, %v771
      %v8585 = vmul.f32 %v8521, %v772
      %v8586 = vmul.f32 %v8522, %v773
      %v8587 = vmul.f32 %v8523, %v774
      %v8588 = vld [vmem:[%s2] sm:$0xff]
      %v8589 = vld [vmem:[%s2 + $0x8] sm:$0xff]
      %v8590 = vld [vmem:[%s2 + $0x10] sm:$0xff]
      %v8591 = vld [vmem:[%s2 + $0x18] sm:$0xff]
      %v8593 = vsel %vm1095, %v8524, 0
      %v8596 = vsel %vm1095, %v8525, 0
      %v8599 = vsel %vm1095, %v8526, 0
      %v8602 = vsel %vm1095, %v8527, 0
      %v8605 = vsel %vm1095, %v8528, 0
      %v8608 = vsel %vm1095, %v8529, 0
      %v8611 = vsel %vm1095, %v8530, 0
      %v8614 = vsel %vm1095, %v8531, 0
      %v8617 = vsel %vm1095, %v8532, 0
      %v8620 = vsel %vm1095, %v8533, 0
      %v8623 = vsel %vm1095, %v8534, 0
      %v8626 = vsel %vm1095, %v8535, 0
      %v8629 = vsel %vm1095, %v8536, 0
      %v8632 = vsel %vm1095, %v8537, 0
      %v8635 = vsel %vm1095, %v8538, 0
      %v8638 = vsel %vm1095, %v8539, 0
      %v8641 = vsel %vm1095, %v8540, 0
      %v8644 = vsel %vm1095, %v8541, 0
      %v8647 = vsel %vm1095, %v8542, 0
      %v8650 = vsel %vm1095, %v8543, 0
      %v8653 = vsel %vm1095, %v8544, 0
      %v8656 = vsel %vm1095, %v8545, 0
      %v8659 = vsel %vm1095, %v8546, 0
      %v8662 = vsel %vm1095, %v8547, 0
      %v8665 = vsel %vm1095, %v8548, 0
      %v8668 = vsel %vm1095, %v8549, 0
      %v8671 = vsel %vm1095, %v8550, 0
      %v8674 = vsel %vm1095, %v8551, 0
      %v8677 = vsel %vm1095, %v8552, 0
      %v8680 = vsel %vm1095, %v8553, 0
      %v8683 = vsel %vm1095, %v8554, 0
      %v8686 = vsel %vm1095, %v8555, 0
      %v8689 = vsel %vm1095, %v8556, 0
      %v8692 = vsel %vm1095, %v8557, 0
      %v8695 = vsel %vm1095, %v8558, 0
      %v8698 = vsel %vm1095, %v8559, 0
      %v8701 = vsel %vm1095, %v8560, 0
      %v8704 = vsel %vm1095, %v8561, 0
      %v8707 = vsel %vm1095, %v8562, 0
      %v8710 = vsel %vm1095, %v8563, 0
      %v8713 = vsel %vm1095, %v8564, 0
      %v8716 = vsel %vm1095, %v8565, 0
      %v8719 = vsel %vm1095, %v8566, 0
      %v8722 = vsel %vm1095, %v8567, 0
      %v8725 = vsel %vm1095, %v8568, 0
      %v8728 = vsel %vm1095, %v8569, 0
      %v8731 = vsel %vm1095, %v8570, 0
      %v8734 = vsel %vm1095, %v8571, 0
      %v8737 = vsel %vm1095, %v8572, 0
      %v8740 = vsel %vm1095, %v8573, 0
      %v8743 = vsel %vm1095, %v8574, 0
      %v8746 = vsel %vm1095, %v8575, 0
      %v8749 = vsel %vm1095, %v8576, 0
      %v8752 = vsel %vm1095, %v8577, 0
      %v8755 = vsel %vm1095, %v8578, 0
      %v8758 = vsel %vm1095, %v8579, 0
      %v8761 = vsel %vm1095, %v8580, 0
      %v8764 = vsel %vm1095, %v8581, 0
      %v8767 = vsel %vm1095, %v8582, 0
      %v8770 = vsel %vm1095, %v8583, 0
      %v8773 = vsel %vm1095, %v8584, 0
      %v8776 = vsel %vm1095, %v8585, 0
      %v8779 = vsel %vm1095, %v8586, 0
      %v8782 = vsel %vm1095, %v8587, 0
      %8784 = vmatprep.subr.mxu0 0.0
      %8785 = vmatpush1.msra.mxu0 %v8588
      %8786 = vmatprep.subr.mxu0 0.0
      %8787 = vmatpush1.msra.mxu0 %v8589
      %8788 = vmatprep.subr.mxu0 0.0
      %8789 = vmatpush1.msra.mxu0 %v8590
      %8790 = vmatprep.subr.mxu0 0.0
      %8791 = vmatpush1.msra.mxu0 %v8591
      %8792 = vmatprep.subr.mxu0 0.0
      %8793 = vmatpush1.msra.mxu0 0.0
      %8794 = vmatprep.subr.mxu0 0.0
      %8795 = vmatpush1.msra.mxu0 0.0
      %8796 = vmatprep.subr.mxu0 0.0
      %8797 = vmatpush1.msra.mxu0 0.0
      %8798 = vmatprep.subr.mxu0 0.0
      %8799 = vmatpush1.msra.mxu0 0.0
      %8800 = vmatprep.subr.mxu0 0.0
      %8801 = vmatpush1.msra.mxu0 0.0
      %8802 = vmatprep.subr.mxu0 0.0
      %8803 = vmatpush1.msra.mxu0 0.0
      %8804 = vmatprep.subr.mxu0 0.0
      %8805 = vmatpush1.msra.mxu0 0.0
      %8806 = vmatprep.subr.mxu0 0.0
      %8807 = vmatpush1.msra.mxu0 0.0
      %8808 = vmatprep.subr.mxu0 0.0
      %8809 = vmatpush1.msra.mxu0 0.0
      %8810 = vmatprep.subr.mxu0 0.0
      %8811 = vmatpush1.msra.mxu0 0.0
      %8812 = vmatprep.subr.mxu0 0.0
      %8813 = vmatpush1.msra.mxu0 0.0
      %8814 = vmatprep.subr.mxu0 0.0
      %8815 = vmatpush1.msra.mxu0 0.0
      %8816 = vmatprep.subr.mxu0 0.0
      %8817 = vmatpush1.msra.mxu0 0.0
      %8818 = vmatprep.subr.mxu0 0.0
      %8819 = vmatpush1.msra.mxu0 0.0
      %8820 = vmatprep.subr.mxu0 0.0
      %8821 = vmatpush1.msra.mxu0 0.0
      %8822 = vmatprep.subr.mxu0 0.0
      %8823 = vmatpush1.msra.mxu0 0.0
      %8824 = vmatprep.subr.mxu0 0.0
      %8825 = vmatpush1.msra.mxu0 0.0
      %8826 = vmatprep.subr.mxu0 0.0
      %8827 = vmatpush1.msra.mxu0 0.0
      %8828 = vmatprep.subr.mxu0 0.0
      %8829 = vmatpush1.msra.mxu0 0.0
      %8830 = vmatprep.subr.mxu0 0.0
      %8831 = vmatpush1.msra.mxu0 0.0
      %8832 = vmatprep.subr.mxu0 0.0
      %8833 = vmatpush1.msra.mxu0 0.0
      %8834 = vmatprep.subr.mxu0 0.0
      %8835 = vmatpush1.msra.mxu0 0.0
      %8836 = vmatprep.subr.mxu0 0.0
      %8837 = vmatpush1.msra.mxu0 0.0
      %8838 = vmatprep.subr.mxu0 0.0
      %8839 = vmatpush1.msra.mxu0 0.0
      %8840 = vmatprep.subr.mxu0 0.0
      %8841 = vmatpush1.msra.mxu0 0.0
      %8842 = vmatprep.subr.mxu0 0.0
      %8843 = vmatpush1.msra.mxu0 0.0
      %8844 = vmatprep.subr.mxu0 0.0
      %8845 = vmatpush1.msra.mxu0 0.0
      %8846 = vmatprep.subr.mxu0 0.0
      %8847 = vmatpush1.msra.mxu0 0.0
      %8848 = vmatprep.mubr.f32.mxu0 0.0
      %8849 = vmatmul.mubr.f32.gmra.mrb[0].mxu0 %v8593
      %v8850 = vpop.f32.mrb[0].mxu0
      %v8851 = vadd.f32 0.0, %v8850
      %v8852 = vpop.f32.mrb[0].mxu0
      %8853 = vmatprep.mubr.f32.mxu0 0.0
      %8854 = vmatmul.mubr.f32.gmra.mrb[0].mxu0 %v8596
      %v8855 = vpop.f32.mrb[0].mxu0
      %v8856 = vadd.f32 0.0, %v8855
      %v8857 = vpop.f32.mrb[0].mxu0
      %8858 = vmatprep.mubr.f32.mxu0 0.0
      %8859 = vmatmul.mubr.f32.gmra.mrb[0].mxu0 %v8599
      %v8860 = vpop.f32.mrb[0].mxu0
      %v8861 = vadd.f32 0.0, %v8860
      %v8862 = vpop.f32.mrb[0].mxu0
      %8863 = vmatprep.mubr.f32.mxu0 0.0
      %8864 = vmatmul.mubr.f32.gmra.mrb[0].mxu0 %v8602
      %v8865 = vpop.f32.mrb[0].mxu0
      %v8866 = vadd.f32 0.0, %v8865
      %v8867 = vpop.f32.mrb[0].mxu0
      %8868 = vmatprep.mubr.f32.mxu0 0.0
      %8869 = vmatmul.mubr.f32.gmra.mrb[0].mxu0 %v8605
      %v8870 = vpop.f32.mrb[0].mxu0
      %v8871 = vadd.f32 0.0, %v8870
      %v8872 = vpop.f32.mrb[0].mxu0
      %8873 = vmatprep.mubr.f32.mxu0 0.0
      %8874 = vmatmul.mubr.f32.gmra.mrb[0].mxu0 %v8608
      %v8875 = vpop.f32.mrb[0].mxu0
      %v8876 = vadd.f32 0.0, %v8875
      %v8877 = vpop.f32.mrb[0].mxu0
      %8878 = vmatprep.mubr.f32.mxu0 0.0
      %8879 = vmatmul.mubr.f32.gmra.mrb[0].mxu0 %v8611
      %v8880 = vpop.f32.mrb[0].mxu0
      %v8881 = vadd.f32 0.0, %v8880
      %v8882 = vpop.f32.mrb[0].mxu0
      %8883 = vmatprep.mubr.f32.mxu0 0.0
      %8884 = vmatmul.mubr.f32.gmra.mrb[0].mxu0 %v8614
      %v8885 = vpop.f32.mrb[0].mxu0
      %v8886 = vadd.f32 0.0, %v8885
      %v8887 = vpop.f32.mrb[0].mxu0
      %8888 = vmatprep.mubr.f32.mxu0 0.0
      %8889 = vmatmul.mubr.f32.gmra.mrb[0].mxu0 %v8617
      %v8890 = vpop.f32.mrb[0].mxu0
      %v8891 = vadd.f32 0.0, %v8890
      %v8892 = vpop.f32.mrb[0].mxu0
      %8893 = vmatprep.mubr.f32.mxu0 0.0
      %8894 = vmatmul.mubr.f32.gmra.mrb[0].mxu0 %v8620
      %v8895 = vpop.f32.mrb[0].mxu0
      %v8896 = vadd.f32 0.0, %v8895
      %v8897 = vpop.f32.mrb[0].mxu0
      %8898 = vmatprep.mubr.f32.mxu0 0.0
      %8899 = vmatmul.mubr.f32.gmra.mrb[0].mxu0 %v8623
      %v8900 = vpop.f32.mrb[0].mxu0
      %v8901 = vadd.f32 0.0, %v8900
      %v8902 = vpop.f32.mrb[0].mxu0
      %8903 = vmatprep.mubr.f32.mxu0 0.0
      %8904 = vmatmul.mubr.f32.gmra.mrb[0].mxu0 %v8626
      %v8905 = vpop.f32.mrb[0].mxu0
      %v8906 = vadd.f32 0.0, %v8905
      %v8907 = vpop.f32.mrb[0].mxu0
      %8908 = vmatprep.mubr.f32.mxu0 0.0
      %8909 = vmatmul.mubr.f32.gmra.mrb[0].mxu0 %v8629
      %v8910 = vpop.f32.mrb[0].mxu0
      %v8911 = vadd.f32 0.0, %v8910
      %v8912 = vpop.f32.mrb[0].mxu0
      %8913 = vmatprep.mubr.f32.mxu0 0.0
      %8914 = vmatmul.mubr.f32.gmra.mrb[0].mxu0 %v8632
      %v8915 = vpop.f32.mrb[0].mxu0
      %v8916 = vadd.f32 0.0, %v8915
      %v8917 = vpop.f32.mrb[0].mxu0
      %8918 = vmatprep.mubr.f32.mxu0 0.0
      %8919 = vmatmul.mubr.f32.gmra.mrb[0].mxu0 %v8635
      %v8920 = vpop.f32.mrb[0].mxu0
      %v8921 = vadd.f32 0.0, %v8920
      %v8922 = vpop.f32.mrb[0].mxu0
      %8923 = vmatprep.mubr.f32.mxu0 0.0
      %8924 = vmatmul.mubr.f32.gmra.mrb[0].mxu0 %v8638
      %v8925 = vpop.f32.mrb[0].mxu0
      %v8926 = vadd.f32 0.0, %v8925
      %v8927 = vpop.f32.mrb[0].mxu0
      %8928 = vmatprep.mubr.f32.mxu0 0.0
      %8929 = vmatmul.mubr.f32.gmra.mrb[0].mxu0 %v8641
      %v8930 = vpop.f32.mrb[0].mxu0
      %v8931 = vadd.f32 0.0, %v8930
      %v8932 = vpop.f32.mrb[0].mxu0
      %8933 = vmatprep.mubr.f32.mxu0 0.0
      %8934 = vmatmul.mubr.f32.gmra.mrb[0].mxu0 %v8644
      %v8935 = vpop.f32.mrb[0].mxu0
      %v8936 = vadd.f32 0.0, %v8935
      %v8937 = vpop.f32.mrb[0].mxu0
      %8938 = vmatprep.mubr.f32.mxu0 0.0
      %8939 = vmatmul.mubr.f32.gmra.mrb[0].mxu0 %v8647
      %v8940 = vpop.f32.mrb[0].mxu0
      %v8941 = vadd.f32 0.0, %v8940
      %v8942 = vpop.f32.mrb[0].mxu0
      %8943 = vmatprep.mubr.f32.mxu0 0.0
      %8944 = vmatmul.mubr.f32.gmra.mrb[0].mxu0 %v8650
      %v8945 = vpop.f32.mrb[0].mxu0
      %v8946 = vadd.f32 0.0, %v8945
      %v8947 = vpop.f32.mrb[0].mxu0
      %8948 = vmatprep.mubr.f32.mxu0 0.0
      %8949 = vmatmul.mubr.f32.gmra.mrb[0].mxu0 %v8653
      %v8950 = vpop.f32.mrb[0].mxu0
      %v8951 = vadd.f32 0.0, %v8950
      %v8952 = vpop.f32.mrb[0].mxu0
      %8953 = vmatprep.mubr.f32.mxu0 0.0
      %8954 = vmatmul.mubr.f32.gmra.mrb[0].mxu0 %v8656
      %v8955 = vpop.f32.mrb[0].mxu0
      %v8956 = vadd.f32 0.0, %v8955
      %v8957 = vpop.f32.mrb[0].mxu0
      %8958 = vmatprep.mubr.f32.mxu0 0.0
      %8959 = vmatmul.mubr.f32.gmra.mrb[0].mxu0 %v8659
      %v8960 = vpop.f32.mrb[0].mxu0
      %v8961 = vadd.f32 0.0, %v8960
      %v8962 = vpop.f32.mrb[0].mxu0
      %8963 = vmatprep.mubr.f32.mxu0 0.0
      %8964 = vmatmul.mubr.f32.gmra.mrb[0].mxu0 %v8662
      %v8965 = vpop.f32.mrb[0].mxu0
      %v8966 = vadd.f32 0.0, %v8965
      %v8967 = vpop.f32.mrb[0].mxu0
      %8968 = vmatprep.mubr.f32.mxu0 0.0
      %8969 = vmatmul.mubr.f32.gmra.mrb[0].mxu0 %v8665
      %v8970 = vpop.f32.mrb[0].mxu0
      %v8971 = vadd.f32 0.0, %v8970
      %v8972 = vpop.f32.mrb[0].mxu0
      %8973 = vmatprep.mubr.f32.mxu0 0.0
      %8974 = vmatmul.mubr.f32.gmra.mrb[0].mxu0 %v8668
      %v8975 = vpop.f32.mrb[0].mxu0
      %v8976 = vadd.f32 0.0, %v8975
      %v8977 = vpop.f32.mrb[0].mxu0
      %8978 = vmatprep.mubr.f32.mxu0 0.0
      %8979 = vmatmul.mubr.f32.gmra.mrb[0].mxu0 %v8671
      %v8980 = vpop.f32.mrb[0].mxu0
      %v8981 = vadd.f32 0.0, %v8980
      %v8982 = vpop.f32.mrb[0].mxu0
      %8983 = vmatprep.mubr.f32.mxu0 0.0
      %8984 = vmatmul.mubr.f32.gmra.mrb[0].mxu0 %v8674
      %v8985 = vpop.f32.mrb[0].mxu0
      %v8986 = vadd.f32 0.0, %v8985
      %v8987 = vpop.f32.mrb[0].mxu0
      %8988 = vmatprep.mubr.f32.mxu0 0.0
      %8989 = vmatmul.mubr.f32.gmra.mrb[0].mxu0 %v8677
      %v8990 = vpop.f32.mrb[0].mxu0
      %v8991 = vadd.f32 0.0, %v8990
      %v8992 = vpop.f32.mrb[0].mxu0
      %8993 = vmatprep.mubr.f32.mxu0 0.0
      %8994 = vmatmul.mubr.f32.gmra.mrb[0].mxu0 %v8680
      %v8995 = vpop.f32.mrb[0].mxu0
      %v8996 = vadd.f32 0.0, %v8995
      %v8997 = vpop.f32.mrb[0].mxu0
      %8998 = vmatprep.mubr.f32.mxu0 0.0
      %8999 = vmatmul.mubr.f32.gmra.mrb[0].mxu0 %v8683
      %v9000 = vpop.f32.mrb[0].mxu0
      %v9001 = vadd.f32 0.0, %v9000
      %v9002 = vpop.f32.mrb[0].mxu0
      %9003 = vmatprep.mubr.f32.mxu0 0.0
      %9004 = vmatmul.mubr.f32.gmra.mrb[0].mxu0 %v8686
      %v9005 = vpop.f32.mrb[0].mxu0
      %v9006 = vadd.f32 0.0, %v9005
      %v9007 = vpop.f32.mrb[0].mxu0
      %9008 = vmatprep.mubr.f32.mxu0 0.0
      %9009 = vmatmul.mubr.f32.gmra.mrb[0].mxu0 %v8689
      %v9010 = vpop.f32.mrb[0].mxu0
      %v9011 = vadd.f32 0.0, %v9010
      %v9012 = vpop.f32.mrb[0].mxu0
      %9013 = vmatprep.mubr.f32.mxu0 0.0
      %9014 = vmatmul.mubr.f32.gmra.mrb[0].mxu0 %v8692
      %v9015 = vpop.f32.mrb[0].mxu0
      %v9016 = vadd.f32 0.0, %v9015
      %v9017 = vpop.f32.mrb[0].mxu0
      %9018 = vmatprep.mubr.f32.mxu0 0.0
      %9019 = vmatmul.mubr.f32.gmra.mrb[0].mxu0 %v8695
      %v9020 = vpop.f32.mrb[0].mxu0
      %v9021 = vadd.f32 0.0, %v9020
      %v9022 = vpop.f32.mrb[0].mxu0
      %9023 = vmatprep.mubr.f32.mxu0 0.0
      %9024 = vmatmul.mubr.f32.gmra.mrb[0].mxu0 %v8698
      %v9025 = vpop.f32.mrb[0].mxu0
      %v9026 = vadd.f32 0.0, %v9025
      %v9027 = vpop.f32.mrb[0].mxu0
      %9028 = vmatprep.mubr.f32.mxu0 0.0
      %9029 = vmatmul.mubr.f32.gmra.mrb[0].mxu0 %v8701
      %v9030 = vpop.f32.mrb[0].mxu0
      %v9031 = vadd.f32 0.0, %v9030
      %v9032 = vpop.f32.mrb[0].mxu0
      %9033 = vmatprep.mubr.f32.mxu0 0.0
      %9034 = vmatmul.mubr.f32.gmra.mrb[0].mxu0 %v8704
      %v9035 = vpop.f32.mrb[0].mxu0
      %v9036 = vadd.f32 0.0, %v9035
      %v9037 = vpop.f32.mrb[0].mxu0
      %9038 = vmatprep.mubr.f32.mxu0 0.0
      %9039 = vmatmul.mubr.f32.gmra.mrb[0].mxu0 %v8707
      %v9040 = vpop.f32.mrb[0].mxu0
      %v9041 = vadd.f32 0.0, %v9040
      %v9042 = vpop.f32.mrb[0].mxu0
      %9043 = vmatprep.mubr.f32.mxu0 0.0
      %9044 = vmatmul.mubr.f32.gmra.mrb[0].mxu0 %v8710
      %v9045 = vpop.f32.mrb[0].mxu0
      %v9046 = vadd.f32 0.0, %v9045
      %v9047 = vpop.f32.mrb[0].mxu0
      %9048 = vmatprep.mubr.f32.mxu0 0.0
      %9049 = vmatmul.mubr.f32.gmra.mrb[0].mxu0 %v8713
      %v9050 = vpop.f32.mrb[0].mxu0
      %v9051 = vadd.f32 0.0, %v9050
      %v9052 = vpop.f32.mrb[0].mxu0
      %9053 = vmatprep.mubr.f32.mxu0 0.0
      %9054 = vmatmul.mubr.f32.gmra.mrb[0].mxu0 %v8716
      %v9055 = vpop.f32.mrb[0].mxu0
      %v9056 = vadd.f32 0.0, %v9055
      %v9057 = vpop.f32.mrb[0].mxu0
      %9058 = vmatprep.mubr.f32.mxu0 0.0
      %9059 = vmatmul.mubr.f32.gmra.mrb[0].mxu0 %v8719
      %v9060 = vpop.f32.mrb[0].mxu0
      %v9061 = vadd.f32 0.0, %v9060
      %v9062 = vpop.f32.mrb[0].mxu0
      %9063 = vmatprep.mubr.f32.mxu0 0.0
      %9064 = vmatmul.mubr.f32.gmra.mrb[0].mxu0 %v8722
      %v9065 = vpop.f32.mrb[0].mxu0
      %v9066 = vadd.f32 0.0, %v9065
      %v9067 = vpop.f32.mrb[0].mxu0
      %9068 = vmatprep.mubr.f32.mxu0 0.0
      %9069 = vmatmul.mubr.f32.gmra.mrb[0].mxu0 %v8725
      %v9070 = vpop.f32.mrb[0].mxu0
      %v9071 = vadd.f32 0.0, %v9070
      %v9072 = vpop.f32.mrb[0].mxu0
      %9073 = vmatprep.mubr.f32.mxu0 0.0
      %9074 = vmatmul.mubr.f32.gmra.mrb[0].mxu0 %v8728
      %v9075 = vpop.f32.mrb[0].mxu0
      %v9076 = vadd.f32 0.0, %v9075
      %v9077 = vpop.f32.mrb[0].mxu0
      %9078 = vmatprep.mubr.f32.mxu0 0.0
      %9079 = vmatmul.mubr.f32.gmra.mrb[0].mxu0 %v8731
      %v9080 = vpop.f32.mrb[0].mxu0
      %v9081 = vadd.f32 0.0, %v9080
      %v9082 = vpop.f32.mrb[0].mxu0
      %9083 = vmatprep.mubr.f32.mxu0 0.0
      %9084 = vmatmul.mubr.f32.gmra.mrb[0].mxu0 %v8734
      %v9085 = vpop.f32.mrb[0].mxu0
      %v9086 = vadd.f32 0.0, %v9085
      %v9087 = vpop.f32.mrb[0].mxu0
      %9088 = vmatprep.mubr.f32.mxu0 0.0
      %9089 = vmatmul.mubr.f32.gmra.mrb[0].mxu0 %v8737
      %v9090 = vpop.f32.mrb[0].mxu0
      %v9091 = vadd.f32 0.0, %v9090
      %v9092 = vpop.f32.mrb[0].mxu0
      %9093 = vmatprep.mubr.f32.mxu0 0.0
      %9094 = vmatmul.mubr.f32.gmra.mrb[0].mxu0 %v8740
      %v9095 = vpop.f32.mrb[0].mxu0
      %v9096 = vadd.f32 0.0, %v9095
      %v9097 = vpop.f32.mrb[0].mxu0
      %9098 = vmatprep.mubr.f32.mxu0 0.0
      %9099 = vmatmul.mubr.f32.gmra.mrb[0].mxu0 %v8743
      %v9100 = vpop.f32.mrb[0].mxu0
      %v9101 = vadd.f32 0.0, %v9100
      %v9102 = vpop.f32.mrb[0].mxu0
      %9103 = vmatprep.mubr.f32.mxu0 0.0
      %9104 = vmatmul.mubr.f32.gmra.mrb[0].mxu0 %v8746
      %v9105 = vpop.f32.mrb[0].mxu0
      %v9106 = vadd.f32 0.0, %v9105
      %v9107 = vpop.f32.mrb[0].mxu0
      %9108 = vmatprep.mubr.f32.mxu0 0.0
      %9109 = vmatmul.mubr.f32.gmra.mrb[0].mxu0 %v8749
      %v9110 = vpop.f32.mrb[0].mxu0
      %v9111 = vadd.f32 0.0, %v9110
      %v9112 = vpop.f32.mrb[0].mxu0
      %9113 = vmatprep.mubr.f32.mxu0 0.0
      %9114 = vmatmul.mubr.f32.gmra.mrb[0].mxu0 %v8752
      %v9115 = vpop.f32.mrb[0].mxu0
      %v9116 = vadd.f32 0.0, %v9115
      %v9117 = vpop.f32.mrb[0].mxu0
      %9118 = vmatprep.mubr.f32.mxu0 0.0
      %9119 = vmatmul.mubr.f32.gmra.mrb[0].mxu0 %v8755
      %v9120 = vpop.f32.mrb[0].mxu0
      %v9121 = vadd.f32 0.0, %v9120
      %v9122 = vpop.f32.mrb[0].mxu0
      %9123 = vmatprep.mubr.f32.mxu0 0.0
      %9124 = vmatmul.mubr.f32.gmra.mrb[0].mxu0 %v8758
      %v9125 = vpop.f32.mrb[0].mxu0
      %v9126 = vadd.f32 0.0, %v9125
      %v9127 = vpop.f32.mrb[0].mxu0
      %9128 = vmatprep.mubr.f32.mxu0 0.0
      %9129 = vmatmul.mubr.f32.gmra.mrb[0].mxu0 %v8761
      %v9130 = vpop.f32.mrb[0].mxu0
      %v9131 = vadd.f32 0.0, %v9130
      %v9132 = vpop.f32.mrb[0].mxu0
      %9133 = vmatprep.mubr.f32.mxu0 0.0
      %9134 = vmatmul.mubr.f32.gmra.mrb[0].mxu0 %v8764
      %v9135 = vpop.f32.mrb[0].mxu0
      %v9136 = vadd.f32 0.0, %v9135
      %v9137 = vpop.f32.mrb[0].mxu0
      %9138 = vmatprep.mubr.f32.mxu0 0.0
      %9139 = vmatmul.mubr.f32.gmra.mrb[0].mxu0 %v8767
      %v9140 = vpop.f32.mrb[0].mxu0
      %v9141 = vadd.f32 0.0, %v9140
      %v9142 = vpop.f32.mrb[0].mxu0
      %9143 = vmatprep.mubr.f32.mxu0 0.0
      %9144 = vmatmul.mubr.f32.gmra.mrb[0].mxu0 %v8770
      %v9145 = vpop.f32.mrb[0].mxu0
      %v9146 = vadd.f32 0.0, %v9145
      %v9147 = vpop.f32.mrb[0].mxu0
      %9148 = vmatprep.mubr.f32.mxu0 0.0
      %9149 = vmatmul.mubr.f32.gmra.mrb[0].mxu0 %v8773
      %v9150 = vpop.f32.mrb[0].mxu0
      %v9151 = vadd.f32 0.0, %v9150
      %v9152 = vpop.f32.mrb[0].mxu0
      %9153 = vmatprep.mubr.f32.mxu0 0.0
      %9154 = vmatmul.mubr.f32.gmra.mrb[0].mxu0 %v8776
      %v9155 = vpop.f32.mrb[0].mxu0
      %v9156 = vadd.f32 0.0, %v9155
      %v9157 = vpop.f32.mrb[0].mxu0
      %9158 = vmatprep.mubr.f32.mxu0 0.0
      %9159 = vmatmul.mubr.f32.gmra.mrb[0].mxu0 %v8779
      %v9160 = vpop.f32.mrb[0].mxu0
      %v9161 = vadd.f32 0.0, %v9160
      %v9162 = vpop.f32.mrb[0].mxu0
      %9163 = vmatprep.mubr.f32.mxu0 0.0
      %9164 = vmatmul.mubr.f32.gmra.mrb[0].mxu0 %v8782
      %v9165 = vpop.f32.mrb[0].mxu0
      %v9166 = vadd.f32 0.0, %v9165
      %v9167 = vpop.f32.mrb[0].mxu0
      %9168 = vdwg.mxu0
      %v9169 = vld [vmem:[%s2 + $0x20] sm:$0xff]
      %v9170 = vld [vmem:[%s2 + $0x28] sm:$0xff]
      %v9171 = vld [vmem:[%s2 + $0x30] sm:$0xff]
      %v9172 = vld [vmem:[%s2 + $0x38] sm:$0xff]
      %v9173 = vld [vmem:[%s2 + $0x40] sm:$0xff]
      %v9174 = vld [vmem:[%s2 + $0x48] sm:$0xff]
      %v9175 = vld [vmem:[%s2 + $0x50] sm:$0xff]
      %v9176 = vld [vmem:[%s2 + $0x58] sm:$0xff]
      %v9177 = vld [vmem:[%s2 + $0x60] sm:$0xff]
      %v9178 = vld [vmem:[%s2 + $0x68] sm:$0xff]
      %v9179 = vld [vmem:[%s2 + $0x70] sm:$0xff]
      %v9180 = vld [vmem:[%s2 + $0x78] sm:$0xff]
      %v9181 = vld [vmem:[%s2 + $0x80] sm:$0xff]
      %v9182 = vld [vmem:[%s2 + $0x88] sm:$0xff]
      %v9183 = vld [vmem:[%s2 + $0x90] sm:$0xff]
      %v9184 = vld [vmem:[%s2 + $0x98] sm:$0xff]
      %v9185 = vld [vmem:[%s2 + $0xa0] sm:$0xff]
      %v9186 = vld [vmem:[%s2 + $0xa8] sm:$0xff]
      %v9187 = vld [vmem:[%s2 + $0xb0] sm:$0xff]
      %v9188 = vld [vmem:[%s2 + $0xb8] sm:$0xff]
      %v9189 = vld [vmem:[%s2 + $0xc0] sm:$0xff]
      %v9190 = vld [vmem:[%s2 + $0xc8] sm:$0xff]
      %v9191 = vld [vmem:[%s2 + $0xd0] sm:$0xff]
      %v9192 = vld [vmem:[%s2 + $0xd8] sm:$0xff]
      %v9193 = vld [vmem:[%s2 + $0xe0] sm:$0xff]
      %v9194 = vld [vmem:[%s2 + $0xe8] sm:$0xff]
      %v9195 = vld [vmem:[%s2 + $0xf0] sm:$0xff]
      %v9196 = vld [vmem:[%s2 + $0xf8] sm:$0xff]
      %v9197 = vld [vmem:[%s2 + $0x100] sm:$0xff]
      %v9198 = vld [vmem:[%s2 + $0x108] sm:$0xff]
      %v9199 = vld [vmem:[%s2 + $0x110] sm:$0xff]
      %v9200 = vld [vmem:[%s2 + $0x118] sm:$0xff]
      %v9201 = vld [vmem:[%s2 + $0x120] sm:$0xff]
      %v9202 = vld [vmem:[%s2 + $0x128] sm:$0xff]
      %v9203 = vld [vmem:[%s2 + $0x130] sm:$0xff]
      %v9204 = vld [vmem:[%s2 + $0x138] sm:$0xff]
      %v9205 = vld [vmem:[%s2 + $0x140] sm:$0xff]
      %v9206 = vld [vmem:[%s2 + $0x148] sm:$0xff]
      %v9207 = vld [vmem:[%s2 + $0x150] sm:$0xff]
      %v9208 = vld [vmem:[%s2 + $0x158] sm:$0xff]
      %v9209 = vld [vmem:[%s2 + $0x160] sm:$0xff]
      %v9210 = vld [vmem:[%s2 + $0x168] sm:$0xff]
      %v9211 = vld [vmem:[%s2 + $0x170] sm:$0xff]
      %v9212 = vld [vmem:[%s2 + $0x178] sm:$0xff]
      %v9213 = vld [vmem:[%s2 + $0x180] sm:$0xff]
      %v9214 = vld [vmem:[%s2 + $0x188] sm:$0xff]
      %v9215 = vld [vmem:[%s2 + $0x190] sm:$0xff]
      %v9216 = vld [vmem:[%s2 + $0x198] sm:$0xff]
      %v9217 = vld [vmem:[%s2 + $0x1a0] sm:$0xff]
      %v9218 = vld [vmem:[%s2 + $0x1a8] sm:$0xff]
      %v9219 = vld [vmem:[%s2 + $0x1b0] sm:$0xff]
      %v9220 = vld [vmem:[%s2 + $0x1b8] sm:$0xff]
      %v9221 = vld [vmem:[%s2 + $0x1c0] sm:$0xff]
      %v9222 = vld [vmem:[%s2 + $0x1c8] sm:$0xff]
      %v9223 = vld [vmem:[%s2 + $0x1d0] sm:$0xff]
      %v9224 = vld [vmem:[%s2 + $0x1d8] sm:$0xff]
      %v9225 = vld [vmem:[%s2 + $0x1e0] sm:$0xff]
      %v9226 = vld [vmem:[%s2 + $0x1e8] sm:$0xff]
      %v9227 = vld [vmem:[%s2 + $0x1f0] sm:$0xff]
      %v9228 = vld [vmem:[%s2 + $0x1f8] sm:$0xff]
      %v9229 = vld [vmem:[%s2 + $0x200] sm:$0xff]
      %v9230 = vld [vmem:[%s2 + $0x208] sm:$0xff]
      %v9231 = vld [vmem:[%s2 + $0x210] sm:$0xff]
      %v9232 = vld [vmem:[%s2 + $0x218] sm:$0xff]
      %v9233 = vmul.f32 %v8851, %v9169
      %v9234 = vmul.f32 %v8856, %v9170
      %v9235 = vmul.f32 %v8861, %v9171
      %v9236 = vmul.f32 %v8866, %v9172
      %v9237 = vmul.f32 %v8871, %v9173
      %v9238 = vmul.f32 %v8876, %v9174
      %v9239 = vmul.f32 %v8881, %v9175
      %v9240 = vmul.f32 %v8886, %v9176
      %v9241 = vmul.f32 %v8891, %v9177
      %v9242 = vmul.f32 %v8896, %v9178
      %v9243 = vmul.f32 %v8901, %v9179
      %v9244 = vmul.f32 %v8906, %v9180
      %v9245 = vmul.f32 %v8911, %v9181
      %v9246 = vmul.f32 %v8916, %v9182
      %v9247 = vmul.f32 %v8921, %v9183
      %v9248 = vmul.f32 %v8926, %v9184
      %v9249 = vmul.f32 %v8931, %v9185
      %v9250 = vmul.f32 %v8936, %v9186
      %v9251 = vmul.f32 %v8941, %v9187
      %v9252 = vmul.f32 %v8946, %v9188
      %v9253 = vmul.f32 %v8951, %v9189
      %v9254 = vmul.f32 %v8956, %v9190
      %v9255 = vmul.f32 %v8961, %v9191
      %v9256 = vmul.f32 %v8966, %v9192
      %v9257 = vmul.f32 %v8971, %v9193
      %v9258 = vmul.f32 %v8976, %v9194
      %v9259 = vmul.f32 %v8981, %v9195
      %v9260 = vmul.f32 %v8986, %v9196
      %v9261 = vmul.f32 %v8991, %v9197
      %v9262 = vmul.f32 %v8996, %v9198
      %v9263 = vmul.f32 %v9001, %v9199
      %v9264 = vmul.f32 %v9006, %v9200
      %v9265 = vmul.f32 %v9011, %v9201
      %v9266 = vmul.f32 %v9016, %v9202
      %v9267 = vmul.f32 %v9021, %v9203
      %v9268 = vmul.f32 %v9026, %v9204
      %v9269 = vmul.f32 %v9031, %v9205
      %v9270 = vmul.f32 %v9036, %v9206
      %v9271 = vmul.f32 %v9041, %v9207
      %v9272 = vmul.f32 %v9046, %v9208
      %v9273 = vmul.f32 %v9051, %v9209
      %v9274 = vmul.f32 %v9056, %v9210
      %v9275 = vmul.f32 %v9061, %v9211
      %v9276 = vmul.f32 %v9066, %v9212
      %v9277 = vmul.f32 %v9071, %v9213
      %v9278 = vmul.f32 %v9076, %v9214
      %v9279 = vmul.f32 %v9081, %v9215
      %v9280 = vmul.f32 %v9086, %v9216
      %v9281 = vmul.f32 %v9091, %v9217
      %v9282 = vmul.f32 %v9096, %v9218
      %v9283 = vmul.f32 %v9101, %v9219
      %v9284 = vmul.f32 %v9106, %v9220
      %v9285 = vmul.f32 %v9111, %v9221
      %v9286 = vmul.f32 %v9116, %v9222
      %v9287 = vmul.f32 %v9121, %v9223
      %v9288 = vmul.f32 %v9126, %v9224
      %v9289 = vmul.f32 %v9131, %v9225
      %v9290 = vmul.f32 %v9136, %v9226
      %v9291 = vmul.f32 %v9141, %v9227
      %v9292 = vmul.f32 %v9146, %v9228
      %v9293 = vmul.f32 %v9151, %v9229
      %v9294 = vmul.f32 %v9156, %v9230
      %v9295 = vmul.f32 %v9161, %v9231
      %v9296 = vmul.f32 %v9166, %v9232
      %v9297 = vld [vmem:[%s3] sm:$0xff]
      %v9298 = vld [vmem:[%s3 + $0x8] sm:$0xff]
      %v9299 = vld [vmem:[%s3 + $0x10] sm:$0xff]
      %v9300 = vld [vmem:[%s3 + $0x18] sm:$0xff]
      %9301 = vmatprep.subr.mxu0 0.0
      %9302 = vmatpush1.msra.mxu0 %v9233
      %9303 = vmatprep.subr.mxu0 0.0
      %9304 = vmatpush1.msra.mxu0 %v9234
      %9305 = vmatprep.subr.mxu0 0.0
      %9306 = vmatpush1.msra.mxu0 %v9235
      %9307 = vmatprep.subr.mxu0 0.0
      %9308 = vmatpush1.msra.mxu0 %v9236
      %9309 = vmatprep.subr.mxu0 0.0
      %9310 = vmatpush1.msra.mxu0 %v9237
      %9311 = vmatprep.subr.mxu0 0.0
      %9312 = vmatpush1.msra.mxu0 %v9238
      %9313 = vmatprep.subr.mxu0 0.0
      %9314 = vmatpush1.msra.mxu0 %v9239
      %9315 = vmatprep.subr.mxu0 0.0
      %9316 = vmatpush1.msra.mxu0 %v9240
      %9317 = vmatprep.subr.mxu0 0.0
      %9318 = vmatpush1.msra.mxu0 %v9241
      %9319 = vmatprep.subr.mxu0 0.0
      %9320 = vmatpush1.msra.mxu0 %v9242
      %9321 = vmatprep.subr.mxu0 0.0
      %9322 = vmatpush1.msra.mxu0 %v9243
      %9323 = vmatprep.subr.mxu0 0.0
      %9324 = vmatpush1.msra.mxu0 %v9244
      %9325 = vmatprep.subr.mxu0 0.0
      %9326 = vmatpush1.msra.mxu0 %v9245
      %9327 = vmatprep.subr.mxu0 0.0
      %9328 = vmatpush1.msra.mxu0 %v9246
      %9329 = vmatprep.subr.mxu0 0.0
      %9330 = vmatpush1.msra.mxu0 %v9247
      %9331 = vmatprep.subr.mxu0 0.0
      %9332 = vmatpush1.msra.mxu0 %v9248
      %9333 = vmatprep.subr.mxu0 0.0
      %9334 = vmatpush1.msra.mxu0 %v9249
      %9335 = vmatprep.subr.mxu0 0.0
      %9336 = vmatpush1.msra.mxu0 %v9250
      %9337 = vmatprep.subr.mxu0 0.0
      %9338 = vmatpush1.msra.mxu0 %v9251
      %9339 = vmatprep.subr.mxu0 0.0
      %9340 = vmatpush1.msra.mxu0 %v9252
      %9341 = vmatprep.subr.mxu0 0.0
      %9342 = vmatpush1.msra.mxu0 %v9253
      %9343 = vmatprep.subr.mxu0 0.0
      %9344 = vmatpush1.msra.mxu0 %v9254
      %9345 = vmatprep.subr.mxu0 0.0
      %9346 = vmatpush1.msra.mxu0 %v9255
      %9347 = vmatprep.subr.mxu0 0.0
      %9348 = vmatpush1.msra.mxu0 %v9256
      %9349 = vmatprep.subr.mxu0 0.0
      %9350 = vmatpush1.msra.mxu0 %v9257
      %9351 = vmatprep.subr.mxu0 0.0
      %9352 = vmatpush1.msra.mxu0 %v9258
      %9353 = vmatprep.subr.mxu0 0.0
      %9354 = vmatpush1.msra.mxu0 %v9259
      %9355 = vmatprep.subr.mxu0 0.0
      %9356 = vmatpush1.msra.mxu0 %v9260
      %9357 = vmatprep.subr.mxu0 0.0
      %9358 = vmatpush1.msra.mxu0 %v9261
      %9359 = vmatprep.subr.mxu0 0.0
      %9360 = vmatpush1.msra.mxu0 %v9262
      %9361 = vmatprep.subr.mxu0 0.0
      %9362 = vmatpush1.msra.mxu0 %v9263
      %9363 = vmatprep.subr.mxu0 0.0
      %9364 = vmatpush1.msra.mxu0 %v9264
      %9365 = vmatprep.mubr.f32.mxu0 %v9298
      %9366 = vmatmul.mubr.f32.gmra.mrb[0].mxu0 %v9297
      %v9367 = vpop.f32.mrb[0].mxu0
      %v9368 = vadd.f32 0.0, %v9367
      %v9369 = vpop.f32.mrb[0].mxu0
      %9370 = vdwg.mxu0
      %9371 = vmatprep.subr.mxu0 0.0
      %9372 = vmatpush1.msra.mxu0 %v9265
      %9373 = vmatprep.subr.mxu0 0.0
      %9374 = vmatpush1.msra.mxu0 %v9266
      %9375 = vmatprep.subr.mxu0 0.0
      %9376 = vmatpush1.msra.mxu0 %v9267
      %9377 = vmatprep.subr.mxu0 0.0
      %9378 = vmatpush1.msra.mxu0 %v9268
      %9379 = vmatprep.subr.mxu0 0.0
      %9380 = vmatpush1.msra.mxu0 %v9269
      %9381 = vmatprep.subr.mxu0 0.0
      %9382 = vmatpush1.msra.mxu0 %v9270
      %9383 = vmatprep.subr.mxu0 0.0
      %9384 = vmatpush1.msra.mxu0 %v9271
      %9385 = vmatprep.subr.mxu0 0.0
      %9386 = vmatpush1.msra.mxu0 %v9272
      %9387 = vmatprep.subr.mxu0 0.0
      %9388 = vmatpush1.msra.mxu0 %v9273
      %9389 = vmatprep.subr.mxu0 0.0
      %9390 = vmatpush1.msra.mxu0 %v9274
      %9391 = vmatprep.subr.mxu0 0.0
      %9392 = vmatpush1.msra.mxu0 %v9275
      %9393 = vmatprep.subr.mxu0 0.0
      %9394 = vmatpush1.msra.mxu0 %v9276
      %9395 = vmatprep.subr.mxu0 0.0
      %9396 = vmatpush1.msra.mxu0 %v9277
      %9397 = vmatprep.subr.mxu0 0.0
      %9398 = vmatpush1.msra.mxu0 %v9278
      %9399 = vmatprep.subr.mxu0 0.0
      %9400 = vmatpush1.msra.mxu0 %v9279
      %9401 = vmatprep.subr.mxu0 0.0
      %9402 = vmatpush1.msra.mxu0 %v9280
      %9403 = vmatprep.subr.mxu0 0.0
      %9404 = vmatpush1.msra.mxu0 %v9281
      %9405 = vmatprep.subr.mxu0 0.0
      %9406 = vmatpush1.msra.mxu0 %v9282
      %9407 = vmatprep.subr.mxu0 0.0
      %9408 = vmatpush1.msra.mxu0 %v9283
      %9409 = vmatprep.subr.mxu0 0.0
      %9410 = vmatpush1.msra.mxu0 %v9284
      %9411 = vmatprep.subr.mxu0 0.0
      %9412 = vmatpush1.msra.mxu0 %v9285
      %9413 = vmatprep.subr.mxu0 0.0
      %9414 = vmatpush1.msra.mxu0 %v9286
      %9415 = vmatprep.subr.mxu0 0.0
      %9416 = vmatpush1.msra.mxu0 %v9287
      %9417 = vmatprep.subr.mxu0 0.0
      %9418 = vmatpush1.msra.mxu0 %v9288
      %9419 = vmatprep.subr.mxu0 0.0
      %9420 = vmatpush1.msra.mxu0 %v9289
      %9421 = vmatprep.subr.mxu0 0.0
      %9422 = vmatpush1.msra.mxu0 %v9290
      %9423 = vmatprep.subr.mxu0 0.0
      %9424 = vmatpush1.msra.mxu0 %v9291
      %9425 = vmatprep.subr.mxu0 0.0
      %9426 = vmatpush1.msra.mxu0 %v9292
      %9427 = vmatprep.subr.mxu0 0.0
      %9428 = vmatpush1.msra.mxu0 %v9293
      %9429 = vmatprep.subr.mxu0 0.0
      %9430 = vmatpush1.msra.mxu0 %v9294
      %9431 = vmatprep.subr.mxu0 0.0
      %9432 = vmatpush1.msra.mxu0 %v9295
      %9433 = vmatprep.subr.mxu0 0.0
      %9434 = vmatpush1.msra.mxu0 %v9296
      %9435 = vmatprep.mubr.f32.mxu0 %v9300
      %9436 = vmatmul.mubr.f32.gmra.mrb[0].mxu0 %v9299
      %v9437 = vpop.f32.mrb[0].mxu0
      %v9438 = vadd.f32 %v9368, %v9437
      %v9439 = vpop.f32.mrb[0].mxu0
      %9440 = vdwg.mxu0
      %v9441 = vld [vmem:[%s2 + $0x220] sm:$0xff]
      %v9442 = vld [vmem:[%s2 + $0x228] sm:$0xff]
      %v9443 = vld [vmem:[%s2 + $0x230] sm:$0xff]
      %v9444 = vld [vmem:[%s2 + $0x238] sm:$0xff]
      %v9445 = vld [vmem:[%s2 + $0x240] sm:$0xff]
      %v9446 = vld [vmem:[%s2 + $0x248] sm:$0xff]
      %v9447 = vld [vmem:[%s2 + $0x250] sm:$0xff]
      %v9448 = vld [vmem:[%s2 + $0x258] sm:$0xff]
      %v9449 = vld [vmem:[%s2 + $0x260] sm:$0xff]
      %v9450 = vld [vmem:[%s2 + $0x268] sm:$0xff]
      %v9451 = vld [vmem:[%s2 + $0x270] sm:$0xff]
      %v9452 = vld [vmem:[%s2 + $0x278] sm:$0xff]
      %v9453 = vld [vmem:[%s2 + $0x280] sm:$0xff]
      %v9454 = vld [vmem:[%s2 + $0x288] sm:$0xff]
      %v9455 = vld [vmem:[%s2 + $0x290] sm:$0xff]
      %v9456 = vld [vmem:[%s2 + $0x298] sm:$0xff]
      %v9457 = vld [vmem:[%s2 + $0x2a0] sm:$0x1]
      %v9458 = vlaneseq
      %v9459 = vshrl.u32 %v9458, 7
      %v9460 = vsub.s32 0, %v9459
      %v9461 = vrot.slane %v9457, %v9460
      %9462 = vmatprep.subr.mxu0 0.0
      %9463 = vmatpush1.msra.mxu0 %v9441
      %9464 = vmatprep.subr.mxu0 0.0
      %9465 = vmatpush1.msra.mxu0 %v9442
      %9466 = vmatprep.subr.mxu0 0.0
      %9467 = vmatpush1.msra.mxu0 %v9443
      %9468 = vmatprep.subr.mxu0 0.0
      %9469 = vmatpush1.msra.mxu0 %v9444
      %9470 = vmatprep.subr.mxu0 0.0
      %9471 = vmatpush1.msra.mxu0 %v9445
      %9472 = vmatprep.subr.mxu0 0.0
      %9473 = vmatpush1.msra.mxu0 %v9446
      %9474 = vmatprep.subr.mxu0 0.0
      %9475 = vmatpush1.msra.mxu0 %v9447
      %9476 = vmatprep.subr.mxu0 0.0
      %9477 = vmatpush1.msra.mxu0 %v9448
      %9478 = vmatprep.subr.mxu0 0.0
      %9479 = vmatpush1.msra.mxu0 %v9449
      %9480 = vmatprep.subr.mxu0 0.0
      %9481 = vmatpush1.msra.mxu0 %v9450
      %9482 = vmatprep.subr.mxu0 0.0
      %9483 = vmatpush1.msra.mxu0 %v9451
      %9484 = vmatprep.subr.mxu0 0.0
      %9485 = vmatpush1.msra.mxu0 %v9452
      %9486 = vmatprep.subr.mxu0 0.0
      %9487 = vmatpush1.msra.mxu0 %v9453
      %9488 = vmatprep.subr.mxu0 0.0
      %9489 = vmatpush1.msra.mxu0 %v9454
      %9490 = vmatprep.subr.mxu0 0.0
      %9491 = vmatpush1.msra.mxu0 %v9455
      %9492 = vmatprep.subr.mxu0 0.0
      %9493 = vmatpush1.msra.mxu0 %v9456
      %9494 = vmatprep.subr.mxu0 0.0
      %9495 = vmatpush1.msra.mxu0 0.0
      %9496 = vmatprep.subr.mxu0 0.0
      %9497 = vmatpush1.msra.mxu0 0.0
      %9498 = vmatprep.subr.mxu0 0.0
      %9499 = vmatpush1.msra.mxu0 0.0
      %9500 = vmatprep.subr.mxu0 0.0
      %9501 = vmatpush1.msra.mxu0 0.0
      %9502 = vmatprep.subr.mxu0 0.0
      %9503 = vmatpush1.msra.mxu0 0.0
      %9504 = vmatprep.subr.mxu0 0.0
      %9505 = vmatpush1.msra.mxu0 0.0
      %9506 = vmatprep.subr.mxu0 0.0
      %9507 = vmatpush1.msra.mxu0 0.0
      %9508 = vmatprep.subr.mxu0 0.0
      %9509 = vmatpush1.msra.mxu0 0.0
      %9510 = vmatprep.subr.mxu0 0.0
      %9511 = vmatpush1.msra.mxu0 0.0
      %9512 = vmatprep.subr.mxu0 0.0
      %9513 = vmatpush1.msra.mxu0 0.0
      %9514 = vmatprep.subr.mxu0 0.0
      %9515 = vmatpush1.msra.mxu0 0.0
      %9516 = vmatprep.subr.mxu0 0.0
      %9517 = vmatpush1.msra.mxu0 0.0
      %9518 = vmatprep.subr.mxu0 0.0
      %9519 = vmatpush1.msra.mxu0 0.0
      %9520 = vmatprep.subr.mxu0 0.0
      %9521 = vmatpush1.msra.mxu0 0.0
      %9522 = vmatprep.subr.mxu0 0.0
      %9523 = vmatpush1.msra.mxu0 0.0
      %9524 = vmatprep.subr.mxu0 0.0
      %9525 = vmatpush1.msra.mxu0 0.0
      %9526 = vmatprep.mubr.f32.mxu0 0.0
      %9527 = vmatmul.mubr.f32.gmra.mrb[0].mxu0 %v9438
      %v9528 = vpop.f32.mrb[0].mxu0
      %v9529 = vadd.f32 %v9461, %v9528
      %v9530 = vpop.f32.mrb[0].mxu0
      %9531 = vdwg.mxu0
      %v9532 = vsel %vm1170, %v9529, -inf
      %9533 = vmax.xlane.f32.xlu0 %v9532
      %v9534 = vpop.xlane.xlu0 %9533
      %v9535 = vsub.f32 %v9529, %v9534
      %v9536 = vmul.f32 %v9535, 1.442695
      %v9537 = vpow.pop %v9536
      %v9538 = vsel %vm1170, %v9537, 0.0
      %9539 = vadd.xlane.f32.xlu0 %v9538
      %v9540 = vpop.xlane.xlu0 %9539
      %v9541 = vrcp.pop %v9540
      %v9542 = vmul.f32 %v9537, %v9541
      %9543 = vst.msk [vmem:[%s197] sm:$0xff] %vm1170, %v9542
      %p9544 = scmp.lt.s32.totalorder %s15, 7
      %s9545 = scalar_select %p9544, %s15, 7
      %s9546 = smul.addr %s9545, 8
      %s9547 = scalar_lea.vmem %s4, %s9546
      // Predicated region
      $region37: #{convnet_forward.1} parent=35 // pred_check
        %p9548 = pneg %p122
      $region38: #{convnet_forward.1} parent=35 // pred_check_branch
        %9550 = sbr.rel (%p9548) target = $region40
      $region39: #{convnet_forward.1} parent=35 // pred_region
        _
      $region40: #{convnet_forward.1} parent=35 // pred_fallthru
        _
    $region36: #{convnet_forward.1} parent=5 // pred_fallthru
      _
    %p9551 = scmp.le.s32.totalorder 2, %s10
    // Predicated region
    $region41: #{convnet_forward.1} parent=5 // pred_check
      %p9552 = pneg %p9551
    $region42: #{convnet_forward.1} parent=5 // pred_check_branch
      %9554 = sbr.rel (%p9552) target = $region44
    $region43: #{convnet_forward.1} parent=5 // pred_region
      %s9555 = ssub.s32 %s10, 2
      // Predicated region
      $region45: #{convnet_forward.1} parent=43 // pred_check
        %p9556 = pneg %p128
      $region46: #{convnet_forward.1} parent=43 // pred_check_branch
        %9558 = sbr.rel (%p9556) target = $region48
      $region47: #{convnet_forward.1} parent=43 // pred_region
        %p9559 = scmp.lt.s32.totalorder %s16, 7
        %s9560 = scalar_select %p9559, %s16, 7
        %s9561 = smul.addr %s9560, 8
        %s9562 = scalar_lea.vmem %s4, %s9561
      $region48: #{convnet_forward.1} parent=43 // pred_fallthru
        _
    $region44: #{convnet_forward.1} parent=5 // pred_fallthru
      _
  $region6: #{convnet_forward.1} parent=0 // loop_footer
    %s14 = sadd.s32 1, %s10
  $region7: #{convnet_forward.1} parent=0 // loop_footer_branch
    %9 = sbr.rel target = $region3
  $region8: #{convnet_forward.1} parent=0 // loop_exit
    _

</llo_original>
